<compile_context>
chip_gen: v7x
topology: tpu7x:2x2x1
jax: 0.10.0
libtpu: 0.0.40
codegen_flags: <defaults>
</compile_context>

<pallas_src>
import math
import numpy as np
import jax
import jax.numpy as jnp
from jax import lax
from jax.experimental import pallas as pl
from jax.experimental.pallas import tpu as pltpu

# ----------------------------- config (small synthetic shapes) ---------------
B, T, S = 2, 8, 8          # batch, target len, source len
E, H = 32, 32              # embedding_size, hidden_size
NH = 4                     # num_heads
KD, VD = 32, 32            # total_key_depth, total_value_depth
F = 64                     # filter_size
dk, dv = KD // NH, VD // NH            # per-head key / value depth
D_QKV = 2 * dk + dv                    # fused self-attn per-head proj width
D_KV = dk + dv                         # fused cross-attn KV per-head proj width
EPS = 1e-6
NEG = -1e18

# ----------------------------- weight-slab layout ----------------------------
# WPROJ slab: (NH, H, 2*PROJ_L)  -- per-layer lane block of width PROJ_L
PROJ_L = D_QKV + dk + D_KV             # 48
P_QKV, P_QC, P_KVC = 0, D_QKV, D_QKV + dk
# WOUT slab: (NH, dv, 2*2*H)     -- per layer: [wo_self | wo_cross]
# W2D slab:  (2*W2D_L + E, 64)   -- per layer: conv1 (3H x F), conv2 (3F x H); then emb
W2D_L = 3 * H + 3 * F                  # 288 rows per layer
EMB_OFF = 2 * W2D_L                    # 576
# VEC slab: (2*VEC_L + 2, 64)
VEC_L = 8
(V_LN1G, V_LN1B, V_LN2G, V_LN2B, V_LN3G, V_LN3B, V_C1B, V_C2B) = range(VEC_L)
V_FG, V_FB = 2 * VEC_L, 2 * VEC_L + 1


# --------------------- helpers traced INSIDE the fused kernel ----------------
def _layer_norm(x, g, b):
    # CEDual's custom LayerNorm: unbiased std (ddof=1), eps added to the std.
    mean = jnp.mean(x, axis=-1, keepdims=True)
    d = x - mean
    var = jnp.sum(d * d, axis=-1, keepdims=True) / (x.shape[-1] - 1)
    inv = pl.reciprocal(jnp.sqrt(var) + EPS, approx=False)   # keep LN exact
    return g * d * inv + b


def _sum_heads(x3):
    # Sum over the (small, untiled) leading head dim: NH-1 vector adds.
    out = x3[0]
    for h in range(1, NH):
        out = out + x3[h]
    return out


def _mha(q, k, v, wo, bias, need_attn):
    # q:(NH,M,dk)  k:(NH,Mk,dk)  v:(NH,Mk,dv)  wo:(NH,dv,H)  bias:(M,Mk) additive
    # (query scale dk**-0.5 already folded into the Q projection weights)
    logits = jnp.einsum('hmd,hnd->hmn', q, k,
                        preferred_element_type=jnp.float32) + bias[None]
    attn = _sum_heads(logits) * (1.0 / NH) if need_attn else None
    mx = jnp.max(logits, axis=-1, keepdims=True)
    e = jnp.exp(logits - mx)
    p = e * pl.reciprocal(jnp.sum(e, axis=-1, keepdims=True), approx=True)  # EUP
    ctx = jnp.einsum('hmn,hnv->hmv', p, v, preferred_element_type=jnp.float32)
    outh = jnp.einsum('hmv,hvc->hmc', ctx, wo, preferred_element_type=jnp.float32)
    return _sum_heads(outh), attn


def _causal_conv3(x, w_flat, bias, m1, m2):
    # Left-padded Conv1d(kernel=3): out[t] = W0@x[t-2] + W1@x[t-1] + W2@x[t] + b,
    # as ONE matmul on tap-concatenated activations.  m1/m2 are the hoisted
    # (M,1) "local time >= 1/2" masks (also stop cross-batch leakage of roll).
    xm1 = jnp.where(m1, pltpu.roll(x, shift=1, axis=0), 0.0)
    xm2 = jnp.where(m2, pltpu.roll(x, shift=2, axis=0), 0.0)
    x3 = jnp.concatenate([xm2, xm1, x], axis=-1)          # (M, 3*Din)
    return jnp.dot(x3, w_flat, preferred_element_type=jnp.float32) + bias


def _decoder_layer(x, enc, dec_bias, src_bias, cm1, cm2,
                   wproj_ref, wout_ref, w2d_ref, vec_ref, li, need_attn):
    pbase = li * PROJ_L
    obase = li * 2 * H
    cbase = li * W2D_L
    vbase = li * VEC_L

    def vec(i, n):
        return vec_ref[vbase + i:vbase + i + 1, :n]       # (1, n)

    # ---- masked multi-head self-attention (pre-LN) + residual; fused QKV ----
    xn = _layer_norm(x, vec(V_LN1G, H), vec(V_LN1B, H))
    xb = jnp.broadcast_to(xn, (NH,) + xn.shape)
    qkv = jnp.einsum('hmc,hcd->hmd', xb,
                     wproj_ref[:, :, pbase + P_QKV:pbase + P_QKV + D_QKV],
                     preferred_element_type=jnp.float32)  # (NH, M, 2dk+dv)
    y, _ = _mha(qkv[:, :, :dk], qkv[:, :, dk:2 * dk], qkv[:, :, 2 * dk:],
                wout_ref[:, :, obase:obase + H], dec_bias, need_attn=False)
    x = x + y

    # ---- encoder-decoder attention (pre-LN) + residual; fused KV ------------
    xn = _layer_norm(x, vec(V_LN2G, H), vec(V_LN2B, H))
    xb = jnp.broadcast_to(xn, (NH,) + xn.shape)
    q = jnp.einsum('hmc,hcd->hmd', xb,
                   wproj_ref[:, :, pbase + P_QC:pbase + P_QC + dk],
                   preferred_element_type=jnp.float32)    # (NH, M, dk)
    eb = jnp.broadcast_to(enc, (NH,) + enc.shape)
    kv = jnp.einsum('hsc,hcd->hsd', eb,
                    wproj_ref[:, :, pbase + P_KVC:pbase + P_KVC + D_KV],
                    preferred_element_type=jnp.float32)   # (NH, Ms, dk+dv)
    y, attn = _mha(q, kv[:, :, :dk], kv[:, :, dk:],
                   wout_ref[:, :, obase + H:obase + 2 * H], src_bias, need_attn)
    x = x + y

    # ---- position-wise FFN ('cc'): two causal convs, ReLU after each ---------
    # (the CEDual/MoEL PFF loop applies ReLU after every layer incl. the last)
    xn = _layer_norm(x, vec(V_LN3G, H), vec(V_LN3B, H))
    h1 = jnp.maximum(
        _causal_conv3(xn, w2d_ref[cbase:cbase + 3 * H, :F], vec(V_C1B, F),
                      cm1, cm2), 0.0)
    y = jnp.maximum(
        _causal_conv3(h1, w2d_ref[cbase + 3 * H:cbase + 3 * H + 3 * F, :H],
                      vec(V_C2B, H), cm1, cm2), 0.0)
    return x + y, attn


# --------------------------------- fused kernel ------------------------------
def _mul_decoder_kernel(lens_ref, x_ref, emo_ref, con_ref, ts_ref,
                        wproj_ref, wout_ref, w2d_ref, vec_ref,
                        y_ref, attn_ref):
    M = x_ref.shape[0]          # B*T
    Ms = emo_ref.shape[0]       # B*S

    # --- additive attention biases rebuilt from lengths (no (B,T,T) DMA) -----
    # lens_ref (SMEM, int32, 2B): [slen_0..slen_{B-1}, tlen_0..tlen_{B-1}]
    q_row = lax.broadcasted_iota(jnp.int32, (M, 1), 0)     # global query row
    kt_col = lax.broadcasted_iota(jnp.int32, (1, M), 1)    # global target-key col
    ks_col = lax.broadcasted_iota(jnp.int32, (1, Ms), 1)   # global source-key col

    dec_vis = src_vis = first_row = second_row = None
    for bb in range(B):                                    # static unroll, no vector int-div
        slen = lens_ref[bb]
        tlen = lens_ref[B + bb]
        qin = (q_row >= bb * T) & (q_row < (bb + 1) * T)   # (M,1) query in batch bb
        dv_b = (qin & (kt_col >= bb * T) & (kt_col <= q_row)
                & (kt_col < bb * T + tlen))                # causal + trg-pad + same batch
        sv_b = qin & (ks_col >= bb * S) & (ks_col < bb * S + slen)
        fr_b = q_row == bb * T
        sr_b = q_row == bb * T + 1
        if bb == 0:
            dec_vis, src_vis, first_row, second_row = dv_b, sv_b, fr_b, sr_b
        else:
            dec_vis = dec_vis | dv_b
            src_vis = src_vis | sv_b
            first_row = first_row | fr_b
            second_row = second_row | sr_b
    dec_bias = jnp.where(dec_vis, 0.0, NEG)                # (M, M)
    src_bias = jnp.where(src_vis, 0.0, NEG)                # (M, Ms)
    # hoisted causal-conv shift masks (batch-local time >= 1 / >= 2)
    cm1 = jnp.logical_not(first_row)                       # (M, 1)
    cm2 = cm1 & jnp.logical_not(second_row)

    # --- embedding_proj (no bias) + timing signal -----------------------------
    emb_w = w2d_ref[EMB_OFF:EMB_OFF + E, :H]
    x = jnp.dot(x_ref[...], emb_w, preferred_element_type=jnp.float32) + ts_ref[...]

    # emotion_dec2 -- its attention distribution is discarded: never computed
    x, _ = _decoder_layer(x, emo_ref[...], dec_bias, src_bias, cm1, cm2,
                          wproj_ref, wout_ref, w2d_ref, vec_ref, 0, False)
    # content_dec2 -- its enc-dec attention is the returned attn_dist
    x, attn = _decoder_layer(x, con_ref[...], dec_bias, src_bias, cm1, cm2,
                             wproj_ref, wout_ref, w2d_ref, vec_ref, 1, True)

    # final custom LayerNorm
    y_ref[...] = _layer_norm(x, vec_ref[V_FG:V_FG + 1, :H],
                             vec_ref[V_FB:V_FB + 1, :H])
    # per-batch diagonal blocks of the head-mean masked logits
    for bb in range(B):
        attn_ref[bb * T:(bb + 1) * T, :] = \
            attn[bb * T:(bb + 1) * T, bb * S:(bb + 1) * S]


# --------------------------- host-side weight packing ------------------------
def _pack_weight_slabs(params):
    scale = dk ** -0.5

    def head3(w, d):            # (H, NH*d) head-major columns -> (NH, H, d)
        return jnp.transpose(w.reshape(H, NH, d), (1, 0, 2))

    def vrow(v):
        v = v.reshape(1, -1)
        return jnp.pad(v, ((0, 0), (0, 64 - v.shape[-1])))

    wproj_layers, wout_layers, w2d_rows, vec_rows = [], [], [], []
    for name in ("emotion_dec2", "content_dec2"):
        p = params[name]
        qkv = jnp.concatenate([head3(p["wq_s"] * scale, dk),     # scale folded into Wq
                               head3(p["wk_s"], dk),
                               head3(p["wv_s"], dv)], axis=-1)   # (NH, H, 24)
        wq_c = head3(p["wq_c"] * scale, dk)                      # (NH, H, 8)
        wkv_c = jnp.concatenate([head3(p["wk_c"], dk),
                                 head3(p["wv_c"], dv)], axis=-1)  # (NH, H, 16)
        wproj_layers.append(jnp.concatenate([qkv, wq_c, wkv_c], axis=-1))   # (NH, H, 48)
        wout_layers.append(jnp.concatenate([p["wo_s"].reshape(NH, dv, H),
                                            p["wo_c"].reshape(NH, dv, H)],
                                           axis=-1))             # (NH, dv, 2H)
        w2d_rows.append(p["conv1_w"].reshape(3 * H, F))                          # (96, 64)
        w2d_rows.append(jnp.pad(p["conv2_w"].reshape(3 * F, H),
                                ((0, 0), (0, 64 - H))))                          # (192, 64)
        for key in ("ln1_g", "ln1_b", "ln2_g", "ln2_b", "ln3_g", "ln3_b",
                    "conv1_b", "conv2_b"):
            vec_rows.append(vrow(p[key]))
    w2d_rows.append(jnp.pad(params["embedding_proj_w"], ((0, 0), (0, 64 - H))))
    vec_rows.append(vrow(params["final_ln_g"]))
    vec_rows.append(vrow(params["final_ln_b"]))

    wproj = jnp.concatenate(wproj_layers, axis=-1)   # (NH, H, 96)
    wout = jnp.concatenate(wout_layers, axis=-1)     # (NH, dv, 128)
    w2d = jnp.concatenate(w2d_rows, axis=0)          # (608, 64)
    vec = jnp.concatenate(vec_rows, axis=0)          # (18, 64)
    return wproj, wout, w2d, vec


# --------------------------------- wrapper ------------------------------------
def mul_decoder_forward(params, inputs, content_output, emotion_output,
                        mask_src, mask_trg, timing_signal):
    Bq, Tq, Ein = inputs.shape
    Ss = content_output.shape[1]
    Hh = params["embedding_proj_w"].shape[1]
    assert (Bq, Tq, Ss, Ein, Hh) == (B, T, S, E, H)   # slab offsets are module constants

    # CEDual's pad masks are trailing-pad (length-based): pass lengths via SMEM
    # scalar prefetch; causal+pad biases are rebuilt inside the kernel.
    # TODO(synk): non-contiguous pad masks would need the dense-mask input path.
    src_lens = (Ss - jnp.sum(mask_src[:, 0, :], axis=-1)).astype(jnp.int32)
    trg_lens = (Tq - jnp.sum(mask_trg[:, 0, :], axis=-1)).astype(jnp.int32)
    lens = jnp.concatenate([src_lens, trg_lens]).astype(jnp.int32)   # (2B,)

    # fold batch along the sublane/M dim (layout plumbing, not compute)
    x2 = inputs.reshape(Bq * Tq, Ein)
    emo2 = emotion_output.reshape(Bq * Ss, Hh)
    con2 = content_output.reshape(Bq * Ss, Hh)
    ts2 = jnp.broadcast_to(timing_signal[:, :Tq, :], (Bq, Tq, Hh)).reshape(Bq * Tq, Hh)
    wproj, wout, w2d, vec = _pack_weight_slabs(params)

    operands = (x2, emo2, con2, ts2, wproj, wout, w2d, vec)

    def full_spec(a):
        nd = a.ndim
        return pl.BlockSpec(a.shape, lambda i, L, _nd=nd: (0,) * _nd)

    # Single grid step: batch is folded into the block (best on single-TC
    # v5e/v6e).  On 2-TC v7x one could keep grid=(B,) + "parallel" instead.
    y2, attn2 = pl.pallas_call(
        _mul_decoder_kernel,
        out_shape=(jax.ShapeDtypeStruct((Bq * Tq, Hh), jnp.float32),
                   jax.ShapeDtypeStruct((Bq * Tq, Ss), jnp.float32)),
        grid_spec=pltpu.PrefetchScalarGridSpec(
            num_scalar_prefetch=1,
            grid=(1,),
            in_specs=[full_spec(a) for a in operands],
            out_specs=(pl.BlockSpec((Bq * Tq, Hh), lambda i, L: (0, 0)),
                       pl.BlockSpec((Bq * Tq, Ss), lambda i, L: (0, 0)))),
        compiler_params=pltpu.CompilerParams(
            dimension_semantics=("arbitrary",)),
    )(lens, *operands)
    return y2.reshape(Bq, Tq, Hh), attn2.reshape(Bq, Tq, Ss)


# ------------------------------- glue (plain JAX) ----------------------------
def gen_timing_signal(length, channels, min_timescale=1.0, max_timescale=1e4):
    position = np.arange(length)
    num_timescales = channels // 2
    log_inc = math.log(float(max_timescale) / float(min_timescale)) / max(num_timescales - 1, 1)
    inv = min_timescale * np.exp(np.arange(num_timescales).astype(np.float64) * -log_inc)
    scaled = np.expand_dims(position, 1) * np.expand_dims(inv, 0)
    signal = np.concatenate([np.sin(scaled), np.cos(scaled)], axis=1)
    signal = np.pad(signal, [[0, 0], [0, channels % 2]], 'constant')
    return jnp.asarray(signal.reshape(1, length, channels), dtype=jnp.float32)


def init_params(key):
    def nrm(k, shape, scale=0.05):
        return scale * jax.random.normal(k, shape, jnp.float32)
    keys = iter(jax.random.split(key, 64))

    def layer_params():
        return dict(
            ln1_g=jnp.ones((1, H), jnp.float32), ln1_b=jnp.zeros((1, H), jnp.float32),
            wq_s=nrm(next(keys), (H, KD)), wk_s=nrm(next(keys), (H, KD)),
            wv_s=nrm(next(keys), (H, VD)), wo_s=nrm(next(keys), (VD, H)),
            ln2_g=jnp.ones((1, H), jnp.float32), ln2_b=jnp.zeros((1, H), jnp.float32),
            wq_c=nrm(next(keys), (H, KD)), wk_c=nrm(next(keys), (H, KD)),
            wv_c=nrm(next(keys), (H, VD)), wo_c=nrm(next(keys), (VD, H)),
            ln3_g=jnp.ones((1, H), jnp.float32), ln3_b=jnp.zeros((1, H), jnp.float32),
            conv1_w=nrm(next(keys), (3, H, F)), conv1_b=jnp.zeros((1, F), jnp.float32),
            conv2_w=nrm(next(keys), (3, F, H)), conv2_b=jnp.zeros((1, H), jnp.float32),
        )

    return dict(
        embedding_proj_w=nrm(next(keys), (E, H)),
        emotion_dec2=layer_params(),
        content_dec2=layer_params(),
        final_ln_g=jnp.ones((1, H), jnp.float32),
        final_ln_b=jnp.zeros((1, H), jnp.float32),
    )


if __name__ == "__main__":
    key = jax.random.PRNGKey(0)
    kp, k1, k2, k3 = jax.random.split(key, 4)
    params = init_params(kp)

    inputs = jax.random.normal(k1, (B, T, E), jnp.float32)            # embedded targets
    content_output = jax.random.normal(k2, (B, S, H), jnp.float32)    # content encoder out
    emotion_output = jax.random.normal(k3, (B, S, H), jnp.float32)    # emotion encoder out

    src_lens = jnp.array([S, 5])
    trg_lens = jnp.array([T, 6])
    pos_s = jnp.arange(S)[None, None, :]
    pos_t = jnp.arange(T)[None, None, :]
    mask_src = (pos_s >= src_lens[:, None, None]).astype(jnp.float32)  # (B,1,S), 1 = pad
    mask_trg = (pos_t >= trg_lens[:, None, None]).astype(jnp.float32)  # (B,1,T), 1 = pad

    timing_signal = gen_timing_signal(1000, H)

    y, attn = mul_decoder_forward(params, inputs, content_output, emotion_output,
                                  mask_src, mask_trg, timing_signal)
    jax.block_until_ready((y, attn))
    assert y.shape == (B, T, H) and attn.shape == (B, T, S)
    assert bool(jnp.all(jnp.isfinite(y))) and bool(jnp.all(jnp.isfinite(attn)))
    print("KERNEL_OK")
</pallas_src>

<mosaic_0001>
module attributes {stable_mosaic.version = 11 : i64} {
  func.func @_mul_decoder_kernel(%arg0: i32, %arg1: memref<4xi32, #tpu.memory_space<smem>>, %arg2: memref<16x32xf32, #tpu.memory_space<vmem>>, %arg3: memref<16x32xf32, #tpu.memory_space<vmem>>, %arg4: memref<16x32xf32, #tpu.memory_space<vmem>>, %arg5: memref<16x32xf32, #tpu.memory_space<vmem>>, %arg6: memref<4x32x96xf32, #tpu.memory_space<vmem>>, %arg7: memref<4x8x128xf32, #tpu.memory_space<vmem>>, %arg8: memref<608x64xf32, #tpu.memory_space<vmem>>, %arg9: memref<18x64xf32, #tpu.memory_space<vmem>>, %arg10: memref<16x32xf32, #tpu.memory_space<vmem>>, %arg11: memref<16x8xf32, #tpu.memory_space<vmem>>) attributes {dimension_semantics = [#tpu.dimension_semantics<arbitrary>], iteration_bounds = array<i64: 1>, scalar_prefetch = 1 : i64, scratch_operands = 0 : i64, tpu.core_type = #tpu.core_type<tc>, window_params = [{pipeline_mode = #tpu.pipeline_mode<synchronous>, transform_indices = @transform_0, window_bounds = array<i64: 16, 32>}, {pipeline_mode = #tpu.pipeline_mode<synchronous>, transform_indices = @transform_1, window_bounds = array<i64: 16, 32>}, {pipeline_mode = #tpu.pipeline_mode<synchronous>, transform_indices = @transform_2, window_bounds = array<i64: 16, 32>}, {pipeline_mode = #tpu.pipeline_mode<synchronous>, transform_indices = @transform_3, window_bounds = array<i64: 16, 32>}, {pipeline_mode = #tpu.pipeline_mode<synchronous>, transform_indices = @transform_4, window_bounds = array<i64: 4, 32, 96>}, {pipeline_mode = #tpu.pipeline_mode<synchronous>, transform_indices = @transform_5, window_bounds = array<i64: 4, 8, 128>}, {pipeline_mode = #tpu.pipeline_mode<synchronous>, transform_indices = @transform_6, window_bounds = array<i64: 608, 64>}, {pipeline_mode = #tpu.pipeline_mode<synchronous>, transform_indices = @transform_7, window_bounds = array<i64: 18, 64>}, {pipeline_mode = #tpu.pipeline_mode<synchronous>, transform_indices = @transform_8, window_bounds = array<i64: 16, 32>}, {pipeline_mode = #tpu.pipeline_mode<synchronous>, transform_indices = @transform_9, window_bounds = array<i64: 16, 8>}]} {
    %0 = tpu.iota {dimensions = array<i32: 0>} : vector<16x1xi32>
    %1 = tpu.iota {dimensions = array<i32: 1>} : vector<1x16xi32>
    %2 = tpu.iota {dimensions = array<i32: 1>} : vector<1x16xi32>
    %c0 = arith.constant 0 : index
    %3 = memref.load %arg1[%c0] : memref<4xi32, #tpu.memory_space<smem>>
    %c2 = arith.constant 2 : index
    %4 = memref.load %arg1[%c2] : memref<4xi32, #tpu.memory_space<smem>>
    %c0_i32 = arith.constant 0 : i32
    %5 = vector.broadcast %c0_i32 : i32 to vector<16x1xi32>
    %6 = arith.cmpi sge, %0, %5 : vector<16x1xi32>
    %c8_i32 = arith.constant 8 : i32
    %7 = vector.broadcast %c8_i32 : i32 to vector<16x1xi32>
    %8 = arith.cmpi slt, %0, %7 : vector<16x1xi32>
    %9 = arith.andi %6, %8 : vector<16x1xi1>
    %c0_i32_0 = arith.constant 0 : i32
    %10 = vector.broadcast %c0_i32_0 : i32 to vector<1x16xi32>
    %11 = arith.cmpi sge, %1, %10 : vector<1x16xi32>
    %12 = vector.broadcast %9 : vector<16x1xi1> to vector<16x16xi1>
    %13 = vector.broadcast %11 : vector<1x16xi1> to vector<16x16xi1>
    %14 = arith.andi %12, %13 : vector<16x16xi1>
    %15 = vector.broadcast %1 : vector<1x16xi32> to vector<16x16xi32>
    %16 = vector.broadcast %0 : vector<16x1xi32> to vector<16x16xi32>
    %17 = arith.cmpi sle, %15, %16 : vector<16x16xi32>
    %18 = arith.andi %14, %17 : vector<16x16xi1>
    %c0_i32_1 = arith.constant 0 : i32
    %19 = arith.addi %c0_i32_1, %4 : i32
    %20 = vector.broadcast %19 : i32 to vector<1x16xi32>
    %21 = arith.cmpi slt, %1, %20 : vector<1x16xi32>
    %22 = vector.broadcast %21 : vector<1x16xi1> to vector<16x16xi1>
    %23 = arith.andi %18, %22 : vector<16x16xi1>
    %c0_i32_2 = arith.constant 0 : i32
    %24 = vector.broadcast %c0_i32_2 : i32 to vector<1x16xi32>
    %25 = arith.cmpi sge, %2, %24 : vector<1x16xi32>
    %26 = vector.broadcast %9 : vector<16x1xi1> to vector<16x16xi1>
    %27 = vector.broadcast %25 : vector<1x16xi1> to vector<16x16xi1>
    %28 = arith.andi %26, %27 : vector<16x16xi1>
    %c0_i32_3 = arith.constant 0 : i32
    %29 = arith.addi %c0_i32_3, %3 : i32
    %30 = vector.broadcast %29 : i32 to vector<1x16xi32>
    %31 = arith.cmpi slt, %2, %30 : vector<1x16xi32>
    %32 = vector.broadcast %31 : vector<1x16xi1> to vector<16x16xi1>
    %33 = arith.andi %28, %32 : vector<16x16xi1>
    %c0_i32_4 = arith.constant 0 : i32
    %34 = vector.broadcast %c0_i32_4 : i32 to vector<16x1xi32>
    %35 = arith.cmpi eq, %0, %34 : vector<16x1xi32>
    %c1_i32 = arith.constant 1 : i32
    %36 = vector.broadcast %c1_i32 : i32 to vector<16x1xi32>
    %37 = arith.cmpi eq, %0, %36 : vector<16x1xi32>
    %c1 = arith.constant 1 : index
    %38 = memref.load %arg1[%c1] : memref<4xi32, #tpu.memory_space<smem>>
    %c3 = arith.constant 3 : index
    %39 = memref.load %arg1[%c3] : memref<4xi32, #tpu.memory_space<smem>>
    %c8_i32_5 = arith.constant 8 : i32
    %40 = vector.broadcast %c8_i32_5 : i32 to vector<16x1xi32>
    %41 = arith.cmpi sge, %0, %40 : vector<16x1xi32>
    %c16_i32 = arith.constant 16 : i32
    %42 = vector.broadcast %c16_i32 : i32 to vector<16x1xi32>
    %43 = arith.cmpi slt, %0, %42 : vector<16x1xi32>
    %44 = arith.andi %41, %43 : vector<16x1xi1>
    %c8_i32_6 = arith.constant 8 : i32
    %45 = vector.broadcast %c8_i32_6 : i32 to vector<1x16xi32>
    %46 = arith.cmpi sge, %1, %45 : vector<1x16xi32>
    %47 = vector.broadcast %44 : vector<16x1xi1> to vector<16x16xi1>
    %48 = vector.broadcast %46 : vector<1x16xi1> to vector<16x16xi1>
    %49 = arith.andi %47, %48 : vector<16x16xi1>
    %50 = vector.broadcast %1 : vector<1x16xi32> to vector<16x16xi32>
    %51 = vector.broadcast %0 : vector<16x1xi32> to vector<16x16xi32>
    %52 = arith.cmpi sle, %50, %51 : vector<16x16xi32>
    %53 = arith.andi %49, %52 : vector<16x16xi1>
    %c8_i32_7 = arith.constant 8 : i32
    %54 = arith.addi %c8_i32_7, %39 : i32
    %55 = vector.broadcast %54 : i32 to vector<1x16xi32>
    %56 = arith.cmpi slt, %1, %55 : vector<1x16xi32>
    %57 = vector.broadcast %56 : vector<1x16xi1> to vector<16x16xi1>
    %58 = arith.andi %53, %57 : vector<16x16xi1>
    %c8_i32_8 = arith.constant 8 : i32
    %59 = vector.broadcast %c8_i32_8 : i32 to vector<1x16xi32>
    %60 = arith.cmpi sge, %2, %59 : vector<1x16xi32>
    %61 = vector.broadcast %44 : vector<16x1xi1> to vector<16x16xi1>
    %62 = vector.broadcast %60 : vector<1x16xi1> to vector<16x16xi1>
    %63 = arith.andi %61, %62 : vector<16x16xi1>
    %c8_i32_9 = arith.constant 8 : i32
    %64 = arith.addi %c8_i32_9, %38 : i32
    %65 = vector.broadcast %64 : i32 to vector<1x16xi32>
    %66 = arith.cmpi slt, %2, %65 : vector<1x16xi32>
    %67 = vector.broadcast %66 : vector<1x16xi1> to vector<16x16xi1>
    %68 = arith.andi %63, %67 : vector<16x16xi1>
    %c8_i32_10 = arith.constant 8 : i32
    %69 = vector.broadcast %c8_i32_10 : i32 to vector<16x1xi32>
    %70 = arith.cmpi eq, %0, %69 : vector<16x1xi32>
    %c9_i32 = arith.constant 9 : i32
    %71 = vector.broadcast %c9_i32 : i32 to vector<16x1xi32>
    %72 = arith.cmpi eq, %0, %71 : vector<16x1xi32>
    %73 = arith.ori %23, %58 : vector<16x16xi1>
    %74 = arith.ori %33, %68 : vector<16x16xi1>
    %75 = arith.ori %35, %70 : vector<16x1xi1>
    %76 = arith.ori %37, %72 : vector<16x1xi1>
    %cst = arith.constant 0.000000e+00 : f32
    %cst_11 = arith.constant -9.99999984E+17 : f32
    %77 = vector.broadcast %cst : f32 to vector<16x16xf32>
    %78 = vector.broadcast %cst_11 : f32 to vector<16x16xf32>
    %79 = arith.select %73, %77, %78 : vector<16x16xi1>, vector<16x16xf32>
    %cst_12 = arith.constant 0.000000e+00 : f32
    %cst_13 = arith.constant -9.99999984E+17 : f32
    %80 = vector.broadcast %cst_12 : f32 to vector<16x16xf32>
    %81 = vector.broadcast %cst_13 : f32 to vector<16x16xf32>
    %82 = arith.select %74, %80, %81 : vector<16x16xi1>, vector<16x16xf32>
    %cst_14 = arith.constant dense<true> : vector<16x1xi1>
    %83 = arith.xori %75, %cst_14 : vector<16x1xi1>
    %cst_15 = arith.constant dense<true> : vector<16x1xi1>
    %84 = arith.xori %76, %cst_15 : vector<16x1xi1>
    %85 = arith.andi %83, %84 : vector<16x1xi1>
    %c576 = arith.constant 576 : index
    %c0_16 = arith.constant 0 : index
    %86 = vector.load %arg8[%c576, %c0_16] : memref<608x64xf32, #tpu.memory_space<vmem>>, vector<32x32xf32>
    %c0_17 = arith.constant 0 : index
    %c0_18 = arith.constant 0 : index
    %87 = vector.load %arg2[%c0_17, %c0_18] : memref<16x32xf32, #tpu.memory_space<vmem>>, vector<16x32xf32>
    %cst_19 = arith.constant dense<0.000000e+00> : vector<16x32xf32>
    %88 = tpu.matmul %87, %86, %cst_19 {dimension_numbers = #tpu.dot_dimension_numbers<[1], [0], [0], [1], [0, 0, 1, 1], [], []>} : vector<16x32xf32>, vector<32x32xf32>, vector<16x32xf32> -> vector<16x32xf32>
    %c0_20 = arith.constant 0 : index
    %c0_21 = arith.constant 0 : index
    %89 = vector.load %arg5[%c0_20, %c0_21] : memref<16x32xf32, #tpu.memory_space<vmem>>, vector<16x32xf32>
    %90 = arith.addf %88, %89 : vector<16x32xf32>
    %c0_22 = arith.constant 0 : index
    %c0_23 = arith.constant 0 : index
    %91 = vector.load %arg3[%c0_22, %c0_23] : memref<16x32xf32, #tpu.memory_space<vmem>>, vector<16x32xf32>
    %c0_24 = arith.constant 0 : index
    %c0_25 = arith.constant 0 : index
    %92 = vector.load %arg9[%c0_24, %c0_25] : memref<18x64xf32, #tpu.memory_space<vmem>>, vector<1x32xf32>
    %c1_26 = arith.constant 1 : index
    %c0_27 = arith.constant 0 : index
    %93 = vector.load %arg9[%c1_26, %c0_27] : memref<18x64xf32, #tpu.memory_space<vmem>>, vector<1x32xf32>
    %cst_28 = arith.constant dense<0.000000e+00> : vector<16xf32>
    %94 = vector.multi_reduction <add>, %90, %cst_28 [1] : vector<16x32xf32> to vector<16xf32>
    %95 = vector.shape_cast %94 : vector<16xf32> to vector<16x1xf32>
    %cst_29 = arith.constant 3.200000e+01 : f32
    %96 = vector.broadcast %cst_29 : f32 to vector<16x1xf32>
    %97 = arith.divf %95, %96 : vector<16x1xf32>
    %98 = vector.broadcast %97 : vector<16x1xf32> to vector<16x32xf32>
    %99 = arith.subf %90, %98 : vector<16x32xf32>
    %100 = arith.mulf %99, %99 : vector<16x32xf32>
    %cst_30 = arith.constant dense<0.000000e+00> : vector<16xf32>
    %101 = vector.multi_reduction <add>, %100, %cst_30 [1] : vector<16x32xf32> to vector<16xf32>
    %102 = vector.shape_cast %101 : vector<16xf32> to vector<16x1xf32>
    %cst_31 = arith.constant 3.100000e+01 : f32
    %103 = vector.broadcast %cst_31 : f32 to vector<16x1xf32>
    %104 = arith.divf %102, %103 : vector<16x1xf32>
    %105 = math.sqrt %104 : vector<16x1xf32>
    %cst_32 = arith.constant 9.99999997E-7 : f32
    %106 = vector.broadcast %cst_32 : f32 to vector<16x1xf32>
    %107 = arith.addf %105, %106 : vector<16x1xf32>
    %108 = tpu.reciprocal %107 : vector<16x1xf32> -> vector<16x1xf32>
    %109 = vector.broadcast %92 : vector<1x32xf32> to vector<16x32xf32>
    %110 = arith.mulf %109, %99 : vector<16x32xf32>
    %111 = vector.broadcast %108 : vector<16x1xf32> to vector<16x32xf32>
    %112 = arith.mulf %110, %111 : vector<16x32xf32>
    %113 = vector.broadcast %93 : vector<1x32xf32> to vector<16x32xf32>
    %114 = arith.addf %112, %113 : vector<16x32xf32>
    %115 = vector.shape_cast %114 : vector<16x32xf32> to vector<1x16x32xf32>
    %116 = vector.broadcast %115 : vector<1x16x32xf32> to vector<4x16x32xf32>
    %c0_33 = arith.constant 0 : index
    %c0_34 = arith.constant 0 : index
    %c0_35 = arith.constant 0 : index
    %117 = vector.load %arg6[%c0_33, %c0_34, %c0_35] : memref<4x32x96xf32, #tpu.memory_space<vmem>>, vector<4x32x24xf32>
    "tpu.trace_start"() <{level = 10 : i32, message = "hmc,hcd->hmd"}> : () -> ()
    %cst_36 = arith.constant dense<0.000000e+00> : vector<4x16x24xf32>
    %118 = tpu.matmul %116, %117, %cst_36 {dimension_numbers = #tpu.dot_dimension_numbers<[2], [1], [1], [2], [0, 0, 0, 1, 1, 2], [0], [0]>} : vector<4x16x32xf32>, vector<4x32x24xf32>, vector<4x16x24xf32> -> vector<4x16x24xf32>
    "tpu.trace_stop"() : () -> ()
    %119 = vector.extract_strided_slice %118 {offsets = [0, 0, 0], sizes = [4, 16, 8], strides = [1, 1, 1]} : vector<4x16x24xf32> to vector<4x16x8xf32>
    %120 = vector.extract_strided_slice %118 {offsets = [0, 0, 8], sizes = [4, 16, 8], strides = [1, 1, 1]} : vector<4x16x24xf32> to vector<4x16x8xf32>
    %121 = vector.extract_strided_slice %118 {offsets = [0, 0, 16], sizes = [4, 16, 8], strides = [1, 1, 1]} : vector<4x16x24xf32> to vector<4x16x8xf32>
    %c0_37 = arith.constant 0 : index
    %c0_38 = arith.constant 0 : index
    %c0_39 = arith.constant 0 : index
    %122 = vector.load %arg7[%c0_37, %c0_38, %c0_39] : memref<4x8x128xf32, #tpu.memory_space<vmem>>, vector<4x8x32xf32>
    "tpu.trace_start"() <{level = 10 : i32, message = "hmd,hnd->hmn"}> : () -> ()
    %cst_40 = arith.constant dense<0.000000e+00> : vector<4x16x16xf32>
    %123 = tpu.matmul %119, %120, %cst_40 {dimension_numbers = #tpu.dot_dimension_numbers<[2], [2], [1], [1], [0, 0, 0, 1, 1, 1], [0], [0]>} : vector<4x16x8xf32>, vector<4x16x8xf32>, vector<4x16x16xf32> -> vector<4x16x16xf32>
    "tpu.trace_stop"() : () -> ()
    %124 = vector.shape_cast %79 : vector<16x16xf32> to vector<1x16x16xf32>
    %125 = vector.broadcast %124 : vector<1x16x16xf32> to vector<4x16x16xf32>
    %126 = arith.addf %123, %125 : vector<4x16x16xf32>
    %cst_41 = arith.constant dense<0xFF800000> : vector<4x16xf32>
    %127 = vector.multi_reduction <maximumf>, %126, %cst_41 [2] : vector<4x16x16xf32> to vector<4x16xf32>
    %128 = vector.shape_cast %127 : vector<4x16xf32> to vector<4x16x1xf32>
    %129 = vector.broadcast %128 : vector<4x16x1xf32> to vector<4x16x16xf32>
    %130 = arith.subf %126, %129 : vector<4x16x16xf32>
    %131 = math.exp %130 : vector<4x16x16xf32>
    %cst_42 = arith.constant dense<0.000000e+00> : vector<4x16xf32>
    %132 = vector.multi_reduction <add>, %131, %cst_42 [2] : vector<4x16x16xf32> to vector<4x16xf32>
    %133 = vector.shape_cast %132 : vector<4x16xf32> to vector<4x16x1xf32>
    %134 = tpu.reciprocal %133 {approx = true} : vector<4x16x1xf32> -> vector<4x16x1xf32>
    %135 = vector.broadcast %134 : vector<4x16x1xf32> to vector<4x16x16xf32>
    %136 = arith.mulf %131, %135 : vector<4x16x16xf32>
    "tpu.trace_start"() <{level = 10 : i32, message = "hmn,hnv->hmv"}> : () -> ()
    %cst_43 = arith.constant dense<0.000000e+00> : vector<4x16x8xf32>
    %137 = tpu.matmul %136, %121, %cst_43 {dimension_numbers = #tpu.dot_dimension_numbers<[2], [1], [1], [2], [0, 0, 0, 1, 1, 2], [0], [0]>} : vector<4x16x16xf32>, vector<4x16x8xf32>, vector<4x16x8xf32> -> vector<4x16x8xf32>
    "tpu.trace_stop"() : () -> ()
    "tpu.trace_start"() <{level = 10 : i32, message = "hmv,hvc->hmc"}> : () -> ()
    %cst_44 = arith.constant dense<0.000000e+00> : vector<4x16x32xf32>
    %138 = tpu.matmul %137, %122, %cst_44 {dimension_numbers = #tpu.dot_dimension_numbers<[2], [1], [1], [2], [0, 0, 0, 1, 1, 2], [0], [0]>} : vector<4x16x8xf32>, vector<4x8x32xf32>, vector<4x16x32xf32> -> vector<4x16x32xf32>
    "tpu.trace_stop"() : () -> ()
    %139 = vector.extract_strided_slice %138 {offsets = [0, 0, 0], sizes = [1, 16, 32], strides = [1, 1, 1]} : vector<4x16x32xf32> to vector<1x16x32xf32>
    %140 = vector.shape_cast %139 : vector<1x16x32xf32> to vector<16x32xf32>
    %141 = vector.extract_strided_slice %138 {offsets = [1, 0, 0], sizes = [1, 16, 32], strides = [1, 1, 1]} : vector<4x16x32xf32> to vector<1x16x32xf32>
    %142 = vector.shape_cast %141 : vector<1x16x32xf32> to vector<16x32xf32>
    %143 = arith.addf %140, %142 : vector<16x32xf32>
    %144 = vector.extract_strided_slice %138 {offsets = [2, 0, 0], sizes = [1, 16, 32], strides = [1, 1, 1]} : vector<4x16x32xf32> to vector<1x16x32xf32>
    %145 = vector.shape_cast %144 : vector<1x16x32xf32> to vector<16x32xf32>
    %146 = arith.addf %143, %145 : vector<16x32xf32>
    %147 = vector.extract_strided_slice %138 {offsets = [3, 0, 0], sizes = [1, 16, 32], strides = [1, 1, 1]} : vector<4x16x32xf32> to vector<1x16x32xf32>
    %148 = vector.shape_cast %147 : vector<1x16x32xf32> to vector<16x32xf32>
    %149 = arith.addf %146, %148 : vector<16x32xf32>
    %150 = arith.addf %90, %149 : vector<16x32xf32>
    %c2_45 = arith.constant 2 : index
    %c0_46 = arith.constant 0 : index
    %151 = vector.load %arg9[%c2_45, %c0_46] : memref<18x64xf32, #tpu.memory_space<vmem>>, vector<1x32xf32>
    %c3_47 = arith.constant 3 : index
    %c0_48 = arith.constant 0 : index
    %152 = vector.load %arg9[%c3_47, %c0_48] : memref<18x64xf32, #tpu.memory_space<vmem>>, vector<1x32xf32>
    %cst_49 = arith.constant dense<0.000000e+00> : vector<16xf32>
    %153 = vector.multi_reduction <add>, %150, %cst_49 [1] : vector<16x32xf32> to vector<16xf32>
    %154 = vector.shape_cast %153 : vector<16xf32> to vector<16x1xf32>
    %cst_50 = arith.constant 3.200000e+01 : f32
    %155 = vector.broadcast %cst_50 : f32 to vector<16x1xf32>
    %156 = arith.divf %154, %155 : vector<16x1xf32>
    %157 = vector.broadcast %156 : vector<16x1xf32> to vector<16x32xf32>
    %158 = arith.subf %150, %157 : vector<16x32xf32>
    %159 = arith.mulf %158, %158 : vector<16x32xf32>
    %cst_51 = arith.constant dense<0.000000e+00> : vector<16xf32>
    %160 = vector.multi_reduction <add>, %159, %cst_51 [1] : vector<16x32xf32> to vector<16xf32>
    %161 = vector.shape_cast %160 : vector<16xf32> to vector<16x1xf32>
    %cst_52 = arith.constant 3.100000e+01 : f32
    %162 = vector.broadcast %cst_52 : f32 to vector<16x1xf32>
    %163 = arith.divf %161, %162 : vector<16x1xf32>
    %164 = math.sqrt %163 : vector<16x1xf32>
    %cst_53 = arith.constant 9.99999997E-7 : f32
    %165 = vector.broadcast %cst_53 : f32 to vector<16x1xf32>
    %166 = arith.addf %164, %165 : vector<16x1xf32>
    %167 = tpu.reciprocal %166 : vector<16x1xf32> -> vector<16x1xf32>
    %168 = vector.broadcast %151 : vector<1x32xf32> to vector<16x32xf32>
    %169 = arith.mulf %168, %158 : vector<16x32xf32>
    %170 = vector.broadcast %167 : vector<16x1xf32> to vector<16x32xf32>
    %171 = arith.mulf %169, %170 : vector<16x32xf32>
    %172 = vector.broadcast %152 : vector<1x32xf32> to vector<16x32xf32>
    %173 = arith.addf %171, %172 : vector<16x32xf32>
    %174 = vector.shape_cast %173 : vector<16x32xf32> to vector<1x16x32xf32>
    %175 = vector.broadcast %174 : vector<1x16x32xf32> to vector<4x16x32xf32>
    %c0_54 = arith.constant 0 : index
    %c0_55 = arith.constant 0 : index
    %c24 = arith.constant 24 : index
    %176 = vector.load %arg6[%c0_54, %c0_55, %c24] : memref<4x32x96xf32, #tpu.memory_space<vmem>>, vector<4x32x8xf32>
    "tpu.trace_start"() <{level = 10 : i32, message = "hmc,hcd->hmd"}> : () -> ()
    %cst_56 = arith.constant dense<0.000000e+00> : vector<4x16x8xf32>
    %177 = tpu.matmul %175, %176, %cst_56 {dimension_numbers = #tpu.dot_dimension_numbers<[2], [1], [1], [2], [0, 0, 0, 1, 1, 2], [0], [0]>} : vector<4x16x32xf32>, vector<4x32x8xf32>, vector<4x16x8xf32> -> vector<4x16x8xf32>
    "tpu.trace_stop"() : () -> ()
    %178 = vector.shape_cast %91 : vector<16x32xf32> to vector<1x16x32xf32>
    %179 = vector.broadcast %178 : vector<1x16x32xf32> to vector<4x16x32xf32>
    %c0_57 = arith.constant 0 : index
    %c0_58 = arith.constant 0 : index
    %c32 = arith.constant 32 : index
    %180 = vector.load %arg6[%c0_57, %c0_58, %c32] : memref<4x32x96xf32, #tpu.memory_space<vmem>>, vector<4x32x16xf32>
    "tpu.trace_start"() <{level = 10 : i32, message = "hsc,hcd->hsd"}> : () -> ()
    %cst_59 = arith.constant dense<0.000000e+00> : vector<4x16x16xf32>
    %181 = tpu.matmul %179, %180, %cst_59 {dimension_numbers = #tpu.dot_dimension_numbers<[2], [1], [1], [2], [0, 0, 0, 1, 1, 2], [0], [0]>} : vector<4x16x32xf32>, vector<4x32x16xf32>, vector<4x16x16xf32> -> vector<4x16x16xf32>
    "tpu.trace_stop"() : () -> ()
    %182 = vector.extract_strided_slice %181 {offsets = [0, 0, 0], sizes = [4, 16, 8], strides = [1, 1, 1]} : vector<4x16x16xf32> to vector<4x16x8xf32>
    %183 = vector.extract_strided_slice %181 {offsets = [0, 0, 8], sizes = [4, 16, 8], strides = [1, 1, 1]} : vector<4x16x16xf32> to vector<4x16x8xf32>
    %c0_60 = arith.constant 0 : index
    %c0_61 = arith.constant 0 : index
    %c32_62 = arith.constant 32 : index
    %184 = vector.load %arg7[%c0_60, %c0_61, %c32_62] : memref<4x8x128xf32, #tpu.memory_space<vmem>>, vector<4x8x32xf32>
    "tpu.trace_start"() <{level = 10 : i32, message = "hmd,hnd->hmn"}> : () -> ()
    %cst_63 = arith.constant dense<0.000000e+00> : vector<4x16x16xf32>
    %185 = tpu.matmul %177, %182, %cst_63 {dimension_numbers = #tpu.dot_dimension_numbers<[2], [2], [1], [1], [0, 0, 0, 1, 1, 1], [0], [0]>} : vector<4x16x8xf32>, vector<4x16x8xf32>, vector<4x16x16xf32> -> vector<4x16x16xf32>
    "tpu.trace_stop"() : () -> ()
    %186 = vector.shape_cast %82 : vector<16x16xf32> to vector<1x16x16xf32>
    %187 = vector.broadcast %186 : vector<1x16x16xf32> to vector<4x16x16xf32>
    %188 = arith.addf %185, %187 : vector<4x16x16xf32>
    %cst_64 = arith.constant dense<0xFF800000> : vector<4x16xf32>
    %189 = vector.multi_reduction <maximumf>, %188, %cst_64 [2] : vector<4x16x16xf32> to vector<4x16xf32>
    %190 = vector.shape_cast %189 : vector<4x16xf32> to vector<4x16x1xf32>
    %191 = vector.broadcast %190 : vector<4x16x1xf32> to vector<4x16x16xf32>
    %192 = arith.subf %188, %191 : vector<4x16x16xf32>
    %193 = math.exp %192 : vector<4x16x16xf32>
    %cst_65 = arith.constant dense<0.000000e+00> : vector<4x16xf32>
    %194 = vector.multi_reduction <add>, %193, %cst_65 [2] : vector<4x16x16xf32> to vector<4x16xf32>
    %195 = vector.shape_cast %194 : vector<4x16xf32> to vector<4x16x1xf32>
    %196 = tpu.reciprocal %195 {approx = true} : vector<4x16x1xf32> -> vector<4x16x1xf32>
    %197 = vector.broadcast %196 : vector<4x16x1xf32> to vector<4x16x16xf32>
    %198 = arith.mulf %193, %197 : vector<4x16x16xf32>
    "tpu.trace_start"() <{level = 10 : i32, message = "hmn,hnv->hmv"}> : () -> ()
    %cst_66 = arith.constant dense<0.000000e+00> : vector<4x16x8xf32>
    %199 = tpu.matmul %198, %183, %cst_66 {dimension_numbers = #tpu.dot_dimension_numbers<[2], [1], [1], [2], [0, 0, 0, 1, 1, 2], [0], [0]>} : vector<4x16x16xf32>, vector<4x16x8xf32>, vector<4x16x8xf32> -> vector<4x16x8xf32>
    "tpu.trace_stop"() : () -> ()
    "tpu.trace_start"() <{level = 10 : i32, message = "hmv,hvc->hmc"}> : () -> ()
    %cst_67 = arith.constant dense<0.000000e+00> : vector<4x16x32xf32>
    %200 = tpu.matmul %199, %184, %cst_67 {dimension_numbers = #tpu.dot_dimension_numbers<[2], [1], [1], [2], [0, 0, 0, 1, 1, 2], [0], [0]>} : vector<4x16x8xf32>, vector<4x8x32xf32>, vector<4x16x32xf32> -> vector<4x16x32xf32>
    "tpu.trace_stop"() : () -> ()
    %201 = vector.extract_strided_slice %200 {offsets = [0, 0, 0], sizes = [1, 16, 32], strides = [1, 1, 1]} : vector<4x16x32xf32> to vector<1x16x32xf32>
    %202 = vector.shape_cast %201 : vector<1x16x32xf32> to vector<16x32xf32>
    %203 = vector.extract_strided_slice %200 {offsets = [1, 0, 0], sizes = [1, 16, 32], strides = [1, 1, 1]} : vector<4x16x32xf32> to vector<1x16x32xf32>
    %204 = vector.shape_cast %203 : vector<1x16x32xf32> to vector<16x32xf32>
    %205 = arith.addf %202, %204 : vector<16x32xf32>
    %206 = vector.extract_strided_slice %200 {offsets = [2, 0, 0], sizes = [1, 16, 32], strides = [1, 1, 1]} : vector<4x16x32xf32> to vector<1x16x32xf32>
    %207 = vector.shape_cast %206 : vector<1x16x32xf32> to vector<16x32xf32>
    %208 = arith.addf %205, %207 : vector<16x32xf32>
    %209 = vector.extract_strided_slice %200 {offsets = [3, 0, 0], sizes = [1, 16, 32], strides = [1, 1, 1]} : vector<4x16x32xf32> to vector<1x16x32xf32>
    %210 = vector.shape_cast %209 : vector<1x16x32xf32> to vector<16x32xf32>
    %211 = arith.addf %208, %210 : vector<16x32xf32>
    %212 = arith.addf %150, %211 : vector<16x32xf32>
    %c4 = arith.constant 4 : index
    %c0_68 = arith.constant 0 : index
    %213 = vector.load %arg9[%c4, %c0_68] : memref<18x64xf32, #tpu.memory_space<vmem>>, vector<1x32xf32>
    %c5 = arith.constant 5 : index
    %c0_69 = arith.constant 0 : index
    %214 = vector.load %arg9[%c5, %c0_69] : memref<18x64xf32, #tpu.memory_space<vmem>>, vector<1x32xf32>
    %cst_70 = arith.constant dense<0.000000e+00> : vector<16xf32>
    %215 = vector.multi_reduction <add>, %212, %cst_70 [1] : vector<16x32xf32> to vector<16xf32>
    %216 = vector.shape_cast %215 : vector<16xf32> to vector<16x1xf32>
    %cst_71 = arith.constant 3.200000e+01 : f32
    %217 = vector.broadcast %cst_71 : f32 to vector<16x1xf32>
    %218 = arith.divf %216, %217 : vector<16x1xf32>
    %219 = vector.broadcast %218 : vector<16x1xf32> to vector<16x32xf32>
    %220 = arith.subf %212, %219 : vector<16x32xf32>
    %221 = arith.mulf %220, %220 : vector<16x32xf32>
    %cst_72 = arith.constant dense<0.000000e+00> : vector<16xf32>
    %222 = vector.multi_reduction <add>, %221, %cst_72 [1] : vector<16x32xf32> to vector<16xf32>
    %223 = vector.shape_cast %222 : vector<16xf32> to vector<16x1xf32>
    %cst_73 = arith.constant 3.100000e+01 : f32
    %224 = vector.broadcast %cst_73 : f32 to vector<16x1xf32>
    %225 = arith.divf %223, %224 : vector<16x1xf32>
    %226 = math.sqrt %225 : vector<16x1xf32>
    %cst_74 = arith.constant 9.99999997E-7 : f32
    %227 = vector.broadcast %cst_74 : f32 to vector<16x1xf32>
    %228 = arith.addf %226, %227 : vector<16x1xf32>
    %229 = tpu.reciprocal %228 : vector<16x1xf32> -> vector<16x1xf32>
    %230 = vector.broadcast %213 : vector<1x32xf32> to vector<16x32xf32>
    %231 = arith.mulf %230, %220 : vector<16x32xf32>
    %232 = vector.broadcast %229 : vector<16x1xf32> to vector<16x32xf32>
    %233 = arith.mulf %231, %232 : vector<16x32xf32>
    %234 = vector.broadcast %214 : vector<1x32xf32> to vector<16x32xf32>
    %235 = arith.addf %233, %234 : vector<16x32xf32>
    %c0_75 = arith.constant 0 : index
    %c0_76 = arith.constant 0 : index
    %236 = vector.load %arg8[%c0_75, %c0_76] : memref<608x64xf32, #tpu.memory_space<vmem>>, vector<96x64xf32>
    %c6 = arith.constant 6 : index
    %c0_77 = arith.constant 0 : index
    %237 = vector.load %arg9[%c6, %c0_77] : memref<18x64xf32, #tpu.memory_space<vmem>>, vector<1x64xf32>
    %c1_i32_78 = arith.constant 1 : i32
    %238 = tpu.dynamic_rotate %235 by %c1_i32_78 dim 0 : vector<16x32xf32>, i32 -> vector<16x32xf32>
    %cst_79 = arith.constant 0.000000e+00 : f32
    %239 = vector.shape_cast %83 : vector<16x1xi1> to vector<16x1xi1>
    %240 = vector.broadcast %239 : vector<16x1xi1> to vector<16x32xi1>
    %241 = vector.broadcast %cst_79 : f32 to vector<16x32xf32>
    %242 = arith.select %240, %238, %241 : vector<16x32xi1>, vector<16x32xf32>
    %c2_i32 = arith.constant 2 : i32
    %243 = tpu.dynamic_rotate %235 by %c2_i32 dim 0 : vector<16x32xf32>, i32 -> vector<16x32xf32>
    %cst_80 = arith.constant 0.000000e+00 : f32
    %244 = vector.shape_cast %85 : vector<16x1xi1> to vector<16x1xi1>
    %245 = vector.broadcast %244 : vector<16x1xi1> to vector<16x32xi1>
    %246 = vector.broadcast %cst_80 : f32 to vector<16x32xf32>
    %247 = arith.select %245, %243, %246 : vector<16x32xi1>, vector<16x32xf32>
    %248 = tpu.concatenate %247, %242, %235 in 1 : vector<16x32xf32>, vector<16x32xf32>, vector<16x32xf32> -> vector<16x96xf32>
    %cst_81 = arith.constant dense<0.000000e+00> : vector<16x64xf32>
    %249 = tpu.matmul %248, %236, %cst_81 {dimension_numbers = #tpu.dot_dimension_numbers<[1], [0], [0], [1], [0, 0, 1, 1], [], []>} : vector<16x96xf32>, vector<96x64xf32>, vector<16x64xf32> -> vector<16x64xf32>
    %250 = vector.broadcast %237 : vector<1x64xf32> to vector<16x64xf32>
    %251 = arith.addf %249, %250 : vector<16x64xf32>
    %cst_82 = arith.constant 0.000000e+00 : f32
    %252 = vector.broadcast %cst_82 : f32 to vector<16x64xf32>
    %253 = arith.maximumf %251, %252 : vector<16x64xf32>
    %c96 = arith.constant 96 : index
    %c0_83 = arith.constant 0 : index
    %254 = vector.load %arg8[%c96, %c0_83] : memref<608x64xf32, #tpu.memory_space<vmem>>, vector<192x32xf32>
    %c7 = arith.constant 7 : index
    %c0_84 = arith.constant 0 : index
    %255 = vector.load %arg9[%c7, %c0_84] : memref<18x64xf32, #tpu.memory_space<vmem>>, vector<1x32xf32>
    %c1_i32_85 = arith.constant 1 : i32
    %256 = tpu.dynamic_rotate %253 by %c1_i32_85 dim 0 : vector<16x64xf32>, i32 -> vector<16x64xf32>
    %cst_86 = arith.constant 0.000000e+00 : f32
    %257 = vector.shape_cast %83 : vector<16x1xi1> to vector<16x1xi1>
    %258 = vector.broadcast %257 : vector<16x1xi1> to vector<16x64xi1>
    %259 = vector.broadcast %cst_86 : f32 to vector<16x64xf32>
    %260 = arith.select %258, %256, %259 : vector<16x64xi1>, vector<16x64xf32>
    %c2_i32_87 = arith.constant 2 : i32
    %261 = tpu.dynamic_rotate %253 by %c2_i32_87 dim 0 : vector<16x64xf32>, i32 -> vector<16x64xf32>
    %cst_88 = arith.constant 0.000000e+00 : f32
    %262 = vector.shape_cast %85 : vector<16x1xi1> to vector<16x1xi1>
    %263 = vector.broadcast %262 : vector<16x1xi1> to vector<16x64xi1>
    %264 = vector.broadcast %cst_88 : f32 to vector<16x64xf32>
    %265 = arith.select %263, %261, %264 : vector<16x64xi1>, vector<16x64xf32>
    %266 = tpu.concatenate %265, %260, %253 in 1 : vector<16x64xf32>, vector<16x64xf32>, vector<16x64xf32> -> vector<16x192xf32>
    %cst_89 = arith.constant dense<0.000000e+00> : vector<16x32xf32>
    %267 = tpu.matmul %266, %254, %cst_89 {dimension_numbers = #tpu.dot_dimension_numbers<[1], [0], [0], [1], [0, 0, 1, 1], [], []>} : vector<16x192xf32>, vector<192x32xf32>, vector<16x32xf32> -> vector<16x32xf32>
    %268 = vector.broadcast %255 : vector<1x32xf32> to vector<16x32xf32>
    %269 = arith.addf %267, %268 : vector<16x32xf32>
    %cst_90 = arith.constant 0.000000e+00 : f32
    %270 = vector.broadcast %cst_90 : f32 to vector<16x32xf32>
    %271 = arith.maximumf %269, %270 : vector<16x32xf32>
    %272 = arith.addf %212, %271 : vector<16x32xf32>
    %c0_91 = arith.constant 0 : index
    %c0_92 = arith.constant 0 : index
    %273 = vector.load %arg4[%c0_91, %c0_92] : memref<16x32xf32, #tpu.memory_space<vmem>>, vector<16x32xf32>
    %c8 = arith.constant 8 : index
    %c0_93 = arith.constant 0 : index
    %274 = vector.load %arg9[%c8, %c0_93] : memref<18x64xf32, #tpu.memory_space<vmem>>, vector<1x32xf32>
    %c9 = arith.constant 9 : index
    %c0_94 = arith.constant 0 : index
    %275 = vector.load %arg9[%c9, %c0_94] : memref<18x64xf32, #tpu.memory_space<vmem>>, vector<1x32xf32>
    %cst_95 = arith.constant dense<0.000000e+00> : vector<16xf32>
    %276 = vector.multi_reduction <add>, %272, %cst_95 [1] : vector<16x32xf32> to vector<16xf32>
    %277 = vector.shape_cast %276 : vector<16xf32> to vector<16x1xf32>
    %cst_96 = arith.constant 3.200000e+01 : f32
    %278 = vector.broadcast %cst_96 : f32 to vector<16x1xf32>
    %279 = arith.divf %277, %278 : vector<16x1xf32>
    %280 = vector.broadcast %279 : vector<16x1xf32> to vector<16x32xf32>
    %281 = arith.subf %272, %280 : vector<16x32xf32>
    %282 = arith.mulf %281, %281 : vector<16x32xf32>
    %cst_97 = arith.constant dense<0.000000e+00> : vector<16xf32>
    %283 = vector.multi_reduction <add>, %282, %cst_97 [1] : vector<16x32xf32> to vector<16xf32>
    %284 = vector.shape_cast %283 : vector<16xf32> to vector<16x1xf32>
    %cst_98 = arith.constant 3.100000e+01 : f32
    %285 = vector.broadcast %cst_98 : f32 to vector<16x1xf32>
    %286 = arith.divf %284, %285 : vector<16x1xf32>
    %287 = math.sqrt %286 : vector<16x1xf32>
    %cst_99 = arith.constant 9.99999997E-7 : f32
    %288 = vector.broadcast %cst_99 : f32 to vector<16x1xf32>
    %289 = arith.addf %287, %288 : vector<16x1xf32>
    %290 = tpu.reciprocal %289 : vector<16x1xf32> -> vector<16x1xf32>
    %291 = vector.broadcast %274 : vector<1x32xf32> to vector<16x32xf32>
    %292 = arith.mulf %291, %281 : vector<16x32xf32>
    %293 = vector.broadcast %290 : vector<16x1xf32> to vector<16x32xf32>
    %294 = arith.mulf %292, %293 : vector<16x32xf32>
    %295 = vector.broadcast %275 : vector<1x32xf32> to vector<16x32xf32>
    %296 = arith.addf %294, %295 : vector<16x32xf32>
    %297 = vector.shape_cast %296 : vector<16x32xf32> to vector<1x16x32xf32>
    %298 = vector.broadcast %297 : vector<1x16x32xf32> to vector<4x16x32xf32>
    %c0_100 = arith.constant 0 : index
    %c0_101 = arith.constant 0 : index
    %c48 = arith.constant 48 : index
    %299 = vector.load %arg6[%c0_100, %c0_101, %c48] : memref<4x32x96xf32, #tpu.memory_space<vmem>>, vector<4x32x24xf32>
    "tpu.trace_start"() <{level = 10 : i32, message = "hmc,hcd->hmd"}> : () -> ()
    %cst_102 = arith.constant dense<0.000000e+00> : vector<4x16x24xf32>
    %300 = tpu.matmul %298, %299, %cst_102 {dimension_numbers = #tpu.dot_dimension_numbers<[2], [1], [1], [2], [0, 0, 0, 1, 1, 2], [0], [0]>} : vector<4x16x32xf32>, vector<4x32x24xf32>, vector<4x16x24xf32> -> vector<4x16x24xf32>
    "tpu.trace_stop"() : () -> ()
    %301 = vector.extract_strided_slice %300 {offsets = [0, 0, 0], sizes = [4, 16, 8], strides = [1, 1, 1]} : vector<4x16x24xf32> to vector<4x16x8xf32>
    %302 = vector.extract_strided_slice %300 {offsets = [0, 0, 8], sizes = [4, 16, 8], strides = [1, 1, 1]} : vector<4x16x24xf32> to vector<4x16x8xf32>
    %303 = vector.extract_strided_slice %300 {offsets = [0, 0, 16], sizes = [4, 16, 8], strides = [1, 1, 1]} : vector<4x16x24xf32> to vector<4x16x8xf32>
    %c0_103 = arith.constant 0 : index
    %c0_104 = arith.constant 0 : index
    %c64 = arith.constant 64 : index
    %304 = vector.load %arg7[%c0_103, %c0_104, %c64] : memref<4x8x128xf32, #tpu.memory_space<vmem>>, vector<4x8x32xf32>
    "tpu.trace_start"() <{level = 10 : i32, message = "hmd,hnd->hmn"}> : () -> ()
    %cst_105 = arith.constant dense<0.000000e+00> : vector<4x16x16xf32>
    %305 = tpu.matmul %301, %302, %cst_105 {dimension_numbers = #tpu.dot_dimension_numbers<[2], [2], [1], [1], [0, 0, 0, 1, 1, 1], [0], [0]>} : vector<4x16x8xf32>, vector<4x16x8xf32>, vector<4x16x16xf32> -> vector<4x16x16xf32>
    "tpu.trace_stop"() : () -> ()
    %306 = vector.shape_cast %79 : vector<16x16xf32> to vector<1x16x16xf32>
    %307 = vector.broadcast %306 : vector<1x16x16xf32> to vector<4x16x16xf32>
    %308 = arith.addf %305, %307 : vector<4x16x16xf32>
    %cst_106 = arith.constant dense<0xFF800000> : vector<4x16xf32>
    %309 = vector.multi_reduction <maximumf>, %308, %cst_106 [2] : vector<4x16x16xf32> to vector<4x16xf32>
    %310 = vector.shape_cast %309 : vector<4x16xf32> to vector<4x16x1xf32>
    %311 = vector.broadcast %310 : vector<4x16x1xf32> to vector<4x16x16xf32>
    %312 = arith.subf %308, %311 : vector<4x16x16xf32>
    %313 = math.exp %312 : vector<4x16x16xf32>
    %cst_107 = arith.constant dense<0.000000e+00> : vector<4x16xf32>
    %314 = vector.multi_reduction <add>, %313, %cst_107 [2] : vector<4x16x16xf32> to vector<4x16xf32>
    %315 = vector.shape_cast %314 : vector<4x16xf32> to vector<4x16x1xf32>
    %316 = tpu.reciprocal %315 {approx = true} : vector<4x16x1xf32> -> vector<4x16x1xf32>
    %317 = vector.broadcast %316 : vector<4x16x1xf32> to vector<4x16x16xf32>
    %318 = arith.mulf %313, %317 : vector<4x16x16xf32>
    "tpu.trace_start"() <{level = 10 : i32, message = "hmn,hnv->hmv"}> : () -> ()
    %cst_108 = arith.constant dense<0.000000e+00> : vector<4x16x8xf32>
    %319 = tpu.matmul %318, %303, %cst_108 {dimension_numbers = #tpu.dot_dimension_numbers<[2], [1], [1], [2], [0, 0, 0, 1, 1, 2], [0], [0]>} : vector<4x16x16xf32>, vector<4x16x8xf32>, vector<4x16x8xf32> -> vector<4x16x8xf32>
    "tpu.trace_stop"() : () -> ()
    "tpu.trace_start"() <{level = 10 : i32, message = "hmv,hvc->hmc"}> : () -> ()
    %cst_109 = arith.constant dense<0.000000e+00> : vector<4x16x32xf32>
    %320 = tpu.matmul %319, %304, %cst_109 {dimension_numbers = #tpu.dot_dimension_numbers<[2], [1], [1], [2], [0, 0, 0, 1, 1, 2], [0], [0]>} : vector<4x16x8xf32>, vector<4x8x32xf32>, vector<4x16x32xf32> -> vector<4x16x32xf32>
    "tpu.trace_stop"() : () -> ()
    %321 = vector.extract_strided_slice %320 {offsets = [0, 0, 0], sizes = [1, 16, 32], strides = [1, 1, 1]} : vector<4x16x32xf32> to vector<1x16x32xf32>
    %322 = vector.shape_cast %321 : vector<1x16x32xf32> to vector<16x32xf32>
    %323 = vector.extract_strided_slice %320 {offsets = [1, 0, 0], sizes = [1, 16, 32], strides = [1, 1, 1]} : vector<4x16x32xf32> to vector<1x16x32xf32>
    %324 = vector.shape_cast %323 : vector<1x16x32xf32> to vector<16x32xf32>
    %325 = arith.addf %322, %324 : vector<16x32xf32>
    %326 = vector.extract_strided_slice %320 {offsets = [2, 0, 0], sizes = [1, 16, 32], strides = [1, 1, 1]} : vector<4x16x32xf32> to vector<1x16x32xf32>
    %327 = vector.shape_cast %326 : vector<1x16x32xf32> to vector<16x32xf32>
    %328 = arith.addf %325, %327 : vector<16x32xf32>
    %329 = vector.extract_strided_slice %320 {offsets = [3, 0, 0], sizes = [1, 16, 32], strides = [1, 1, 1]} : vector<4x16x32xf32> to vector<1x16x32xf32>
    %330 = vector.shape_cast %329 : vector<1x16x32xf32> to vector<16x32xf32>
    %331 = arith.addf %328, %330 : vector<16x32xf32>
    %332 = arith.addf %272, %331 : vector<16x32xf32>
    %c10 = arith.constant 10 : index
    %c0_110 = arith.constant 0 : index
    %333 = vector.load %arg9[%c10, %c0_110] : memref<18x64xf32, #tpu.memory_space<vmem>>, vector<1x32xf32>
    %c11 = arith.constant 11 : index
    %c0_111 = arith.constant 0 : index
    %334 = vector.load %arg9[%c11, %c0_111] : memref<18x64xf32, #tpu.memory_space<vmem>>, vector<1x32xf32>
    %cst_112 = arith.constant dense<0.000000e+00> : vector<16xf32>
    %335 = vector.multi_reduction <add>, %332, %cst_112 [1] : vector<16x32xf32> to vector<16xf32>
    %336 = vector.shape_cast %335 : vector<16xf32> to vector<16x1xf32>
    %cst_113 = arith.constant 3.200000e+01 : f32
    %337 = vector.broadcast %cst_113 : f32 to vector<16x1xf32>
    %338 = arith.divf %336, %337 : vector<16x1xf32>
    %339 = vector.broadcast %338 : vector<16x1xf32> to vector<16x32xf32>
    %340 = arith.subf %332, %339 : vector<16x32xf32>
    %341 = arith.mulf %340, %340 : vector<16x32xf32>
    %cst_114 = arith.constant dense<0.000000e+00> : vector<16xf32>
    %342 = vector.multi_reduction <add>, %341, %cst_114 [1] : vector<16x32xf32> to vector<16xf32>
    %343 = vector.shape_cast %342 : vector<16xf32> to vector<16x1xf32>
    %cst_115 = arith.constant 3.100000e+01 : f32
    %344 = vector.broadcast %cst_115 : f32 to vector<16x1xf32>
    %345 = arith.divf %343, %344 : vector<16x1xf32>
    %346 = math.sqrt %345 : vector<16x1xf32>
    %cst_116 = arith.constant 9.99999997E-7 : f32
    %347 = vector.broadcast %cst_116 : f32 to vector<16x1xf32>
    %348 = arith.addf %346, %347 : vector<16x1xf32>
    %349 = tpu.reciprocal %348 : vector<16x1xf32> -> vector<16x1xf32>
    %350 = vector.broadcast %333 : vector<1x32xf32> to vector<16x32xf32>
    %351 = arith.mulf %350, %340 : vector<16x32xf32>
    %352 = vector.broadcast %349 : vector<16x1xf32> to vector<16x32xf32>
    %353 = arith.mulf %351, %352 : vector<16x32xf32>
    %354 = vector.broadcast %334 : vector<1x32xf32> to vector<16x32xf32>
    %355 = arith.addf %353, %354 : vector<16x32xf32>
    %356 = vector.shape_cast %355 : vector<16x32xf32> to vector<1x16x32xf32>
    %357 = vector.broadcast %356 : vector<1x16x32xf32> to vector<4x16x32xf32>
    %c0_117 = arith.constant 0 : index
    %c0_118 = arith.constant 0 : index
    %c72 = arith.constant 72 : index
    %358 = vector.load %arg6[%c0_117, %c0_118, %c72] : memref<4x32x96xf32, #tpu.memory_space<vmem>>, vector<4x32x8xf32>
    "tpu.trace_start"() <{level = 10 : i32, message = "hmc,hcd->hmd"}> : () -> ()
    %cst_119 = arith.constant dense<0.000000e+00> : vector<4x16x8xf32>
    %359 = tpu.matmul %357, %358, %cst_119 {dimension_numbers = #tpu.dot_dimension_numbers<[2], [1], [1], [2], [0, 0, 0, 1, 1, 2], [0], [0]>} : vector<4x16x32xf32>, vector<4x32x8xf32>, vector<4x16x8xf32> -> vector<4x16x8xf32>
    "tpu.trace_stop"() : () -> ()
    %360 = vector.shape_cast %273 : vector<16x32xf32> to vector<1x16x32xf32>
    %361 = vector.broadcast %360 : vector<1x16x32xf32> to vector<4x16x32xf32>
    %c0_120 = arith.constant 0 : index
    %c0_121 = arith.constant 0 : index
    %c80 = arith.constant 80 : index
    %362 = vector.load %arg6[%c0_120, %c0_121, %c80] : memref<4x32x96xf32, #tpu.memory_space<vmem>>, vector<4x32x16xf32>
    "tpu.trace_start"() <{level = 10 : i32, message = "hsc,hcd->hsd"}> : () -> ()
    %cst_122 = arith.constant dense<0.000000e+00> : vector<4x16x16xf32>
    %363 = tpu.matmul %361, %362, %cst_122 {dimension_numbers = #tpu.dot_dimension_numbers<[2], [1], [1], [2], [0, 0, 0, 1, 1, 2], [0], [0]>} : vector<4x16x32xf32>, vector<4x32x16xf32>, vector<4x16x16xf32> -> vector<4x16x16xf32>
    "tpu.trace_stop"() : () -> ()
    %364 = vector.extract_strided_slice %363 {offsets = [0, 0, 0], sizes = [4, 16, 8], strides = [1, 1, 1]} : vector<4x16x16xf32> to vector<4x16x8xf32>
    %365 = vector.extract_strided_slice %363 {offsets = [0, 0, 8], sizes = [4, 16, 8], strides = [1, 1, 1]} : vector<4x16x16xf32> to vector<4x16x8xf32>
    %c0_123 = arith.constant 0 : index
    %c0_124 = arith.constant 0 : index
    %c96_125 = arith.constant 96 : index
    %366 = vector.load %arg7[%c0_123, %c0_124, %c96_125] : memref<4x8x128xf32, #tpu.memory_space<vmem>>, vector<4x8x32xf32>
    "tpu.trace_start"() <{level = 10 : i32, message = "hmd,hnd->hmn"}> : () -> ()
    %cst_126 = arith.constant dense<0.000000e+00> : vector<4x16x16xf32>
    %367 = tpu.matmul %359, %364, %cst_126 {dimension_numbers = #tpu.dot_dimension_numbers<[2], [2], [1], [1], [0, 0, 0, 1, 1, 1], [0], [0]>} : vector<4x16x8xf32>, vector<4x16x8xf32>, vector<4x16x16xf32> -> vector<4x16x16xf32>
    "tpu.trace_stop"() : () -> ()
    %368 = vector.shape_cast %82 : vector<16x16xf32> to vector<1x16x16xf32>
    %369 = vector.broadcast %368 : vector<1x16x16xf32> to vector<4x16x16xf32>
    %370 = arith.addf %367, %369 : vector<4x16x16xf32>
    %371 = vector.extract_strided_slice %370 {offsets = [0, 0, 0], sizes = [1, 16, 16], strides = [1, 1, 1]} : vector<4x16x16xf32> to vector<1x16x16xf32>
    %372 = vector.shape_cast %371 : vector<1x16x16xf32> to vector<16x16xf32>
    %373 = vector.extract_strided_slice %370 {offsets = [1, 0, 0], sizes = [1, 16, 16], strides = [1, 1, 1]} : vector<4x16x16xf32> to vector<1x16x16xf32>
    %374 = vector.shape_cast %373 : vector<1x16x16xf32> to vector<16x16xf32>
    %375 = arith.addf %372, %374 : vector<16x16xf32>
    %376 = vector.extract_strided_slice %370 {offsets = [2, 0, 0], sizes = [1, 16, 16], strides = [1, 1, 1]} : vector<4x16x16xf32> to vector<1x16x16xf32>
    %377 = vector.shape_cast %376 : vector<1x16x16xf32> to vector<16x16xf32>
    %378 = arith.addf %375, %377 : vector<16x16xf32>
    %379 = vector.extract_strided_slice %370 {offsets = [3, 0, 0], sizes = [1, 16, 16], strides = [1, 1, 1]} : vector<4x16x16xf32> to vector<1x16x16xf32>
    %380 = vector.shape_cast %379 : vector<1x16x16xf32> to vector<16x16xf32>
    %381 = arith.addf %378, %380 : vector<16x16xf32>
    %cst_127 = arith.constant 2.500000e-01 : f32
    %382 = vector.broadcast %cst_127 : f32 to vector<16x16xf32>
    %383 = arith.mulf %381, %382 : vector<16x16xf32>
    %cst_128 = arith.constant dense<0xFF800000> : vector<4x16xf32>
    %384 = vector.multi_reduction <maximumf>, %370, %cst_128 [2] : vector<4x16x16xf32> to vector<4x16xf32>
    %385 = vector.shape_cast %384 : vector<4x16xf32> to vector<4x16x1xf32>
    %386 = vector.broadcast %385 : vector<4x16x1xf32> to vector<4x16x16xf32>
    %387 = arith.subf %370, %386 : vector<4x16x16xf32>
    %388 = math.exp %387 : vector<4x16x16xf32>
    %cst_129 = arith.constant dense<0.000000e+00> : vector<4x16xf32>
    %389 = vector.multi_reduction <add>, %388, %cst_129 [2] : vector<4x16x16xf32> to vector<4x16xf32>
    %390 = vector.shape_cast %389 : vector<4x16xf32> to vector<4x16x1xf32>
    %391 = tpu.reciprocal %390 {approx = true} : vector<4x16x1xf32> -> vector<4x16x1xf32>
    %392 = vector.broadcast %391 : vector<4x16x1xf32> to vector<4x16x16xf32>
    %393 = arith.mulf %388, %392 : vector<4x16x16xf32>
    "tpu.trace_start"() <{level = 10 : i32, message = "hmn,hnv->hmv"}> : () -> ()
    %cst_130 = arith.constant dense<0.000000e+00> : vector<4x16x8xf32>
    %394 = tpu.matmul %393, %365, %cst_130 {dimension_numbers = #tpu.dot_dimension_numbers<[2], [1], [1], [2], [0, 0, 0, 1, 1, 2], [0], [0]>} : vector<4x16x16xf32>, vector<4x16x8xf32>, vector<4x16x8xf32> -> vector<4x16x8xf32>
    "tpu.trace_stop"() : () -> ()
    "tpu.trace_start"() <{level = 10 : i32, message = "hmv,hvc->hmc"}> : () -> ()
    %cst_131 = arith.constant dense<0.000000e+00> : vector<4x16x32xf32>
    %395 = tpu.matmul %394, %366, %cst_131 {dimension_numbers = #tpu.dot_dimension_numbers<[2], [1], [1], [2], [0, 0, 0, 1, 1, 2], [0], [0]>} : vector<4x16x8xf32>, vector<4x8x32xf32>, vector<4x16x32xf32> -> vector<4x16x32xf32>
    "tpu.trace_stop"() : () -> ()
    %396 = vector.extract_strided_slice %395 {offsets = [0, 0, 0], sizes = [1, 16, 32], strides = [1, 1, 1]} : vector<4x16x32xf32> to vector<1x16x32xf32>
    %397 = vector.shape_cast %396 : vector<1x16x32xf32> to vector<16x32xf32>
    %398 = vector.extract_strided_slice %395 {offsets = [1, 0, 0], sizes = [1, 16, 32], strides = [1, 1, 1]} : vector<4x16x32xf32> to vector<1x16x32xf32>
    %399 = vector.shape_cast %398 : vector<1x16x32xf32> to vector<16x32xf32>
    %400 = arith.addf %397, %399 : vector<16x32xf32>
    %401 = vector.extract_strided_slice %395 {offsets = [2, 0, 0], sizes = [1, 16, 32], strides = [1, 1, 1]} : vector<4x16x32xf32> to vector<1x16x32xf32>
    %402 = vector.shape_cast %401 : vector<1x16x32xf32> to vector<16x32xf32>
    %403 = arith.addf %400, %402 : vector<16x32xf32>
    %404 = vector.extract_strided_slice %395 {offsets = [3, 0, 0], sizes = [1, 16, 32], strides = [1, 1, 1]} : vector<4x16x32xf32> to vector<1x16x32xf32>
    %405 = vector.shape_cast %404 : vector<1x16x32xf32> to vector<16x32xf32>
    %406 = arith.addf %403, %405 : vector<16x32xf32>
    %407 = arith.addf %332, %406 : vector<16x32xf32>
    %c12 = arith.constant 12 : index
    %c0_132 = arith.constant 0 : index
    %408 = vector.load %arg9[%c12, %c0_132] : memref<18x64xf32, #tpu.memory_space<vmem>>, vector<1x32xf32>
    %c13 = arith.constant 13 : index
    %c0_133 = arith.constant 0 : index
    %409 = vector.load %arg9[%c13, %c0_133] : memref<18x64xf32, #tpu.memory_space<vmem>>, vector<1x32xf32>
    %cst_134 = arith.constant dense<0.000000e+00> : vector<16xf32>
    %410 = vector.multi_reduction <add>, %407, %cst_134 [1] : vector<16x32xf32> to vector<16xf32>
    %411 = vector.shape_cast %410 : vector<16xf32> to vector<16x1xf32>
    %cst_135 = arith.constant 3.200000e+01 : f32
    %412 = vector.broadcast %cst_135 : f32 to vector<16x1xf32>
    %413 = arith.divf %411, %412 : vector<16x1xf32>
    %414 = vector.broadcast %413 : vector<16x1xf32> to vector<16x32xf32>
    %415 = arith.subf %407, %414 : vector<16x32xf32>
    %416 = arith.mulf %415, %415 : vector<16x32xf32>
    %cst_136 = arith.constant dense<0.000000e+00> : vector<16xf32>
    %417 = vector.multi_reduction <add>, %416, %cst_136 [1] : vector<16x32xf32> to vector<16xf32>
    %418 = vector.shape_cast %417 : vector<16xf32> to vector<16x1xf32>
    %cst_137 = arith.constant 3.100000e+01 : f32
    %419 = vector.broadcast %cst_137 : f32 to vector<16x1xf32>
    %420 = arith.divf %418, %419 : vector<16x1xf32>
    %421 = math.sqrt %420 : vector<16x1xf32>
    %cst_138 = arith.constant 9.99999997E-7 : f32
    %422 = vector.broadcast %cst_138 : f32 to vector<16x1xf32>
    %423 = arith.addf %421, %422 : vector<16x1xf32>
    %424 = tpu.reciprocal %423 : vector<16x1xf32> -> vector<16x1xf32>
    %425 = vector.broadcast %408 : vector<1x32xf32> to vector<16x32xf32>
    %426 = arith.mulf %425, %415 : vector<16x32xf32>
    %427 = vector.broadcast %424 : vector<16x1xf32> to vector<16x32xf32>
    %428 = arith.mulf %426, %427 : vector<16x32xf32>
    %429 = vector.broadcast %409 : vector<1x32xf32> to vector<16x32xf32>
    %430 = arith.addf %428, %429 : vector<16x32xf32>
    %c288 = arith.constant 288 : index
    %c0_139 = arith.constant 0 : index
    %431 = vector.load %arg8[%c288, %c0_139] : memref<608x64xf32, #tpu.memory_space<vmem>>, vector<96x64xf32>
    %c14 = arith.constant 14 : index
    %c0_140 = arith.constant 0 : index
    %432 = vector.load %arg9[%c14, %c0_140] : memref<18x64xf32, #tpu.memory_space<vmem>>, vector<1x64xf32>
    %c1_i32_141 = arith.constant 1 : i32
    %433 = tpu.dynamic_rotate %430 by %c1_i32_141 dim 0 : vector<16x32xf32>, i32 -> vector<16x32xf32>
    %cst_142 = arith.constant 0.000000e+00 : f32
    %434 = vector.shape_cast %83 : vector<16x1xi1> to vector<16x1xi1>
    %435 = vector.broadcast %434 : vector<16x1xi1> to vector<16x32xi1>
    %436 = vector.broadcast %cst_142 : f32 to vector<16x32xf32>
    %437 = arith.select %435, %433, %436 : vector<16x32xi1>, vector<16x32xf32>
    %c2_i32_143 = arith.constant 2 : i32
    %438 = tpu.dynamic_rotate %430 by %c2_i32_143 dim 0 : vector<16x32xf32>, i32 -> vector<16x32xf32>
    %cst_144 = arith.constant 0.000000e+00 : f32
    %439 = vector.shape_cast %85 : vector<16x1xi1> to vector<16x1xi1>
    %440 = vector.broadcast %439 : vector<16x1xi1> to vector<16x32xi1>
    %441 = vector.broadcast %cst_144 : f32 to vector<16x32xf32>
    %442 = arith.select %440, %438, %441 : vector<16x32xi1>, vector<16x32xf32>
    %443 = tpu.concatenate %442, %437, %430 in 1 : vector<16x32xf32>, vector<16x32xf32>, vector<16x32xf32> -> vector<16x96xf32>
    %cst_145 = arith.constant dense<0.000000e+00> : vector<16x64xf32>
    %444 = tpu.matmul %443, %431, %cst_145 {dimension_numbers = #tpu.dot_dimension_numbers<[1], [0], [0], [1], [0, 0, 1, 1], [], []>} : vector<16x96xf32>, vector<96x64xf32>, vector<16x64xf32> -> vector<16x64xf32>
    %445 = vector.broadcast %432 : vector<1x64xf32> to vector<16x64xf32>
    %446 = arith.addf %444, %445 : vector<16x64xf32>
    %cst_146 = arith.constant 0.000000e+00 : f32
    %447 = vector.broadcast %cst_146 : f32 to vector<16x64xf32>
    %448 = arith.maximumf %446, %447 : vector<16x64xf32>
    %c384 = arith.constant 384 : index
    %c0_147 = arith.constant 0 : index
    %449 = vector.load %arg8[%c384, %c0_147] : memref<608x64xf32, #tpu.memory_space<vmem>>, vector<192x32xf32>
    %c15 = arith.constant 15 : index
    %c0_148 = arith.constant 0 : index
    %450 = vector.load %arg9[%c15, %c0_148] : memref<18x64xf32, #tpu.memory_space<vmem>>, vector<1x32xf32>
    %c1_i32_149 = arith.constant 1 : i32
    %451 = tpu.dynamic_rotate %448 by %c1_i32_149 dim 0 : vector<16x64xf32>, i32 -> vector<16x64xf32>
    %cst_150 = arith.constant 0.000000e+00 : f32
    %452 = vector.shape_cast %83 : vector<16x1xi1> to vector<16x1xi1>
    %453 = vector.broadcast %452 : vector<16x1xi1> to vector<16x64xi1>
    %454 = vector.broadcast %cst_150 : f32 to vector<16x64xf32>
    %455 = arith.select %453, %451, %454 : vector<16x64xi1>, vector<16x64xf32>
    %c2_i32_151 = arith.constant 2 : i32
    %456 = tpu.dynamic_rotate %448 by %c2_i32_151 dim 0 : vector<16x64xf32>, i32 -> vector<16x64xf32>
    %cst_152 = arith.constant 0.000000e+00 : f32
    %457 = vector.shape_cast %85 : vector<16x1xi1> to vector<16x1xi1>
    %458 = vector.broadcast %457 : vector<16x1xi1> to vector<16x64xi1>
    %459 = vector.broadcast %cst_152 : f32 to vector<16x64xf32>
    %460 = arith.select %458, %456, %459 : vector<16x64xi1>, vector<16x64xf32>
    %461 = tpu.concatenate %460, %455, %448 in 1 : vector<16x64xf32>, vector<16x64xf32>, vector<16x64xf32> -> vector<16x192xf32>
    %cst_153 = arith.constant dense<0.000000e+00> : vector<16x32xf32>
    %462 = tpu.matmul %461, %449, %cst_153 {dimension_numbers = #tpu.dot_dimension_numbers<[1], [0], [0], [1], [0, 0, 1, 1], [], []>} : vector<16x192xf32>, vector<192x32xf32>, vector<16x32xf32> -> vector<16x32xf32>
    %463 = vector.broadcast %450 : vector<1x32xf32> to vector<16x32xf32>
    %464 = arith.addf %462, %463 : vector<16x32xf32>
    %cst_154 = arith.constant 0.000000e+00 : f32
    %465 = vector.broadcast %cst_154 : f32 to vector<16x32xf32>
    %466 = arith.maximumf %464, %465 : vector<16x32xf32>
    %467 = arith.addf %407, %466 : vector<16x32xf32>
    %c16 = arith.constant 16 : index
    %c0_155 = arith.constant 0 : index
    %468 = vector.load %arg9[%c16, %c0_155] : memref<18x64xf32, #tpu.memory_space<vmem>>, vector<1x32xf32>
    %c17 = arith.constant 17 : index
    %c0_156 = arith.constant 0 : index
    %469 = vector.load %arg9[%c17, %c0_156] : memref<18x64xf32, #tpu.memory_space<vmem>>, vector<1x32xf32>
    %cst_157 = arith.constant dense<0.000000e+00> : vector<16xf32>
    %470 = vector.multi_reduction <add>, %467, %cst_157 [1] : vector<16x32xf32> to vector<16xf32>
    %471 = vector.shape_cast %470 : vector<16xf32> to vector<16x1xf32>
    %cst_158 = arith.constant 3.200000e+01 : f32
    %472 = vector.broadcast %cst_158 : f32 to vector<16x1xf32>
    %473 = arith.divf %471, %472 : vector<16x1xf32>
    %474 = vector.broadcast %473 : vector<16x1xf32> to vector<16x32xf32>
    %475 = arith.subf %467, %474 : vector<16x32xf32>
    %476 = arith.mulf %475, %475 : vector<16x32xf32>
    %cst_159 = arith.constant dense<0.000000e+00> : vector<16xf32>
    %477 = vector.multi_reduction <add>, %476, %cst_159 [1] : vector<16x32xf32> to vector<16xf32>
    %478 = vector.shape_cast %477 : vector<16xf32> to vector<16x1xf32>
    %cst_160 = arith.constant 3.100000e+01 : f32
    %479 = vector.broadcast %cst_160 : f32 to vector<16x1xf32>
    %480 = arith.divf %478, %479 : vector<16x1xf32>
    %481 = math.sqrt %480 : vector<16x1xf32>
    %cst_161 = arith.constant 9.99999997E-7 : f32
    %482 = vector.broadcast %cst_161 : f32 to vector<16x1xf32>
    %483 = arith.addf %481, %482 : vector<16x1xf32>
    %484 = tpu.reciprocal %483 : vector<16x1xf32> -> vector<16x1xf32>
    %485 = vector.broadcast %468 : vector<1x32xf32> to vector<16x32xf32>
    %486 = arith.mulf %485, %475 : vector<16x32xf32>
    %487 = vector.broadcast %484 : vector<16x1xf32> to vector<16x32xf32>
    %488 = arith.mulf %486, %487 : vector<16x32xf32>
    %489 = vector.broadcast %469 : vector<1x32xf32> to vector<16x32xf32>
    %490 = arith.addf %488, %489 : vector<16x32xf32>
    %c0_162 = arith.constant 0 : index
    %c0_163 = arith.constant 0 : index
    %491 = vector.load %arg10[%c0_162, %c0_163] : memref<16x32xf32, #tpu.memory_space<vmem>>, vector<16x32xf32>
    tpu.vector_store %arg10[%c0_162, %c0_163], %490 {strides = array<i32>} : memref<16x32xf32, #tpu.memory_space<vmem>>, vector<16x32xf32>,
    %492 = vector.extract_strided_slice %383 {offsets = [0, 0], sizes = [8, 8], strides = [1, 1]} : vector<16x16xf32> to vector<8x8xf32>
    %c0_164 = arith.constant 0 : index
    %c0_165 = arith.constant 0 : index
    %493 = vector.load %arg11[%c0_164, %c0_165] : memref<16x8xf32, #tpu.memory_space<vmem>>, vector<8x8xf32>
    tpu.vector_store %arg11[%c0_164, %c0_165], %492 {strides = array<i32>} : memref<16x8xf32, #tpu.memory_space<vmem>>, vector<8x8xf32>,
    %494 = vector.extract_strided_slice %383 {offsets = [8, 8], sizes = [8, 8], strides = [1, 1]} : vector<16x16xf32> to vector<8x8xf32>
    %c8_166 = arith.constant 8 : index
    %c0_167 = arith.constant 0 : index
    %495 = vector.load %arg11[%c8_166, %c0_167] : memref<16x8xf32, #tpu.memory_space<vmem>>, vector<8x8xf32>
    tpu.vector_store %arg11[%c8_166, %c0_167], %494 {strides = array<i32>} : memref<16x8xf32, #tpu.memory_space<vmem>>, vector<8x8xf32>,
    return
  }
  func.func @transform_0(%arg0: i32, %arg1: memref<4xi32, #tpu.memory_space<smem>>) -> (i32, i32) {
    %c0_i32 = arith.constant 0 : i32
    %c0_i32_0 = arith.constant 0 : i32
    %c0_i32_1 = arith.constant 0 : i32
    return %c0_i32, %c0_i32_0 : i32, i32
  }
  func.func @transform_1(%arg0: i32, %arg1: memref<4xi32, #tpu.memory_space<smem>>) -> (i32, i32) {
    %c0_i32 = arith.constant 0 : i32
    %c0_i32_0 = arith.constant 0 : i32
    %c0_i32_1 = arith.constant 0 : i32
    return %c0_i32, %c0_i32_0 : i32, i32
  }
  func.func @transform_2(%arg0: i32, %arg1: memref<4xi32, #tpu.memory_space<smem>>) -> (i32, i32) {
    %c0_i32 = arith.constant 0 : i32
    %c0_i32_0 = arith.constant 0 : i32
    %c0_i32_1 = arith.constant 0 : i32
    return %c0_i32, %c0_i32_0 : i32, i32
  }
  func.func @transform_3(%arg0: i32, %arg1: memref<4xi32, #tpu.memory_space<smem>>) -> (i32, i32) {
    %c0_i32 = arith.constant 0 : i32
    %c0_i32_0 = arith.constant 0 : i32
    %c0_i32_1 = arith.constant 0 : i32
    return %c0_i32, %c0_i32_0 : i32, i32
  }
  func.func @transform_4(%arg0: i32, %arg1: memref<4xi32, #tpu.memory_space<smem>>) -> (i32, i32, i32) {
    %c0_i32 = arith.constant 0 : i32
    %c0_i32_0 = arith.constant 0 : i32
    %c0_i32_1 = arith.constant 0 : i32
    %c0_i32_2 = arith.constant 0 : i32
    return %c0_i32, %c0_i32_0, %c0_i32_1 : i32, i32, i32
  }
  func.func @transform_5(%arg0: i32, %arg1: memref<4xi32, #tpu.memory_space<smem>>) -> (i32, i32, i32) {
    %c0_i32 = arith.constant 0 : i32
    %c0_i32_0 = arith.constant 0 : i32
    %c0_i32_1 = arith.constant 0 : i32
    %c0_i32_2 = arith.constant 0 : i32
    return %c0_i32, %c0_i32_0, %c0_i32_1 : i32, i32, i32
  }
  func.func @transform_6(%arg0: i32, %arg1: memref<4xi32, #tpu.memory_space<smem>>) -> (i32, i32) {
    %c0_i32 = arith.constant 0 : i32
    %c0_i32_0 = arith.constant 0 : i32
    %c0_i32_1 = arith.constant 0 : i32
    return %c0_i32, %c0_i32_0 : i32, i32
  }
  func.func @transform_7(%arg0: i32, %arg1: memref<4xi32, #tpu.memory_space<smem>>) -> (i32, i32) {
    %c0_i32 = arith.constant 0 : i32
    %c0_i32_0 = arith.constant 0 : i32
    %c0_i32_1 = arith.constant 0 : i32
    return %c0_i32, %c0_i32_0 : i32, i32
  }
  func.func @transform_8(%arg0: i32, %arg1: memref<4xi32, #tpu.memory_space<smem>>) -> (i32, i32) {
    %c0_i32 = arith.constant 0 : i32
    %c0_i32_0 = arith.constant 0 : i32
    %c0_i32_1 = arith.constant 0 : i32
    return %c0_i32, %c0_i32_0 : i32, i32
  }
  func.func @transform_9(%arg0: i32, %arg1: memref<4xi32, #tpu.memory_space<smem>>) -> (i32, i32) {
    %c0_i32 = arith.constant 0 : i32
    %c0_i32_0 = arith.constant 0 : i32
    %c0_i32_1 = arith.constant 0 : i32
    return %c0_i32, %c0_i32_0 : i32, i32
  }
}

</mosaic_0001>

<llo_original>
// kernel: tpu_custom_call.1
$region0: #{tpu_custom_call.1}
  #allocation0 [shape = 'u32[]', space=smem, size = 0x4, offset = 0x4, fixed_abs, tag = 'smem constant byte address 0x4 - core index']
  #allocation1 [shape = 'u32[144,128]{1,0:T(1,128)}', space=vmem, size = 0x12000, scoped, tag = 'internal scratch']
  #allocation2 [shape = 's32[1]{0}', space=sflag, size = 0x4, scoped, tag = 'scoped memory for tpu_custom_call.1']
  #allocation3 [shape = 'u8[512]{0}', space=smem, size = 0x200, scoped, tag = 'prefetched SMEM operand 0']
  %s0 = inlined_call_operand.vmem [shape: s32[4], index: 0, kind: input, shape index: {}]
  %s1 = inlined_call_operand.vmem [shape: f32[16,32], index: 1, kind: input, shape index: {}]
  %s2 = inlined_call_operand.vmem [shape: f32[16,32], index: 2, kind: input, shape index: {}]
  %s3 = inlined_call_operand.vmem [shape: f32[16,32], index: 3, kind: input, shape index: {}]
  %s4 = inlined_call_operand.vmem [shape: f32[16,32], index: 4, kind: input, shape index: {}]
  %s5 = inlined_call_operand.vmem [shape: f32[4,32,96], index: 5, kind: input, shape index: {}]
  %s6 = inlined_call_operand.vmem [shape: f32[4,8,128], index: 6, kind: input, shape index: {}]
  %s7 = inlined_call_operand.vmem [shape: f32[608,64], index: 7, kind: input, shape index: {}]
  %s8 = inlined_call_operand.vmem [shape: f32[18,64], index: 8, kind: input, shape index: {}]
  %s9 = inlined_call_operand.hbm [shape: f32[16,32], index: 9, kind: output, shape index: {0}]
  %s10 = inlined_call_operand.vmem [shape: f32[16,8], index: 10, kind: output, shape index: {1}]
  %11 = xla_tuple %s9, %s10
  %s12 = sld [smem:[#allocation0]]
  $region50: #{tpu_custom_call.1} parent=0
    _
  %s14 = ssub.s32 1, %s12
  %s15 = scalar_select 0, %s14, %s12
  %s16 = sshll.u32 %s0, 4
  %s17 = int_to_ptr.vmem [resolvable:$true] %s16
  %19 = dma.vmem_to_smem %s17, 16, [#allocation3], [#allocation2]
  %20 = dma.done [#allocation2], 16
  %21 = sfence
  $region1: #{tpu_custom_call.1} parent=0
    #allocation4 [shape = 'u8[8192]{0}', space=vmem, size = 0x2000, scoped, tag = 'output window, operand 0, single buffered']
    #allocation5 [shape = 's32[1]{0}', space=sflag, size = 0x4, scoped, tag = 'scoped memory for tpu_custom_call.1']
    %22 = vsyncpa [#allocation5], 0
    // Predicated region
    $region2: #{tpu_custom_call.1} parent=1 // pred_check
      _
    $region3: #{tpu_custom_call.1} parent=1 // pred_check_branch
      %24 = sbr.rel (0) target = $region5
    $region4: #{tpu_custom_call.1} parent=1 // pred_region
      _
    $region5: #{tpu_custom_call.1} parent=1 // pred_fallthru
      _
    // Predicated region
    $region6: #{tpu_custom_call.1} parent=1 // pred_check
      _
    $region7: #{tpu_custom_call.1} parent=1 // pred_check_branch
      %26 = sbr.rel (0) target = $region9
    $region8: #{tpu_custom_call.1} parent=1 // pred_region
      _
    $region9: #{tpu_custom_call.1} parent=1 // pred_fallthru
      _
    // Predicated region
    $region10: #{tpu_custom_call.1} parent=1 // pred_check
      _
    $region11: #{tpu_custom_call.1} parent=1 // pred_check_branch
      %28 = sbr.rel (0) target = $region13
    $region12: #{tpu_custom_call.1} parent=1 // pred_region
      _
    $region13: #{tpu_custom_call.1} parent=1 // pred_fallthru
      _
    // Predicated region
    $region14: #{tpu_custom_call.1} parent=1 // pred_check
      _
    $region15: #{tpu_custom_call.1} parent=1 // pred_check_branch
      %30 = sbr.rel (0) target = $region17
    $region16: #{tpu_custom_call.1} parent=1 // pred_region
      _
    $region17: #{tpu_custom_call.1} parent=1 // pred_fallthru
      _
    // Predicated region
    $region18: #{tpu_custom_call.1} parent=1 // pred_check
      _
    $region19: #{tpu_custom_call.1} parent=1 // pred_check_branch
      %32 = sbr.rel (0) target = $region21
    $region20: #{tpu_custom_call.1} parent=1 // pred_region
      _
    $region21: #{tpu_custom_call.1} parent=1 // pred_fallthru
      _
    // Predicated region
    $region22: #{tpu_custom_call.1} parent=1 // pred_check
      _
    $region23: #{tpu_custom_call.1} parent=1 // pred_check_branch
      %34 = sbr.rel (0) target = $region25
    $region24: #{tpu_custom_call.1} parent=1 // pred_region
      _
    $region25: #{tpu_custom_call.1} parent=1 // pred_fallthru
      _
    // Predicated region
    $region26: #{tpu_custom_call.1} parent=1 // pred_check
      _
    $region27: #{tpu_custom_call.1} parent=1 // pred_check_branch
      %36 = sbr.rel (0) target = $region29
    $region28: #{tpu_custom_call.1} parent=1 // pred_region
      _
    $region29: #{tpu_custom_call.1} parent=1 // pred_fallthru
      _
    // Predicated region
    $region30: #{tpu_custom_call.1} parent=1 // pred_check
      _
    $region31: #{tpu_custom_call.1} parent=1 // pred_check_branch
      %38 = sbr.rel (0) target = $region33
    $region32: #{tpu_custom_call.1} parent=1 // pred_region
      _
    $region33: #{tpu_custom_call.1} parent=1 // pred_fallthru
      _
    %v39 = vlaneseq
    %v40 = vshrl.u32 %v39, 7
    %v41 = vadd.s32 %v40, 8
    %v42 = vlaneseq
    %v43 = vand.u32 %v42, 127
    %s44 = sld [smem:[#allocation3]]
    %s45 = sld [smem:[#allocation3 + $0x2]]
    %vm46 = vcmp.ge.s32.totalorder %v40, 0
    %vm47 = vcmp.ge.s32.totalorder %v41, 0
    %vm48 = vcmp.lt.s32.totalorder %v40, 8
    %vm49 = vcmp.lt.s32.totalorder %v41, 8
    %vm50 = vmand %vm46, %vm48
    %vm51 = vmand %vm47, %vm49
    %vm52 = vcmp.ge.s32.totalorder %v43, 0
    %v53 = vsel %vm50, 1, 0
    %v54 = vsel %vm51, 1, 0
    %vm55 = vcmp.eq.s32.totalorder %v53, 1
    %vm56 = vcmp.eq.s32.totalorder %v54, 1
    %v57 = vsel %vm52, 1, 0
    %vm58 = vcmp.eq.s32.totalorder %v57, 1
    %vm59 = vmand %vm55, %vm58
    %vm60 = vmand %vm56, %vm58
    %vm61 = vcmp.le.s32.totalorder %v43, %v40
    %vm62 = vcmp.le.s32.totalorder %v43, %v41
    %vm63 = vmand %vm59, %vm61
    %vm64 = vmand %vm60, %vm62
    %v65 = vstv %s45
    %vm66 = vcmp.lt.s32.totalorder %v43, %v65
    %v67 = vsel %vm66, 1, 0
    %vm68 = vcmp.eq.s32.totalorder %v67, 1
    %vm69 = vmand %vm63, %vm68
    %vm70 = vmand %vm64, %vm68
    %v71 = vstv %s44
    %vm72 = vcmp.lt.s32.totalorder %v43, %v71
    %v73 = vsel %vm72, 1, 0
    %vm74 = vcmp.eq.s32.totalorder %v73, 1
    %vm75 = vmand %vm59, %vm74
    %vm76 = vmand %vm60, %vm74
    %vm77 = vcmp.eq.s32.totalorder %v40, 0
    %vm78 = vcmp.eq.s32.totalorder %v41, 0
    %vm79 = vcmp.eq.s32.totalorder %v40, 1
    %vm80 = vcmp.eq.s32.totalorder %v41, 1
    %s81 = sld [smem:[#allocation3 + $0x1]]
    %s82 = sld [smem:[#allocation3 + $0x3]]
    %vm83 = vcmp.ge.s32.totalorder %v40, 8
    %vm84 = vcmp.ge.s32.totalorder %v41, 8
    %vm85 = vcmp.lt.s32.totalorder %v40, 16
    %vm86 = vcmp.lt.s32.totalorder %v41, 16
    %vm87 = vmand %vm83, %vm85
    %vm88 = vmand %vm84, %vm86
    %vm89 = vcmp.ge.s32.totalorder %v43, 8
    %v90 = vsel %vm87, 1, 0
    %v91 = vsel %vm88, 1, 0
    %vm92 = vcmp.eq.s32.totalorder %v90, 1
    %vm93 = vcmp.eq.s32.totalorder %v91, 1
    %v94 = vsel %vm89, 1, 0
    %vm95 = vcmp.eq.s32.totalorder %v94, 1
    %vm96 = vmand %vm92, %vm95
    %vm97 = vmand %vm93, %vm95
    %vm98 = vmand %vm96, %vm61
    %vm99 = vmand %vm97, %vm62
    %s100 = sadd.s32 %s82, 8
    %v101 = vstv %s100
    %vm102 = vcmp.lt.s32.totalorder %v43, %v101
    %v103 = vsel %vm102, 1, 0
    %vm104 = vcmp.eq.s32.totalorder %v103, 1
    %vm105 = vmand %vm98, %vm104
    %vm106 = vmand %vm99, %vm104
    %s107 = sadd.s32 %s81, 8
    %v108 = vstv %s107
    %vm109 = vcmp.lt.s32.totalorder %v43, %v108
    %v110 = vsel %vm109, 1, 0
    %vm111 = vcmp.eq.s32.totalorder %v110, 1
    %vm112 = vmand %vm96, %vm111
    %vm113 = vmand %vm97, %vm111
    %vm114 = vcmp.eq.s32.totalorder %v40, 8
    %vm115 = vcmp.eq.s32.totalorder %v41, 8
    %vm116 = vcmp.eq.s32.totalorder %v40, 9
    %vm117 = vcmp.eq.s32.totalorder %v41, 9
    %vm118 = vmor %vm69, %vm105
    %vm119 = vmor %vm70, %vm106
    %vm120 = vmor %vm75, %vm112
    %vm121 = vmor %vm76, %vm113
    %vm122 = vmor %vm77, %vm114
    %vm123 = vmor %vm78, %vm115
    %vm124 = vmor %vm79, %vm116
    %vm125 = vmor %vm80, %vm117
    %v126 = vsel %vm118, 0.0, -1e+18
    %v127 = vsel %vm119, 0.0, -1e+18
    %v128 = vsel %vm120, 0.0, -1e+18
    %v129 = vsel %vm121, 0.0, -1e+18
    %vm130 = vmxor %vm122, 1
    %vm131 = vmxor %vm123, 1
    %vm132 = vmxor %vm124, 1
    %vm133 = vmxor %vm125, 1
    %vm134 = vmand %vm130, %vm132
    %vm135 = vmand %vm131, %vm133
    %v136 = vld [vmem:[%s7 + $0x240] sm:$0xff]
    %v137 = vld [vmem:[%s7 + $0x248] sm:$0xff]
    %v138 = vld [vmem:[%s7 + $0x250] sm:$0xff]
    %v139 = vld [vmem:[%s7 + $0x258] sm:$0xff]
    %v140 = vld [vmem:[%s1] sm:$0xff]
    %v141 = vld [vmem:[%s1 + $0x8] sm:$0xff]
    %v142 = vld [vmem:[%s4] sm:$0xff]
    %v143 = vld [vmem:[%s4 + $0x8] sm:$0xff]
    %vm144 = vcmask 261120
    %v146 = vsel %vm144, %v140, 0
    %v149 = vsel %vm144, %v141, 0
    %151 = vmatprep.subr.mxu0 0.0
    %152 = vmatpush1.msra.mxu0 %v136
    %153 = vmatprep.subr.mxu0 0.0
    %154 = vmatpush1.msra.mxu0 %v137
    %155 = vmatprep.subr.mxu0 0.0
    %156 = vmatpush1.msra.mxu0 %v138
    %157 = vmatprep.subr.mxu0 0.0
    %158 = vmatpush1.msra.mxu0 %v139
    %159 = vmatprep.subr.mxu0 0.0
    %160 = vmatpush1.msra.mxu0 0.0
    %161 = vmatprep.subr.mxu0 0.0
    %162 = vmatpush1.msra.mxu0 0.0
    %163 = vmatprep.subr.mxu0 0.0
    %164 = vmatpush1.msra.mxu0 0.0
    %165 = vmatprep.subr.mxu0 0.0
    %166 = vmatpush1.msra.mxu0 0.0
    %167 = vmatprep.subr.mxu0 0.0
    %168 = vmatpush1.msra.mxu0 0.0
    %169 = vmatprep.subr.mxu0 0.0
    %170 = vmatpush1.msra.mxu0 0.0
    %171 = vmatprep.subr.mxu0 0.0
    %172 = vmatpush1.msra.mxu0 0.0
    %173 = vmatprep.subr.mxu0 0.0
    %174 = vmatpush1.msra.mxu0 0.0
    %175 = vmatprep.subr.mxu0 0.0
    %176 = vmatpush1.msra.mxu0 0.0
    %177 = vmatprep.subr.mxu0 0.0
    %178 = vmatpush1.msra.mxu0 0.0
    %179 = vmatprep.subr.mxu0 0.0
    %180 = vmatpush1.msra.mxu0 0.0
    %181 = vmatprep.subr.mxu0 0.0
    %182 = vmatpush1.msra.mxu0 0.0
    %183 = vmatprep.subr.mxu0 0.0
    %184 = vmatpush1.msra.mxu0 0.0
    %185 = vmatprep.subr.mxu0 0.0
    %186 = vmatpush1.msra.mxu0 0.0
    %187 = vmatprep.subr.mxu0 0.0
    %188 = vmatpush1.msra.mxu0 0.0
    %189 = vmatprep.subr.mxu0 0.0
    %190 = vmatpush1.msra.mxu0 0.0
    %191 = vmatprep.subr.mxu0 0.0
    %192 = vmatpush1.msra.mxu0 0.0
    %193 = vmatprep.subr.mxu0 0.0
    %194 = vmatpush1.msra.mxu0 0.0
    %195 = vmatprep.subr.mxu0 0.0
    %196 = vmatpush1.msra.mxu0 0.0
    %197 = vmatprep.subr.mxu0 0.0
    %198 = vmatpush1.msra.mxu0 0.0
    %199 = vmatprep.subr.mxu0 0.0
    %200 = vmatpush1.msra.mxu0 0.0
    %201 = vmatprep.subr.mxu0 0.0
    %202 = vmatpush1.msra.mxu0 0.0
    %203 = vmatprep.subr.mxu0 0.0
    %204 = vmatpush1.msra.mxu0 0.0
    %205 = vmatprep.subr.mxu0 0.0
    %206 = vmatpush1.msra.mxu0 0.0
    %207 = vmatprep.subr.mxu0 0.0
    %208 = vmatpush1.msra.mxu0 0.0
    %209 = vmatprep.subr.mxu0 0.0
    %210 = vmatpush1.msra.mxu0 0.0
    %211 = vmatprep.subr.mxu0 0.0
    %212 = vmatpush1.msra.mxu0 0.0
    %213 = vmatprep.subr.mxu0 0.0
    %214 = vmatpush1.msra.mxu0 0.0
    %215 = vmatprep.mubr.f32.mxu0 0.0
    %216 = vmatmul.mubr.f32.gmra.mrb[0].mxu0 %v146
    %v217 = vpop.f32.mrb[0].mxu0
    %v218 = vadd.f32 %v142, %v217
    %v219 = vpop.f32.mrb[0].mxu0
    %220 = vmatprep.mubr.f32.mxu0 0.0
    %221 = vmatmul.mubr.f32.gmra.mrb[0].mxu0 %v149
    %v222 = vpop.f32.mrb[0].mxu0
    %v223 = vadd.f32 %v143, %v222
    %v224 = vpop.f32.mrb[0].mxu0
    %225 = vdwg.mxu0
    %v226 = vld [vmem:[%s2] sm:$0xff]
    %v227 = vld [vmem:[%s2 + $0x8] sm:$0xff]
    %v228 = vld [vmem:[%s8] sm:$0x1]
    %v229 = vld [vmem:[%s8 + $0x1] sm:$0x1]
    %v230 = vsel %vm144, %v218, 0.0
    %231 = vadd.xlane.f32.xlu0 %v230
    %v232 = vpop.xlane.xlu0 %231
    %v233 = vsel %vm144, %v223, 0.0
    %234 = vadd.xlane.f32.xlu0 %v233
    %v235 = vpop.xlane.xlu0 %234
    %v236 = vrcp.pop 32.0
    %v237 = vmul.f32 %v232, %v236
    %v238 = vmul.f32 %v235, %v236
    %v239 = vsub.f32 %v218, %v237
    %v240 = vsub.f32 %v223, %v238
    %v241 = vmul.f32 %v239, %v239
    %v242 = vmul.f32 %v240, %v240
    %v243 = vsel %vm144, %v241, 0.0
    %244 = vadd.xlane.f32.xlu0 %v243
    %v245 = vpop.xlane.xlu0 %244
    %v246 = vsel %vm144, %v242, 0.0
    %247 = vadd.xlane.f32.xlu0 %v246
    %v248 = vpop.xlane.xlu0 %247
    %v249 = vrcp.pop 31.0
    %v250 = vmul.f32 %v245, %v249
    %v251 = vmul.f32 %v248, %v249
    %v252 = vrsqrt.pop %v250
    %v253 = vmul.f32 %v250, %v252
    %vm254 = vcmp.eq.f32.partialorder %v250, inf
    %v255 = vsel %vm254, %v250, %v253
    %vm256 = vcmp.eq.f32.partialorder %v250, 0.0
    %v257 = vand.u32 %v250, 2147483648
    %v258 = vsel %vm256, %v257, %v255
    %v259 = vrsqrt.pop %v251
    %v260 = vmul.f32 %v251, %v259
    %vm261 = vcmp.eq.f32.partialorder %v251, inf
    %v262 = vsel %vm261, %v251, %v260
    %vm263 = vcmp.eq.f32.partialorder %v251, 0.0
    %v264 = vand.u32 %v251, 2147483648
    %v265 = vsel %vm263, %v264, %v262
    %v266 = vadd.f32 %v258, 1e-06
    %v267 = vadd.f32 %v265, 1e-06
    %v268 = vrcp.pop %v266
    %v269 = vrcp.pop %v267
    %v270 = vlaneseq
    %v271 = vshrl.u32 %v270, 7
    %v272 = vsub.s32 0, %v271
    %v273 = vrot.slane %v228, %v272
    %v274 = vmul.f32 %v273, %v239
    %v275 = vmul.f32 %v273, %v240
    %v276 = vmul.f32 %v274, %v268
    %v277 = vmul.f32 %v275, %v269
    %v278 = vlaneseq
    %v279 = vshrl.u32 %v278, 7
    %v280 = vsub.s32 0, %v279
    %v281 = vrot.slane %v229, %v280
    %v282 = vadd.f32 %v276, %v281
    %v283 = vadd.f32 %v277, %v281
    %v284 = vld [vmem:[%s5] sm:$0xff]
    %v285 = vld [vmem:[%s5 + $0x8] sm:$0xff]
    %v286 = vld [vmem:[%s5 + $0x10] sm:$0xff]
    %v287 = vld [vmem:[%s5 + $0x18] sm:$0xff]
    %v288 = vld [vmem:[%s5 + $0x20] sm:$0xff]
    %v289 = vld [vmem:[%s5 + $0x28] sm:$0xff]
    %v290 = vld [vmem:[%s5 + $0x30] sm:$0xff]
    %v291 = vld [vmem:[%s5 + $0x38] sm:$0xff]
    %v292 = vld [vmem:[%s5 + $0x40] sm:$0xff]
    %v293 = vld [vmem:[%s5 + $0x48] sm:$0xff]
    %v294 = vld [vmem:[%s5 + $0x50] sm:$0xff]
    %v295 = vld [vmem:[%s5 + $0x58] sm:$0xff]
    %v296 = vld [vmem:[%s5 + $0x60] sm:$0xff]
    %v297 = vld [vmem:[%s5 + $0x68] sm:$0xff]
    %v298 = vld [vmem:[%s5 + $0x70] sm:$0xff]
    %v299 = vld [vmem:[%s5 + $0x78] sm:$0xff]
    %v301 = vsel %vm144, %v282, 0
    %v304 = vsel %vm144, %v283, 0
    %306 = vmatprep.subr.mxu0 0.0
    %307 = vmatpush1.msra.mxu0 %v284
    %308 = vmatprep.subr.mxu0 0.0
    %309 = vmatpush1.msra.mxu0 %v285
    %310 = vmatprep.subr.mxu0 0.0
    %311 = vmatpush1.msra.mxu0 %v286
    %312 = vmatprep.subr.mxu0 0.0
    %313 = vmatpush1.msra.mxu0 %v287
    %314 = vmatprep.subr.mxu0 0.0
    %315 = vmatpush1.msra.mxu0 0.0
    %316 = vmatprep.subr.mxu0 0.0
    %317 = vmatpush1.msra.mxu0 0.0
    %318 = vmatprep.subr.mxu0 0.0
    %319 = vmatpush1.msra.mxu0 0.0
    %320 = vmatprep.subr.mxu0 0.0
    %321 = vmatpush1.msra.mxu0 0.0
    %322 = vmatprep.subr.mxu0 0.0
    %323 = vmatpush1.msra.mxu0 0.0
    %324 = vmatprep.subr.mxu0 0.0
    %325 = vmatpush1.msra.mxu0 0.0
    %326 = vmatprep.subr.mxu0 0.0
    %327 = vmatpush1.msra.mxu0 0.0
    %328 = vmatprep.subr.mxu0 0.0
    %329 = vmatpush1.msra.mxu0 0.0
    %330 = vmatprep.subr.mxu0 0.0
    %331 = vmatpush1.msra.mxu0 0.0
    %332 = vmatprep.subr.mxu0 0.0
    %333 = vmatpush1.msra.mxu0 0.0
    %334 = vmatprep.subr.mxu0 0.0
    %335 = vmatpush1.msra.mxu0 0.0
    %336 = vmatprep.subr.mxu0 0.0
    %337 = vmatpush1.msra.mxu0 0.0
    %338 = vmatprep.subr.mxu0 0.0
    %339 = vmatpush1.msra.mxu0 0.0
    %340 = vmatprep.subr.mxu0 0.0
    %341 = vmatpush1.msra.mxu0 0.0
    %342 = vmatprep.subr.mxu0 0.0
    %343 = vmatpush1.msra.mxu0 0.0
    %344 = vmatprep.subr.mxu0 0.0
    %345 = vmatpush1.msra.mxu0 0.0
    %346 = vmatprep.subr.mxu0 0.0
    %347 = vmatpush1.msra.mxu0 0.0
    %348 = vmatprep.subr.mxu0 0.0
    %349 = vmatpush1.msra.mxu0 0.0
    %350 = vmatprep.subr.mxu0 0.0
    %351 = vmatpush1.msra.mxu0 0.0
    %352 = vmatprep.subr.mxu0 0.0
    %353 = vmatpush1.msra.mxu0 0.0
    %354 = vmatprep.subr.mxu0 0.0
    %355 = vmatpush1.msra.mxu0 0.0
    %356 = vmatprep.subr.mxu0 0.0
    %357 = vmatpush1.msra.mxu0 0.0
    %358 = vmatprep.subr.mxu0 0.0
    %359 = vmatpush1.msra.mxu0 0.0
    %360 = vmatprep.subr.mxu0 0.0
    %361 = vmatpush1.msra.mxu0 0.0
    %362 = vmatprep.subr.mxu0 0.0
    %363 = vmatpush1.msra.mxu0 0.0
    %364 = vmatprep.subr.mxu0 0.0
    %365 = vmatpush1.msra.mxu0 0.0
    %366 = vmatprep.subr.mxu0 0.0
    %367 = vmatpush1.msra.mxu0 0.0
    %368 = vmatprep.subr.mxu0 0.0
    %369 = vmatpush1.msra.mxu0 0.0
    %370 = vmatprep.mubr.f32.mxu0 0.0
    %371 = vmatmul.mubr.f32.gmra.mrb[0].mxu0 %v301
    %v372 = vpop.f32.mrb[0].mxu0
    %v373 = vadd.f32 0.0, %v372
    %v374 = vpop.f32.mrb[0].mxu0
    %375 = vmatprep.mubr.f32.mxu0 0.0
    %376 = vmatmul.mubr.f32.gmra.mrb[0].mxu0 %v304
    %v377 = vpop.f32.mrb[0].mxu0
    %v378 = vadd.f32 0.0, %v377
    %v379 = vpop.f32.mrb[0].mxu0
    %380 = vdwg.mxu0
    %381 = vmatprep.subr.mxu0 0.0
    %382 = vmatpush1.msra.mxu0 %v288
    %383 = vmatprep.subr.mxu0 0.0
    %384 = vmatpush1.msra.mxu0 %v289
    %385 = vmatprep.subr.mxu0 0.0
    %386 = vmatpush1.msra.mxu0 %v290
    %387 = vmatprep.subr.mxu0 0.0
    %388 = vmatpush1.msra.mxu0 %v291
    %389 = vmatprep.subr.mxu0 0.0
    %390 = vmatpush1.msra.mxu0 0.0
    %391 = vmatprep.subr.mxu0 0.0
    %392 = vmatpush1.msra.mxu0 0.0
    %393 = vmatprep.subr.mxu0 0.0
    %394 = vmatpush1.msra.mxu0 0.0
    %395 = vmatprep.subr.mxu0 0.0
    %396 = vmatpush1.msra.mxu0 0.0
    %397 = vmatprep.subr.mxu0 0.0
    %398 = vmatpush1.msra.mxu0 0.0
    %399 = vmatprep.subr.mxu0 0.0
    %400 = vmatpush1.msra.mxu0 0.0
    %401 = vmatprep.subr.mxu0 0.0
    %402 = vmatpush1.msra.mxu0 0.0
    %403 = vmatprep.subr.mxu0 0.0
    %404 = vmatpush1.msra.mxu0 0.0
    %405 = vmatprep.subr.mxu0 0.0
    %406 = vmatpush1.msra.mxu0 0.0
    %407 = vmatprep.subr.mxu0 0.0
    %408 = vmatpush1.msra.mxu0 0.0
    %409 = vmatprep.subr.mxu0 0.0
    %410 = vmatpush1.msra.mxu0 0.0
    %411 = vmatprep.subr.mxu0 0.0
    %412 = vmatpush1.msra.mxu0 0.0
    %413 = vmatprep.subr.mxu0 0.0
    %414 = vmatpush1.msra.mxu0 0.0
    %415 = vmatprep.subr.mxu0 0.0
    %416 = vmatpush1.msra.mxu0 0.0
    %417 = vmatprep.subr.mxu0 0.0
    %418 = vmatpush1.msra.mxu0 0.0
    %419 = vmatprep.subr.mxu0 0.0
    %420 = vmatpush1.msra.mxu0 0.0
    %421 = vmatprep.subr.mxu0 0.0
    %422 = vmatpush1.msra.mxu0 0.0
    %423 = vmatprep.subr.mxu0 0.0
    %424 = vmatpush1.msra.mxu0 0.0
    %425 = vmatprep.subr.mxu0 0.0
    %426 = vmatpush1.msra.mxu0 0.0
    %427 = vmatprep.subr.mxu0 0.0
    %428 = vmatpush1.msra.mxu0 0.0
    %429 = vmatprep.subr.mxu0 0.0
    %430 = vmatpush1.msra.mxu0 0.0
    %431 = vmatprep.subr.mxu0 0.0
    %432 = vmatpush1.msra.mxu0 0.0
    %433 = vmatprep.subr.mxu0 0.0
    %434 = vmatpush1.msra.mxu0 0.0
    %435 = vmatprep.subr.mxu0 0.0
    %436 = vmatpush1.msra.mxu0 0.0
    %437 = vmatprep.subr.mxu0 0.0
    %438 = vmatpush1.msra.mxu0 0.0
    %439 = vmatprep.subr.mxu0 0.0
    %440 = vmatpush1.msra.mxu0 0.0
    %441 = vmatprep.subr.mxu0 0.0
    %442 = vmatpush1.msra.mxu0 0.0
    %443 = vmatprep.subr.mxu0 0.0
    %444 = vmatpush1.msra.mxu0 0.0
    %445 = vmatprep.mubr.f32.mxu0 0.0
    %446 = vmatmul.mubr.f32.gmra.mrb[0].mxu0 %v301
    %v447 = vpop.f32.mrb[0].mxu0
    %v448 = vadd.f32 0.0, %v447
    %v449 = vpop.f32.mrb[0].mxu0
    %450 = vmatprep.mubr.f32.mxu0 0.0
    %451 = vmatmul.mubr.f32.gmra.mrb[0].mxu0 %v304
    %v452 = vpop.f32.mrb[0].mxu0
    %v453 = vadd.f32 0.0, %v452
    %v454 = vpop.f32.mrb[0].mxu0
    %455 = vdwg.mxu0
    %456 = vmatprep.subr.mxu0 0.0
    %457 = vmatpush1.msra.mxu0 %v292
    %458 = vmatprep.subr.mxu0 0.0
    %459 = vmatpush1.msra.mxu0 %v293
    %460 = vmatprep.subr.mxu0 0.0
    %461 = vmatpush1.msra.mxu0 %v294
    %462 = vmatprep.subr.mxu0 0.0
    %463 = vmatpush1.msra.mxu0 %v295
    %464 = vmatprep.subr.mxu0 0.0
    %465 = vmatpush1.msra.mxu0 0.0
    %466 = vmatprep.subr.mxu0 0.0
    %467 = vmatpush1.msra.mxu0 0.0
    %468 = vmatprep.subr.mxu0 0.0
    %469 = vmatpush1.msra.mxu0 0.0
    %470 = vmatprep.subr.mxu0 0.0
    %471 = vmatpush1.msra.mxu0 0.0
    %472 = vmatprep.subr.mxu0 0.0
    %473 = vmatpush1.msra.mxu0 0.0
    %474 = vmatprep.subr.mxu0 0.0
    %475 = vmatpush1.msra.mxu0 0.0
    %476 = vmatprep.subr.mxu0 0.0
    %477 = vmatpush1.msra.mxu0 0.0
    %478 = vmatprep.subr.mxu0 0.0
    %479 = vmatpush1.msra.mxu0 0.0
    %480 = vmatprep.subr.mxu0 0.0
    %481 = vmatpush1.msra.mxu0 0.0
    %482 = vmatprep.subr.mxu0 0.0
    %483 = vmatpush1.msra.mxu0 0.0
    %484 = vmatprep.subr.mxu0 0.0
    %485 = vmatpush1.msra.mxu0 0.0
    %486 = vmatprep.subr.mxu0 0.0
    %487 = vmatpush1.msra.mxu0 0.0
    %488 = vmatprep.subr.mxu0 0.0
    %489 = vmatpush1.msra.mxu0 0.0
    %490 = vmatprep.subr.mxu0 0.0
    %491 = vmatpush1.msra.mxu0 0.0
    %492 = vmatprep.subr.mxu0 0.0
    %493 = vmatpush1.msra.mxu0 0.0
    %494 = vmatprep.subr.mxu0 0.0
    %495 = vmatpush1.msra.mxu0 0.0
    %496 = vmatprep.subr.mxu0 0.0
    %497 = vmatpush1.msra.mxu0 0.0
    %498 = vmatprep.subr.mxu0 0.0
    %499 = vmatpush1.msra.mxu0 0.0
    %500 = vmatprep.subr.mxu0 0.0
    %501 = vmatpush1.msra.mxu0 0.0
    %502 = vmatprep.subr.mxu0 0.0
    %503 = vmatpush1.msra.mxu0 0.0
    %504 = vmatprep.subr.mxu0 0.0
    %505 = vmatpush1.msra.mxu0 0.0
    %506 = vmatprep.subr.mxu0 0.0
    %507 = vmatpush1.msra.mxu0 0.0
    %508 = vmatprep.subr.mxu0 0.0
    %509 = vmatpush1.msra.mxu0 0.0
    %510 = vmatprep.subr.mxu0 0.0
    %511 = vmatpush1.msra.mxu0 0.0
    %512 = vmatprep.subr.mxu0 0.0
    %513 = vmatpush1.msra.mxu0 0.0
    %514 = vmatprep.subr.mxu0 0.0
    %515 = vmatpush1.msra.mxu0 0.0
    %516 = vmatprep.subr.mxu0 0.0
    %517 = vmatpush1.msra.mxu0 0.0
    %518 = vmatprep.subr.mxu0 0.0
    %519 = vmatpush1.msra.mxu0 0.0
    %520 = vmatprep.mubr.f32.mxu0 0.0
    %521 = vmatmul.mubr.f32.gmra.mrb[0].mxu0 %v301
    %v522 = vpop.f32.mrb[0].mxu0
    %v523 = vadd.f32 0.0, %v522
    %v524 = vpop.f32.mrb[0].mxu0
    %525 = vmatprep.mubr.f32.mxu0 0.0
    %526 = vmatmul.mubr.f32.gmra.mrb[0].mxu0 %v304
    %v527 = vpop.f32.mrb[0].mxu0
    %v528 = vadd.f32 0.0, %v527
    %v529 = vpop.f32.mrb[0].mxu0
    %530 = vdwg.mxu0
    %531 = vmatprep.subr.mxu0 0.0
    %532 = vmatpush1.msra.mxu0 %v296
    %533 = vmatprep.subr.mxu0 0.0
    %534 = vmatpush1.msra.mxu0 %v297
    %535 = vmatprep.subr.mxu0 0.0
    %536 = vmatpush1.msra.mxu0 %v298
    %537 = vmatprep.subr.mxu0 0.0
    %538 = vmatpush1.msra.mxu0 %v299
    %539 = vmatprep.subr.mxu0 0.0
    %540 = vmatpush1.msra.mxu0 0.0
    %541 = vmatprep.subr.mxu0 0.0
    %542 = vmatpush1.msra.mxu0 0.0
    %543 = vmatprep.subr.mxu0 0.0
    %544 = vmatpush1.msra.mxu0 0.0
    %545 = vmatprep.subr.mxu0 0.0
    %546 = vmatpush1.msra.mxu0 0.0
    %547 = vmatprep.subr.mxu0 0.0
    %548 = vmatpush1.msra.mxu0 0.0
    %549 = vmatprep.subr.mxu0 0.0
    %550 = vmatpush1.msra.mxu0 0.0
    %551 = vmatprep.subr.mxu0 0.0
    %552 = vmatpush1.msra.mxu0 0.0
    %553 = vmatprep.subr.mxu0 0.0
    %554 = vmatpush1.msra.mxu0 0.0
    %555 = vmatprep.subr.mxu0 0.0
    %556 = vmatpush1.msra.mxu0 0.0
    %557 = vmatprep.subr.mxu0 0.0
    %558 = vmatpush1.msra.mxu0 0.0
    %559 = vmatprep.subr.mxu0 0.0
    %560 = vmatpush1.msra.mxu0 0.0
    %561 = vmatprep.subr.mxu0 0.0
    %562 = vmatpush1.msra.mxu0 0.0
    %563 = vmatprep.subr.mxu0 0.0
    %564 = vmatpush1.msra.mxu0 0.0
    %565 = vmatprep.subr.mxu0 0.0
    %566 = vmatpush1.msra.mxu0 0.0
    %567 = vmatprep.subr.mxu0 0.0
    %568 = vmatpush1.msra.mxu0 0.0
    %569 = vmatprep.subr.mxu0 0.0
    %570 = vmatpush1.msra.mxu0 0.0
    %571 = vmatprep.subr.mxu0 0.0
    %572 = vmatpush1.msra.mxu0 0.0
    %573 = vmatprep.subr.mxu0 0.0
    %574 = vmatpush1.msra.mxu0 0.0
    %575 = vmatprep.subr.mxu0 0.0
    %576 = vmatpush1.msra.mxu0 0.0
    %577 = vmatprep.subr.mxu0 0.0
    %578 = vmatpush1.msra.mxu0 0.0
    %579 = vmatprep.subr.mxu0 0.0
    %580 = vmatpush1.msra.mxu0 0.0
    %581 = vmatprep.subr.mxu0 0.0
    %582 = vmatpush1.msra.mxu0 0.0
    %583 = vmatprep.subr.mxu0 0.0
    %584 = vmatpush1.msra.mxu0 0.0
    %585 = vmatprep.subr.mxu0 0.0
    %586 = vmatpush1.msra.mxu0 0.0
    %587 = vmatprep.subr.mxu0 0.0
    %588 = vmatpush1.msra.mxu0 0.0
    %589 = vmatprep.subr.mxu0 0.0
    %590 = vmatpush1.msra.mxu0 0.0
    %591 = vmatprep.subr.mxu0 0.0
    %592 = vmatpush1.msra.mxu0 0.0
    %593 = vmatprep.subr.mxu0 0.0
    %594 = vmatpush1.msra.mxu0 0.0
    %595 = vmatprep.mubr.f32.mxu0 0.0
    %596 = vmatmul.mubr.f32.gmra.mrb[0].mxu0 %v301
    %v597 = vpop.f32.mrb[0].mxu0
    %v598 = vadd.f32 0.0, %v597
    %v599 = vpop.f32.mrb[0].mxu0
    %600 = vmatprep.mubr.f32.mxu0 0.0
    %601 = vmatmul.mubr.f32.gmra.mrb[0].mxu0 %v304
    %v602 = vpop.f32.mrb[0].mxu0
    %v603 = vadd.f32 0.0, %v602
    %v604 = vpop.f32.mrb[0].mxu0
    %605 = vdwg.mxu0
    %v606 = vld [vmem:[%s6] sm:$0xff]
    %v607 = vld [vmem:[%s6 + $0x8] sm:$0xff]
    %v608 = vld [vmem:[%s6 + $0x10] sm:$0xff]
    %v609 = vld [vmem:[%s6 + $0x18] sm:$0xff]
    %612 = vrot.lane.b32.xlu0 %v373, 120
    %v613 = vpop.permute.xlu0 %612
    %614 = vrot.lane.b32.xlu0 %v378, 120
    %v615 = vpop.permute.xlu0 %614
    %vm616 = vcmask 64512
    %v617 = vsel %vm616, %v373, 0
    %v619 = vsel %vm616, %v378, 0
    %v621 = vsel %vm616, %v613, 0
    %v623 = vsel %vm616, %v615, 0
    %625 = vmatprep.subr.mxu0 0.0
    %626 = vmatpush1.xpose.msra.mxu0 %v621
    %627 = vmatprep.subr.mxu0 0.0
    %628 = vmatpush1.xpose.msra.mxu0 %v623
    %629 = vmatprep.subr.mxu0 0.0
    %630 = vmatpush1.xpose.msra.mxu0 0.0
    %631 = vmatprep.subr.mxu0 0.0
    %632 = vmatpush1.xpose.msra.mxu0 0.0
    %633 = vmatprep.subr.mxu0 0.0
    %634 = vmatpush1.xpose.msra.mxu0 0.0
    %635 = vmatprep.subr.mxu0 0.0
    %636 = vmatpush1.xpose.msra.mxu0 0.0
    %637 = vmatprep.subr.mxu0 0.0
    %638 = vmatpush1.xpose.msra.mxu0 0.0
    %639 = vmatprep.subr.mxu0 0.0
    %640 = vmatpush1.xpose.msra.mxu0 0.0
    %641 = vmatprep.subr.mxu0 0.0
    %642 = vmatpush1.xpose.msra.mxu0 0.0
    %643 = vmatprep.subr.mxu0 0.0
    %644 = vmatpush1.xpose.msra.mxu0 0.0
    %645 = vmatprep.subr.mxu0 0.0
    %646 = vmatpush1.xpose.msra.mxu0 0.0
    %647 = vmatprep.subr.mxu0 0.0
    %648 = vmatpush1.xpose.msra.mxu0 0.0
    %649 = vmatprep.subr.mxu0 0.0
    %650 = vmatpush1.xpose.msra.mxu0 0.0
    %651 = vmatprep.subr.mxu0 0.0
    %652 = vmatpush1.xpose.msra.mxu0 0.0
    %653 = vmatprep.subr.mxu0 0.0
    %654 = vmatpush1.xpose.msra.mxu0 0.0
    %655 = vmatprep.subr.mxu0 0.0
    %656 = vmatpush1.xpose.msra.mxu0 0.0
    %657 = vmatprep.subr.mxu0 0.0
    %658 = vmatpush1.xpose.msra.mxu0 0.0
    %659 = vmatprep.subr.mxu0 0.0
    %660 = vmatpush1.xpose.msra.mxu0 0.0
    %661 = vmatprep.subr.mxu0 0.0
    %662 = vmatpush1.xpose.msra.mxu0 0.0
    %663 = vmatprep.subr.mxu0 0.0
    %664 = vmatpush1.xpose.msra.mxu0 0.0
    %665 = vmatprep.subr.mxu0 0.0
    %666 = vmatpush1.xpose.msra.mxu0 0.0
    %667 = vmatprep.subr.mxu0 0.0
    %668 = vmatpush1.xpose.msra.mxu0 0.0
    %669 = vmatprep.subr.mxu0 0.0
    %670 = vmatpush1.xpose.msra.mxu0 0.0
    %671 = vmatprep.subr.mxu0 0.0
    %672 = vmatpush1.xpose.msra.mxu0 0.0
    %673 = vmatprep.subr.mxu0 0.0
    %674 = vmatpush1.xpose.msra.mxu0 0.0
    %675 = vmatprep.subr.mxu0 0.0
    %676 = vmatpush1.xpose.msra.mxu0 0.0
    %677 = vmatprep.subr.mxu0 0.0
    %678 = vmatpush1.xpose.msra.mxu0 0.0
    %679 = vmatprep.subr.mxu0 0.0
    %680 = vmatpush1.xpose.msra.mxu0 0.0
    %681 = vmatprep.subr.mxu0 0.0
    %682 = vmatpush1.xpose.msra.mxu0 0.0
    %683 = vmatprep.subr.mxu0 0.0
    %684 = vmatpush1.xpose.msra.mxu0 0.0
    %685 = vmatprep.subr.mxu0 0.0
    %686 = vmatpush1.xpose.msra.mxu0 0.0
    %687 = vmatprep.subr.mxu0 0.0
    %688 = vmatpush1.xpose.msra.mxu0 0.0
    %689 = vmatprep.mubr.f32.mxu0 0.0
    %690 = vmatmul.mubr.f32.gmra.mrb[0].mxu0 %v617
    %v691 = vpop.f32.mrb[0].mxu0
    %v692 = vadd.f32 %v126, %v691
    %v693 = vpop.f32.mrb[0].mxu0
    %694 = vmatprep.mubr.f32.mxu0 0.0
    %695 = vmatmul.mubr.f32.gmra.mrb[0].mxu0 %v619
    %v696 = vpop.f32.mrb[0].mxu0
    %v697 = vadd.f32 %v127, %v696
    %v698 = vpop.f32.mrb[0].mxu0
    %699 = vdwg.mxu0
    %702 = vrot.lane.b32.xlu0 %v448, 120
    %v703 = vpop.permute.xlu0 %702
    %704 = vrot.lane.b32.xlu0 %v453, 120
    %v705 = vpop.permute.xlu0 %704
    %v706 = vsel %vm616, %v448, 0
    %v708 = vsel %vm616, %v453, 0
    %v710 = vsel %vm616, %v703, 0
    %v712 = vsel %vm616, %v705, 0
    %714 = vmatprep.subr.mxu0 0.0
    %715 = vmatpush1.xpose.msra.mxu0 %v710
    %716 = vmatprep.subr.mxu0 0.0
    %717 = vmatpush1.xpose.msra.mxu0 %v712
    %718 = vmatprep.subr.mxu0 0.0
    %719 = vmatpush1.xpose.msra.mxu0 0.0
    %720 = vmatprep.subr.mxu0 0.0
    %721 = vmatpush1.xpose.msra.mxu0 0.0
    %722 = vmatprep.subr.mxu0 0.0
    %723 = vmatpush1.xpose.msra.mxu0 0.0
    %724 = vmatprep.subr.mxu0 0.0
    %725 = vmatpush1.xpose.msra.mxu0 0.0
    %726 = vmatprep.subr.mxu0 0.0
    %727 = vmatpush1.xpose.msra.mxu0 0.0
    %728 = vmatprep.subr.mxu0 0.0
    %729 = vmatpush1.xpose.msra.mxu0 0.0
    %730 = vmatprep.subr.mxu0 0.0
    %731 = vmatpush1.xpose.msra.mxu0 0.0
    %732 = vmatprep.subr.mxu0 0.0
    %733 = vmatpush1.xpose.msra.mxu0 0.0
    %734 = vmatprep.subr.mxu0 0.0
    %735 = vmatpush1.xpose.msra.mxu0 0.0
    %736 = vmatprep.subr.mxu0 0.0
    %737 = vmatpush1.xpose.msra.mxu0 0.0
    %738 = vmatprep.subr.mxu0 0.0
    %739 = vmatpush1.xpose.msra.mxu0 0.0
    %740 = vmatprep.subr.mxu0 0.0
    %741 = vmatpush1.xpose.msra.mxu0 0.0
    %742 = vmatprep.subr.mxu0 0.0
    %743 = vmatpush1.xpose.msra.mxu0 0.0
    %744 = vmatprep.subr.mxu0 0.0
    %745 = vmatpush1.xpose.msra.mxu0 0.0
    %746 = vmatprep.subr.mxu0 0.0
    %747 = vmatpush1.xpose.msra.mxu0 0.0
    %748 = vmatprep.subr.mxu0 0.0
    %749 = vmatpush1.xpose.msra.mxu0 0.0
    %750 = vmatprep.subr.mxu0 0.0
    %751 = vmatpush1.xpose.msra.mxu0 0.0
    %752 = vmatprep.subr.mxu0 0.0
    %753 = vmatpush1.xpose.msra.mxu0 0.0
    %754 = vmatprep.subr.mxu0 0.0
    %755 = vmatpush1.xpose.msra.mxu0 0.0
    %756 = vmatprep.subr.mxu0 0.0
    %757 = vmatpush1.xpose.msra.mxu0 0.0
    %758 = vmatprep.subr.mxu0 0.0
    %759 = vmatpush1.xpose.msra.mxu0 0.0
    %760 = vmatprep.subr.mxu0 0.0
    %761 = vmatpush1.xpose.msra.mxu0 0.0
    %762 = vmatprep.subr.mxu0 0.0
    %763 = vmatpush1.xpose.msra.mxu0 0.0
    %764 = vmatprep.subr.mxu0 0.0
    %765 = vmatpush1.xpose.msra.mxu0 0.0
    %766 = vmatprep.subr.mxu0 0.0
    %767 = vmatpush1.xpose.msra.mxu0 0.0
    %768 = vmatprep.subr.mxu0 0.0
    %769 = vmatpush1.xpose.msra.mxu0 0.0
    %770 = vmatprep.subr.mxu0 0.0
    %771 = vmatpush1.xpose.msra.mxu0 0.0
    %772 = vmatprep.subr.mxu0 0.0
    %773 = vmatpush1.xpose.msra.mxu0 0.0
    %774 = vmatprep.subr.mxu0 0.0
    %775 = vmatpush1.xpose.msra.mxu0 0.0
    %776 = vmatprep.subr.mxu0 0.0
    %777 = vmatpush1.xpose.msra.mxu0 0.0
    %778 = vmatprep.mubr.f32.mxu0 0.0
    %779 = vmatmul.mubr.f32.gmra.mrb[0].mxu0 %v706
    %v780 = vpop.f32.mrb[0].mxu0
    %v781 = vadd.f32 %v126, %v780
    %v782 = vpop.f32.mrb[0].mxu0
    %783 = vmatprep.mubr.f32.mxu0 0.0
    %784 = vmatmul.mubr.f32.gmra.mrb[0].mxu0 %v708
    %v785 = vpop.f32.mrb[0].mxu0
    %v786 = vadd.f32 %v127, %v785
    %v787 = vpop.f32.mrb[0].mxu0
    %788 = vdwg.mxu0
    %791 = vrot.lane.b32.xlu0 %v523, 120
    %v792 = vpop.permute.xlu0 %791
    %793 = vrot.lane.b32.xlu0 %v528, 120
    %v794 = vpop.permute.xlu0 %793
    %v795 = vsel %vm616, %v523, 0
    %v797 = vsel %vm616, %v528, 0
    %v799 = vsel %vm616, %v792, 0
    %v801 = vsel %vm616, %v794, 0
    %803 = vmatprep.subr.mxu0 0.0
    %804 = vmatpush1.xpose.msra.mxu0 %v799
    %805 = vmatprep.subr.mxu0 0.0
    %806 = vmatpush1.xpose.msra.mxu0 %v801
    %807 = vmatprep.subr.mxu0 0.0
    %808 = vmatpush1.xpose.msra.mxu0 0.0
    %809 = vmatprep.subr.mxu0 0.0
    %810 = vmatpush1.xpose.msra.mxu0 0.0
    %811 = vmatprep.subr.mxu0 0.0
    %812 = vmatpush1.xpose.msra.mxu0 0.0
    %813 = vmatprep.subr.mxu0 0.0
    %814 = vmatpush1.xpose.msra.mxu0 0.0
    %815 = vmatprep.subr.mxu0 0.0
    %816 = vmatpush1.xpose.msra.mxu0 0.0
    %817 = vmatprep.subr.mxu0 0.0
    %818 = vmatpush1.xpose.msra.mxu0 0.0
    %819 = vmatprep.subr.mxu0 0.0
    %820 = vmatpush1.xpose.msra.mxu0 0.0
    %821 = vmatprep.subr.mxu0 0.0
    %822 = vmatpush1.xpose.msra.mxu0 0.0
    %823 = vmatprep.subr.mxu0 0.0
    %824 = vmatpush1.xpose.msra.mxu0 0.0
    %825 = vmatprep.subr.mxu0 0.0
    %826 = vmatpush1.xpose.msra.mxu0 0.0
    %827 = vmatprep.subr.mxu0 0.0
    %828 = vmatpush1.xpose.msra.mxu0 0.0
    %829 = vmatprep.subr.mxu0 0.0
    %830 = vmatpush1.xpose.msra.mxu0 0.0
    %831 = vmatprep.subr.mxu0 0.0
    %832 = vmatpush1.xpose.msra.mxu0 0.0
    %833 = vmatprep.subr.mxu0 0.0
    %834 = vmatpush1.xpose.msra.mxu0 0.0
    %835 = vmatprep.subr.mxu0 0.0
    %836 = vmatpush1.xpose.msra.mxu0 0.0
    %837 = vmatprep.subr.mxu0 0.0
    %838 = vmatpush1.xpose.msra.mxu0 0.0
    %839 = vmatprep.subr.mxu0 0.0
    %840 = vmatpush1.xpose.msra.mxu0 0.0
    %841 = vmatprep.subr.mxu0 0.0
    %842 = vmatpush1.xpose.msra.mxu0 0.0
    %843 = vmatprep.subr.mxu0 0.0
    %844 = vmatpush1.xpose.msra.mxu0 0.0
    %845 = vmatprep.subr.mxu0 0.0
    %846 = vmatpush1.xpose.msra.mxu0 0.0
    %847 = vmatprep.subr.mxu0 0.0
    %848 = vmatpush1.xpose.msra.mxu0 0.0
    %849 = vmatprep.subr.mxu0 0.0
    %850 = vmatpush1.xpose.msra.mxu0 0.0
    %851 = vmatprep.subr.mxu0 0.0
    %852 = vmatpush1.xpose.msra.mxu0 0.0
    %853 = vmatprep.subr.mxu0 0.0
    %854 = vmatpush1.xpose.msra.mxu0 0.0
    %855 = vmatprep.subr.mxu0 0.0
    %856 = vmatpush1.xpose.msra.mxu0 0.0
    %857 = vmatprep.subr.mxu0 0.0
    %858 = vmatpush1.xpose.msra.mxu0 0.0
    %859 = vmatprep.subr.mxu0 0.0
    %860 = vmatpush1.xpose.msra.mxu0 0.0
    %861 = vmatprep.subr.mxu0 0.0
    %862 = vmatpush1.xpose.msra.mxu0 0.0
    %863 = vmatprep.subr.mxu0 0.0
    %864 = vmatpush1.xpose.msra.mxu0 0.0
    %865 = vmatprep.subr.mxu0 0.0
    %866 = vmatpush1.xpose.msra.mxu0 0.0
    %867 = vmatprep.mubr.f32.mxu0 0.0
    %868 = vmatmul.mubr.f32.gmra.mrb[0].mxu0 %v795
    %v869 = vpop.f32.mrb[0].mxu0
    %v870 = vadd.f32 %v126, %v869
    %v871 = vpop.f32.mrb[0].mxu0
    %872 = vmatprep.mubr.f32.mxu0 0.0
    %873 = vmatmul.mubr.f32.gmra.mrb[0].mxu0 %v797
    %v874 = vpop.f32.mrb[0].mxu0
    %v875 = vadd.f32 %v127, %v874
    %v876 = vpop.f32.mrb[0].mxu0
    %877 = vdwg.mxu0
    %880 = vrot.lane.b32.xlu0 %v598, 120
    %v881 = vpop.permute.xlu0 %880
    %882 = vrot.lane.b32.xlu0 %v603, 120
    %v883 = vpop.permute.xlu0 %882
    %v884 = vsel %vm616, %v598, 0
    %v886 = vsel %vm616, %v603, 0
    %v888 = vsel %vm616, %v881, 0
    %v890 = vsel %vm616, %v883, 0
    %892 = vmatprep.subr.mxu0 0.0
    %893 = vmatpush1.xpose.msra.mxu0 %v888
    %894 = vmatprep.subr.mxu0 0.0
    %895 = vmatpush1.xpose.msra.mxu0 %v890
    %896 = vmatprep.subr.mxu0 0.0
    %897 = vmatpush1.xpose.msra.mxu0 0.0
    %898 = vmatprep.subr.mxu0 0.0
    %899 = vmatpush1.xpose.msra.mxu0 0.0
    %900 = vmatprep.subr.mxu0 0.0
    %901 = vmatpush1.xpose.msra.mxu0 0.0
    %902 = vmatprep.subr.mxu0 0.0
    %903 = vmatpush1.xpose.msra.mxu0 0.0
    %904 = vmatprep.subr.mxu0 0.0
    %905 = vmatpush1.xpose.msra.mxu0 0.0
    %906 = vmatprep.subr.mxu0 0.0
    %907 = vmatpush1.xpose.msra.mxu0 0.0
    %908 = vmatprep.subr.mxu0 0.0
    %909 = vmatpush1.xpose.msra.mxu0 0.0
    %910 = vmatprep.subr.mxu0 0.0
    %911 = vmatpush1.xpose.msra.mxu0 0.0
    %912 = vmatprep.subr.mxu0 0.0
    %913 = vmatpush1.xpose.msra.mxu0 0.0
    %914 = vmatprep.subr.mxu0 0.0
    %915 = vmatpush1.xpose.msra.mxu0 0.0
    %916 = vmatprep.subr.mxu0 0.0
    %917 = vmatpush1.xpose.msra.mxu0 0.0
    %918 = vmatprep.subr.mxu0 0.0
    %919 = vmatpush1.xpose.msra.mxu0 0.0
    %920 = vmatprep.subr.mxu0 0.0
    %921 = vmatpush1.xpose.msra.mxu0 0.0
    %922 = vmatprep.subr.mxu0 0.0
    %923 = vmatpush1.xpose.msra.mxu0 0.0
    %924 = vmatprep.subr.mxu0 0.0
    %925 = vmatpush1.xpose.msra.mxu0 0.0
    %926 = vmatprep.subr.mxu0 0.0
    %927 = vmatpush1.xpose.msra.mxu0 0.0
    %928 = vmatprep.subr.mxu0 0.0
    %929 = vmatpush1.xpose.msra.mxu0 0.0
    %930 = vmatprep.subr.mxu0 0.0
    %931 = vmatpush1.xpose.msra.mxu0 0.0
    %932 = vmatprep.subr.mxu0 0.0
    %933 = vmatpush1.xpose.msra.mxu0 0.0
    %934 = vmatprep.subr.mxu0 0.0
    %935 = vmatpush1.xpose.msra.mxu0 0.0
    %936 = vmatprep.subr.mxu0 0.0
    %937 = vmatpush1.xpose.msra.mxu0 0.0
    %938 = vmatprep.subr.mxu0 0.0
    %939 = vmatpush1.xpose.msra.mxu0 0.0
    %940 = vmatprep.subr.mxu0 0.0
    %941 = vmatpush1.xpose.msra.mxu0 0.0
    %942 = vmatprep.subr.mxu0 0.0
    %943 = vmatpush1.xpose.msra.mxu0 0.0
    %944 = vmatprep.subr.mxu0 0.0
    %945 = vmatpush1.xpose.msra.mxu0 0.0
    %946 = vmatprep.subr.mxu0 0.0
    %947 = vmatpush1.xpose.msra.mxu0 0.0
    %948 = vmatprep.subr.mxu0 0.0
    %949 = vmatpush1.xpose.msra.mxu0 0.0
    %950 = vmatprep.subr.mxu0 0.0
    %951 = vmatpush1.xpose.msra.mxu0 0.0
    %952 = vmatprep.subr.mxu0 0.0
    %953 = vmatpush1.xpose.msra.mxu0 0.0
    %954 = vmatprep.subr.mxu0 0.0
    %955 = vmatpush1.xpose.msra.mxu0 0.0
    %956 = vmatprep.mubr.f32.mxu0 0.0
    %957 = vmatmul.mubr.f32.gmra.mrb[0].mxu0 %v884
    %v958 = vpop.f32.mrb[0].mxu0
    %v959 = vadd.f32 %v126, %v958
    %v960 = vpop.f32.mrb[0].mxu0
    %961 = vmatprep.mubr.f32.mxu0 0.0
    %962 = vmatmul.mubr.f32.gmra.mrb[0].mxu0 %v886
    %v963 = vpop.f32.mrb[0].mxu0
    %v964 = vadd.f32 %v127, %v963
    %v965 = vpop.f32.mrb[0].mxu0
    %966 = vdwg.mxu0
    %vm967 = vcmask 130048
    %v968 = vsel %vm967, %v692, -inf
    %969 = vmax.xlane.f32.xlu0 %v968
    %v970 = vpop.xlane.xlu0 %969
    %v971 = vsel %vm967, %v697, -inf
    %972 = vmax.xlane.f32.xlu0 %v971
    %v973 = vpop.xlane.xlu0 %972
    %v974 = vsel %vm967, %v781, -inf
    %975 = vmax.xlane.f32.xlu0 %v974
    %v976 = vpop.xlane.xlu0 %975
    %v977 = vsel %vm967, %v786, -inf
    %978 = vmax.xlane.f32.xlu0 %v977
    %v979 = vpop.xlane.xlu0 %978
    %v980 = vsel %vm967, %v870, -inf
    %981 = vmax.xlane.f32.xlu0 %v980
    %v982 = vpop.xlane.xlu0 %981
    %v983 = vsel %vm967, %v875, -inf
    %984 = vmax.xlane.f32.xlu0 %v983
    %v985 = vpop.xlane.xlu0 %984
    %v986 = vsel %vm967, %v959, -inf
    %987 = vmax.xlane.f32.xlu0 %v986
    %v988 = vpop.xlane.xlu0 %987
    %v989 = vsel %vm967, %v964, -inf
    %990 = vmax.xlane.f32.xlu0 %v989
    %v991 = vpop.xlane.xlu0 %990
    %v992 = vsub.f32 %v692, %v970
    %v993 = vsub.f32 %v697, %v973
    %v994 = vsub.f32 %v781, %v976
    %v995 = vsub.f32 %v786, %v979
    %v996 = vsub.f32 %v870, %v982
    %v997 = vsub.f32 %v875, %v985
    %v998 = vsub.f32 %v959, %v988
    %v999 = vsub.f32 %v964, %v991
    %v1000 = vmul.f32 %v992, 1.442695
    %v1001 = vpow.pop %v1000
    %v1002 = vmul.f32 %v993, 1.442695
    %v1003 = vpow.pop %v1002
    %v1004 = vmul.f32 %v994, 1.442695
    %v1005 = vpow.pop %v1004
    %v1006 = vmul.f32 %v995, 1.442695
    %v1007 = vpow.pop %v1006
    %v1008 = vmul.f32 %v996, 1.442695
    %v1009 = vpow.pop %v1008
    %v1010 = vmul.f32 %v997, 1.442695
    %v1011 = vpow.pop %v1010
    %v1012 = vmul.f32 %v998, 1.442695
    %v1013 = vpow.pop %v1012
    %v1014 = vmul.f32 %v999, 1.442695
    %v1015 = vpow.pop %v1014
    %v1016 = vsel %vm967, %v1001, 0.0
    %1017 = vadd.xlane.f32.xlu0 %v1016
    %v1018 = vpop.xlane.xlu0 %1017
    %v1019 = vsel %vm967, %v1003, 0.0
    %1020 = vadd.xlane.f32.xlu0 %v1019
    %v1021 = vpop.xlane.xlu0 %1020
    %v1022 = vsel %vm967, %v1005, 0.0
    %1023 = vadd.xlane.f32.xlu0 %v1022
    %v1024 = vpop.xlane.xlu0 %1023
    %v1025 = vsel %vm967, %v1007, 0.0
    %1026 = vadd.xlane.f32.xlu0 %v1025
    %v1027 = vpop.xlane.xlu0 %1026
    %v1028 = vsel %vm967, %v1009, 0.0
    %1029 = vadd.xlane.f32.xlu0 %v1028
    %v1030 = vpop.xlane.xlu0 %1029
    %v1031 = vsel %vm967, %v1011, 0.0
    %1032 = vadd.xlane.f32.xlu0 %v1031
    %v1033 = vpop.xlane.xlu0 %1032
    %v1034 = vsel %vm967, %v1013, 0.0
    %1035 = vadd.xlane.f32.xlu0 %v1034
    %v1036 = vpop.xlane.xlu0 %1035
    %v1037 = vsel %vm967, %v1015, 0.0
    %1038 = vadd.xlane.f32.xlu0 %v1037
    %v1039 = vpop.xlane.xlu0 %1038
    %v1040 = vrcp.pop %v1018
    %v1041 = vrcp.pop %v1021
    %v1042 = vrcp.pop %v1024
    %v1043 = vrcp.pop %v1027
    %v1044 = vrcp.pop %v1030
    %v1045 = vrcp.pop %v1033
    %v1046 = vrcp.pop %v1036
    %v1047 = vrcp.pop %v1039
    %v1048 = vmul.f32 %v1001, %v1040
    %v1049 = vmul.f32 %v1003, %v1041
    %v1050 = vmul.f32 %v1005, %v1042
    %v1051 = vmul.f32 %v1007, %v1043
    %v1052 = vmul.f32 %v1009, %v1044
    %v1053 = vmul.f32 %v1011, %v1045
    %v1054 = vmul.f32 %v1013, %v1046
    %v1055 = vmul.f32 %v1015, %v1047
    %1056 = vrot.lane.b32.xlu0 %v373, 112
    %v1057 = vpop.permute.xlu0 %1056
    %1058 = vrot.lane.b32.xlu0 %v378, 112
    %v1059 = vpop.permute.xlu0 %1058
    %v1063 = vsel %vm967, %v1048, 0
    %v1066 = vsel %vm967, %v1049, 0
    %1068 = vmatprep.subr.mxu0 0.0
    %1069 = vmatpush1.msra.mxu0 %v1057
    %1070 = vmatprep.subr.mxu0 0.0
    %1071 = vmatpush1.msra.mxu0 %v1059
    %1072 = vmatprep.subr.mxu0 0.0
    %1073 = vmatpush1.msra.mxu0 0.0
    %1074 = vmatprep.subr.mxu0 0.0
    %1075 = vmatpush1.msra.mxu0 0.0
    %1076 = vmatprep.subr.mxu0 0.0
    %1077 = vmatpush1.msra.mxu0 0.0
    %1078 = vmatprep.subr.mxu0 0.0
    %1079 = vmatpush1.msra.mxu0 0.0
    %1080 = vmatprep.subr.mxu0 0.0
    %1081 = vmatpush1.msra.mxu0 0.0
    %1082 = vmatprep.subr.mxu0 0.0
    %1083 = vmatpush1.msra.mxu0 0.0
    %1084 = vmatprep.subr.mxu0 0.0
    %1085 = vmatpush1.msra.mxu0 0.0
    %1086 = vmatprep.subr.mxu0 0.0
    %1087 = vmatpush1.msra.mxu0 0.0
    %1088 = vmatprep.subr.mxu0 0.0
    %1089 = vmatpush1.msra.mxu0 0.0
    %1090 = vmatprep.subr.mxu0 0.0
    %1091 = vmatpush1.msra.mxu0 0.0
    %1092 = vmatprep.subr.mxu0 0.0
    %1093 = vmatpush1.msra.mxu0 0.0
    %1094 = vmatprep.subr.mxu0 0.0
    %1095 = vmatpush1.msra.mxu0 0.0
    %1096 = vmatprep.subr.mxu0 0.0
    %1097 = vmatpush1.msra.mxu0 0.0
    %1098 = vmatprep.subr.mxu0 0.0
    %1099 = vmatpush1.msra.mxu0 0.0
    %1100 = vmatprep.subr.mxu0 0.0
    %1101 = vmatpush1.msra.mxu0 0.0
    %1102 = vmatprep.subr.mxu0 0.0
    %1103 = vmatpush1.msra.mxu0 0.0
    %1104 = vmatprep.subr.mxu0 0.0
    %1105 = vmatpush1.msra.mxu0 0.0
    %1106 = vmatprep.subr.mxu0 0.0
    %1107 = vmatpush1.msra.mxu0 0.0
    %1108 = vmatprep.subr.mxu0 0.0
    %1109 = vmatpush1.msra.mxu0 0.0
    %1110 = vmatprep.subr.mxu0 0.0
    %1111 = vmatpush1.msra.mxu0 0.0
    %1112 = vmatprep.subr.mxu0 0.0
    %1113 = vmatpush1.msra.mxu0 0.0
    %1114 = vmatprep.subr.mxu0 0.0
    %1115 = vmatpush1.msra.mxu0 0.0
    %1116 = vmatprep.subr.mxu0 0.0
    %1117 = vmatpush1.msra.mxu0 0.0
    %1118 = vmatprep.subr.mxu0 0.0
    %1119 = vmatpush1.msra.mxu0 0.0
    %1120 = vmatprep.subr.mxu0 0.0
    %1121 = vmatpush1.msra.mxu0 0.0
    %1122 = vmatprep.subr.mxu0 0.0
    %1123 = vmatpush1.msra.mxu0 0.0
    %1124 = vmatprep.subr.mxu0 0.0
    %1125 = vmatpush1.msra.mxu0 0.0
    %1126 = vmatprep.subr.mxu0 0.0
    %1127 = vmatpush1.msra.mxu0 0.0
    %1128 = vmatprep.subr.mxu0 0.0
    %1129 = vmatpush1.msra.mxu0 0.0
    %1130 = vmatprep.subr.mxu0 0.0
    %1131 = vmatpush1.msra.mxu0 0.0
    %1132 = vmatprep.mubr.f32.mxu0 0.0
    %1133 = vmatmul.mubr.f32.gmra.mrb[0].mxu0 %v1063
    %v1134 = vpop.f32.mrb[0].mxu0
    %v1135 = vadd.f32 0.0, %v1134
    %v1136 = vpop.f32.mrb[0].mxu0
    %1137 = vmatprep.mubr.f32.mxu0 0.0
    %1138 = vmatmul.mubr.f32.gmra.mrb[0].mxu0 %v1066
    %v1139 = vpop.f32.mrb[0].mxu0
    %v1140 = vadd.f32 0.0, %v1139
    %v1141 = vpop.f32.mrb[0].mxu0
    %1142 = vdwg.mxu0
    %1143 = vrot.lane.b32.xlu0 %v448, 112
    %v1144 = vpop.permute.xlu0 %1143
    %1145 = vrot.lane.b32.xlu0 %v453, 112
    %v1146 = vpop.permute.xlu0 %1145
    %v1150 = vsel %vm967, %v1050, 0
    %v1153 = vsel %vm967, %v1051, 0
    %1155 = vmatprep.subr.mxu0 0.0
    %1156 = vmatpush1.msra.mxu0 %v1144
    %1157 = vmatprep.subr.mxu0 0.0
    %1158 = vmatpush1.msra.mxu0 %v1146
    %1159 = vmatprep.subr.mxu0 0.0
    %1160 = vmatpush1.msra.mxu0 0.0
    %1161 = vmatprep.subr.mxu0 0.0
    %1162 = vmatpush1.msra.mxu0 0.0
    %1163 = vmatprep.subr.mxu0 0.0
    %1164 = vmatpush1.msra.mxu0 0.0
    %1165 = vmatprep.subr.mxu0 0.0
    %1166 = vmatpush1.msra.mxu0 0.0
    %1167 = vmatprep.subr.mxu0 0.0
    %1168 = vmatpush1.msra.mxu0 0.0
    %1169 = vmatprep.subr.mxu0 0.0
    %1170 = vmatpush1.msra.mxu0 0.0
    %1171 = vmatprep.subr.mxu0 0.0
    %1172 = vmatpush1.msra.mxu0 0.0
    %1173 = vmatprep.subr.mxu0 0.0
    %1174 = vmatpush1.msra.mxu0 0.0
    %1175 = vmatprep.subr.mxu0 0.0
    %1176 = vmatpush1.msra.mxu0 0.0
    %1177 = vmatprep.subr.mxu0 0.0
    %1178 = vmatpush1.msra.mxu0 0.0
    %1179 = vmatprep.subr.mxu0 0.0
    %1180 = vmatpush1.msra.mxu0 0.0
    %1181 = vmatprep.subr.mxu0 0.0
    %1182 = vmatpush1.msra.mxu0 0.0
    %1183 = vmatprep.subr.mxu0 0.0
    %1184 = vmatpush1.msra.mxu0 0.0
    %1185 = vmatprep.subr.mxu0 0.0
    %1186 = vmatpush1.msra.mxu0 0.0
    %1187 = vmatprep.subr.mxu0 0.0
    %1188 = vmatpush1.msra.mxu0 0.0
    %1189 = vmatprep.subr.mxu0 0.0
    %1190 = vmatpush1.msra.mxu0 0.0
    %1191 = vmatprep.subr.mxu0 0.0
    %1192 = vmatpush1.msra.mxu0 0.0
    %1193 = vmatprep.subr.mxu0 0.0
    %1194 = vmatpush1.msra.mxu0 0.0
    %1195 = vmatprep.subr.mxu0 0.0
    %1196 = vmatpush1.msra.mxu0 0.0
    %1197 = vmatprep.subr.mxu0 0.0
    %1198 = vmatpush1.msra.mxu0 0.0
    %1199 = vmatprep.subr.mxu0 0.0
    %1200 = vmatpush1.msra.mxu0 0.0
    %1201 = vmatprep.subr.mxu0 0.0
    %1202 = vmatpush1.msra.mxu0 0.0
    %1203 = vmatprep.subr.mxu0 0.0
    %1204 = vmatpush1.msra.mxu0 0.0
    %1205 = vmatprep.subr.mxu0 0.0
    %1206 = vmatpush1.msra.mxu0 0.0
    %1207 = vmatprep.subr.mxu0 0.0
    %1208 = vmatpush1.msra.mxu0 0.0
    %1209 = vmatprep.subr.mxu0 0.0
    %1210 = vmatpush1.msra.mxu0 0.0
    %1211 = vmatprep.subr.mxu0 0.0
    %1212 = vmatpush1.msra.mxu0 0.0
    %1213 = vmatprep.subr.mxu0 0.0
    %1214 = vmatpush1.msra.mxu0 0.0
    %1215 = vmatprep.subr.mxu0 0.0
    %1216 = vmatpush1.msra.mxu0 0.0
    %1217 = vmatprep.subr.mxu0 0.0
    %1218 = vmatpush1.msra.mxu0 0.0
    %1219 = vmatprep.mubr.f32.mxu0 0.0
    %1220 = vmatmul.mubr.f32.gmra.mrb[0].mxu0 %v1150
    %v1221 = vpop.f32.mrb[0].mxu0
    %v1222 = vadd.f32 0.0, %v1221
    %v1223 = vpop.f32.mrb[0].mxu0
    %1224 = vmatprep.mubr.f32.mxu0 0.0
    %1225 = vmatmul.mubr.f32.gmra.mrb[0].mxu0 %v1153
    %v1226 = vpop.f32.mrb[0].mxu0
    %v1227 = vadd.f32 0.0, %v1226
    %v1228 = vpop.f32.mrb[0].mxu0
    %1229 = vdwg.mxu0
    %1230 = vrot.lane.b32.xlu0 %v523, 112
    %v1231 = vpop.permute.xlu0 %1230
    %1232 = vrot.lane.b32.xlu0 %v528, 112
    %v1233 = vpop.permute.xlu0 %1232
    %v1237 = vsel %vm967, %v1052, 0
    %v1240 = vsel %vm967, %v1053, 0
    %1242 = vmatprep.subr.mxu0 0.0
    %1243 = vmatpush1.msra.mxu0 %v1231
    %1244 = vmatprep.subr.mxu0 0.0
    %1245 = vmatpush1.msra.mxu0 %v1233
    %1246 = vmatprep.subr.mxu0 0.0
    %1247 = vmatpush1.msra.mxu0 0.0
    %1248 = vmatprep.subr.mxu0 0.0
    %1249 = vmatpush1.msra.mxu0 0.0
    %1250 = vmatprep.subr.mxu0 0.0
    %1251 = vmatpush1.msra.mxu0 0.0
    %1252 = vmatprep.subr.mxu0 0.0
    %1253 = vmatpush1.msra.mxu0 0.0
    %1254 = vmatprep.subr.mxu0 0.0
    %1255 = vmatpush1.msra.mxu0 0.0
    %1256 = vmatprep.subr.mxu0 0.0
    %1257 = vmatpush1.msra.mxu0 0.0
    %1258 = vmatprep.subr.mxu0 0.0
    %1259 = vmatpush1.msra.mxu0 0.0
    %1260 = vmatprep.subr.mxu0 0.0
    %1261 = vmatpush1.msra.mxu0 0.0
    %1262 = vmatprep.subr.mxu0 0.0
    %1263 = vmatpush1.msra.mxu0 0.0
    %1264 = vmatprep.subr.mxu0 0.0
    %1265 = vmatpush1.msra.mxu0 0.0
    %1266 = vmatprep.subr.mxu0 0.0
    %1267 = vmatpush1.msra.mxu0 0.0
    %1268 = vmatprep.subr.mxu0 0.0
    %1269 = vmatpush1.msra.mxu0 0.0
    %1270 = vmatprep.subr.mxu0 0.0
    %1271 = vmatpush1.msra.mxu0 0.0
    %1272 = vmatprep.subr.mxu0 0.0
    %1273 = vmatpush1.msra.mxu0 0.0
    %1274 = vmatprep.subr.mxu0 0.0
    %1275 = vmatpush1.msra.mxu0 0.0
    %1276 = vmatprep.subr.mxu0 0.0
    %1277 = vmatpush1.msra.mxu0 0.0
    %1278 = vmatprep.subr.mxu0 0.0
    %1279 = vmatpush1.msra.mxu0 0.0
    %1280 = vmatprep.subr.mxu0 0.0
    %1281 = vmatpush1.msra.mxu0 0.0
    %1282 = vmatprep.subr.mxu0 0.0
    %1283 = vmatpush1.msra.mxu0 0.0
    %1284 = vmatprep.subr.mxu0 0.0
    %1285 = vmatpush1.msra.mxu0 0.0
    %1286 = vmatprep.subr.mxu0 0.0
    %1287 = vmatpush1.msra.mxu0 0.0
    %1288 = vmatprep.subr.mxu0 0.0
    %1289 = vmatpush1.msra.mxu0 0.0
    %1290 = vmatprep.subr.mxu0 0.0
    %1291 = vmatpush1.msra.mxu0 0.0
    %1292 = vmatprep.subr.mxu0 0.0
    %1293 = vmatpush1.msra.mxu0 0.0
    %1294 = vmatprep.subr.mxu0 0.0
    %1295 = vmatpush1.msra.mxu0 0.0
    %1296 = vmatprep.subr.mxu0 0.0
    %1297 = vmatpush1.msra.mxu0 0.0
    %1298 = vmatprep.subr.mxu0 0.0
    %1299 = vmatpush1.msra.mxu0 0.0
    %1300 = vmatprep.subr.mxu0 0.0
    %1301 = vmatpush1.msra.mxu0 0.0
    %1302 = vmatprep.subr.mxu0 0.0
    %1303 = vmatpush1.msra.mxu0 0.0
    %1304 = vmatprep.subr.mxu0 0.0
    %1305 = vmatpush1.msra.mxu0 0.0
    %1306 = vmatprep.mubr.f32.mxu0 0.0
    %1307 = vmatmul.mubr.f32.gmra.mrb[0].mxu0 %v1237
    %v1308 = vpop.f32.mrb[0].mxu0
    %v1309 = vadd.f32 0.0, %v1308
    %v1310 = vpop.f32.mrb[0].mxu0
    %1311 = vmatprep.mubr.f32.mxu0 0.0
    %1312 = vmatmul.mubr.f32.gmra.mrb[0].mxu0 %v1240
    %v1313 = vpop.f32.mrb[0].mxu0
    %v1314 = vadd.f32 0.0, %v1313
    %v1315 = vpop.f32.mrb[0].mxu0
    %1316 = vdwg.mxu0
    %1317 = vrot.lane.b32.xlu0 %v598, 112
    %v1318 = vpop.permute.xlu0 %1317
    %1319 = vrot.lane.b32.xlu0 %v603, 112
    %v1320 = vpop.permute.xlu0 %1319
    %v1324 = vsel %vm967, %v1054, 0
    %v1327 = vsel %vm967, %v1055, 0
    %1329 = vmatprep.subr.mxu0 0.0
    %1330 = vmatpush1.msra.mxu0 %v1318
    %1331 = vmatprep.subr.mxu0 0.0
    %1332 = vmatpush1.msra.mxu0 %v1320
    %1333 = vmatprep.subr.mxu0 0.0
    %1334 = vmatpush1.msra.mxu0 0.0
    %1335 = vmatprep.subr.mxu0 0.0
    %1336 = vmatpush1.msra.mxu0 0.0
    %1337 = vmatprep.subr.mxu0 0.0
    %1338 = vmatpush1.msra.mxu0 0.0
    %1339 = vmatprep.subr.mxu0 0.0
    %1340 = vmatpush1.msra.mxu0 0.0
    %1341 = vmatprep.subr.mxu0 0.0
    %1342 = vmatpush1.msra.mxu0 0.0
    %1343 = vmatprep.subr.mxu0 0.0
    %1344 = vmatpush1.msra.mxu0 0.0
    %1345 = vmatprep.subr.mxu0 0.0
    %1346 = vmatpush1.msra.mxu0 0.0
    %1347 = vmatprep.subr.mxu0 0.0
    %1348 = vmatpush1.msra.mxu0 0.0
    %1349 = vmatprep.subr.mxu0 0.0
    %1350 = vmatpush1.msra.mxu0 0.0
    %1351 = vmatprep.subr.mxu0 0.0
    %1352 = vmatpush1.msra.mxu0 0.0
    %1353 = vmatprep.subr.mxu0 0.0
    %1354 = vmatpush1.msra.mxu0 0.0
    %1355 = vmatprep.subr.mxu0 0.0
    %1356 = vmatpush1.msra.mxu0 0.0
    %1357 = vmatprep.subr.mxu0 0.0
    %1358 = vmatpush1.msra.mxu0 0.0
    %1359 = vmatprep.subr.mxu0 0.0
    %1360 = vmatpush1.msra.mxu0 0.0
    %1361 = vmatprep.subr.mxu0 0.0
    %1362 = vmatpush1.msra.mxu0 0.0
    %1363 = vmatprep.subr.mxu0 0.0
    %1364 = vmatpush1.msra.mxu0 0.0
    %1365 = vmatprep.subr.mxu0 0.0
    %1366 = vmatpush1.msra.mxu0 0.0
    %1367 = vmatprep.subr.mxu0 0.0
    %1368 = vmatpush1.msra.mxu0 0.0
    %1369 = vmatprep.subr.mxu0 0.0
    %1370 = vmatpush1.msra.mxu0 0.0
    %1371 = vmatprep.subr.mxu0 0.0
    %1372 = vmatpush1.msra.mxu0 0.0
    %1373 = vmatprep.subr.mxu0 0.0
    %1374 = vmatpush1.msra.mxu0 0.0
    %1375 = vmatprep.subr.mxu0 0.0
    %1376 = vmatpush1.msra.mxu0 0.0
    %1377 = vmatprep.subr.mxu0 0.0
    %1378 = vmatpush1.msra.mxu0 0.0
    %1379 = vmatprep.subr.mxu0 0.0
    %1380 = vmatpush1.msra.mxu0 0.0
    %1381 = vmatprep.subr.mxu0 0.0
    %1382 = vmatpush1.msra.mxu0 0.0
    %1383 = vmatprep.subr.mxu0 0.0
    %1384 = vmatpush1.msra.mxu0 0.0
    %1385 = vmatprep.subr.mxu0 0.0
    %1386 = vmatpush1.msra.mxu0 0.0
    %1387 = vmatprep.subr.mxu0 0.0
    %1388 = vmatpush1.msra.mxu0 0.0
    %1389 = vmatprep.subr.mxu0 0.0
    %1390 = vmatpush1.msra.mxu0 0.0
    %1391 = vmatprep.subr.mxu0 0.0
    %1392 = vmatpush1.msra.mxu0 0.0
    %1393 = vmatprep.mubr.f32.mxu0 0.0
    %1394 = vmatmul.mubr.f32.gmra.mrb[0].mxu0 %v1324
    %v1395 = vpop.f32.mrb[0].mxu0
    %v1396 = vadd.f32 0.0, %v1395
    %v1397 = vpop.f32.mrb[0].mxu0
    %1398 = vmatprep.mubr.f32.mxu0 0.0
    %1399 = vmatmul.mubr.f32.gmra.mrb[0].mxu0 %v1327
    %v1400 = vpop.f32.mrb[0].mxu0
    %v1401 = vadd.f32 0.0, %v1400
    %v1402 = vpop.f32.mrb[0].mxu0
    %1403 = vdwg.mxu0
    %v1405 = vsel %vm616, %v1135, 0
    %v1408 = vsel %vm616, %v1140, 0
    %1410 = vmatprep.subr.mxu0 0.0
    %1411 = vmatpush1.msra.mxu0 %v606
    %1412 = vmatprep.subr.mxu0 0.0
    %1413 = vmatpush1.msra.mxu0 0.0
    %1414 = vmatprep.subr.mxu0 0.0
    %1415 = vmatpush1.msra.mxu0 0.0
    %1416 = vmatprep.subr.mxu0 0.0
    %1417 = vmatpush1.msra.mxu0 0.0
    %1418 = vmatprep.subr.mxu0 0.0
    %1419 = vmatpush1.msra.mxu0 0.0
    %1420 = vmatprep.subr.mxu0 0.0
    %1421 = vmatpush1.msra.mxu0 0.0
    %1422 = vmatprep.subr.mxu0 0.0
    %1423 = vmatpush1.msra.mxu0 0.0
    %1424 = vmatprep.subr.mxu0 0.0
    %1425 = vmatpush1.msra.mxu0 0.0
    %1426 = vmatprep.subr.mxu0 0.0
    %1427 = vmatpush1.msra.mxu0 0.0
    %1428 = vmatprep.subr.mxu0 0.0
    %1429 = vmatpush1.msra.mxu0 0.0
    %1430 = vmatprep.subr.mxu0 0.0
    %1431 = vmatpush1.msra.mxu0 0.0
    %1432 = vmatprep.subr.mxu0 0.0
    %1433 = vmatpush1.msra.mxu0 0.0
    %1434 = vmatprep.subr.mxu0 0.0
    %1435 = vmatpush1.msra.mxu0 0.0
    %1436 = vmatprep.subr.mxu0 0.0
    %1437 = vmatpush1.msra.mxu0 0.0
    %1438 = vmatprep.subr.mxu0 0.0
    %1439 = vmatpush1.msra.mxu0 0.0
    %1440 = vmatprep.subr.mxu0 0.0
    %1441 = vmatpush1.msra.mxu0 0.0
    %1442 = vmatprep.subr.mxu0 0.0
    %1443 = vmatpush1.msra.mxu0 0.0
    %1444 = vmatprep.subr.mxu0 0.0
    %1445 = vmatpush1.msra.mxu0 0.0
    %1446 = vmatprep.subr.mxu0 0.0
    %1447 = vmatpush1.msra.mxu0 0.0
    %1448 = vmatprep.subr.mxu0 0.0
    %1449 = vmatpush1.msra.mxu0 0.0
    %1450 = vmatprep.subr.mxu0 0.0
    %1451 = vmatpush1.msra.mxu0 0.0
    %1452 = vmatprep.subr.mxu0 0.0
    %1453 = vmatpush1.msra.mxu0 0.0
    %1454 = vmatprep.subr.mxu0 0.0
    %1455 = vmatpush1.msra.mxu0 0.0
    %1456 = vmatprep.subr.mxu0 0.0
    %1457 = vmatpush1.msra.mxu0 0.0
    %1458 = vmatprep.subr.mxu0 0.0
    %1459 = vmatpush1.msra.mxu0 0.0
    %1460 = vmatprep.subr.mxu0 0.0
    %1461 = vmatpush1.msra.mxu0 0.0
    %1462 = vmatprep.subr.mxu0 0.0
    %1463 = vmatpush1.msra.mxu0 0.0
    %1464 = vmatprep.subr.mxu0 0.0
    %1465 = vmatpush1.msra.mxu0 0.0
    %1466 = vmatprep.subr.mxu0 0.0
    %1467 = vmatpush1.msra.mxu0 0.0
    %1468 = vmatprep.subr.mxu0 0.0
    %1469 = vmatpush1.msra.mxu0 0.0
    %1470 = vmatprep.subr.mxu0 0.0
    %1471 = vmatpush1.msra.mxu0 0.0
    %1472 = vmatprep.subr.mxu0 0.0
    %1473 = vmatpush1.msra.mxu0 0.0
    %1474 = vmatprep.mubr.f32.mxu0 0.0
    %1475 = vmatmul.mubr.f32.gmra.mrb[0].mxu0 %v1405
    %v1476 = vpop.f32.mrb[0].mxu0
    %v1477 = vadd.f32 0.0, %v1476
    %v1478 = vpop.f32.mrb[0].mxu0
    %1479 = vmatprep.mubr.f32.mxu0 0.0
    %1480 = vmatmul.mubr.f32.gmra.mrb[0].mxu0 %v1408
    %v1481 = vpop.f32.mrb[0].mxu0
    %v1482 = vadd.f32 0.0, %v1481
    %v1483 = vpop.f32.mrb[0].mxu0
    %1484 = vdwg.mxu0
    %v1486 = vsel %vm616, %v1222, 0
    %v1489 = vsel %vm616, %v1227, 0
    %1491 = vmatprep.subr.mxu0 0.0
    %1492 = vmatpush1.msra.mxu0 %v607
    %1493 = vmatprep.subr.mxu0 0.0
    %1494 = vmatpush1.msra.mxu0 0.0
    %1495 = vmatprep.subr.mxu0 0.0
    %1496 = vmatpush1.msra.mxu0 0.0
    %1497 = vmatprep.subr.mxu0 0.0
    %1498 = vmatpush1.msra.mxu0 0.0
    %1499 = vmatprep.subr.mxu0 0.0
    %1500 = vmatpush1.msra.mxu0 0.0
    %1501 = vmatprep.subr.mxu0 0.0
    %1502 = vmatpush1.msra.mxu0 0.0
    %1503 = vmatprep.subr.mxu0 0.0
    %1504 = vmatpush1.msra.mxu0 0.0
    %1505 = vmatprep.subr.mxu0 0.0
    %1506 = vmatpush1.msra.mxu0 0.0
    %1507 = vmatprep.subr.mxu0 0.0
    %1508 = vmatpush1.msra.mxu0 0.0
    %1509 = vmatprep.subr.mxu0 0.0
    %1510 = vmatpush1.msra.mxu0 0.0
    %1511 = vmatprep.subr.mxu0 0.0
    %1512 = vmatpush1.msra.mxu0 0.0
    %1513 = vmatprep.subr.mxu0 0.0
    %1514 = vmatpush1.msra.mxu0 0.0
    %1515 = vmatprep.subr.mxu0 0.0
    %1516 = vmatpush1.msra.mxu0 0.0
    %1517 = vmatprep.subr.mxu0 0.0
    %1518 = vmatpush1.msra.mxu0 0.0
    %1519 = vmatprep.subr.mxu0 0.0
    %1520 = vmatpush1.msra.mxu0 0.0
    %1521 = vmatprep.subr.mxu0 0.0
    %1522 = vmatpush1.msra.mxu0 0.0
    %1523 = vmatprep.subr.mxu0 0.0
    %1524 = vmatpush1.msra.mxu0 0.0
    %1525 = vmatprep.subr.mxu0 0.0
    %1526 = vmatpush1.msra.mxu0 0.0
    %1527 = vmatprep.subr.mxu0 0.0
    %1528 = vmatpush1.msra.mxu0 0.0
    %1529 = vmatprep.subr.mxu0 0.0
    %1530 = vmatpush1.msra.mxu0 0.0
    %1531 = vmatprep.subr.mxu0 0.0
    %1532 = vmatpush1.msra.mxu0 0.0
    %1533 = vmatprep.subr.mxu0 0.0
    %1534 = vmatpush1.msra.mxu0 0.0
    %1535 = vmatprep.subr.mxu0 0.0
    %1536 = vmatpush1.msra.mxu0 0.0
    %1537 = vmatprep.subr.mxu0 0.0
    %1538 = vmatpush1.msra.mxu0 0.0
    %1539 = vmatprep.subr.mxu0 0.0
    %1540 = vmatpush1.msra.mxu0 0.0
    %1541 = vmatprep.subr.mxu0 0.0
    %1542 = vmatpush1.msra.mxu0 0.0
    %1543 = vmatprep.subr.mxu0 0.0
    %1544 = vmatpush1.msra.mxu0 0.0
    %1545 = vmatprep.subr.mxu0 0.0
    %1546 = vmatpush1.msra.mxu0 0.0
    %1547 = vmatprep.subr.mxu0 0.0
    %1548 = vmatpush1.msra.mxu0 0.0
    %1549 = vmatprep.subr.mxu0 0.0
    %1550 = vmatpush1.msra.mxu0 0.0
    %1551 = vmatprep.subr.mxu0 0.0
    %1552 = vmatpush1.msra.mxu0 0.0
    %1553 = vmatprep.subr.mxu0 0.0
    %1554 = vmatpush1.msra.mxu0 0.0
    %1555 = vmatprep.mubr.f32.mxu0 0.0
    %1556 = vmatmul.mubr.f32.gmra.mrb[0].mxu0 %v1486
    %v1557 = vpop.f32.mrb[0].mxu0
    %v1558 = vadd.f32 0.0, %v1557
    %v1559 = vpop.f32.mrb[0].mxu0
    %1560 = vmatprep.mubr.f32.mxu0 0.0
    %1561 = vmatmul.mubr.f32.gmra.mrb[0].mxu0 %v1489
    %v1562 = vpop.f32.mrb[0].mxu0
    %v1563 = vadd.f32 0.0, %v1562
    %v1564 = vpop.f32.mrb[0].mxu0
    %1565 = vdwg.mxu0
    %v1567 = vsel %vm616, %v1309, 0
    %v1570 = vsel %vm616, %v1314, 0
    %1572 = vmatprep.subr.mxu0 0.0
    %1573 = vmatpush1.msra.mxu0 %v608
    %1574 = vmatprep.subr.mxu0 0.0
    %1575 = vmatpush1.msra.mxu0 0.0
    %1576 = vmatprep.subr.mxu0 0.0
    %1577 = vmatpush1.msra.mxu0 0.0
    %1578 = vmatprep.subr.mxu0 0.0
    %1579 = vmatpush1.msra.mxu0 0.0
    %1580 = vmatprep.subr.mxu0 0.0
    %1581 = vmatpush1.msra.mxu0 0.0
    %1582 = vmatprep.subr.mxu0 0.0
    %1583 = vmatpush1.msra.mxu0 0.0
    %1584 = vmatprep.subr.mxu0 0.0
    %1585 = vmatpush1.msra.mxu0 0.0
    %1586 = vmatprep.subr.mxu0 0.0
    %1587 = vmatpush1.msra.mxu0 0.0
    %1588 = vmatprep.subr.mxu0 0.0
    %1589 = vmatpush1.msra.mxu0 0.0
    %1590 = vmatprep.subr.mxu0 0.0
    %1591 = vmatpush1.msra.mxu0 0.0
    %1592 = vmatprep.subr.mxu0 0.0
    %1593 = vmatpush1.msra.mxu0 0.0
    %1594 = vmatprep.subr.mxu0 0.0
    %1595 = vmatpush1.msra.mxu0 0.0
    %1596 = vmatprep.subr.mxu0 0.0
    %1597 = vmatpush1.msra.mxu0 0.0
    %1598 = vmatprep.subr.mxu0 0.0
    %1599 = vmatpush1.msra.mxu0 0.0
    %1600 = vmatprep.subr.mxu0 0.0
    %1601 = vmatpush1.msra.mxu0 0.0
    %1602 = vmatprep.subr.mxu0 0.0
    %1603 = vmatpush1.msra.mxu0 0.0
    %1604 = vmatprep.subr.mxu0 0.0
    %1605 = vmatpush1.msra.mxu0 0.0
    %1606 = vmatprep.subr.mxu0 0.0
    %1607 = vmatpush1.msra.mxu0 0.0
    %1608 = vmatprep.subr.mxu0 0.0
    %1609 = vmatpush1.msra.mxu0 0.0
    %1610 = vmatprep.subr.mxu0 0.0
    %1611 = vmatpush1.msra.mxu0 0.0
    %1612 = vmatprep.subr.mxu0 0.0
    %1613 = vmatpush1.msra.mxu0 0.0
    %1614 = vmatprep.subr.mxu0 0.0
    %1615 = vmatpush1.msra.mxu0 0.0
    %1616 = vmatprep.subr.mxu0 0.0
    %1617 = vmatpush1.msra.mxu0 0.0
    %1618 = vmatprep.subr.mxu0 0.0
    %1619 = vmatpush1.msra.mxu0 0.0
    %1620 = vmatprep.subr.mxu0 0.0
    %1621 = vmatpush1.msra.mxu0 0.0
    %1622 = vmatprep.subr.mxu0 0.0
    %1623 = vmatpush1.msra.mxu0 0.0
    %1624 = vmatprep.subr.mxu0 0.0
    %1625 = vmatpush1.msra.mxu0 0.0
    %1626 = vmatprep.subr.mxu0 0.0
    %1627 = vmatpush1.msra.mxu0 0.0
    %1628 = vmatprep.subr.mxu0 0.0
    %1629 = vmatpush1.msra.mxu0 0.0
    %1630 = vmatprep.subr.mxu0 0.0
    %1631 = vmatpush1.msra.mxu0 0.0
    %1632 = vmatprep.subr.mxu0 0.0
    %1633 = vmatpush1.msra.mxu0 0.0
    %1634 = vmatprep.subr.mxu0 0.0
    %1635 = vmatpush1.msra.mxu0 0.0
    %1636 = vmatprep.mubr.f32.mxu0 0.0
    %1637 = vmatmul.mubr.f32.gmra.mrb[0].mxu0 %v1567
    %v1638 = vpop.f32.mrb[0].mxu0
    %v1639 = vadd.f32 0.0, %v1638
    %v1640 = vpop.f32.mrb[0].mxu0
    %1641 = vmatprep.mubr.f32.mxu0 0.0
    %1642 = vmatmul.mubr.f32.gmra.mrb[0].mxu0 %v1570
    %v1643 = vpop.f32.mrb[0].mxu0
    %v1644 = vadd.f32 0.0, %v1643
    %v1645 = vpop.f32.mrb[0].mxu0
    %1646 = vdwg.mxu0
    %v1648 = vsel %vm616, %v1396, 0
    %v1651 = vsel %vm616, %v1401, 0
    %1653 = vmatprep.subr.mxu0 0.0
    %1654 = vmatpush1.msra.mxu0 %v609
    %1655 = vmatprep.subr.mxu0 0.0
    %1656 = vmatpush1.msra.mxu0 0.0
    %1657 = vmatprep.subr.mxu0 0.0
    %1658 = vmatpush1.msra.mxu0 0.0
    %1659 = vmatprep.subr.mxu0 0.0
    %1660 = vmatpush1.msra.mxu0 0.0
    %1661 = vmatprep.subr.mxu0 0.0
    %1662 = vmatpush1.msra.mxu0 0.0
    %1663 = vmatprep.subr.mxu0 0.0
    %1664 = vmatpush1.msra.mxu0 0.0
    %1665 = vmatprep.subr.mxu0 0.0
    %1666 = vmatpush1.msra.mxu0 0.0
    %1667 = vmatprep.subr.mxu0 0.0
    %1668 = vmatpush1.msra.mxu0 0.0
    %1669 = vmatprep.subr.mxu0 0.0
    %1670 = vmatpush1.msra.mxu0 0.0
    %1671 = vmatprep.subr.mxu0 0.0
    %1672 = vmatpush1.msra.mxu0 0.0
    %1673 = vmatprep.subr.mxu0 0.0
    %1674 = vmatpush1.msra.mxu0 0.0
    %1675 = vmatprep.subr.mxu0 0.0
    %1676 = vmatpush1.msra.mxu0 0.0
    %1677 = vmatprep.subr.mxu0 0.0
    %1678 = vmatpush1.msra.mxu0 0.0
    %1679 = vmatprep.subr.mxu0 0.0
    %1680 = vmatpush1.msra.mxu0 0.0
    %1681 = vmatprep.subr.mxu0 0.0
    %1682 = vmatpush1.msra.mxu0 0.0
    %1683 = vmatprep.subr.mxu0 0.0
    %1684 = vmatpush1.msra.mxu0 0.0
    %1685 = vmatprep.subr.mxu0 0.0
    %1686 = vmatpush1.msra.mxu0 0.0
    %1687 = vmatprep.subr.mxu0 0.0
    %1688 = vmatpush1.msra.mxu0 0.0
    %1689 = vmatprep.subr.mxu0 0.0
    %1690 = vmatpush1.msra.mxu0 0.0
    %1691 = vmatprep.subr.mxu0 0.0
    %1692 = vmatpush1.msra.mxu0 0.0
    %1693 = vmatprep.subr.mxu0 0.0
    %1694 = vmatpush1.msra.mxu0 0.0
    %1695 = vmatprep.subr.mxu0 0.0
    %1696 = vmatpush1.msra.mxu0 0.0
    %1697 = vmatprep.subr.mxu0 0.0
    %1698 = vmatpush1.msra.mxu0 0.0
    %1699 = vmatprep.subr.mxu0 0.0
    %1700 = vmatpush1.msra.mxu0 0.0
    %1701 = vmatprep.subr.mxu0 0.0
    %1702 = vmatpush1.msra.mxu0 0.0
    %1703 = vmatprep.subr.mxu0 0.0
    %1704 = vmatpush1.msra.mxu0 0.0
    %1705 = vmatprep.subr.mxu0 0.0
    %1706 = vmatpush1.msra.mxu0 0.0
    %1707 = vmatprep.subr.mxu0 0.0
    %1708 = vmatpush1.msra.mxu0 0.0
    %1709 = vmatprep.subr.mxu0 0.0
    %1710 = vmatpush1.msra.mxu0 0.0
    %1711 = vmatprep.subr.mxu0 0.0
    %1712 = vmatpush1.msra.mxu0 0.0
    %1713 = vmatprep.subr.mxu0 0.0
    %1714 = vmatpush1.msra.mxu0 0.0
    %1715 = vmatprep.subr.mxu0 0.0
    %1716 = vmatpush1.msra.mxu0 0.0
    %1717 = vmatprep.mubr.f32.mxu0 0.0
    %1718 = vmatmul.mubr.f32.gmra.mrb[0].mxu0 %v1648
    %v1719 = vpop.f32.mrb[0].mxu0
    %v1720 = vadd.f32 0.0, %v1719
    %v1721 = vpop.f32.mrb[0].mxu0
    %1722 = vmatprep.mubr.f32.mxu0 0.0
    %1723 = vmatmul.mubr.f32.gmra.mrb[0].mxu0 %v1651
    %v1724 = vpop.f32.mrb[0].mxu0
    %v1725 = vadd.f32 0.0, %v1724
    %v1726 = vpop.f32.mrb[0].mxu0
    %1727 = vdwg.mxu0
    %v1728 = vadd.f32 %v1477, %v1558
    %v1729 = vadd.f32 %v1482, %v1563
    %v1730 = vadd.f32 %v1728, %v1639
    %v1731 = vadd.f32 %v1729, %v1644
    %v1732 = vadd.f32 %v1730, %v1720
    %v1733 = vadd.f32 %v1731, %v1725
    %v1734 = vadd.f32 %v218, %v1732
    %v1735 = vadd.f32 %v223, %v1733
    %v1736 = vld [vmem:[%s8 + $0x2] sm:$0x1]
    %v1737 = vld [vmem:[%s8 + $0x3] sm:$0x1]
    %v1738 = vsel %vm144, %v1734, 0.0
    %1739 = vadd.xlane.f32.xlu0 %v1738
    %v1740 = vpop.xlane.xlu0 %1739
    %v1741 = vsel %vm144, %v1735, 0.0
    %1742 = vadd.xlane.f32.xlu0 %v1741
    %v1743 = vpop.xlane.xlu0 %1742
    %v1744 = vmul.f32 %v1740, %v236
    %v1745 = vmul.f32 %v1743, %v236
    %v1746 = vsub.f32 %v1734, %v1744
    %v1747 = vsub.f32 %v1735, %v1745
    %v1748 = vmul.f32 %v1746, %v1746
    %v1749 = vmul.f32 %v1747, %v1747
    %v1750 = vsel %vm144, %v1748, 0.0
    %1751 = vadd.xlane.f32.xlu0 %v1750
    %v1752 = vpop.xlane.xlu0 %1751
    %v1753 = vsel %vm144, %v1749, 0.0
    %1754 = vadd.xlane.f32.xlu0 %v1753
    %v1755 = vpop.xlane.xlu0 %1754
    %v1756 = vmul.f32 %v1752, %v249
    %v1757 = vmul.f32 %v1755, %v249
    %v1758 = vrsqrt.pop %v1756
    %v1759 = vmul.f32 %v1756, %v1758
    %vm1760 = vcmp.eq.f32.partialorder %v1756, inf
    %v1761 = vsel %vm1760, %v1756, %v1759
    %vm1762 = vcmp.eq.f32.partialorder %v1756, 0.0
    %v1763 = vand.u32 %v1756, 2147483648
    %v1764 = vsel %vm1762, %v1763, %v1761
    %v1765 = vrsqrt.pop %v1757
    %v1766 = vmul.f32 %v1757, %v1765
    %vm1767 = vcmp.eq.f32.partialorder %v1757, inf
    %v1768 = vsel %vm1767, %v1757, %v1766
    %vm1769 = vcmp.eq.f32.partialorder %v1757, 0.0
    %v1770 = vand.u32 %v1757, 2147483648
    %v1771 = vsel %vm1769, %v1770, %v1768
    %v1772 = vadd.f32 %v1764, 1e-06
    %v1773 = vadd.f32 %v1771, 1e-06
    %v1774 = vrcp.pop %v1772
    %v1775 = vrcp.pop %v1773
    %v1776 = vlaneseq
    %v1777 = vshrl.u32 %v1776, 7
    %v1778 = vsub.s32 0, %v1777
    %v1779 = vrot.slane %v1736, %v1778
    %v1780 = vmul.f32 %v1779, %v1746
    %v1781 = vmul.f32 %v1779, %v1747
    %v1782 = vmul.f32 %v1780, %v1774
    %v1783 = vmul.f32 %v1781, %v1775
    %v1784 = vlaneseq
    %v1785 = vshrl.u32 %v1784, 7
    %v1786 = vsub.s32 0, %v1785
    %v1787 = vrot.slane %v1737, %v1786
    %v1788 = vadd.f32 %v1782, %v1787
    %v1789 = vadd.f32 %v1783, %v1787
    %v1790 = vld [vmem:[%s5] sm:$0xff]
    %v1791 = vld [vmem:[%s5 + $0x8] sm:$0xff]
    %v1792 = vld [vmem:[%s5 + $0x10] sm:$0xff]
    %v1793 = vld [vmem:[%s5 + $0x18] sm:$0xff]
    %v1794 = vld [vmem:[%s5 + $0x20] sm:$0xff]
    %v1795 = vld [vmem:[%s5 + $0x28] sm:$0xff]
    %v1796 = vld [vmem:[%s5 + $0x30] sm:$0xff]
    %v1797 = vld [vmem:[%s5 + $0x38] sm:$0xff]
    %v1798 = vld [vmem:[%s5 + $0x40] sm:$0xff]
    %v1799 = vld [vmem:[%s5 + $0x48] sm:$0xff]
    %v1800 = vld [vmem:[%s5 + $0x50] sm:$0xff]
    %v1801 = vld [vmem:[%s5 + $0x58] sm:$0xff]
    %v1802 = vld [vmem:[%s5 + $0x60] sm:$0xff]
    %v1803 = vld [vmem:[%s5 + $0x68] sm:$0xff]
    %v1804 = vld [vmem:[%s5 + $0x70] sm:$0xff]
    %v1805 = vld [vmem:[%s5 + $0x78] sm:$0xff]
    %1810 = vrot.lane.b32.xlu0 %v1790, 104
    %v1811 = vpop.permute.xlu0 %1810
    %1812 = vrot.lane.b32.xlu0 %v1791, 104
    %v1813 = vpop.permute.xlu0 %1812
    %1814 = vrot.lane.b32.xlu0 %v1792, 104
    %v1815 = vpop.permute.xlu0 %1814
    %1816 = vrot.lane.b32.xlu0 %v1793, 104
    %v1817 = vpop.permute.xlu0 %1816
    %v1823 = vsel %vm144, %v1788, 0
    %v1826 = vsel %vm144, %v1789, 0
    %1828 = vmatprep.subr.mxu0 0.0
    %1829 = vmatpush1.msra.mxu0 %v1811
    %1830 = vmatprep.subr.mxu0 0.0
    %1831 = vmatpush1.msra.mxu0 %v1813
    %1832 = vmatprep.subr.mxu0 0.0
    %1833 = vmatpush1.msra.mxu0 %v1815
    %1834 = vmatprep.subr.mxu0 0.0
    %1835 = vmatpush1.msra.mxu0 %v1817
    %1836 = vmatprep.subr.mxu0 0.0
    %1837 = vmatpush1.msra.mxu0 0.0
    %1838 = vmatprep.subr.mxu0 0.0
    %1839 = vmatpush1.msra.mxu0 0.0
    %1840 = vmatprep.subr.mxu0 0.0
    %1841 = vmatpush1.msra.mxu0 0.0
    %1842 = vmatprep.subr.mxu0 0.0
    %1843 = vmatpush1.msra.mxu0 0.0
    %1844 = vmatprep.subr.mxu0 0.0
    %1845 = vmatpush1.msra.mxu0 0.0
    %1846 = vmatprep.subr.mxu0 0.0
    %1847 = vmatpush1.msra.mxu0 0.0
    %1848 = vmatprep.subr.mxu0 0.0
    %1849 = vmatpush1.msra.mxu0 0.0
    %1850 = vmatprep.subr.mxu0 0.0
    %1851 = vmatpush1.msra.mxu0 0.0
    %1852 = vmatprep.subr.mxu0 0.0
    %1853 = vmatpush1.msra.mxu0 0.0
    %1854 = vmatprep.subr.mxu0 0.0
    %1855 = vmatpush1.msra.mxu0 0.0
    %1856 = vmatprep.subr.mxu0 0.0
    %1857 = vmatpush1.msra.mxu0 0.0
    %1858 = vmatprep.subr.mxu0 0.0
    %1859 = vmatpush1.msra.mxu0 0.0
    %1860 = vmatprep.subr.mxu0 0.0
    %1861 = vmatpush1.msra.mxu0 0.0
    %1862 = vmatprep.subr.mxu0 0.0
    %1863 = vmatpush1.msra.mxu0 0.0
    %1864 = vmatprep.subr.mxu0 0.0
    %1865 = vmatpush1.msra.mxu0 0.0
    %1866 = vmatprep.subr.mxu0 0.0
    %1867 = vmatpush1.msra.mxu0 0.0
    %1868 = vmatprep.subr.mxu0 0.0
    %1869 = vmatpush1.msra.mxu0 0.0
    %1870 = vmatprep.subr.mxu0 0.0
    %1871 = vmatpush1.msra.mxu0 0.0
    %1872 = vmatprep.subr.mxu0 0.0
    %1873 = vmatpush1.msra.mxu0 0.0
    %1874 = vmatprep.subr.mxu0 0.0
    %1875 = vmatpush1.msra.mxu0 0.0
    %1876 = vmatprep.subr.mxu0 0.0
    %1877 = vmatpush1.msra.mxu0 0.0
    %1878 = vmatprep.subr.mxu0 0.0
    %1879 = vmatpush1.msra.mxu0 0.0
    %1880 = vmatprep.subr.mxu0 0.0
    %1881 = vmatpush1.msra.mxu0 0.0
    %1882 = vmatprep.subr.mxu0 0.0
    %1883 = vmatpush1.msra.mxu0 0.0
    %1884 = vmatprep.subr.mxu0 0.0
    %1885 = vmatpush1.msra.mxu0 0.0
    %1886 = vmatprep.subr.mxu0 0.0
    %1887 = vmatpush1.msra.mxu0 0.0
    %1888 = vmatprep.subr.mxu0 0.0
    %1889 = vmatpush1.msra.mxu0 0.0
    %1890 = vmatprep.subr.mxu0 0.0
    %1891 = vmatpush1.msra.mxu0 0.0
    %1892 = vmatprep.mubr.f32.mxu0 0.0
    %1893 = vmatmul.mubr.f32.gmra.mrb[0].mxu0 %v1823
    %v1894 = vpop.f32.mrb[0].mxu0
    %v1895 = vadd.f32 0.0, %v1894
    %v1896 = vpop.f32.mrb[0].mxu0
    %1897 = vmatprep.mubr.f32.mxu0 0.0
    %1898 = vmatmul.mubr.f32.gmra.mrb[0].mxu0 %v1826
    %v1899 = vpop.f32.mrb[0].mxu0
    %v1900 = vadd.f32 0.0, %v1899
    %v1901 = vpop.f32.mrb[0].mxu0
    %1902 = vdwg.mxu0
    %1907 = vrot.lane.b32.xlu0 %v1794, 104
    %v1908 = vpop.permute.xlu0 %1907
    %1909 = vrot.lane.b32.xlu0 %v1795, 104
    %v1910 = vpop.permute.xlu0 %1909
    %1911 = vrot.lane.b32.xlu0 %v1796, 104
    %v1912 = vpop.permute.xlu0 %1911
    %1913 = vrot.lane.b32.xlu0 %v1797, 104
    %v1914 = vpop.permute.xlu0 %1913
    %1919 = vmatprep.subr.mxu0 0.0
    %1920 = vmatpush1.msra.mxu0 %v1908
    %1921 = vmatprep.subr.mxu0 0.0
    %1922 = vmatpush1.msra.mxu0 %v1910
    %1923 = vmatprep.subr.mxu0 0.0
    %1924 = vmatpush1.msra.mxu0 %v1912
    %1925 = vmatprep.subr.mxu0 0.0
    %1926 = vmatpush1.msra.mxu0 %v1914
    %1927 = vmatprep.subr.mxu0 0.0
    %1928 = vmatpush1.msra.mxu0 0.0
    %1929 = vmatprep.subr.mxu0 0.0
    %1930 = vmatpush1.msra.mxu0 0.0
    %1931 = vmatprep.subr.mxu0 0.0
    %1932 = vmatpush1.msra.mxu0 0.0
    %1933 = vmatprep.subr.mxu0 0.0
    %1934 = vmatpush1.msra.mxu0 0.0
    %1935 = vmatprep.subr.mxu0 0.0
    %1936 = vmatpush1.msra.mxu0 0.0
    %1937 = vmatprep.subr.mxu0 0.0
    %1938 = vmatpush1.msra.mxu0 0.0
    %1939 = vmatprep.subr.mxu0 0.0
    %1940 = vmatpush1.msra.mxu0 0.0
    %1941 = vmatprep.subr.mxu0 0.0
    %1942 = vmatpush1.msra.mxu0 0.0
    %1943 = vmatprep.subr.mxu0 0.0
    %1944 = vmatpush1.msra.mxu0 0.0
    %1945 = vmatprep.subr.mxu0 0.0
    %1946 = vmatpush1.msra.mxu0 0.0
    %1947 = vmatprep.subr.mxu0 0.0
    %1948 = vmatpush1.msra.mxu0 0.0
    %1949 = vmatprep.subr.mxu0 0.0
    %1950 = vmatpush1.msra.mxu0 0.0
    %1951 = vmatprep.subr.mxu0 0.0
    %1952 = vmatpush1.msra.mxu0 0.0
    %1953 = vmatprep.subr.mxu0 0.0
    %1954 = vmatpush1.msra.mxu0 0.0
    %1955 = vmatprep.subr.mxu0 0.0
    %1956 = vmatpush1.msra.mxu0 0.0
    %1957 = vmatprep.subr.mxu0 0.0
    %1958 = vmatpush1.msra.mxu0 0.0
    %1959 = vmatprep.subr.mxu0 0.0
    %1960 = vmatpush1.msra.mxu0 0.0
    %1961 = vmatprep.subr.mxu0 0.0
    %1962 = vmatpush1.msra.mxu0 0.0
    %1963 = vmatprep.subr.mxu0 0.0
    %1964 = vmatpush1.msra.mxu0 0.0
    %1965 = vmatprep.subr.mxu0 0.0
    %1966 = vmatpush1.msra.mxu0 0.0
    %1967 = vmatprep.subr.mxu0 0.0
    %1968 = vmatpush1.msra.mxu0 0.0
    %1969 = vmatprep.subr.mxu0 0.0
    %1970 = vmatpush1.msra.mxu0 0.0
    %1971 = vmatprep.subr.mxu0 0.0
    %1972 = vmatpush1.msra.mxu0 0.0
    %1973 = vmatprep.subr.mxu0 0.0
    %1974 = vmatpush1.msra.mxu0 0.0
    %1975 = vmatprep.subr.mxu0 0.0
    %1976 = vmatpush1.msra.mxu0 0.0
    %1977 = vmatprep.subr.mxu0 0.0
    %1978 = vmatpush1.msra.mxu0 0.0
    %1979 = vmatprep.subr.mxu0 0.0
    %1980 = vmatpush1.msra.mxu0 0.0
    %1981 = vmatprep.subr.mxu0 0.0
    %1982 = vmatpush1.msra.mxu0 0.0
    %1983 = vmatprep.mubr.f32.mxu0 0.0
    %1984 = vmatmul.mubr.f32.gmra.mrb[0].mxu0 %v1823
    %v1985 = vpop.f32.mrb[0].mxu0
    %v1986 = vadd.f32 0.0, %v1985
    %v1987 = vpop.f32.mrb[0].mxu0
    %1988 = vmatprep.mubr.f32.mxu0 0.0
    %1989 = vmatmul.mubr.f32.gmra.mrb[0].mxu0 %v1826
    %v1990 = vpop.f32.mrb[0].mxu0
    %v1991 = vadd.f32 0.0, %v1990
    %v1992 = vpop.f32.mrb[0].mxu0
    %1993 = vdwg.mxu0
    %1998 = vrot.lane.b32.xlu0 %v1798, 104
    %v1999 = vpop.permute.xlu0 %1998
    %2000 = vrot.lane.b32.xlu0 %v1799, 104
    %v2001 = vpop.permute.xlu0 %2000
    %2002 = vrot.lane.b32.xlu0 %v1800, 104
    %v2003 = vpop.permute.xlu0 %2002
    %2004 = vrot.lane.b32.xlu0 %v1801, 104
    %v2005 = vpop.permute.xlu0 %2004
    %2010 = vmatprep.subr.mxu0 0.0
    %2011 = vmatpush1.msra.mxu0 %v1999
    %2012 = vmatprep.subr.mxu0 0.0
    %2013 = vmatpush1.msra.mxu0 %v2001
    %2014 = vmatprep.subr.mxu0 0.0
    %2015 = vmatpush1.msra.mxu0 %v2003
    %2016 = vmatprep.subr.mxu0 0.0
    %2017 = vmatpush1.msra.mxu0 %v2005
    %2018 = vmatprep.subr.mxu0 0.0
    %2019 = vmatpush1.msra.mxu0 0.0
    %2020 = vmatprep.subr.mxu0 0.0
    %2021 = vmatpush1.msra.mxu0 0.0
    %2022 = vmatprep.subr.mxu0 0.0
    %2023 = vmatpush1.msra.mxu0 0.0
    %2024 = vmatprep.subr.mxu0 0.0
    %2025 = vmatpush1.msra.mxu0 0.0
    %2026 = vmatprep.subr.mxu0 0.0
    %2027 = vmatpush1.msra.mxu0 0.0
    %2028 = vmatprep.subr.mxu0 0.0
    %2029 = vmatpush1.msra.mxu0 0.0
    %2030 = vmatprep.subr.mxu0 0.0
    %2031 = vmatpush1.msra.mxu0 0.0
    %2032 = vmatprep.subr.mxu0 0.0
    %2033 = vmatpush1.msra.mxu0 0.0
    %2034 = vmatprep.subr.mxu0 0.0
    %2035 = vmatpush1.msra.mxu0 0.0
    %2036 = vmatprep.subr.mxu0 0.0
    %2037 = vmatpush1.msra.mxu0 0.0
    %2038 = vmatprep.subr.mxu0 0.0
    %2039 = vmatpush1.msra.mxu0 0.0
    %2040 = vmatprep.subr.mxu0 0.0
    %2041 = vmatpush1.msra.mxu0 0.0
    %2042 = vmatprep.subr.mxu0 0.0
    %2043 = vmatpush1.msra.mxu0 0.0
    %2044 = vmatprep.subr.mxu0 0.0
    %2045 = vmatpush1.msra.mxu0 0.0
    %2046 = vmatprep.subr.mxu0 0.0
    %2047 = vmatpush1.msra.mxu0 0.0
    %2048 = vmatprep.subr.mxu0 0.0
    %2049 = vmatpush1.msra.mxu0 0.0
    %2050 = vmatprep.subr.mxu0 0.0
    %2051 = vmatpush1.msra.mxu0 0.0
    %2052 = vmatprep.subr.mxu0 0.0
    %2053 = vmatpush1.msra.mxu0 0.0
    %2054 = vmatprep.subr.mxu0 0.0
    %2055 = vmatpush1.msra.mxu0 0.0
    %2056 = vmatprep.subr.mxu0 0.0
    %2057 = vmatpush1.msra.mxu0 0.0
    %2058 = vmatprep.subr.mxu0 0.0
    %2059 = vmatpush1.msra.mxu0 0.0
    %2060 = vmatprep.subr.mxu0 0.0
    %2061 = vmatpush1.msra.mxu0 0.0
    %2062 = vmatprep.subr.mxu0 0.0
    %2063 = vmatpush1.msra.mxu0 0.0
    %2064 = vmatprep.subr.mxu0 0.0
    %2065 = vmatpush1.msra.mxu0 0.0
    %2066 = vmatprep.subr.mxu0 0.0
    %2067 = vmatpush1.msra.mxu0 0.0
    %2068 = vmatprep.subr.mxu0 0.0
    %2069 = vmatpush1.msra.mxu0 0.0
    %2070 = vmatprep.subr.mxu0 0.0
    %2071 = vmatpush1.msra.mxu0 0.0
    %2072 = vmatprep.subr.mxu0 0.0
    %2073 = vmatpush1.msra.mxu0 0.0
    %2074 = vmatprep.mubr.f32.mxu0 0.0
    %2075 = vmatmul.mubr.f32.gmra.mrb[0].mxu0 %v1823
    %v2076 = vpop.f32.mrb[0].mxu0
    %v2077 = vadd.f32 0.0, %v2076
    %v2078 = vpop.f32.mrb[0].mxu0
    %2079 = vmatprep.mubr.f32.mxu0 0.0
    %2080 = vmatmul.mubr.f32.gmra.mrb[0].mxu0 %v1826
    %v2081 = vpop.f32.mrb[0].mxu0
    %v2082 = vadd.f32 0.0, %v2081
    %v2083 = vpop.f32.mrb[0].mxu0
    %2084 = vdwg.mxu0
    %2089 = vrot.lane.b32.xlu0 %v1802, 104
    %v2090 = vpop.permute.xlu0 %2089
    %2091 = vrot.lane.b32.xlu0 %v1803, 104
    %v2092 = vpop.permute.xlu0 %2091
    %2093 = vrot.lane.b32.xlu0 %v1804, 104
    %v2094 = vpop.permute.xlu0 %2093
    %2095 = vrot.lane.b32.xlu0 %v1805, 104
    %v2096 = vpop.permute.xlu0 %2095
    %2101 = vmatprep.subr.mxu0 0.0
    %2102 = vmatpush1.msra.mxu0 %v2090
    %2103 = vmatprep.subr.mxu0 0.0
    %2104 = vmatpush1.msra.mxu0 %v2092
    %2105 = vmatprep.subr.mxu0 0.0
    %2106 = vmatpush1.msra.mxu0 %v2094
    %2107 = vmatprep.subr.mxu0 0.0
    %2108 = vmatpush1.msra.mxu0 %v2096
    %2109 = vmatprep.subr.mxu0 0.0
    %2110 = vmatpush1.msra.mxu0 0.0
    %2111 = vmatprep.subr.mxu0 0.0
    %2112 = vmatpush1.msra.mxu0 0.0
    %2113 = vmatprep.subr.mxu0 0.0
    %2114 = vmatpush1.msra.mxu0 0.0
    %2115 = vmatprep.subr.mxu0 0.0
    %2116 = vmatpush1.msra.mxu0 0.0
    %2117 = vmatprep.subr.mxu0 0.0
    %2118 = vmatpush1.msra.mxu0 0.0
    %2119 = vmatprep.subr.mxu0 0.0
    %2120 = vmatpush1.msra.mxu0 0.0
    %2121 = vmatprep.subr.mxu0 0.0
    %2122 = vmatpush1.msra.mxu0 0.0
    %2123 = vmatprep.subr.mxu0 0.0
    %2124 = vmatpush1.msra.mxu0 0.0
    %2125 = vmatprep.subr.mxu0 0.0
    %2126 = vmatpush1.msra.mxu0 0.0
    %2127 = vmatprep.subr.mxu0 0.0
    %2128 = vmatpush1.msra.mxu0 0.0
    %2129 = vmatprep.subr.mxu0 0.0
    %2130 = vmatpush1.msra.mxu0 0.0
    %2131 = vmatprep.subr.mxu0 0.0
    %2132 = vmatpush1.msra.mxu0 0.0
    %2133 = vmatprep.subr.mxu0 0.0
    %2134 = vmatpush1.msra.mxu0 0.0
    %2135 = vmatprep.subr.mxu0 0.0
    %2136 = vmatpush1.msra.mxu0 0.0
    %2137 = vmatprep.subr.mxu0 0.0
    %2138 = vmatpush1.msra.mxu0 0.0
    %2139 = vmatprep.subr.mxu0 0.0
    %2140 = vmatpush1.msra.mxu0 0.0
    %2141 = vmatprep.subr.mxu0 0.0
    %2142 = vmatpush1.msra.mxu0 0.0
    %2143 = vmatprep.subr.mxu0 0.0
    %2144 = vmatpush1.msra.mxu0 0.0
    %2145 = vmatprep.subr.mxu0 0.0
    %2146 = vmatpush1.msra.mxu0 0.0
    %2147 = vmatprep.subr.mxu0 0.0
    %2148 = vmatpush1.msra.mxu0 0.0
    %2149 = vmatprep.subr.mxu0 0.0
    %2150 = vmatpush1.msra.mxu0 0.0
    %2151 = vmatprep.subr.mxu0 0.0
    %2152 = vmatpush1.msra.mxu0 0.0
    %2153 = vmatprep.subr.mxu0 0.0
    %2154 = vmatpush1.msra.mxu0 0.0
    %2155 = vmatprep.subr.mxu0 0.0
    %2156 = vmatpush1.msra.mxu0 0.0
    %2157 = vmatprep.subr.mxu0 0.0
    %2158 = vmatpush1.msra.mxu0 0.0
    %2159 = vmatprep.subr.mxu0 0.0
    %2160 = vmatpush1.msra.mxu0 0.0
    %2161 = vmatprep.subr.mxu0 0.0
    %2162 = vmatpush1.msra.mxu0 0.0
    %2163 = vmatprep.subr.mxu0 0.0
    %2164 = vmatpush1.msra.mxu0 0.0
    %2165 = vmatprep.mubr.f32.mxu0 0.0
    %2166 = vmatmul.mubr.f32.gmra.mrb[0].mxu0 %v1823
    %v2167 = vpop.f32.mrb[0].mxu0
    %v2168 = vadd.f32 0.0, %v2167
    %v2169 = vpop.f32.mrb[0].mxu0
    %2170 = vmatprep.mubr.f32.mxu0 0.0
    %2171 = vmatmul.mubr.f32.gmra.mrb[0].mxu0 %v1826
    %v2172 = vpop.f32.mrb[0].mxu0
    %v2173 = vadd.f32 0.0, %v2172
    %v2174 = vpop.f32.mrb[0].mxu0
    %2175 = vdwg.mxu0
    %v2176 = vld [vmem:[%s5] sm:$0xff]
    %v2177 = vld [vmem:[%s5 + $0x8] sm:$0xff]
    %v2178 = vld [vmem:[%s5 + $0x10] sm:$0xff]
    %v2179 = vld [vmem:[%s5 + $0x18] sm:$0xff]
    %v2180 = vld [vmem:[%s5 + $0x20] sm:$0xff]
    %v2181 = vld [vmem:[%s5 + $0x28] sm:$0xff]
    %v2182 = vld [vmem:[%s5 + $0x30] sm:$0xff]
    %v2183 = vld [vmem:[%s5 + $0x38] sm:$0xff]
    %v2184 = vld [vmem:[%s5 + $0x40] sm:$0xff]
    %v2185 = vld [vmem:[%s5 + $0x48] sm:$0xff]
    %v2186 = vld [vmem:[%s5 + $0x50] sm:$0xff]
    %v2187 = vld [vmem:[%s5 + $0x58] sm:$0xff]
    %v2188 = vld [vmem:[%s5 + $0x60] sm:$0xff]
    %v2189 = vld [vmem:[%s5 + $0x68] sm:$0xff]
    %v2190 = vld [vmem:[%s5 + $0x70] sm:$0xff]
    %v2191 = vld [vmem:[%s5 + $0x78] sm:$0xff]
    %2196 = vrot.lane.b32.xlu0 %v2176, 96
    %v2197 = vpop.permute.xlu0 %2196
    %2198 = vrot.lane.b32.xlu0 %v2177, 96
    %v2199 = vpop.permute.xlu0 %2198
    %2200 = vrot.lane.b32.xlu0 %v2178, 96
    %v2201 = vpop.permute.xlu0 %2200
    %2202 = vrot.lane.b32.xlu0 %v2179, 96
    %v2203 = vpop.permute.xlu0 %2202
    %v2209 = vsel %vm144, %v226, 0
    %v2212 = vsel %vm144, %v227, 0
    %2214 = vmatprep.subr.mxu0 0.0
    %2215 = vmatpush1.msra.mxu0 %v2197
    %2216 = vmatprep.subr.mxu0 0.0
    %2217 = vmatpush1.msra.mxu0 %v2199
    %2218 = vmatprep.subr.mxu0 0.0
    %2219 = vmatpush1.msra.mxu0 %v2201
    %2220 = vmatprep.subr.mxu0 0.0
    %2221 = vmatpush1.msra.mxu0 %v2203
    %2222 = vmatprep.subr.mxu0 0.0
    %2223 = vmatpush1.msra.mxu0 0.0
    %2224 = vmatprep.subr.mxu0 0.0
    %2225 = vmatpush1.msra.mxu0 0.0
    %2226 = vmatprep.subr.mxu0 0.0
    %2227 = vmatpush1.msra.mxu0 0.0
    %2228 = vmatprep.subr.mxu0 0.0
    %2229 = vmatpush1.msra.mxu0 0.0
    %2230 = vmatprep.subr.mxu0 0.0
    %2231 = vmatpush1.msra.mxu0 0.0
    %2232 = vmatprep.subr.mxu0 0.0
    %2233 = vmatpush1.msra.mxu0 0.0
    %2234 = vmatprep.subr.mxu0 0.0
    %2235 = vmatpush1.msra.mxu0 0.0
    %2236 = vmatprep.subr.mxu0 0.0
    %2237 = vmatpush1.msra.mxu0 0.0
    %2238 = vmatprep.subr.mxu0 0.0
    %2239 = vmatpush1.msra.mxu0 0.0
    %2240 = vmatprep.subr.mxu0 0.0
    %2241 = vmatpush1.msra.mxu0 0.0
    %2242 = vmatprep.subr.mxu0 0.0
    %2243 = vmatpush1.msra.mxu0 0.0
    %2244 = vmatprep.subr.mxu0 0.0
    %2245 = vmatpush1.msra.mxu0 0.0
    %2246 = vmatprep.subr.mxu0 0.0
    %2247 = vmatpush1.msra.mxu0 0.0
    %2248 = vmatprep.subr.mxu0 0.0
    %2249 = vmatpush1.msra.mxu0 0.0
    %2250 = vmatprep.subr.mxu0 0.0
    %2251 = vmatpush1.msra.mxu0 0.0
    %2252 = vmatprep.subr.mxu0 0.0
    %2253 = vmatpush1.msra.mxu0 0.0
    %2254 = vmatprep.subr.mxu0 0.0
    %2255 = vmatpush1.msra.mxu0 0.0
    %2256 = vmatprep.subr.mxu0 0.0
    %2257 = vmatpush1.msra.mxu0 0.0
    %2258 = vmatprep.subr.mxu0 0.0
    %2259 = vmatpush1.msra.mxu0 0.0
    %2260 = vmatprep.subr.mxu0 0.0
    %2261 = vmatpush1.msra.mxu0 0.0
    %2262 = vmatprep.subr.mxu0 0.0
    %2263 = vmatpush1.msra.mxu0 0.0
    %2264 = vmatprep.subr.mxu0 0.0
    %2265 = vmatpush1.msra.mxu0 0.0
    %2266 = vmatprep.subr.mxu0 0.0
    %2267 = vmatpush1.msra.mxu0 0.0
    %2268 = vmatprep.subr.mxu0 0.0
    %2269 = vmatpush1.msra.mxu0 0.0
    %2270 = vmatprep.subr.mxu0 0.0
    %2271 = vmatpush1.msra.mxu0 0.0
    %2272 = vmatprep.subr.mxu0 0.0
    %2273 = vmatpush1.msra.mxu0 0.0
    %2274 = vmatprep.subr.mxu0 0.0
    %2275 = vmatpush1.msra.mxu0 0.0
    %2276 = vmatprep.subr.mxu0 0.0
    %2277 = vmatpush1.msra.mxu0 0.0
    %2278 = vmatprep.mubr.f32.mxu0 0.0
    %2279 = vmatmul.mubr.f32.gmra.mrb[0].mxu0 %v2209
    %v2280 = vpop.f32.mrb[0].mxu0
    %v2281 = vadd.f32 0.0, %v2280
    %v2282 = vpop.f32.mrb[0].mxu0
    %2283 = vmatprep.mubr.f32.mxu0 0.0
    %2284 = vmatmul.mubr.f32.gmra.mrb[0].mxu0 %v2212
    %v2285 = vpop.f32.mrb[0].mxu0
    %v2286 = vadd.f32 0.0, %v2285
    %v2287 = vpop.f32.mrb[0].mxu0
    %2288 = vdwg.mxu0
    %2293 = vrot.lane.b32.xlu0 %v2180, 96
    %v2294 = vpop.permute.xlu0 %2293
    %2295 = vrot.lane.b32.xlu0 %v2181, 96
    %v2296 = vpop.permute.xlu0 %2295
    %2297 = vrot.lane.b32.xlu0 %v2182, 96
    %v2298 = vpop.permute.xlu0 %2297
    %2299 = vrot.lane.b32.xlu0 %v2183, 96
    %v2300 = vpop.permute.xlu0 %2299
    %2305 = vmatprep.subr.mxu0 0.0
    %2306 = vmatpush1.msra.mxu0 %v2294
    %2307 = vmatprep.subr.mxu0 0.0
    %2308 = vmatpush1.msra.mxu0 %v2296
    %2309 = vmatprep.subr.mxu0 0.0
    %2310 = vmatpush1.msra.mxu0 %v2298
    %2311 = vmatprep.subr.mxu0 0.0
    %2312 = vmatpush1.msra.mxu0 %v2300
    %2313 = vmatprep.subr.mxu0 0.0
    %2314 = vmatpush1.msra.mxu0 0.0
    %2315 = vmatprep.subr.mxu0 0.0
    %2316 = vmatpush1.msra.mxu0 0.0
    %2317 = vmatprep.subr.mxu0 0.0
    %2318 = vmatpush1.msra.mxu0 0.0
    %2319 = vmatprep.subr.mxu0 0.0
    %2320 = vmatpush1.msra.mxu0 0.0
    %2321 = vmatprep.subr.mxu0 0.0
    %2322 = vmatpush1.msra.mxu0 0.0
    %2323 = vmatprep.subr.mxu0 0.0
    %2324 = vmatpush1.msra.mxu0 0.0
    %2325 = vmatprep.subr.mxu0 0.0
    %2326 = vmatpush1.msra.mxu0 0.0
    %2327 = vmatprep.subr.mxu0 0.0
    %2328 = vmatpush1.msra.mxu0 0.0
    %2329 = vmatprep.subr.mxu0 0.0
    %2330 = vmatpush1.msra.mxu0 0.0
    %2331 = vmatprep.subr.mxu0 0.0
    %2332 = vmatpush1.msra.mxu0 0.0
    %2333 = vmatprep.subr.mxu0 0.0
    %2334 = vmatpush1.msra.mxu0 0.0
    %2335 = vmatprep.subr.mxu0 0.0
    %2336 = vmatpush1.msra.mxu0 0.0
    %2337 = vmatprep.subr.mxu0 0.0
    %2338 = vmatpush1.msra.mxu0 0.0
    %2339 = vmatprep.subr.mxu0 0.0
    %2340 = vmatpush1.msra.mxu0 0.0
    %2341 = vmatprep.subr.mxu0 0.0
    %2342 = vmatpush1.msra.mxu0 0.0
    %2343 = vmatprep.subr.mxu0 0.0
    %2344 = vmatpush1.msra.mxu0 0.0
    %2345 = vmatprep.subr.mxu0 0.0
    %2346 = vmatpush1.msra.mxu0 0.0
    %2347 = vmatprep.subr.mxu0 0.0
    %2348 = vmatpush1.msra.mxu0 0.0
    %2349 = vmatprep.subr.mxu0 0.0
    %2350 = vmatpush1.msra.mxu0 0.0
    %2351 = vmatprep.subr.mxu0 0.0
    %2352 = vmatpush1.msra.mxu0 0.0
    %2353 = vmatprep.subr.mxu0 0.0
    %2354 = vmatpush1.msra.mxu0 0.0
    %2355 = vmatprep.subr.mxu0 0.0
    %2356 = vmatpush1.msra.mxu0 0.0
    %2357 = vmatprep.subr.mxu0 0.0
    %2358 = vmatpush1.msra.mxu0 0.0
    %2359 = vmatprep.subr.mxu0 0.0
    %2360 = vmatpush1.msra.mxu0 0.0
    %2361 = vmatprep.subr.mxu0 0.0
    %2362 = vmatpush1.msra.mxu0 0.0
    %2363 = vmatprep.subr.mxu0 0.0
    %2364 = vmatpush1.msra.mxu0 0.0
    %2365 = vmatprep.subr.mxu0 0.0
    %2366 = vmatpush1.msra.mxu0 0.0
    %2367 = vmatprep.subr.mxu0 0.0
    %2368 = vmatpush1.msra.mxu0 0.0
    %2369 = vmatprep.mubr.f32.mxu0 0.0
    %2370 = vmatmul.mubr.f32.gmra.mrb[0].mxu0 %v2209
    %v2371 = vpop.f32.mrb[0].mxu0
    %v2372 = vadd.f32 0.0, %v2371
    %v2373 = vpop.f32.mrb[0].mxu0
    %2374 = vmatprep.mubr.f32.mxu0 0.0
    %2375 = vmatmul.mubr.f32.gmra.mrb[0].mxu0 %v2212
    %v2376 = vpop.f32.mrb[0].mxu0
    %v2377 = vadd.f32 0.0, %v2376
    %v2378 = vpop.f32.mrb[0].mxu0
    %2379 = vdwg.mxu0
    %2384 = vrot.lane.b32.xlu0 %v2184, 96
    %v2385 = vpop.permute.xlu0 %2384
    %2386 = vrot.lane.b32.xlu0 %v2185, 96
    %v2387 = vpop.permute.xlu0 %2386
    %2388 = vrot.lane.b32.xlu0 %v2186, 96
    %v2389 = vpop.permute.xlu0 %2388
    %2390 = vrot.lane.b32.xlu0 %v2187, 96
    %v2391 = vpop.permute.xlu0 %2390
    %2396 = vmatprep.subr.mxu0 0.0
    %2397 = vmatpush1.msra.mxu0 %v2385
    %2398 = vmatprep.subr.mxu0 0.0
    %2399 = vmatpush1.msra.mxu0 %v2387
    %2400 = vmatprep.subr.mxu0 0.0
    %2401 = vmatpush1.msra.mxu0 %v2389
    %2402 = vmatprep.subr.mxu0 0.0
    %2403 = vmatpush1.msra.mxu0 %v2391
    %2404 = vmatprep.subr.mxu0 0.0
    %2405 = vmatpush1.msra.mxu0 0.0
    %2406 = vmatprep.subr.mxu0 0.0
    %2407 = vmatpush1.msra.mxu0 0.0
    %2408 = vmatprep.subr.mxu0 0.0
    %2409 = vmatpush1.msra.mxu0 0.0
    %2410 = vmatprep.subr.mxu0 0.0
    %2411 = vmatpush1.msra.mxu0 0.0
    %2412 = vmatprep.subr.mxu0 0.0
    %2413 = vmatpush1.msra.mxu0 0.0
    %2414 = vmatprep.subr.mxu0 0.0
    %2415 = vmatpush1.msra.mxu0 0.0
    %2416 = vmatprep.subr.mxu0 0.0
    %2417 = vmatpush1.msra.mxu0 0.0
    %2418 = vmatprep.subr.mxu0 0.0
    %2419 = vmatpush1.msra.mxu0 0.0
    %2420 = vmatprep.subr.mxu0 0.0
    %2421 = vmatpush1.msra.mxu0 0.0
    %2422 = vmatprep.subr.mxu0 0.0
    %2423 = vmatpush1.msra.mxu0 0.0
    %2424 = vmatprep.subr.mxu0 0.0
    %2425 = vmatpush1.msra.mxu0 0.0
    %2426 = vmatprep.subr.mxu0 0.0
    %2427 = vmatpush1.msra.mxu0 0.0
    %2428 = vmatprep.subr.mxu0 0.0
    %2429 = vmatpush1.msra.mxu0 0.0
    %2430 = vmatprep.subr.mxu0 0.0
    %2431 = vmatpush1.msra.mxu0 0.0
    %2432 = vmatprep.subr.mxu0 0.0
    %2433 = vmatpush1.msra.mxu0 0.0
    %2434 = vmatprep.subr.mxu0 0.0
    %2435 = vmatpush1.msra.mxu0 0.0
    %2436 = vmatprep.subr.mxu0 0.0
    %2437 = vmatpush1.msra.mxu0 0.0
    %2438 = vmatprep.subr.mxu0 0.0
    %2439 = vmatpush1.msra.mxu0 0.0
    %2440 = vmatprep.subr.mxu0 0.0
    %2441 = vmatpush1.msra.mxu0 0.0
    %2442 = vmatprep.subr.mxu0 0.0
    %2443 = vmatpush1.msra.mxu0 0.0
    %2444 = vmatprep.subr.mxu0 0.0
    %2445 = vmatpush1.msra.mxu0 0.0
    %2446 = vmatprep.subr.mxu0 0.0
    %2447 = vmatpush1.msra.mxu0 0.0
    %2448 = vmatprep.subr.mxu0 0.0
    %2449 = vmatpush1.msra.mxu0 0.0
    %2450 = vmatprep.subr.mxu0 0.0
    %2451 = vmatpush1.msra.mxu0 0.0
    %2452 = vmatprep.subr.mxu0 0.0
    %2453 = vmatpush1.msra.mxu0 0.0
    %2454 = vmatprep.subr.mxu0 0.0
    %2455 = vmatpush1.msra.mxu0 0.0
    %2456 = vmatprep.subr.mxu0 0.0
    %2457 = vmatpush1.msra.mxu0 0.0
    %2458 = vmatprep.subr.mxu0 0.0
    %2459 = vmatpush1.msra.mxu0 0.0
    %2460 = vmatprep.mubr.f32.mxu0 0.0
    %2461 = vmatmul.mubr.f32.gmra.mrb[0].mxu0 %v2209
    %v2462 = vpop.f32.mrb[0].mxu0
    %v2463 = vadd.f32 0.0, %v2462
    %v2464 = vpop.f32.mrb[0].mxu0
    %2465 = vmatprep.mubr.f32.mxu0 0.0
    %2466 = vmatmul.mubr.f32.gmra.mrb[0].mxu0 %v2212
    %v2467 = vpop.f32.mrb[0].mxu0
    %v2468 = vadd.f32 0.0, %v2467
    %v2469 = vpop.f32.mrb[0].mxu0
    %2470 = vdwg.mxu0
    %2475 = vrot.lane.b32.xlu0 %v2188, 96
    %v2476 = vpop.permute.xlu0 %2475
    %2477 = vrot.lane.b32.xlu0 %v2189, 96
    %v2478 = vpop.permute.xlu0 %2477
    %2479 = vrot.lane.b32.xlu0 %v2190, 96
    %v2480 = vpop.permute.xlu0 %2479
    %2481 = vrot.lane.b32.xlu0 %v2191, 96
    %v2482 = vpop.permute.xlu0 %2481
    %2487 = vmatprep.subr.mxu0 0.0
    %2488 = vmatpush1.msra.mxu0 %v2476
    %2489 = vmatprep.subr.mxu0 0.0
    %2490 = vmatpush1.msra.mxu0 %v2478
    %2491 = vmatprep.subr.mxu0 0.0
    %2492 = vmatpush1.msra.mxu0 %v2480
    %2493 = vmatprep.subr.mxu0 0.0
    %2494 = vmatpush1.msra.mxu0 %v2482
    %2495 = vmatprep.subr.mxu0 0.0
    %2496 = vmatpush1.msra.mxu0 0.0
    %2497 = vmatprep.subr.mxu0 0.0
    %2498 = vmatpush1.msra.mxu0 0.0
    %2499 = vmatprep.subr.mxu0 0.0
    %2500 = vmatpush1.msra.mxu0 0.0
    %2501 = vmatprep.subr.mxu0 0.0
    %2502 = vmatpush1.msra.mxu0 0.0
    %2503 = vmatprep.subr.mxu0 0.0
    %2504 = vmatpush1.msra.mxu0 0.0
    %2505 = vmatprep.subr.mxu0 0.0
    %2506 = vmatpush1.msra.mxu0 0.0
    %2507 = vmatprep.subr.mxu0 0.0
    %2508 = vmatpush1.msra.mxu0 0.0
    %2509 = vmatprep.subr.mxu0 0.0
    %2510 = vmatpush1.msra.mxu0 0.0
    %2511 = vmatprep.subr.mxu0 0.0
    %2512 = vmatpush1.msra.mxu0 0.0
    %2513 = vmatprep.subr.mxu0 0.0
    %2514 = vmatpush1.msra.mxu0 0.0
    %2515 = vmatprep.subr.mxu0 0.0
    %2516 = vmatpush1.msra.mxu0 0.0
    %2517 = vmatprep.subr.mxu0 0.0
    %2518 = vmatpush1.msra.mxu0 0.0
    %2519 = vmatprep.subr.mxu0 0.0
    %2520 = vmatpush1.msra.mxu0 0.0
    %2521 = vmatprep.subr.mxu0 0.0
    %2522 = vmatpush1.msra.mxu0 0.0
    %2523 = vmatprep.subr.mxu0 0.0
    %2524 = vmatpush1.msra.mxu0 0.0
    %2525 = vmatprep.subr.mxu0 0.0
    %2526 = vmatpush1.msra.mxu0 0.0
    %2527 = vmatprep.subr.mxu0 0.0
    %2528 = vmatpush1.msra.mxu0 0.0
    %2529 = vmatprep.subr.mxu0 0.0
    %2530 = vmatpush1.msra.mxu0 0.0
    %2531 = vmatprep.subr.mxu0 0.0
    %2532 = vmatpush1.msra.mxu0 0.0
    %2533 = vmatprep.subr.mxu0 0.0
    %2534 = vmatpush1.msra.mxu0 0.0
    %2535 = vmatprep.subr.mxu0 0.0
    %2536 = vmatpush1.msra.mxu0 0.0
    %2537 = vmatprep.subr.mxu0 0.0
    %2538 = vmatpush1.msra.mxu0 0.0
    %2539 = vmatprep.subr.mxu0 0.0
    %2540 = vmatpush1.msra.mxu0 0.0
    %2541 = vmatprep.subr.mxu0 0.0
    %2542 = vmatpush1.msra.mxu0 0.0
    %2543 = vmatprep.subr.mxu0 0.0
    %2544 = vmatpush1.msra.mxu0 0.0
    %2545 = vmatprep.subr.mxu0 0.0
    %2546 = vmatpush1.msra.mxu0 0.0
    %2547 = vmatprep.subr.mxu0 0.0
    %2548 = vmatpush1.msra.mxu0 0.0
    %2549 = vmatprep.subr.mxu0 0.0
    %2550 = vmatpush1.msra.mxu0 0.0
    %2551 = vmatprep.mubr.f32.mxu0 0.0
    %2552 = vmatmul.mubr.f32.gmra.mrb[0].mxu0 %v2209
    %v2553 = vpop.f32.mrb[0].mxu0
    %v2554 = vadd.f32 0.0, %v2553
    %v2555 = vpop.f32.mrb[0].mxu0
    %2556 = vmatprep.mubr.f32.mxu0 0.0
    %2557 = vmatmul.mubr.f32.gmra.mrb[0].mxu0 %v2212
    %v2558 = vpop.f32.mrb[0].mxu0
    %v2559 = vadd.f32 0.0, %v2558
    %v2560 = vpop.f32.mrb[0].mxu0
    %2561 = vdwg.mxu0
    %v2562 = vld [vmem:[%s6] sm:$0xff]
    %v2563 = vld [vmem:[%s6 + $0x8] sm:$0xff]
    %v2564 = vld [vmem:[%s6 + $0x10] sm:$0xff]
    %v2565 = vld [vmem:[%s6 + $0x18] sm:$0xff]
    %v2567 = vsel %vm616, %v1895, 0
    %v2570 = vsel %vm616, %v1900, 0
    %v2573 = vsel %vm616, %v2281, 0
    %v2576 = vsel %vm616, %v2286, 0
    %2578 = vmatprep.subr.mxu0 0.0
    %2579 = vmatpush1.xpose.msra.mxu0 %v2573
    %2580 = vmatprep.subr.mxu0 0.0
    %2581 = vmatpush1.xpose.msra.mxu0 %v2576
    %2582 = vmatprep.subr.mxu0 0.0
    %2583 = vmatpush1.xpose.msra.mxu0 0.0
    %2584 = vmatprep.subr.mxu0 0.0
    %2585 = vmatpush1.xpose.msra.mxu0 0.0
    %2586 = vmatprep.subr.mxu0 0.0
    %2587 = vmatpush1.xpose.msra.mxu0 0.0
    %2588 = vmatprep.subr.mxu0 0.0
    %2589 = vmatpush1.xpose.msra.mxu0 0.0
    %2590 = vmatprep.subr.mxu0 0.0
    %2591 = vmatpush1.xpose.msra.mxu0 0.0
    %2592 = vmatprep.subr.mxu0 0.0
    %2593 = vmatpush1.xpose.msra.mxu0 0.0
    %2594 = vmatprep.subr.mxu0 0.0
    %2595 = vmatpush1.xpose.msra.mxu0 0.0
    %2596 = vmatprep.subr.mxu0 0.0
    %2597 = vmatpush1.xpose.msra.mxu0 0.0
    %2598 = vmatprep.subr.mxu0 0.0
    %2599 = vmatpush1.xpose.msra.mxu0 0.0
    %2600 = vmatprep.subr.mxu0 0.0
    %2601 = vmatpush1.xpose.msra.mxu0 0.0
    %2602 = vmatprep.subr.mxu0 0.0
    %2603 = vmatpush1.xpose.msra.mxu0 0.0
    %2604 = vmatprep.subr.mxu0 0.0
    %2605 = vmatpush1.xpose.msra.mxu0 0.0
    %2606 = vmatprep.subr.mxu0 0.0
    %2607 = vmatpush1.xpose.msra.mxu0 0.0
    %2608 = vmatprep.subr.mxu0 0.0
    %2609 = vmatpush1.xpose.msra.mxu0 0.0
    %2610 = vmatprep.subr.mxu0 0.0
    %2611 = vmatpush1.xpose.msra.mxu0 0.0
    %2612 = vmatprep.subr.mxu0 0.0
    %2613 = vmatpush1.xpose.msra.mxu0 0.0
    %2614 = vmatprep.subr.mxu0 0.0
    %2615 = vmatpush1.xpose.msra.mxu0 0.0
    %2616 = vmatprep.subr.mxu0 0.0
    %2617 = vmatpush1.xpose.msra.mxu0 0.0
    %2618 = vmatprep.subr.mxu0 0.0
    %2619 = vmatpush1.xpose.msra.mxu0 0.0
    %2620 = vmatprep.subr.mxu0 0.0
    %2621 = vmatpush1.xpose.msra.mxu0 0.0
    %2622 = vmatprep.subr.mxu0 0.0
    %2623 = vmatpush1.xpose.msra.mxu0 0.0
    %2624 = vmatprep.subr.mxu0 0.0
    %2625 = vmatpush1.xpose.msra.mxu0 0.0
    %2626 = vmatprep.subr.mxu0 0.0
    %2627 = vmatpush1.xpose.msra.mxu0 0.0
    %2628 = vmatprep.subr.mxu0 0.0
    %2629 = vmatpush1.xpose.msra.mxu0 0.0
    %2630 = vmatprep.subr.mxu0 0.0
    %2631 = vmatpush1.xpose.msra.mxu0 0.0
    %2632 = vmatprep.subr.mxu0 0.0
    %2633 = vmatpush1.xpose.msra.mxu0 0.0
    %2634 = vmatprep.subr.mxu0 0.0
    %2635 = vmatpush1.xpose.msra.mxu0 0.0
    %2636 = vmatprep.subr.mxu0 0.0
    %2637 = vmatpush1.xpose.msra.mxu0 0.0
    %2638 = vmatprep.subr.mxu0 0.0
    %2639 = vmatpush1.xpose.msra.mxu0 0.0
    %2640 = vmatprep.subr.mxu0 0.0
    %2641 = vmatpush1.xpose.msra.mxu0 0.0
    %2642 = vmatprep.mubr.f32.mxu0 0.0
    %2643 = vmatmul.mubr.f32.gmra.mrb[0].mxu0 %v2567
    %v2644 = vpop.f32.mrb[0].mxu0
    %v2645 = vadd.f32 %v128, %v2644
    %v2646 = vpop.f32.mrb[0].mxu0
    %2647 = vmatprep.mubr.f32.mxu0 0.0
    %2648 = vmatmul.mubr.f32.gmra.mrb[0].mxu0 %v2570
    %v2649 = vpop.f32.mrb[0].mxu0
    %v2650 = vadd.f32 %v129, %v2649
    %v2651 = vpop.f32.mrb[0].mxu0
    %2652 = vdwg.mxu0
    %v2654 = vsel %vm616, %v1986, 0
    %v2657 = vsel %vm616, %v1991, 0
    %v2660 = vsel %vm616, %v2372, 0
    %v2663 = vsel %vm616, %v2377, 0
    %2665 = vmatprep.subr.mxu0 0.0
    %2666 = vmatpush1.xpose.msra.mxu0 %v2660
    %2667 = vmatprep.subr.mxu0 0.0
    %2668 = vmatpush1.xpose.msra.mxu0 %v2663
    %2669 = vmatprep.subr.mxu0 0.0
    %2670 = vmatpush1.xpose.msra.mxu0 0.0
    %2671 = vmatprep.subr.mxu0 0.0
    %2672 = vmatpush1.xpose.msra.mxu0 0.0
    %2673 = vmatprep.subr.mxu0 0.0
    %2674 = vmatpush1.xpose.msra.mxu0 0.0
    %2675 = vmatprep.subr.mxu0 0.0
    %2676 = vmatpush1.xpose.msra.mxu0 0.0
    %2677 = vmatprep.subr.mxu0 0.0
    %2678 = vmatpush1.xpose.msra.mxu0 0.0
    %2679 = vmatprep.subr.mxu0 0.0
    %2680 = vmatpush1.xpose.msra.mxu0 0.0
    %2681 = vmatprep.subr.mxu0 0.0
    %2682 = vmatpush1.xpose.msra.mxu0 0.0
    %2683 = vmatprep.subr.mxu0 0.0
    %2684 = vmatpush1.xpose.msra.mxu0 0.0
    %2685 = vmatprep.subr.mxu0 0.0
    %2686 = vmatpush1.xpose.msra.mxu0 0.0
    %2687 = vmatprep.subr.mxu0 0.0
    %2688 = vmatpush1.xpose.msra.mxu0 0.0
    %2689 = vmatprep.subr.mxu0 0.0
    %2690 = vmatpush1.xpose.msra.mxu0 0.0
    %2691 = vmatprep.subr.mxu0 0.0
    %2692 = vmatpush1.xpose.msra.mxu0 0.0
    %2693 = vmatprep.subr.mxu0 0.0
    %2694 = vmatpush1.xpose.msra.mxu0 0.0
    %2695 = vmatprep.subr.mxu0 0.0
    %2696 = vmatpush1.xpose.msra.mxu0 0.0
    %2697 = vmatprep.subr.mxu0 0.0
    %2698 = vmatpush1.xpose.msra.mxu0 0.0
    %2699 = vmatprep.subr.mxu0 0.0
    %2700 = vmatpush1.xpose.msra.mxu0 0.0
    %2701 = vmatprep.subr.mxu0 0.0
    %2702 = vmatpush1.xpose.msra.mxu0 0.0
    %2703 = vmatprep.subr.mxu0 0.0
    %2704 = vmatpush1.xpose.msra.mxu0 0.0
    %2705 = vmatprep.subr.mxu0 0.0
    %2706 = vmatpush1.xpose.msra.mxu0 0.0
    %2707 = vmatprep.subr.mxu0 0.0
    %2708 = vmatpush1.xpose.msra.mxu0 0.0
    %2709 = vmatprep.subr.mxu0 0.0
    %2710 = vmatpush1.xpose.msra.mxu0 0.0
    %2711 = vmatprep.subr.mxu0 0.0
    %2712 = vmatpush1.xpose.msra.mxu0 0.0
    %2713 = vmatprep.subr.mxu0 0.0
    %2714 = vmatpush1.xpose.msra.mxu0 0.0
    %2715 = vmatprep.subr.mxu0 0.0
    %2716 = vmatpush1.xpose.msra.mxu0 0.0
    %2717 = vmatprep.subr.mxu0 0.0
    %2718 = vmatpush1.xpose.msra.mxu0 0.0
    %2719 = vmatprep.subr.mxu0 0.0
    %2720 = vmatpush1.xpose.msra.mxu0 0.0
    %2721 = vmatprep.subr.mxu0 0.0
    %2722 = vmatpush1.xpose.msra.mxu0 0.0
    %2723 = vmatprep.subr.mxu0 0.0
    %2724 = vmatpush1.xpose.msra.mxu0 0.0
    %2725 = vmatprep.subr.mxu0 0.0
    %2726 = vmatpush1.xpose.msra.mxu0 0.0
    %2727 = vmatprep.subr.mxu0 0.0
    %2728 = vmatpush1.xpose.msra.mxu0 0.0
    %2729 = vmatprep.mubr.f32.mxu0 0.0
    %2730 = vmatmul.mubr.f32.gmra.mrb[0].mxu0 %v2654
    %v2731 = vpop.f32.mrb[0].mxu0
    %v2732 = vadd.f32 %v128, %v2731
    %v2733 = vpop.f32.mrb[0].mxu0
    %2734 = vmatprep.mubr.f32.mxu0 0.0
    %2735 = vmatmul.mubr.f32.gmra.mrb[0].mxu0 %v2657
    %v2736 = vpop.f32.mrb[0].mxu0
    %v2737 = vadd.f32 %v129, %v2736
    %v2738 = vpop.f32.mrb[0].mxu0
    %2739 = vdwg.mxu0
    %v2741 = vsel %vm616, %v2077, 0
    %v2744 = vsel %vm616, %v2082, 0
    %v2747 = vsel %vm616, %v2463, 0
    %v2750 = vsel %vm616, %v2468, 0
    %2752 = vmatprep.subr.mxu0 0.0
    %2753 = vmatpush1.xpose.msra.mxu0 %v2747
    %2754 = vmatprep.subr.mxu0 0.0
    %2755 = vmatpush1.xpose.msra.mxu0 %v2750
    %2756 = vmatprep.subr.mxu0 0.0
    %2757 = vmatpush1.xpose.msra.mxu0 0.0
    %2758 = vmatprep.subr.mxu0 0.0
    %2759 = vmatpush1.xpose.msra.mxu0 0.0
    %2760 = vmatprep.subr.mxu0 0.0
    %2761 = vmatpush1.xpose.msra.mxu0 0.0
    %2762 = vmatprep.subr.mxu0 0.0
    %2763 = vmatpush1.xpose.msra.mxu0 0.0
    %2764 = vmatprep.subr.mxu0 0.0
    %2765 = vmatpush1.xpose.msra.mxu0 0.0
    %2766 = vmatprep.subr.mxu0 0.0
    %2767 = vmatpush1.xpose.msra.mxu0 0.0
    %2768 = vmatprep.subr.mxu0 0.0
    %2769 = vmatpush1.xpose.msra.mxu0 0.0
    %2770 = vmatprep.subr.mxu0 0.0
    %2771 = vmatpush1.xpose.msra.mxu0 0.0
    %2772 = vmatprep.subr.mxu0 0.0
    %2773 = vmatpush1.xpose.msra.mxu0 0.0
    %2774 = vmatprep.subr.mxu0 0.0
    %2775 = vmatpush1.xpose.msra.mxu0 0.0
    %2776 = vmatprep.subr.mxu0 0.0
    %2777 = vmatpush1.xpose.msra.mxu0 0.0
    %2778 = vmatprep.subr.mxu0 0.0
    %2779 = vmatpush1.xpose.msra.mxu0 0.0
    %2780 = vmatprep.subr.mxu0 0.0
    %2781 = vmatpush1.xpose.msra.mxu0 0.0
    %2782 = vmatprep.subr.mxu0 0.0
    %2783 = vmatpush1.xpose.msra.mxu0 0.0
    %2784 = vmatprep.subr.mxu0 0.0
    %2785 = vmatpush1.xpose.msra.mxu0 0.0
    %2786 = vmatprep.subr.mxu0 0.0
    %2787 = vmatpush1.xpose.msra.mxu0 0.0
    %2788 = vmatprep.subr.mxu0 0.0
    %2789 = vmatpush1.xpose.msra.mxu0 0.0
    %2790 = vmatprep.subr.mxu0 0.0
    %2791 = vmatpush1.xpose.msra.mxu0 0.0
    %2792 = vmatprep.subr.mxu0 0.0
    %2793 = vmatpush1.xpose.msra.mxu0 0.0
    %2794 = vmatprep.subr.mxu0 0.0
    %2795 = vmatpush1.xpose.msra.mxu0 0.0
    %2796 = vmatprep.subr.mxu0 0.0
    %2797 = vmatpush1.xpose.msra.mxu0 0.0
    %2798 = vmatprep.subr.mxu0 0.0
    %2799 = vmatpush1.xpose.msra.mxu0 0.0
    %2800 = vmatprep.subr.mxu0 0.0
    %2801 = vmatpush1.xpose.msra.mxu0 0.0
    %2802 = vmatprep.subr.mxu0 0.0
    %2803 = vmatpush1.xpose.msra.mxu0 0.0
    %2804 = vmatprep.subr.mxu0 0.0
    %2805 = vmatpush1.xpose.msra.mxu0 0.0
    %2806 = vmatprep.subr.mxu0 0.0
    %2807 = vmatpush1.xpose.msra.mxu0 0.0
    %2808 = vmatprep.subr.mxu0 0.0
    %2809 = vmatpush1.xpose.msra.mxu0 0.0
    %2810 = vmatprep.subr.mxu0 0.0
    %2811 = vmatpush1.xpose.msra.mxu0 0.0
    %2812 = vmatprep.subr.mxu0 0.0
    %2813 = vmatpush1.xpose.msra.mxu0 0.0
    %2814 = vmatprep.subr.mxu0 0.0
    %2815 = vmatpush1.xpose.msra.mxu0 0.0
    %2816 = vmatprep.mubr.f32.mxu0 0.0
    %2817 = vmatmul.mubr.f32.gmra.mrb[0].mxu0 %v2741
    %v2818 = vpop.f32.mrb[0].mxu0
    %v2819 = vadd.f32 %v128, %v2818
    %v2820 = vpop.f32.mrb[0].mxu0
    %2821 = vmatprep.mubr.f32.mxu0 0.0
    %2822 = vmatmul.mubr.f32.gmra.mrb[0].mxu0 %v2744
    %v2823 = vpop.f32.mrb[0].mxu0
    %v2824 = vadd.f32 %v129, %v2823
    %v2825 = vpop.f32.mrb[0].mxu0
    %2826 = vdwg.mxu0
    %v2828 = vsel %vm616, %v2168, 0
    %v2831 = vsel %vm616, %v2173, 0
    %v2834 = vsel %vm616, %v2554, 0
    %v2837 = vsel %vm616, %v2559, 0
    %2839 = vmatprep.subr.mxu0 0.0
    %2840 = vmatpush1.xpose.msra.mxu0 %v2834
    %2841 = vmatprep.subr.mxu0 0.0
    %2842 = vmatpush1.xpose.msra.mxu0 %v2837
    %2843 = vmatprep.subr.mxu0 0.0
    %2844 = vmatpush1.xpose.msra.mxu0 0.0
    %2845 = vmatprep.subr.mxu0 0.0
    %2846 = vmatpush1.xpose.msra.mxu0 0.0
    %2847 = vmatprep.subr.mxu0 0.0
    %2848 = vmatpush1.xpose.msra.mxu0 0.0
    %2849 = vmatprep.subr.mxu0 0.0
    %2850 = vmatpush1.xpose.msra.mxu0 0.0
    %2851 = vmatprep.subr.mxu0 0.0
    %2852 = vmatpush1.xpose.msra.mxu0 0.0
    %2853 = vmatprep.subr.mxu0 0.0
    %2854 = vmatpush1.xpose.msra.mxu0 0.0
    %2855 = vmatprep.subr.mxu0 0.0
    %2856 = vmatpush1.xpose.msra.mxu0 0.0
    %2857 = vmatprep.subr.mxu0 0.0
    %2858 = vmatpush1.xpose.msra.mxu0 0.0
    %2859 = vmatprep.subr.mxu0 0.0
    %2860 = vmatpush1.xpose.msra.mxu0 0.0
    %2861 = vmatprep.subr.mxu0 0.0
    %2862 = vmatpush1.xpose.msra.mxu0 0.0
    %2863 = vmatprep.subr.mxu0 0.0
    %2864 = vmatpush1.xpose.msra.mxu0 0.0
    %2865 = vmatprep.subr.mxu0 0.0
    %2866 = vmatpush1.xpose.msra.mxu0 0.0
    %2867 = vmatprep.subr.mxu0 0.0
    %2868 = vmatpush1.xpose.msra.mxu0 0.0
    %2869 = vmatprep.subr.mxu0 0.0
    %2870 = vmatpush1.xpose.msra.mxu0 0.0
    %2871 = vmatprep.subr.mxu0 0.0
    %2872 = vmatpush1.xpose.msra.mxu0 0.0
    %2873 = vmatprep.subr.mxu0 0.0
    %2874 = vmatpush1.xpose.msra.mxu0 0.0
    %2875 = vmatprep.subr.mxu0 0.0
    %2876 = vmatpush1.xpose.msra.mxu0 0.0
    %2877 = vmatprep.subr.mxu0 0.0
    %2878 = vmatpush1.xpose.msra.mxu0 0.0
    %2879 = vmatprep.subr.mxu0 0.0
    %2880 = vmatpush1.xpose.msra.mxu0 0.0
    %2881 = vmatprep.subr.mxu0 0.0
    %2882 = vmatpush1.xpose.msra.mxu0 0.0
    %2883 = vmatprep.subr.mxu0 0.0
    %2884 = vmatpush1.xpose.msra.mxu0 0.0
    %2885 = vmatprep.subr.mxu0 0.0
    %2886 = vmatpush1.xpose.msra.mxu0 0.0
    %2887 = vmatprep.subr.mxu0 0.0
    %2888 = vmatpush1.xpose.msra.mxu0 0.0
    %2889 = vmatprep.subr.mxu0 0.0
    %2890 = vmatpush1.xpose.msra.mxu0 0.0
    %2891 = vmatprep.subr.mxu0 0.0
    %2892 = vmatpush1.xpose.msra.mxu0 0.0
    %2893 = vmatprep.subr.mxu0 0.0
    %2894 = vmatpush1.xpose.msra.mxu0 0.0
    %2895 = vmatprep.subr.mxu0 0.0
    %2896 = vmatpush1.xpose.msra.mxu0 0.0
    %2897 = vmatprep.subr.mxu0 0.0
    %2898 = vmatpush1.xpose.msra.mxu0 0.0
    %2899 = vmatprep.subr.mxu0 0.0
    %2900 = vmatpush1.xpose.msra.mxu0 0.0
    %2901 = vmatprep.subr.mxu0 0.0
    %2902 = vmatpush1.xpose.msra.mxu0 0.0
    %2903 = vmatprep.mubr.f32.mxu0 0.0
    %2904 = vmatmul.mubr.f32.gmra.mrb[0].mxu0 %v2828
    %v2905 = vpop.f32.mrb[0].mxu0
    %v2906 = vadd.f32 %v128, %v2905
    %v2907 = vpop.f32.mrb[0].mxu0
    %2908 = vmatprep.mubr.f32.mxu0 0.0
    %2909 = vmatmul.mubr.f32.gmra.mrb[0].mxu0 %v2831
    %v2910 = vpop.f32.mrb[0].mxu0
    %v2911 = vadd.f32 %v129, %v2910
    %v2912 = vpop.f32.mrb[0].mxu0
    %2913 = vdwg.mxu0
    %v2914 = vsel %vm967, %v2645, -inf
    %2915 = vmax.xlane.f32.xlu0 %v2914
    %v2916 = vpop.xlane.xlu0 %2915
    %v2917 = vsel %vm967, %v2650, -inf
    %2918 = vmax.xlane.f32.xlu0 %v2917
    %v2919 = vpop.xlane.xlu0 %2918
    %v2920 = vsel %vm967, %v2732, -inf
    %2921 = vmax.xlane.f32.xlu0 %v2920
    %v2922 = vpop.xlane.xlu0 %2921
    %v2923 = vsel %vm967, %v2737, -inf
    %2924 = vmax.xlane.f32.xlu0 %v2923
    %v2925 = vpop.xlane.xlu0 %2924
    %v2926 = vsel %vm967, %v2819, -inf
    %2927 = vmax.xlane.f32.xlu0 %v2926
    %v2928 = vpop.xlane.xlu0 %2927
    %v2929 = vsel %vm967, %v2824, -inf
    %2930 = vmax.xlane.f32.xlu0 %v2929
    %v2931 = vpop.xlane.xlu0 %2930
    %v2932 = vsel %vm967, %v2906, -inf
    %2933 = vmax.xlane.f32.xlu0 %v2932
    %v2934 = vpop.xlane.xlu0 %2933
    %v2935 = vsel %vm967, %v2911, -inf
    %2936 = vmax.xlane.f32.xlu0 %v2935
    %v2937 = vpop.xlane.xlu0 %2936
    %v2938 = vsub.f32 %v2645, %v2916
    %v2939 = vsub.f32 %v2650, %v2919
    %v2940 = vsub.f32 %v2732, %v2922
    %v2941 = vsub.f32 %v2737, %v2925
    %v2942 = vsub.f32 %v2819, %v2928
    %v2943 = vsub.f32 %v2824, %v2931
    %v2944 = vsub.f32 %v2906, %v2934
    %v2945 = vsub.f32 %v2911, %v2937
    %v2946 = vmul.f32 %v2938, 1.442695
    %v2947 = vpow.pop %v2946
    %v2948 = vmul.f32 %v2939, 1.442695
    %v2949 = vpow.pop %v2948
    %v2950 = vmul.f32 %v2940, 1.442695
    %v2951 = vpow.pop %v2950
    %v2952 = vmul.f32 %v2941, 1.442695
    %v2953 = vpow.pop %v2952
    %v2954 = vmul.f32 %v2942, 1.442695
    %v2955 = vpow.pop %v2954
    %v2956 = vmul.f32 %v2943, 1.442695
    %v2957 = vpow.pop %v2956
    %v2958 = vmul.f32 %v2944, 1.442695
    %v2959 = vpow.pop %v2958
    %v2960 = vmul.f32 %v2945, 1.442695
    %v2961 = vpow.pop %v2960
    %v2962 = vsel %vm967, %v2947, 0.0
    %2963 = vadd.xlane.f32.xlu0 %v2962
    %v2964 = vpop.xlane.xlu0 %2963
    %v2965 = vsel %vm967, %v2949, 0.0
    %2966 = vadd.xlane.f32.xlu0 %v2965
    %v2967 = vpop.xlane.xlu0 %2966
    %v2968 = vsel %vm967, %v2951, 0.0
    %2969 = vadd.xlane.f32.xlu0 %v2968
    %v2970 = vpop.xlane.xlu0 %2969
    %v2971 = vsel %vm967, %v2953, 0.0
    %2972 = vadd.xlane.f32.xlu0 %v2971
    %v2973 = vpop.xlane.xlu0 %2972
    %v2974 = vsel %vm967, %v2955, 0.0
    %2975 = vadd.xlane.f32.xlu0 %v2974
    %v2976 = vpop.xlane.xlu0 %2975
    %v2977 = vsel %vm967, %v2957, 0.0
    %2978 = vadd.xlane.f32.xlu0 %v2977
    %v2979 = vpop.xlane.xlu0 %2978
    %v2980 = vsel %vm967, %v2959, 0.0
    %2981 = vadd.xlane.f32.xlu0 %v2980
    %v2982 = vpop.xlane.xlu0 %2981
    %v2983 = vsel %vm967, %v2961, 0.0
    %2984 = vadd.xlane.f32.xlu0 %v2983
    %v2985 = vpop.xlane.xlu0 %2984
    %v2986 = vrcp.pop %v2964
    %v2987 = vrcp.pop %v2967
    %v2988 = vrcp.pop %v2970
    %v2989 = vrcp.pop %v2973
    %v2990 = vrcp.pop %v2976
    %v2991 = vrcp.pop %v2979
    %v2992 = vrcp.pop %v2982
    %v2993 = vrcp.pop %v2985
    %v2994 = vmul.f32 %v2947, %v2986
    %v2995 = vmul.f32 %v2949, %v2987
    %v2996 = vmul.f32 %v2951, %v2988
    %v2997 = vmul.f32 %v2953, %v2989
    %v2998 = vmul.f32 %v2955, %v2990
    %v2999 = vmul.f32 %v2957, %v2991
    %v3000 = vmul.f32 %v2959, %v2992
    %v3001 = vmul.f32 %v2961, %v2993
    %3002 = vrot.lane.b32.xlu0 %v2281, 120
    %v3003 = vpop.permute.xlu0 %3002
    %3004 = vrot.lane.b32.xlu0 %v2286, 120
    %v3005 = vpop.permute.xlu0 %3004
    %v3009 = vsel %vm967, %v2994, 0
    %v3012 = vsel %vm967, %v2995, 0
    %3014 = vmatprep.subr.mxu0 0.0
    %3015 = vmatpush1.msra.mxu0 %v3003
    %3016 = vmatprep.subr.mxu0 0.0
    %3017 = vmatpush1.msra.mxu0 %v3005
    %3018 = vmatprep.subr.mxu0 0.0
    %3019 = vmatpush1.msra.mxu0 0.0
    %3020 = vmatprep.subr.mxu0 0.0
    %3021 = vmatpush1.msra.mxu0 0.0
    %3022 = vmatprep.subr.mxu0 0.0
    %3023 = vmatpush1.msra.mxu0 0.0
    %3024 = vmatprep.subr.mxu0 0.0
    %3025 = vmatpush1.msra.mxu0 0.0
    %3026 = vmatprep.subr.mxu0 0.0
    %3027 = vmatpush1.msra.mxu0 0.0
    %3028 = vmatprep.subr.mxu0 0.0
    %3029 = vmatpush1.msra.mxu0 0.0
    %3030 = vmatprep.subr.mxu0 0.0
    %3031 = vmatpush1.msra.mxu0 0.0
    %3032 = vmatprep.subr.mxu0 0.0
    %3033 = vmatpush1.msra.mxu0 0.0
    %3034 = vmatprep.subr.mxu0 0.0
    %3035 = vmatpush1.msra.mxu0 0.0
    %3036 = vmatprep.subr.mxu0 0.0
    %3037 = vmatpush1.msra.mxu0 0.0
    %3038 = vmatprep.subr.mxu0 0.0
    %3039 = vmatpush1.msra.mxu0 0.0
    %3040 = vmatprep.subr.mxu0 0.0
    %3041 = vmatpush1.msra.mxu0 0.0
    %3042 = vmatprep.subr.mxu0 0.0
    %3043 = vmatpush1.msra.mxu0 0.0
    %3044 = vmatprep.subr.mxu0 0.0
    %3045 = vmatpush1.msra.mxu0 0.0
    %3046 = vmatprep.subr.mxu0 0.0
    %3047 = vmatpush1.msra.mxu0 0.0
    %3048 = vmatprep.subr.mxu0 0.0
    %3049 = vmatpush1.msra.mxu0 0.0
    %3050 = vmatprep.subr.mxu0 0.0
    %3051 = vmatpush1.msra.mxu0 0.0
    %3052 = vmatprep.subr.mxu0 0.0
    %3053 = vmatpush1.msra.mxu0 0.0
    %3054 = vmatprep.subr.mxu0 0.0
    %3055 = vmatpush1.msra.mxu0 0.0
    %3056 = vmatprep.subr.mxu0 0.0
    %3057 = vmatpush1.msra.mxu0 0.0
    %3058 = vmatprep.subr.mxu0 0.0
    %3059 = vmatpush1.msra.mxu0 0.0
    %3060 = vmatprep.subr.mxu0 0.0
    %3061 = vmatpush1.msra.mxu0 0.0
    %3062 = vmatprep.subr.mxu0 0.0
    %3063 = vmatpush1.msra.mxu0 0.0
    %3064 = vmatprep.subr.mxu0 0.0
    %3065 = vmatpush1.msra.mxu0 0.0
    %3066 = vmatprep.subr.mxu0 0.0
    %3067 = vmatpush1.msra.mxu0 0.0
    %3068 = vmatprep.subr.mxu0 0.0
    %3069 = vmatpush1.msra.mxu0 0.0
    %3070 = vmatprep.subr.mxu0 0.0
    %3071 = vmatpush1.msra.mxu0 0.0
    %3072 = vmatprep.subr.mxu0 0.0
    %3073 = vmatpush1.msra.mxu0 0.0
    %3074 = vmatprep.subr.mxu0 0.0
    %3075 = vmatpush1.msra.mxu0 0.0
    %3076 = vmatprep.subr.mxu0 0.0
    %3077 = vmatpush1.msra.mxu0 0.0
    %3078 = vmatprep.mubr.f32.mxu0 0.0
    %3079 = vmatmul.mubr.f32.gmra.mrb[0].mxu0 %v3009
    %v3080 = vpop.f32.mrb[0].mxu0
    %v3081 = vadd.f32 0.0, %v3080
    %v3082 = vpop.f32.mrb[0].mxu0
    %3083 = vmatprep.mubr.f32.mxu0 0.0
    %3084 = vmatmul.mubr.f32.gmra.mrb[0].mxu0 %v3012
    %v3085 = vpop.f32.mrb[0].mxu0
    %v3086 = vadd.f32 0.0, %v3085
    %v3087 = vpop.f32.mrb[0].mxu0
    %3088 = vdwg.mxu0
    %3089 = vrot.lane.b32.xlu0 %v2372, 120
    %v3090 = vpop.permute.xlu0 %3089
    %3091 = vrot.lane.b32.xlu0 %v2377, 120
    %v3092 = vpop.permute.xlu0 %3091
    %v3096 = vsel %vm967, %v2996, 0
    %v3099 = vsel %vm967, %v2997, 0
    %3101 = vmatprep.subr.mxu0 0.0
    %3102 = vmatpush1.msra.mxu0 %v3090
    %3103 = vmatprep.subr.mxu0 0.0
    %3104 = vmatpush1.msra.mxu0 %v3092
    %3105 = vmatprep.subr.mxu0 0.0
    %3106 = vmatpush1.msra.mxu0 0.0
    %3107 = vmatprep.subr.mxu0 0.0
    %3108 = vmatpush1.msra.mxu0 0.0
    %3109 = vmatprep.subr.mxu0 0.0
    %3110 = vmatpush1.msra.mxu0 0.0
    %3111 = vmatprep.subr.mxu0 0.0
    %3112 = vmatpush1.msra.mxu0 0.0
    %3113 = vmatprep.subr.mxu0 0.0
    %3114 = vmatpush1.msra.mxu0 0.0
    %3115 = vmatprep.subr.mxu0 0.0
    %3116 = vmatpush1.msra.mxu0 0.0
    %3117 = vmatprep.subr.mxu0 0.0
    %3118 = vmatpush1.msra.mxu0 0.0
    %3119 = vmatprep.subr.mxu0 0.0
    %3120 = vmatpush1.msra.mxu0 0.0
    %3121 = vmatprep.subr.mxu0 0.0
    %3122 = vmatpush1.msra.mxu0 0.0
    %3123 = vmatprep.subr.mxu0 0.0
    %3124 = vmatpush1.msra.mxu0 0.0
    %3125 = vmatprep.subr.mxu0 0.0
    %3126 = vmatpush1.msra.mxu0 0.0
    %3127 = vmatprep.subr.mxu0 0.0
    %3128 = vmatpush1.msra.mxu0 0.0
    %3129 = vmatprep.subr.mxu0 0.0
    %3130 = vmatpush1.msra.mxu0 0.0
    %3131 = vmatprep.subr.mxu0 0.0
    %3132 = vmatpush1.msra.mxu0 0.0
    %3133 = vmatprep.subr.mxu0 0.0
    %3134 = vmatpush1.msra.mxu0 0.0
    %3135 = vmatprep.subr.mxu0 0.0
    %3136 = vmatpush1.msra.mxu0 0.0
    %3137 = vmatprep.subr.mxu0 0.0
    %3138 = vmatpush1.msra.mxu0 0.0
    %3139 = vmatprep.subr.mxu0 0.0
    %3140 = vmatpush1.msra.mxu0 0.0
    %3141 = vmatprep.subr.mxu0 0.0
    %3142 = vmatpush1.msra.mxu0 0.0
    %3143 = vmatprep.subr.mxu0 0.0
    %3144 = vmatpush1.msra.mxu0 0.0
    %3145 = vmatprep.subr.mxu0 0.0
    %3146 = vmatpush1.msra.mxu0 0.0
    %3147 = vmatprep.subr.mxu0 0.0
    %3148 = vmatpush1.msra.mxu0 0.0
    %3149 = vmatprep.subr.mxu0 0.0
    %3150 = vmatpush1.msra.mxu0 0.0
    %3151 = vmatprep.subr.mxu0 0.0
    %3152 = vmatpush1.msra.mxu0 0.0
    %3153 = vmatprep.subr.mxu0 0.0
    %3154 = vmatpush1.msra.mxu0 0.0
    %3155 = vmatprep.subr.mxu0 0.0
    %3156 = vmatpush1.msra.mxu0 0.0
    %3157 = vmatprep.subr.mxu0 0.0
    %3158 = vmatpush1.msra.mxu0 0.0
    %3159 = vmatprep.subr.mxu0 0.0
    %3160 = vmatpush1.msra.mxu0 0.0
    %3161 = vmatprep.subr.mxu0 0.0
    %3162 = vmatpush1.msra.mxu0 0.0
    %3163 = vmatprep.subr.mxu0 0.0
    %3164 = vmatpush1.msra.mxu0 0.0
    %3165 = vmatprep.mubr.f32.mxu0 0.0
    %3166 = vmatmul.mubr.f32.gmra.mrb[0].mxu0 %v3096
    %v3167 = vpop.f32.mrb[0].mxu0
    %v3168 = vadd.f32 0.0, %v3167
    %v3169 = vpop.f32.mrb[0].mxu0
    %3170 = vmatprep.mubr.f32.mxu0 0.0
    %3171 = vmatmul.mubr.f32.gmra.mrb[0].mxu0 %v3099
    %v3172 = vpop.f32.mrb[0].mxu0
    %v3173 = vadd.f32 0.0, %v3172
    %v3174 = vpop.f32.mrb[0].mxu0
    %3175 = vdwg.mxu0
    %3176 = vrot.lane.b32.xlu0 %v2463, 120
    %v3177 = vpop.permute.xlu0 %3176
    %3178 = vrot.lane.b32.xlu0 %v2468, 120
    %v3179 = vpop.permute.xlu0 %3178
    %v3183 = vsel %vm967, %v2998, 0
    %v3186 = vsel %vm967, %v2999, 0
    %3188 = vmatprep.subr.mxu0 0.0
    %3189 = vmatpush1.msra.mxu0 %v3177
    %3190 = vmatprep.subr.mxu0 0.0
    %3191 = vmatpush1.msra.mxu0 %v3179
    %3192 = vmatprep.subr.mxu0 0.0
    %3193 = vmatpush1.msra.mxu0 0.0
    %3194 = vmatprep.subr.mxu0 0.0
    %3195 = vmatpush1.msra.mxu0 0.0
    %3196 = vmatprep.subr.mxu0 0.0
    %3197 = vmatpush1.msra.mxu0 0.0
    %3198 = vmatprep.subr.mxu0 0.0
    %3199 = vmatpush1.msra.mxu0 0.0
    %3200 = vmatprep.subr.mxu0 0.0
    %3201 = vmatpush1.msra.mxu0 0.0
    %3202 = vmatprep.subr.mxu0 0.0
    %3203 = vmatpush1.msra.mxu0 0.0
    %3204 = vmatprep.subr.mxu0 0.0
    %3205 = vmatpush1.msra.mxu0 0.0
    %3206 = vmatprep.subr.mxu0 0.0
    %3207 = vmatpush1.msra.mxu0 0.0
    %3208 = vmatprep.subr.mxu0 0.0
    %3209 = vmatpush1.msra.mxu0 0.0
    %3210 = vmatprep.subr.mxu0 0.0
    %3211 = vmatpush1.msra.mxu0 0.0
    %3212 = vmatprep.subr.mxu0 0.0
    %3213 = vmatpush1.msra.mxu0 0.0
    %3214 = vmatprep.subr.mxu0 0.0
    %3215 = vmatpush1.msra.mxu0 0.0
    %3216 = vmatprep.subr.mxu0 0.0
    %3217 = vmatpush1.msra.mxu0 0.0
    %3218 = vmatprep.subr.mxu0 0.0
    %3219 = vmatpush1.msra.mxu0 0.0
    %3220 = vmatprep.subr.mxu0 0.0
    %3221 = vmatpush1.msra.mxu0 0.0
    %3222 = vmatprep.subr.mxu0 0.0
    %3223 = vmatpush1.msra.mxu0 0.0
    %3224 = vmatprep.subr.mxu0 0.0
    %3225 = vmatpush1.msra.mxu0 0.0
    %3226 = vmatprep.subr.mxu0 0.0
    %3227 = vmatpush1.msra.mxu0 0.0
    %3228 = vmatprep.subr.mxu0 0.0
    %3229 = vmatpush1.msra.mxu0 0.0
    %3230 = vmatprep.subr.mxu0 0.0
    %3231 = vmatpush1.msra.mxu0 0.0
    %3232 = vmatprep.subr.mxu0 0.0
    %3233 = vmatpush1.msra.mxu0 0.0
    %3234 = vmatprep.subr.mxu0 0.0
    %3235 = vmatpush1.msra.mxu0 0.0
    %3236 = vmatprep.subr.mxu0 0.0
    %3237 = vmatpush1.msra.mxu0 0.0
    %3238 = vmatprep.subr.mxu0 0.0
    %3239 = vmatpush1.msra.mxu0 0.0
    %3240 = vmatprep.subr.mxu0 0.0
    %3241 = vmatpush1.msra.mxu0 0.0
    %3242 = vmatprep.subr.mxu0 0.0
    %3243 = vmatpush1.msra.mxu0 0.0
    %3244 = vmatprep.subr.mxu0 0.0
    %3245 = vmatpush1.msra.mxu0 0.0
    %3246 = vmatprep.subr.mxu0 0.0
    %3247 = vmatpush1.msra.mxu0 0.0
    %3248 = vmatprep.subr.mxu0 0.0
    %3249 = vmatpush1.msra.mxu0 0.0
    %3250 = vmatprep.subr.mxu0 0.0
    %3251 = vmatpush1.msra.mxu0 0.0
    %3252 = vmatprep.mubr.f32.mxu0 0.0
    %3253 = vmatmul.mubr.f32.gmra.mrb[0].mxu0 %v3183
    %v3254 = vpop.f32.mrb[0].mxu0
    %v3255 = vadd.f32 0.0, %v3254
    %v3256 = vpop.f32.mrb[0].mxu0
    %3257 = vmatprep.mubr.f32.mxu0 0.0
    %3258 = vmatmul.mubr.f32.gmra.mrb[0].mxu0 %v3186
    %v3259 = vpop.f32.mrb[0].mxu0
    %v3260 = vadd.f32 0.0, %v3259
    %v3261 = vpop.f32.mrb[0].mxu0
    %3262 = vdwg.mxu0
    %3263 = vrot.lane.b32.xlu0 %v2554, 120
    %v3264 = vpop.permute.xlu0 %3263
    %3265 = vrot.lane.b32.xlu0 %v2559, 120
    %v3266 = vpop.permute.xlu0 %3265
    %v3270 = vsel %vm967, %v3000, 0
    %v3273 = vsel %vm967, %v3001, 0
    %3275 = vmatprep.subr.mxu0 0.0
    %3276 = vmatpush1.msra.mxu0 %v3264
    %3277 = vmatprep.subr.mxu0 0.0
    %3278 = vmatpush1.msra.mxu0 %v3266
    %3279 = vmatprep.subr.mxu0 0.0
    %3280 = vmatpush1.msra.mxu0 0.0
    %3281 = vmatprep.subr.mxu0 0.0
    %3282 = vmatpush1.msra.mxu0 0.0
    %3283 = vmatprep.subr.mxu0 0.0
    %3284 = vmatpush1.msra.mxu0 0.0
    %3285 = vmatprep.subr.mxu0 0.0
    %3286 = vmatpush1.msra.mxu0 0.0
    %3287 = vmatprep.subr.mxu0 0.0
    %3288 = vmatpush1.msra.mxu0 0.0
    %3289 = vmatprep.subr.mxu0 0.0
    %3290 = vmatpush1.msra.mxu0 0.0
    %3291 = vmatprep.subr.mxu0 0.0
    %3292 = vmatpush1.msra.mxu0 0.0
    %3293 = vmatprep.subr.mxu0 0.0
    %3294 = vmatpush1.msra.mxu0 0.0
    %3295 = vmatprep.subr.mxu0 0.0
    %3296 = vmatpush1.msra.mxu0 0.0
    %3297 = vmatprep.subr.mxu0 0.0
    %3298 = vmatpush1.msra.mxu0 0.0
    %3299 = vmatprep.subr.mxu0 0.0
    %3300 = vmatpush1.msra.mxu0 0.0
    %3301 = vmatprep.subr.mxu0 0.0
    %3302 = vmatpush1.msra.mxu0 0.0
    %3303 = vmatprep.subr.mxu0 0.0
    %3304 = vmatpush1.msra.mxu0 0.0
    %3305 = vmatprep.subr.mxu0 0.0
    %3306 = vmatpush1.msra.mxu0 0.0
    %3307 = vmatprep.subr.mxu0 0.0
    %3308 = vmatpush1.msra.mxu0 0.0
    %3309 = vmatprep.subr.mxu0 0.0
    %3310 = vmatpush1.msra.mxu0 0.0
    %3311 = vmatprep.subr.mxu0 0.0
    %3312 = vmatpush1.msra.mxu0 0.0
    %3313 = vmatprep.subr.mxu0 0.0
    %3314 = vmatpush1.msra.mxu0 0.0
    %3315 = vmatprep.subr.mxu0 0.0
    %3316 = vmatpush1.msra.mxu0 0.0
    %3317 = vmatprep.subr.mxu0 0.0
    %3318 = vmatpush1.msra.mxu0 0.0
    %3319 = vmatprep.subr.mxu0 0.0
    %3320 = vmatpush1.msra.mxu0 0.0
    %3321 = vmatprep.subr.mxu0 0.0
    %3322 = vmatpush1.msra.mxu0 0.0
    %3323 = vmatprep.subr.mxu0 0.0
    %3324 = vmatpush1.msra.mxu0 0.0
    %3325 = vmatprep.subr.mxu0 0.0
    %3326 = vmatpush1.msra.mxu0 0.0
    %3327 = vmatprep.subr.mxu0 0.0
    %3328 = vmatpush1.msra.mxu0 0.0
    %3329 = vmatprep.subr.mxu0 0.0
    %3330 = vmatpush1.msra.mxu0 0.0
    %3331 = vmatprep.subr.mxu0 0.0
    %3332 = vmatpush1.msra.mxu0 0.0
    %3333 = vmatprep.subr.mxu0 0.0
    %3334 = vmatpush1.msra.mxu0 0.0
    %3335 = vmatprep.subr.mxu0 0.0
    %3336 = vmatpush1.msra.mxu0 0.0
    %3337 = vmatprep.subr.mxu0 0.0
    %3338 = vmatpush1.msra.mxu0 0.0
    %3339 = vmatprep.mubr.f32.mxu0 0.0
    %3340 = vmatmul.mubr.f32.gmra.mrb[0].mxu0 %v3270
    %v3341 = vpop.f32.mrb[0].mxu0
    %v3342 = vadd.f32 0.0, %v3341
    %v3343 = vpop.f32.mrb[0].mxu0
    %3344 = vmatprep.mubr.f32.mxu0 0.0
    %3345 = vmatmul.mubr.f32.gmra.mrb[0].mxu0 %v3273
    %v3346 = vpop.f32.mrb[0].mxu0
    %v3347 = vadd.f32 0.0, %v3346
    %v3348 = vpop.f32.mrb[0].mxu0
    %3349 = vdwg.mxu0
    %3351 = vrot.lane.b32.xlu0 %v2562, 96
    %v3352 = vpop.permute.xlu0 %3351
    %v3355 = vsel %vm616, %v3081, 0
    %v3358 = vsel %vm616, %v3086, 0
    %3360 = vmatprep.subr.mxu0 0.0
    %3361 = vmatpush1.msra.mxu0 %v3352
    %3362 = vmatprep.subr.mxu0 0.0
    %3363 = vmatpush1.msra.mxu0 0.0
    %3364 = vmatprep.subr.mxu0 0.0
    %3365 = vmatpush1.msra.mxu0 0.0
    %3366 = vmatprep.subr.mxu0 0.0
    %3367 = vmatpush1.msra.mxu0 0.0
    %3368 = vmatprep.subr.mxu0 0.0
    %3369 = vmatpush1.msra.mxu0 0.0
    %3370 = vmatprep.subr.mxu0 0.0
    %3371 = vmatpush1.msra.mxu0 0.0
    %3372 = vmatprep.subr.mxu0 0.0
    %3373 = vmatpush1.msra.mxu0 0.0
    %3374 = vmatprep.subr.mxu0 0.0
    %3375 = vmatpush1.msra.mxu0 0.0
    %3376 = vmatprep.subr.mxu0 0.0
    %3377 = vmatpush1.msra.mxu0 0.0
    %3378 = vmatprep.subr.mxu0 0.0
    %3379 = vmatpush1.msra.mxu0 0.0
    %3380 = vmatprep.subr.mxu0 0.0
    %3381 = vmatpush1.msra.mxu0 0.0
    %3382 = vmatprep.subr.mxu0 0.0
    %3383 = vmatpush1.msra.mxu0 0.0
    %3384 = vmatprep.subr.mxu0 0.0
    %3385 = vmatpush1.msra.mxu0 0.0
    %3386 = vmatprep.subr.mxu0 0.0
    %3387 = vmatpush1.msra.mxu0 0.0
    %3388 = vmatprep.subr.mxu0 0.0
    %3389 = vmatpush1.msra.mxu0 0.0
    %3390 = vmatprep.subr.mxu0 0.0
    %3391 = vmatpush1.msra.mxu0 0.0
    %3392 = vmatprep.subr.mxu0 0.0
    %3393 = vmatpush1.msra.mxu0 0.0
    %3394 = vmatprep.subr.mxu0 0.0
    %3395 = vmatpush1.msra.mxu0 0.0
    %3396 = vmatprep.subr.mxu0 0.0
    %3397 = vmatpush1.msra.mxu0 0.0
    %3398 = vmatprep.subr.mxu0 0.0
    %3399 = vmatpush1.msra.mxu0 0.0
    %3400 = vmatprep.subr.mxu0 0.0
    %3401 = vmatpush1.msra.mxu0 0.0
    %3402 = vmatprep.subr.mxu0 0.0
    %3403 = vmatpush1.msra.mxu0 0.0
    %3404 = vmatprep.subr.mxu0 0.0
    %3405 = vmatpush1.msra.mxu0 0.0
    %3406 = vmatprep.subr.mxu0 0.0
    %3407 = vmatpush1.msra.mxu0 0.0
    %3408 = vmatprep.subr.mxu0 0.0
    %3409 = vmatpush1.msra.mxu0 0.0
    %3410 = vmatprep.subr.mxu0 0.0
    %3411 = vmatpush1.msra.mxu0 0.0
    %3412 = vmatprep.subr.mxu0 0.0
    %3413 = vmatpush1.msra.mxu0 0.0
    %3414 = vmatprep.subr.mxu0 0.0
    %3415 = vmatpush1.msra.mxu0 0.0
    %3416 = vmatprep.subr.mxu0 0.0
    %3417 = vmatpush1.msra.mxu0 0.0
    %3418 = vmatprep.subr.mxu0 0.0
    %3419 = vmatpush1.msra.mxu0 0.0
    %3420 = vmatprep.subr.mxu0 0.0
    %3421 = vmatpush1.msra.mxu0 0.0
    %3422 = vmatprep.subr.mxu0 0.0
    %3423 = vmatpush1.msra.mxu0 0.0
    %3424 = vmatprep.mubr.f32.mxu0 0.0
    %3425 = vmatmul.mubr.f32.gmra.mrb[0].mxu0 %v3355
    %v3426 = vpop.f32.mrb[0].mxu0
    %v3427 = vadd.f32 0.0, %v3426
    %v3428 = vpop.f32.mrb[0].mxu0
    %3429 = vmatprep.mubr.f32.mxu0 0.0
    %3430 = vmatmul.mubr.f32.gmra.mrb[0].mxu0 %v3358
    %v3431 = vpop.f32.mrb[0].mxu0
    %v3432 = vadd.f32 0.0, %v3431
    %v3433 = vpop.f32.mrb[0].mxu0
    %3434 = vdwg.mxu0
    %3436 = vrot.lane.b32.xlu0 %v2563, 96
    %v3437 = vpop.permute.xlu0 %3436
    %v3440 = vsel %vm616, %v3168, 0
    %v3443 = vsel %vm616, %v3173, 0
    %3445 = vmatprep.subr.mxu0 0.0
    %3446 = vmatpush1.msra.mxu0 %v3437
    %3447 = vmatprep.subr.mxu0 0.0
    %3448 = vmatpush1.msra.mxu0 0.0
    %3449 = vmatprep.subr.mxu0 0.0
    %3450 = vmatpush1.msra.mxu0 0.0
    %3451 = vmatprep.subr.mxu0 0.0
    %3452 = vmatpush1.msra.mxu0 0.0
    %3453 = vmatprep.subr.mxu0 0.0
    %3454 = vmatpush1.msra.mxu0 0.0
    %3455 = vmatprep.subr.mxu0 0.0
    %3456 = vmatpush1.msra.mxu0 0.0
    %3457 = vmatprep.subr.mxu0 0.0
    %3458 = vmatpush1.msra.mxu0 0.0
    %3459 = vmatprep.subr.mxu0 0.0
    %3460 = vmatpush1.msra.mxu0 0.0
    %3461 = vmatprep.subr.mxu0 0.0
    %3462 = vmatpush1.msra.mxu0 0.0
    %3463 = vmatprep.subr.mxu0 0.0
    %3464 = vmatpush1.msra.mxu0 0.0
    %3465 = vmatprep.subr.mxu0 0.0
    %3466 = vmatpush1.msra.mxu0 0.0
    %3467 = vmatprep.subr.mxu0 0.0
    %3468 = vmatpush1.msra.mxu0 0.0
    %3469 = vmatprep.subr.mxu0 0.0
    %3470 = vmatpush1.msra.mxu0 0.0
    %3471 = vmatprep.subr.mxu0 0.0
    %3472 = vmatpush1.msra.mxu0 0.0
    %3473 = vmatprep.subr.mxu0 0.0
    %3474 = vmatpush1.msra.mxu0 0.0
    %3475 = vmatprep.subr.mxu0 0.0
    %3476 = vmatpush1.msra.mxu0 0.0
    %3477 = vmatprep.subr.mxu0 0.0
    %3478 = vmatpush1.msra.mxu0 0.0
    %3479 = vmatprep.subr.mxu0 0.0
    %3480 = vmatpush1.msra.mxu0 0.0
    %3481 = vmatprep.subr.mxu0 0.0
    %3482 = vmatpush1.msra.mxu0 0.0
    %3483 = vmatprep.subr.mxu0 0.0
    %3484 = vmatpush1.msra.mxu0 0.0
    %3485 = vmatprep.subr.mxu0 0.0
    %3486 = vmatpush1.msra.mxu0 0.0
    %3487 = vmatprep.subr.mxu0 0.0
    %3488 = vmatpush1.msra.mxu0 0.0
    %3489 = vmatprep.subr.mxu0 0.0
    %3490 = vmatpush1.msra.mxu0 0.0
    %3491 = vmatprep.subr.mxu0 0.0
    %3492 = vmatpush1.msra.mxu0 0.0
    %3493 = vmatprep.subr.mxu0 0.0
    %3494 = vmatpush1.msra.mxu0 0.0
    %3495 = vmatprep.subr.mxu0 0.0
    %3496 = vmatpush1.msra.mxu0 0.0
    %3497 = vmatprep.subr.mxu0 0.0
    %3498 = vmatpush1.msra.mxu0 0.0
    %3499 = vmatprep.subr.mxu0 0.0
    %3500 = vmatpush1.msra.mxu0 0.0
    %3501 = vmatprep.subr.mxu0 0.0
    %3502 = vmatpush1.msra.mxu0 0.0
    %3503 = vmatprep.subr.mxu0 0.0
    %3504 = vmatpush1.msra.mxu0 0.0
    %3505 = vmatprep.subr.mxu0 0.0
    %3506 = vmatpush1.msra.mxu0 0.0
    %3507 = vmatprep.subr.mxu0 0.0
    %3508 = vmatpush1.msra.mxu0 0.0
    %3509 = vmatprep.mubr.f32.mxu0 0.0
    %3510 = vmatmul.mubr.f32.gmra.mrb[0].mxu0 %v3440
    %v3511 = vpop.f32.mrb[0].mxu0
    %v3512 = vadd.f32 0.0, %v3511
    %v3513 = vpop.f32.mrb[0].mxu0
    %3514 = vmatprep.mubr.f32.mxu0 0.0
    %3515 = vmatmul.mubr.f32.gmra.mrb[0].mxu0 %v3443
    %v3516 = vpop.f32.mrb[0].mxu0
    %v3517 = vadd.f32 0.0, %v3516
    %v3518 = vpop.f32.mrb[0].mxu0
    %3519 = vdwg.mxu0
    %3521 = vrot.lane.b32.xlu0 %v2564, 96
    %v3522 = vpop.permute.xlu0 %3521
    %v3525 = vsel %vm616, %v3255, 0
    %v3528 = vsel %vm616, %v3260, 0
    %3530 = vmatprep.subr.mxu0 0.0
    %3531 = vmatpush1.msra.mxu0 %v3522
    %3532 = vmatprep.subr.mxu0 0.0
    %3533 = vmatpush1.msra.mxu0 0.0
    %3534 = vmatprep.subr.mxu0 0.0
    %3535 = vmatpush1.msra.mxu0 0.0
    %3536 = vmatprep.subr.mxu0 0.0
    %3537 = vmatpush1.msra.mxu0 0.0
    %3538 = vmatprep.subr.mxu0 0.0
    %3539 = vmatpush1.msra.mxu0 0.0
    %3540 = vmatprep.subr.mxu0 0.0
    %3541 = vmatpush1.msra.mxu0 0.0
    %3542 = vmatprep.subr.mxu0 0.0
    %3543 = vmatpush1.msra.mxu0 0.0
    %3544 = vmatprep.subr.mxu0 0.0
    %3545 = vmatpush1.msra.mxu0 0.0
    %3546 = vmatprep.subr.mxu0 0.0
    %3547 = vmatpush1.msra.mxu0 0.0
    %3548 = vmatprep.subr.mxu0 0.0
    %3549 = vmatpush1.msra.mxu0 0.0
    %3550 = vmatprep.subr.mxu0 0.0
    %3551 = vmatpush1.msra.mxu0 0.0
    %3552 = vmatprep.subr.mxu0 0.0
    %3553 = vmatpush1.msra.mxu0 0.0
    %3554 = vmatprep.subr.mxu0 0.0
    %3555 = vmatpush1.msra.mxu0 0.0
    %3556 = vmatprep.subr.mxu0 0.0
    %3557 = vmatpush1.msra.mxu0 0.0
    %3558 = vmatprep.subr.mxu0 0.0
    %3559 = vmatpush1.msra.mxu0 0.0
    %3560 = vmatprep.subr.mxu0 0.0
    %3561 = vmatpush1.msra.mxu0 0.0
    %3562 = vmatprep.subr.mxu0 0.0
    %3563 = vmatpush1.msra.mxu0 0.0
    %3564 = vmatprep.subr.mxu0 0.0
    %3565 = vmatpush1.msra.mxu0 0.0
    %3566 = vmatprep.subr.mxu0 0.0
    %3567 = vmatpush1.msra.mxu0 0.0
    %3568 = vmatprep.subr.mxu0 0.0
    %3569 = vmatpush1.msra.mxu0 0.0
    %3570 = vmatprep.subr.mxu0 0.0
    %3571 = vmatpush1.msra.mxu0 0.0
    %3572 = vmatprep.subr.mxu0 0.0
    %3573 = vmatpush1.msra.mxu0 0.0
    %3574 = vmatprep.subr.mxu0 0.0
    %3575 = vmatpush1.msra.mxu0 0.0
    %3576 = vmatprep.subr.mxu0 0.0
    %3577 = vmatpush1.msra.mxu0 0.0
    %3578 = vmatprep.subr.mxu0 0.0
    %3579 = vmatpush1.msra.mxu0 0.0
    %3580 = vmatprep.subr.mxu0 0.0
    %3581 = vmatpush1.msra.mxu0 0.0
    %3582 = vmatprep.subr.mxu0 0.0
    %3583 = vmatpush1.msra.mxu0 0.0
    %3584 = vmatprep.subr.mxu0 0.0
    %3585 = vmatpush1.msra.mxu0 0.0
    %3586 = vmatprep.subr.mxu0 0.0
    %3587 = vmatpush1.msra.mxu0 0.0
    %3588 = vmatprep.subr.mxu0 0.0
    %3589 = vmatpush1.msra.mxu0 0.0
    %3590 = vmatprep.subr.mxu0 0.0
    %3591 = vmatpush1.msra.mxu0 0.0
    %3592 = vmatprep.subr.mxu0 0.0
    %3593 = vmatpush1.msra.mxu0 0.0
    %3594 = vmatprep.mubr.f32.mxu0 0.0
    %3595 = vmatmul.mubr.f32.gmra.mrb[0].mxu0 %v3525
    %v3596 = vpop.f32.mrb[0].mxu0
    %v3597 = vadd.f32 0.0, %v3596
    %v3598 = vpop.f32.mrb[0].mxu0
    %3599 = vmatprep.mubr.f32.mxu0 0.0
    %3600 = vmatmul.mubr.f32.gmra.mrb[0].mxu0 %v3528
    %v3601 = vpop.f32.mrb[0].mxu0
    %v3602 = vadd.f32 0.0, %v3601
    %v3603 = vpop.f32.mrb[0].mxu0
    %3604 = vdwg.mxu0
    %3606 = vrot.lane.b32.xlu0 %v2565, 96
    %v3607 = vpop.permute.xlu0 %3606
    %v3610 = vsel %vm616, %v3342, 0
    %v3613 = vsel %vm616, %v3347, 0
    %3615 = vmatprep.subr.mxu0 0.0
    %3616 = vmatpush1.msra.mxu0 %v3607
    %3617 = vmatprep.subr.mxu0 0.0
    %3618 = vmatpush1.msra.mxu0 0.0
    %3619 = vmatprep.subr.mxu0 0.0
    %3620 = vmatpush1.msra.mxu0 0.0
    %3621 = vmatprep.subr.mxu0 0.0
    %3622 = vmatpush1.msra.mxu0 0.0
    %3623 = vmatprep.subr.mxu0 0.0
    %3624 = vmatpush1.msra.mxu0 0.0
    %3625 = vmatprep.subr.mxu0 0.0
    %3626 = vmatpush1.msra.mxu0 0.0
    %3627 = vmatprep.subr.mxu0 0.0
    %3628 = vmatpush1.msra.mxu0 0.0
    %3629 = vmatprep.subr.mxu0 0.0
    %3630 = vmatpush1.msra.mxu0 0.0
    %3631 = vmatprep.subr.mxu0 0.0
    %3632 = vmatpush1.msra.mxu0 0.0
    %3633 = vmatprep.subr.mxu0 0.0
    %3634 = vmatpush1.msra.mxu0 0.0
    %3635 = vmatprep.subr.mxu0 0.0
    %3636 = vmatpush1.msra.mxu0 0.0
    %3637 = vmatprep.subr.mxu0 0.0
    %3638 = vmatpush1.msra.mxu0 0.0
    %3639 = vmatprep.subr.mxu0 0.0
    %3640 = vmatpush1.msra.mxu0 0.0
    %3641 = vmatprep.subr.mxu0 0.0
    %3642 = vmatpush1.msra.mxu0 0.0
    %3643 = vmatprep.subr.mxu0 0.0
    %3644 = vmatpush1.msra.mxu0 0.0
    %3645 = vmatprep.subr.mxu0 0.0
    %3646 = vmatpush1.msra.mxu0 0.0
    %3647 = vmatprep.subr.mxu0 0.0
    %3648 = vmatpush1.msra.mxu0 0.0
    %3649 = vmatprep.subr.mxu0 0.0
    %3650 = vmatpush1.msra.mxu0 0.0
    %3651 = vmatprep.subr.mxu0 0.0
    %3652 = vmatpush1.msra.mxu0 0.0
    %3653 = vmatprep.subr.mxu0 0.0
    %3654 = vmatpush1.msra.mxu0 0.0
    %3655 = vmatprep.subr.mxu0 0.0
    %3656 = vmatpush1.msra.mxu0 0.0
    %3657 = vmatprep.subr.mxu0 0.0
    %3658 = vmatpush1.msra.mxu0 0.0
    %3659 = vmatprep.subr.mxu0 0.0
    %3660 = vmatpush1.msra.mxu0 0.0
    %3661 = vmatprep.subr.mxu0 0.0
    %3662 = vmatpush1.msra.mxu0 0.0
    %3663 = vmatprep.subr.mxu0 0.0
    %3664 = vmatpush1.msra.mxu0 0.0
    %3665 = vmatprep.subr.mxu0 0.0
    %3666 = vmatpush1.msra.mxu0 0.0
    %3667 = vmatprep.subr.mxu0 0.0
    %3668 = vmatpush1.msra.mxu0 0.0
    %3669 = vmatprep.subr.mxu0 0.0
    %3670 = vmatpush1.msra.mxu0 0.0
    %3671 = vmatprep.subr.mxu0 0.0
    %3672 = vmatpush1.msra.mxu0 0.0
    %3673 = vmatprep.subr.mxu0 0.0
    %3674 = vmatpush1.msra.mxu0 0.0
    %3675 = vmatprep.subr.mxu0 0.0
    %3676 = vmatpush1.msra.mxu0 0.0
    %3677 = vmatprep.subr.mxu0 0.0
    %3678 = vmatpush1.msra.mxu0 0.0
    %3679 = vmatprep.mubr.f32.mxu0 0.0
    %3680 = vmatmul.mubr.f32.gmra.mrb[0].mxu0 %v3610
    %v3681 = vpop.f32.mrb[0].mxu0
    %v3682 = vadd.f32 0.0, %v3681
    %v3683 = vpop.f32.mrb[0].mxu0
    %3684 = vmatprep.mubr.f32.mxu0 0.0
    %3685 = vmatmul.mubr.f32.gmra.mrb[0].mxu0 %v3613
    %v3686 = vpop.f32.mrb[0].mxu0
    %v3687 = vadd.f32 0.0, %v3686
    %v3688 = vpop.f32.mrb[0].mxu0
    %3689 = vdwg.mxu0
    %v3690 = vadd.f32 %v3427, %v3512
    %v3691 = vadd.f32 %v3432, %v3517
    %v3692 = vadd.f32 %v3690, %v3597
    %v3693 = vadd.f32 %v3691, %v3602
    %v3694 = vadd.f32 %v3692, %v3682
    %v3695 = vadd.f32 %v3693, %v3687
    %v3696 = vadd.f32 %v1734, %v3694
    %v3697 = vadd.f32 %v1735, %v3695
    %v3698 = vld [vmem:[%s8 + $0x4] sm:$0x1]
    %v3699 = vld [vmem:[%s8 + $0x5] sm:$0x1]
    %v3700 = vsel %vm144, %v3696, 0.0
    %3701 = vadd.xlane.f32.xlu0 %v3700
    %v3702 = vpop.xlane.xlu0 %3701
    %v3703 = vsel %vm144, %v3697, 0.0
    %3704 = vadd.xlane.f32.xlu0 %v3703
    %v3705 = vpop.xlane.xlu0 %3704
    %v3706 = vmul.f32 %v3702, %v236
    %v3707 = vmul.f32 %v3705, %v236
    %v3708 = vsub.f32 %v3696, %v3706
    %v3709 = vsub.f32 %v3697, %v3707
    %v3710 = vmul.f32 %v3708, %v3708
    %v3711 = vmul.f32 %v3709, %v3709
    %v3712 = vsel %vm144, %v3710, 0.0
    %3713 = vadd.xlane.f32.xlu0 %v3712
    %v3714 = vpop.xlane.xlu0 %3713
    %v3715 = vsel %vm144, %v3711, 0.0
    %3716 = vadd.xlane.f32.xlu0 %v3715
    %v3717 = vpop.xlane.xlu0 %3716
    %v3718 = vmul.f32 %v3714, %v249
    %v3719 = vmul.f32 %v3717, %v249
    %v3720 = vrsqrt.pop %v3718
    %v3721 = vmul.f32 %v3718, %v3720
    %vm3722 = vcmp.eq.f32.partialorder %v3718, inf
    %v3723 = vsel %vm3722, %v3718, %v3721
    %vm3724 = vcmp.eq.f32.partialorder %v3718, 0.0
    %v3725 = vand.u32 %v3718, 2147483648
    %v3726 = vsel %vm3724, %v3725, %v3723
    %v3727 = vrsqrt.pop %v3719
    %v3728 = vmul.f32 %v3719, %v3727
    %vm3729 = vcmp.eq.f32.partialorder %v3719, inf
    %v3730 = vsel %vm3729, %v3719, %v3728
    %vm3731 = vcmp.eq.f32.partialorder %v3719, 0.0
    %v3732 = vand.u32 %v3719, 2147483648
    %v3733 = vsel %vm3731, %v3732, %v3730
    %v3734 = vadd.f32 %v3726, 1e-06
    %v3735 = vadd.f32 %v3733, 1e-06
    %v3736 = vrcp.pop %v3734
    %v3737 = vrcp.pop %v3735
    %v3738 = vlaneseq
    %v3739 = vshrl.u32 %v3738, 7
    %v3740 = vsub.s32 0, %v3739
    %v3741 = vrot.slane %v3698, %v3740
    %v3742 = vmul.f32 %v3741, %v3708
    %v3743 = vmul.f32 %v3741, %v3709
    %v3744 = vmul.f32 %v3742, %v3736
    %v3745 = vmul.f32 %v3743, %v3737
    %v3746 = vlaneseq
    %v3747 = vshrl.u32 %v3746, 7
    %v3748 = vsub.s32 0, %v3747
    %v3749 = vrot.slane %v3699, %v3748
    %v3750 = vadd.f32 %v3744, %v3749
    %v3751 = vadd.f32 %v3745, %v3749
    %v3752 = vld [vmem:[%s7] sm:$0xff]
    %v3753 = vld [vmem:[%s7 + $0x8] sm:$0xff]
    %v3754 = vld [vmem:[%s7 + $0x10] sm:$0xff]
    %v3755 = vld [vmem:[%s7 + $0x18] sm:$0xff]
    %v3756 = vld [vmem:[%s7 + $0x20] sm:$0xff]
    %v3757 = vld [vmem:[%s7 + $0x28] sm:$0xff]
    %v3758 = vld [vmem:[%s7 + $0x30] sm:$0xff]
    %v3759 = vld [vmem:[%s7 + $0x38] sm:$0xff]
    %v3760 = vld [vmem:[%s7 + $0x40] sm:$0xff]
    %v3761 = vld [vmem:[%s7 + $0x48] sm:$0xff]
    %v3762 = vld [vmem:[%s7 + $0x50] sm:$0xff]
    %v3763 = vld [vmem:[%s7 + $0x58] sm:$0xff]
    %v3764 = vld [vmem:[%s8 + $0x6] sm:$0x1]
    %v3765 = vrot.slane %v3750, 7
    %v3766 = vrot.slane %v3751, 7
    %vm3767 = vcmp.lt.s32.totalorder %v40, 1
    %v3768 = vsel %vm3767, %v3765, %v3766
    %v3769 = vsel %vm3767, %v3766, %v3765
    %v3770 = vsel %vm130, 1, 0
    %v3771 = vsel %vm131, 1, 0
    %vm3772 = vcmp.eq.s32.totalorder %v3770, 1
    %vm3773 = vcmp.eq.s32.totalorder %v3771, 1
    %v3774 = vsel %vm3772, %v3769, 0.0
    %v3775 = vsel %vm3773, %v3768, 0.0
    %v3776 = vrot.slane %v3750, 6
    %v3777 = vrot.slane %v3751, 6
    %vm3778 = vcmp.lt.s32.totalorder %v40, 2
    %v3779 = vsel %vm3778, %v3776, %v3777
    %v3780 = vsel %vm3778, %v3777, %v3776
    %v3781 = vsel %vm134, 1, 0
    %v3782 = vsel %vm135, 1, 0
    %vm3783 = vcmp.eq.s32.totalorder %v3781, 1
    %vm3784 = vcmp.eq.s32.totalorder %v3782, 1
    %v3785 = vsel %vm3783, %v3780, 0.0
    %v3786 = vsel %vm3784, %v3779, 0.0
    %3789 = vrot.lane.b32.xlu0 %v3774, 32
    %v3790 = vpop.permute.xlu0 %3789
    %3791 = vrot.lane.b32.xlu0 %v3775, 32
    %v3792 = vpop.permute.xlu0 %3791
    %3797 = vrot.lane.b32.xlu0 %v3750, 64
    %v3798 = vpop.permute.xlu0 %3797
    %3799 = vrot.lane.b32.xlu0 %v3751, 64
    %v3800 = vpop.permute.xlu0 %3799
    %v3803 = vsel %vm144, %v3785, %v3790
    %v3804 = vsel %vm144, %v3786, %v3792
    %vm3805 = vcmask 523264
    %v3806 = vsel %vm3805, %v3803, %v3798
    %v3807 = vsel %vm3805, %v3804, %v3800
    %v3808 = vlaneseq
    %v3809 = vshrl.u32 %v3808, 7
    %v3810 = vsub.s32 0, %v3809
    %v3811 = vrot.slane %v3764, %v3810
    %vm3812 = vcmask 785408
    %v3814 = vsel %vm3812, %v3806, 0
    %v3817 = vsel %vm3812, %v3807, 0
    %3819 = vmatprep.subr.mxu0 0.0
    %3820 = vmatpush1.msra.mxu0 %v3752
    %3821 = vmatprep.subr.mxu0 0.0
    %3822 = vmatpush1.msra.mxu0 %v3753
    %3823 = vmatprep.subr.mxu0 0.0
    %3824 = vmatpush1.msra.mxu0 %v3754
    %3825 = vmatprep.subr.mxu0 0.0
    %3826 = vmatpush1.msra.mxu0 %v3755
    %3827 = vmatprep.subr.mxu0 0.0
    %3828 = vmatpush1.msra.mxu0 %v3756
    %3829 = vmatprep.subr.mxu0 0.0
    %3830 = vmatpush1.msra.mxu0 %v3757
    %3831 = vmatprep.subr.mxu0 0.0
    %3832 = vmatpush1.msra.mxu0 %v3758
    %3833 = vmatprep.subr.mxu0 0.0
    %3834 = vmatpush1.msra.mxu0 %v3759
    %3835 = vmatprep.subr.mxu0 0.0
    %3836 = vmatpush1.msra.mxu0 %v3760
    %3837 = vmatprep.subr.mxu0 0.0
    %3838 = vmatpush1.msra.mxu0 %v3761
    %3839 = vmatprep.subr.mxu0 0.0
    %3840 = vmatpush1.msra.mxu0 %v3762
    %3841 = vmatprep.subr.mxu0 0.0
    %3842 = vmatpush1.msra.mxu0 %v3763
    %3843 = vmatprep.subr.mxu0 0.0
    %3844 = vmatpush1.msra.mxu0 0.0
    %3845 = vmatprep.subr.mxu0 0.0
    %3846 = vmatpush1.msra.mxu0 0.0
    %3847 = vmatprep.subr.mxu0 0.0
    %3848 = vmatpush1.msra.mxu0 0.0
    %3849 = vmatprep.subr.mxu0 0.0
    %3850 = vmatpush1.msra.mxu0 0.0
    %3851 = vmatprep.subr.mxu0 0.0
    %3852 = vmatpush1.msra.mxu0 0.0
    %3853 = vmatprep.subr.mxu0 0.0
    %3854 = vmatpush1.msra.mxu0 0.0
    %3855 = vmatprep.subr.mxu0 0.0
    %3856 = vmatpush1.msra.mxu0 0.0
    %3857 = vmatprep.subr.mxu0 0.0
    %3858 = vmatpush1.msra.mxu0 0.0
    %3859 = vmatprep.subr.mxu0 0.0
    %3860 = vmatpush1.msra.mxu0 0.0
    %3861 = vmatprep.subr.mxu0 0.0
    %3862 = vmatpush1.msra.mxu0 0.0
    %3863 = vmatprep.subr.mxu0 0.0
    %3864 = vmatpush1.msra.mxu0 0.0
    %3865 = vmatprep.subr.mxu0 0.0
    %3866 = vmatpush1.msra.mxu0 0.0
    %3867 = vmatprep.subr.mxu0 0.0
    %3868 = vmatpush1.msra.mxu0 0.0
    %3869 = vmatprep.subr.mxu0 0.0
    %3870 = vmatpush1.msra.mxu0 0.0
    %3871 = vmatprep.subr.mxu0 0.0
    %3872 = vmatpush1.msra.mxu0 0.0
    %3873 = vmatprep.subr.mxu0 0.0
    %3874 = vmatpush1.msra.mxu0 0.0
    %3875 = vmatprep.subr.mxu0 0.0
    %3876 = vmatpush1.msra.mxu0 0.0
    %3877 = vmatprep.subr.mxu0 0.0
    %3878 = vmatpush1.msra.mxu0 0.0
    %3879 = vmatprep.subr.mxu0 0.0
    %3880 = vmatpush1.msra.mxu0 0.0
    %3881 = vmatprep.subr.mxu0 0.0
    %3882 = vmatpush1.msra.mxu0 0.0
    %3883 = vmatprep.mubr.f32.mxu0 0.0
    %3884 = vmatmul.mubr.f32.gmra.mrb[0].mxu0 %v3814
    %v3885 = vpop.f32.mrb[0].mxu0
    %v3886 = vadd.f32 %v3811, %v3885
    %v3887 = vpop.f32.mrb[0].mxu0
    %3888 = vmatprep.mubr.f32.mxu0 0.0
    %3889 = vmatmul.mubr.f32.gmra.mrb[0].mxu0 %v3817
    %v3890 = vpop.f32.mrb[0].mxu0
    %v3891 = vadd.f32 %v3811, %v3890
    %v3892 = vpop.f32.mrb[0].mxu0
    %3893 = vdwg.mxu0
    %v3894 = vmax.f32 %v3886, 0.0
    %v3895 = vmax.f32 %v3891, 0.0
    %v3896 = vld [vmem:[%s7 + $0x60] sm:$0xff]
    %v3897 = vld [vmem:[%s7 + $0x68] sm:$0xff]
    %v3898 = vld [vmem:[%s7 + $0x70] sm:$0xff]
    %v3899 = vld [vmem:[%s7 + $0x78] sm:$0xff]
    %v3900 = vld [vmem:[%s7 + $0x80] sm:$0xff]
    %v3901 = vld [vmem:[%s7 + $0x88] sm:$0xff]
    %v3902 = vld [vmem:[%s7 + $0x90] sm:$0xff]
    %v3903 = vld [vmem:[%s7 + $0x98] sm:$0xff]
    %v3904 = vld [vmem:[%s7 + $0xa0] sm:$0xff]
    %v3905 = vld [vmem:[%s7 + $0xa8] sm:$0xff]
    %v3906 = vld [vmem:[%s7 + $0xb0] sm:$0xff]
    %v3907 = vld [vmem:[%s7 + $0xb8] sm:$0xff]
    %v3908 = vld [vmem:[%s7 + $0xc0] sm:$0xff]
    %v3909 = vld [vmem:[%s7 + $0xc8] sm:$0xff]
    %v3910 = vld [vmem:[%s7 + $0xd0] sm:$0xff]
    %v3911 = vld [vmem:[%s7 + $0xd8] sm:$0xff]
    %v3912 = vld [vmem:[%s7 + $0xe0] sm:$0xff]
    %v3913 = vld [vmem:[%s7 + $0xe8] sm:$0xff]
    %v3914 = vld [vmem:[%s7 + $0xf0] sm:$0xff]
    %v3915 = vld [vmem:[%s7 + $0xf8] sm:$0xff]
    %v3916 = vld [vmem:[%s7 + $0x100] sm:$0xff]
    %v3917 = vld [vmem:[%s7 + $0x108] sm:$0xff]
    %v3918 = vld [vmem:[%s7 + $0x110] sm:$0xff]
    %v3919 = vld [vmem:[%s7 + $0x118] sm:$0xff]
    %v3920 = vld [vmem:[%s8 + $0x7] sm:$0x1]
    %v3921 = vrot.slane %v3894, 7
    %v3922 = vrot.slane %v3895, 7
    %v3923 = vsel %vm3767, %v3921, %v3922
    %v3924 = vsel %vm3767, %v3922, %v3921
    %v3925 = vsel %vm3772, %v3924, 0.0
    %v3926 = vsel %vm3773, %v3923, 0.0
    %v3927 = vrot.slane %v3894, 6
    %v3928 = vrot.slane %v3895, 6
    %v3929 = vsel %vm3778, %v3927, %v3928
    %v3930 = vsel %vm3778, %v3928, %v3927
    %v3931 = vsel %vm3783, %v3930, 0.0
    %v3932 = vsel %vm3784, %v3929, 0.0
    %3935 = vrot.lane.b32.xlu0 %v3925, 64
    %v3936 = vpop.permute.xlu0 %3935
    %3937 = vrot.lane.b32.xlu0 %v3926, 64
    %v3938 = vpop.permute.xlu0 %3937
    %v3941 = vsel %vm3805, %v3931, %v3936
    %v3942 = vsel %vm3805, %v3932, %v3938
    %v3943 = vlaneseq
    %v3944 = vshrl.u32 %v3943, 7
    %v3945 = vsub.s32 0, %v3944
    %v3946 = vrot.slane %v3920, %v3945
    %v3948 = vsel %vm3805, %v3894, 0
    %v3951 = vsel %vm3805, %v3895, 0
    %3953 = vmatprep.subr.mxu0 0.0
    %3954 = vmatpush1.msra.mxu0 %v3896
    %3955 = vmatprep.subr.mxu0 0.0
    %3956 = vmatpush1.msra.mxu0 %v3897
    %3957 = vmatprep.subr.mxu0 0.0
    %3958 = vmatpush1.msra.mxu0 %v3898
    %3959 = vmatprep.subr.mxu0 0.0
    %3960 = vmatpush1.msra.mxu0 %v3899
    %3961 = vmatprep.subr.mxu0 0.0
    %3962 = vmatpush1.msra.mxu0 %v3900
    %3963 = vmatprep.subr.mxu0 0.0
    %3964 = vmatpush1.msra.mxu0 %v3901
    %3965 = vmatprep.subr.mxu0 0.0
    %3966 = vmatpush1.msra.mxu0 %v3902
    %3967 = vmatprep.subr.mxu0 0.0
    %3968 = vmatpush1.msra.mxu0 %v3903
    %3969 = vmatprep.subr.mxu0 0.0
    %3970 = vmatpush1.msra.mxu0 %v3904
    %3971 = vmatprep.subr.mxu0 0.0
    %3972 = vmatpush1.msra.mxu0 %v3905
    %3973 = vmatprep.subr.mxu0 0.0
    %3974 = vmatpush1.msra.mxu0 %v3906
    %3975 = vmatprep.subr.mxu0 0.0
    %3976 = vmatpush1.msra.mxu0 %v3907
    %3977 = vmatprep.subr.mxu0 0.0
    %3978 = vmatpush1.msra.mxu0 %v3908
    %3979 = vmatprep.subr.mxu0 0.0
    %3980 = vmatpush1.msra.mxu0 %v3909
    %3981 = vmatprep.subr.mxu0 0.0
    %3982 = vmatpush1.msra.mxu0 %v3910
    %3983 = vmatprep.subr.mxu0 0.0
    %3984 = vmatpush1.msra.mxu0 %v3911
    %3985 = vmatprep.subr.mxu0 0.0
    %3986 = vmatpush1.msra.mxu0 %v3912
    %3987 = vmatprep.subr.mxu0 0.0
    %3988 = vmatpush1.msra.mxu0 %v3913
    %3989 = vmatprep.subr.mxu0 0.0
    %3990 = vmatpush1.msra.mxu0 %v3914
    %3991 = vmatprep.subr.mxu0 0.0
    %3992 = vmatpush1.msra.mxu0 %v3915
    %3993 = vmatprep.subr.mxu0 0.0
    %3994 = vmatpush1.msra.mxu0 %v3916
    %3995 = vmatprep.subr.mxu0 0.0
    %3996 = vmatpush1.msra.mxu0 %v3917
    %3997 = vmatprep.subr.mxu0 0.0
    %3998 = vmatpush1.msra.mxu0 %v3918
    %3999 = vmatprep.subr.mxu0 0.0
    %4000 = vmatpush1.msra.mxu0 %v3919
    %4001 = vmatprep.subr.mxu0 0.0
    %4002 = vmatpush1.msra.mxu0 0.0
    %4003 = vmatprep.subr.mxu0 0.0
    %4004 = vmatpush1.msra.mxu0 0.0
    %4005 = vmatprep.subr.mxu0 0.0
    %4006 = vmatpush1.msra.mxu0 0.0
    %4007 = vmatprep.subr.mxu0 0.0
    %4008 = vmatpush1.msra.mxu0 0.0
    %4009 = vmatprep.subr.mxu0 0.0
    %4010 = vmatpush1.msra.mxu0 0.0
    %4011 = vmatprep.subr.mxu0 0.0
    %4012 = vmatpush1.msra.mxu0 0.0
    %4013 = vmatprep.subr.mxu0 0.0
    %4014 = vmatpush1.msra.mxu0 0.0
    %4015 = vmatprep.subr.mxu0 0.0
    %4016 = vmatpush1.msra.mxu0 0.0
    %4017 = vmatprep.mubr.f32.mxu0 %v3948
    %4018 = vmatmul.mubr.f32.gmra.mrb[0].mxu0 %v3941
    %v4019 = vpop.f32.mrb[0].mxu0
    %v4020 = vadd.f32 %v3946, %v4019
    %v4021 = vpop.f32.mrb[0].mxu0
    %4022 = vmatprep.mubr.f32.mxu0 %v3951
    %4023 = vmatmul.mubr.f32.gmra.mrb[0].mxu0 %v3942
    %v4024 = vpop.f32.mrb[0].mxu0
    %v4025 = vadd.f32 %v3946, %v4024
    %v4026 = vpop.f32.mrb[0].mxu0
    %4027 = vdwg.mxu0
    %v4028 = vmax.f32 %v4020, 0.0
    %v4029 = vmax.f32 %v4025, 0.0
    %v4030 = vadd.f32 %v3696, %v4028
    %v4031 = vadd.f32 %v3697, %v4029
    %v4032 = vld [vmem:[%s3] sm:$0xff]
    %v4033 = vld [vmem:[%s3 + $0x8] sm:$0xff]
    %v4034 = vld [vmem:[%s8 + $0x8] sm:$0x1]
    %v4035 = vld [vmem:[%s8 + $0x9] sm:$0x1]
    %v4036 = vsel %vm144, %v4030, 0.0
    %4037 = vadd.xlane.f32.xlu0 %v4036
    %v4038 = vpop.xlane.xlu0 %4037
    %v4039 = vsel %vm144, %v4031, 0.0
    %4040 = vadd.xlane.f32.xlu0 %v4039
    %v4041 = vpop.xlane.xlu0 %4040
    %v4042 = vmul.f32 %v4038, %v236
    %v4043 = vmul.f32 %v4041, %v236
    %v4044 = vsub.f32 %v4030, %v4042
    %v4045 = vsub.f32 %v4031, %v4043
    %v4046 = vmul.f32 %v4044, %v4044
    %v4047 = vmul.f32 %v4045, %v4045
    %v4048 = vsel %vm144, %v4046, 0.0
    %4049 = vadd.xlane.f32.xlu0 %v4048
    %v4050 = vpop.xlane.xlu0 %4049
    %v4051 = vsel %vm144, %v4047, 0.0
    %4052 = vadd.xlane.f32.xlu0 %v4051
    %v4053 = vpop.xlane.xlu0 %4052
    %v4054 = vmul.f32 %v4050, %v249
    %v4055 = vmul.f32 %v4053, %v249
    %v4056 = vrsqrt.pop %v4054
    %v4057 = vmul.f32 %v4054, %v4056
    %vm4058 = vcmp.eq.f32.partialorder %v4054, inf
    %v4059 = vsel %vm4058, %v4054, %v4057
    %vm4060 = vcmp.eq.f32.partialorder %v4054, 0.0
    %v4061 = vand.u32 %v4054, 2147483648
    %v4062 = vsel %vm4060, %v4061, %v4059
    %v4063 = vrsqrt.pop %v4055
    %v4064 = vmul.f32 %v4055, %v4063
    %vm4065 = vcmp.eq.f32.partialorder %v4055, inf
    %v4066 = vsel %vm4065, %v4055, %v4064
    %vm4067 = vcmp.eq.f32.partialorder %v4055, 0.0
    %v4068 = vand.u32 %v4055, 2147483648
    %v4069 = vsel %vm4067, %v4068, %v4066
    %v4070 = vadd.f32 %v4062, 1e-06
    %v4071 = vadd.f32 %v4069, 1e-06
    %v4072 = vrcp.pop %v4070
    %v4073 = vrcp.pop %v4071
    %v4074 = vlaneseq
    %v4075 = vshrl.u32 %v4074, 7
    %v4076 = vsub.s32 0, %v4075
    %v4077 = vrot.slane %v4034, %v4076
    %v4078 = vmul.f32 %v4077, %v4044
    %v4079 = vmul.f32 %v4077, %v4045
    %v4080 = vmul.f32 %v4078, %v4072
    %v4081 = vmul.f32 %v4079, %v4073
    %v4082 = vlaneseq
    %v4083 = vshrl.u32 %v4082, 7
    %v4084 = vsub.s32 0, %v4083
    %v4085 = vrot.slane %v4035, %v4084
    %v4086 = vadd.f32 %v4080, %v4085
    %v4087 = vadd.f32 %v4081, %v4085
    %v4088 = vld [vmem:[%s5] sm:$0xff]
    %v4089 = vld [vmem:[%s5 + $0x8] sm:$0xff]
    %v4090 = vld [vmem:[%s5 + $0x10] sm:$0xff]
    %v4091 = vld [vmem:[%s5 + $0x18] sm:$0xff]
    %v4092 = vld [vmem:[%s5 + $0x20] sm:$0xff]
    %v4093 = vld [vmem:[%s5 + $0x28] sm:$0xff]
    %v4094 = vld [vmem:[%s5 + $0x30] sm:$0xff]
    %v4095 = vld [vmem:[%s5 + $0x38] sm:$0xff]
    %v4096 = vld [vmem:[%s5 + $0x40] sm:$0xff]
    %v4097 = vld [vmem:[%s5 + $0x48] sm:$0xff]
    %v4098 = vld [vmem:[%s5 + $0x50] sm:$0xff]
    %v4099 = vld [vmem:[%s5 + $0x58] sm:$0xff]
    %v4100 = vld [vmem:[%s5 + $0x60] sm:$0xff]
    %v4101 = vld [vmem:[%s5 + $0x68] sm:$0xff]
    %v4102 = vld [vmem:[%s5 + $0x70] sm:$0xff]
    %v4103 = vld [vmem:[%s5 + $0x78] sm:$0xff]
    %4108 = vrot.lane.b32.xlu0 %v4088, 80
    %v4109 = vpop.permute.xlu0 %4108
    %4110 = vrot.lane.b32.xlu0 %v4089, 80
    %v4111 = vpop.permute.xlu0 %4110
    %4112 = vrot.lane.b32.xlu0 %v4090, 80
    %v4113 = vpop.permute.xlu0 %4112
    %4114 = vrot.lane.b32.xlu0 %v4091, 80
    %v4115 = vpop.permute.xlu0 %4114
    %v4121 = vsel %vm144, %v4086, 0
    %v4124 = vsel %vm144, %v4087, 0
    %4126 = vmatprep.subr.mxu0 0.0
    %4127 = vmatpush1.msra.mxu0 %v4109
    %4128 = vmatprep.subr.mxu0 0.0
    %4129 = vmatpush1.msra.mxu0 %v4111
    %4130 = vmatprep.subr.mxu0 0.0
    %4131 = vmatpush1.msra.mxu0 %v4113
    %4132 = vmatprep.subr.mxu0 0.0
    %4133 = vmatpush1.msra.mxu0 %v4115
    %4134 = vmatprep.subr.mxu0 0.0
    %4135 = vmatpush1.msra.mxu0 0.0
    %4136 = vmatprep.subr.mxu0 0.0
    %4137 = vmatpush1.msra.mxu0 0.0
    %4138 = vmatprep.subr.mxu0 0.0
    %4139 = vmatpush1.msra.mxu0 0.0
    %4140 = vmatprep.subr.mxu0 0.0
    %4141 = vmatpush1.msra.mxu0 0.0
    %4142 = vmatprep.subr.mxu0 0.0
    %4143 = vmatpush1.msra.mxu0 0.0
    %4144 = vmatprep.subr.mxu0 0.0
    %4145 = vmatpush1.msra.mxu0 0.0
    %4146 = vmatprep.subr.mxu0 0.0
    %4147 = vmatpush1.msra.mxu0 0.0
    %4148 = vmatprep.subr.mxu0 0.0
    %4149 = vmatpush1.msra.mxu0 0.0
    %4150 = vmatprep.subr.mxu0 0.0
    %4151 = vmatpush1.msra.mxu0 0.0
    %4152 = vmatprep.subr.mxu0 0.0
    %4153 = vmatpush1.msra.mxu0 0.0
    %4154 = vmatprep.subr.mxu0 0.0
    %4155 = vmatpush1.msra.mxu0 0.0
    %4156 = vmatprep.subr.mxu0 0.0
    %4157 = vmatpush1.msra.mxu0 0.0
    %4158 = vmatprep.subr.mxu0 0.0
    %4159 = vmatpush1.msra.mxu0 0.0
    %4160 = vmatprep.subr.mxu0 0.0
    %4161 = vmatpush1.msra.mxu0 0.0
    %4162 = vmatprep.subr.mxu0 0.0
    %4163 = vmatpush1.msra.mxu0 0.0
    %4164 = vmatprep.subr.mxu0 0.0
    %4165 = vmatpush1.msra.mxu0 0.0
    %4166 = vmatprep.subr.mxu0 0.0
    %4167 = vmatpush1.msra.mxu0 0.0
    %4168 = vmatprep.subr.mxu0 0.0
    %4169 = vmatpush1.msra.mxu0 0.0
    %4170 = vmatprep.subr.mxu0 0.0
    %4171 = vmatpush1.msra.mxu0 0.0
    %4172 = vmatprep.subr.mxu0 0.0
    %4173 = vmatpush1.msra.mxu0 0.0
    %4174 = vmatprep.subr.mxu0 0.0
    %4175 = vmatpush1.msra.mxu0 0.0
    %4176 = vmatprep.subr.mxu0 0.0
    %4177 = vmatpush1.msra.mxu0 0.0
    %4178 = vmatprep.subr.mxu0 0.0
    %4179 = vmatpush1.msra.mxu0 0.0
    %4180 = vmatprep.subr.mxu0 0.0
    %4181 = vmatpush1.msra.mxu0 0.0
    %4182 = vmatprep.subr.mxu0 0.0
    %4183 = vmatpush1.msra.mxu0 0.0
    %4184 = vmatprep.subr.mxu0 0.0
    %4185 = vmatpush1.msra.mxu0 0.0
    %4186 = vmatprep.subr.mxu0 0.0
    %4187 = vmatpush1.msra.mxu0 0.0
    %4188 = vmatprep.subr.mxu0 0.0
    %4189 = vmatpush1.msra.mxu0 0.0
    %4190 = vmatprep.mubr.f32.mxu0 0.0
    %4191 = vmatmul.mubr.f32.gmra.mrb[0].mxu0 %v4121
    %v4192 = vpop.f32.mrb[0].mxu0
    %v4193 = vadd.f32 0.0, %v4192
    %v4194 = vpop.f32.mrb[0].mxu0
    %4195 = vmatprep.mubr.f32.mxu0 0.0
    %4196 = vmatmul.mubr.f32.gmra.mrb[0].mxu0 %v4124
    %v4197 = vpop.f32.mrb[0].mxu0
    %v4198 = vadd.f32 0.0, %v4197
    %v4199 = vpop.f32.mrb[0].mxu0
    %4200 = vdwg.mxu0
    %4205 = vrot.lane.b32.xlu0 %v4092, 80
    %v4206 = vpop.permute.xlu0 %4205
    %4207 = vrot.lane.b32.xlu0 %v4093, 80
    %v4208 = vpop.permute.xlu0 %4207
    %4209 = vrot.lane.b32.xlu0 %v4094, 80
    %v4210 = vpop.permute.xlu0 %4209
    %4211 = vrot.lane.b32.xlu0 %v4095, 80
    %v4212 = vpop.permute.xlu0 %4211
    %4217 = vmatprep.subr.mxu0 0.0
    %4218 = vmatpush1.msra.mxu0 %v4206
    %4219 = vmatprep.subr.mxu0 0.0
    %4220 = vmatpush1.msra.mxu0 %v4208
    %4221 = vmatprep.subr.mxu0 0.0
    %4222 = vmatpush1.msra.mxu0 %v4210
    %4223 = vmatprep.subr.mxu0 0.0
    %4224 = vmatpush1.msra.mxu0 %v4212
    %4225 = vmatprep.subr.mxu0 0.0
    %4226 = vmatpush1.msra.mxu0 0.0
    %4227 = vmatprep.subr.mxu0 0.0
    %4228 = vmatpush1.msra.mxu0 0.0
    %4229 = vmatprep.subr.mxu0 0.0
    %4230 = vmatpush1.msra.mxu0 0.0
    %4231 = vmatprep.subr.mxu0 0.0
    %4232 = vmatpush1.msra.mxu0 0.0
    %4233 = vmatprep.subr.mxu0 0.0
    %4234 = vmatpush1.msra.mxu0 0.0
    %4235 = vmatprep.subr.mxu0 0.0
    %4236 = vmatpush1.msra.mxu0 0.0
    %4237 = vmatprep.subr.mxu0 0.0
    %4238 = vmatpush1.msra.mxu0 0.0
    %4239 = vmatprep.subr.mxu0 0.0
    %4240 = vmatpush1.msra.mxu0 0.0
    %4241 = vmatprep.subr.mxu0 0.0
    %4242 = vmatpush1.msra.mxu0 0.0
    %4243 = vmatprep.subr.mxu0 0.0
    %4244 = vmatpush1.msra.mxu0 0.0
    %4245 = vmatprep.subr.mxu0 0.0
    %4246 = vmatpush1.msra.mxu0 0.0
    %4247 = vmatprep.subr.mxu0 0.0
    %4248 = vmatpush1.msra.mxu0 0.0
    %4249 = vmatprep.subr.mxu0 0.0
    %4250 = vmatpush1.msra.mxu0 0.0
    %4251 = vmatprep.subr.mxu0 0.0
    %4252 = vmatpush1.msra.mxu0 0.0
    %4253 = vmatprep.subr.mxu0 0.0
    %4254 = vmatpush1.msra.mxu0 0.0
    %4255 = vmatprep.subr.mxu0 0.0
    %4256 = vmatpush1.msra.mxu0 0.0
    %4257 = vmatprep.subr.mxu0 0.0
    %4258 = vmatpush1.msra.mxu0 0.0
    %4259 = vmatprep.subr.mxu0 0.0
    %4260 = vmatpush1.msra.mxu0 0.0
    %4261 = vmatprep.subr.mxu0 0.0
    %4262 = vmatpush1.msra.mxu0 0.0
    %4263 = vmatprep.subr.mxu0 0.0
    %4264 = vmatpush1.msra.mxu0 0.0
    %4265 = vmatprep.subr.mxu0 0.0
    %4266 = vmatpush1.msra.mxu0 0.0
    %4267 = vmatprep.subr.mxu0 0.0
    %4268 = vmatpush1.msra.mxu0 0.0
    %4269 = vmatprep.subr.mxu0 0.0
    %4270 = vmatpush1.msra.mxu0 0.0
    %4271 = vmatprep.subr.mxu0 0.0
    %4272 = vmatpush1.msra.mxu0 0.0
    %4273 = vmatprep.subr.mxu0 0.0
    %4274 = vmatpush1.msra.mxu0 0.0
    %4275 = vmatprep.subr.mxu0 0.0
    %4276 = vmatpush1.msra.mxu0 0.0
    %4277 = vmatprep.subr.mxu0 0.0
    %4278 = vmatpush1.msra.mxu0 0.0
    %4279 = vmatprep.subr.mxu0 0.0
    %4280 = vmatpush1.msra.mxu0 0.0
    %4281 = vmatprep.mubr.f32.mxu0 0.0
    %4282 = vmatmul.mubr.f32.gmra.mrb[0].mxu0 %v4121
    %v4283 = vpop.f32.mrb[0].mxu0
    %v4284 = vadd.f32 0.0, %v4283
    %v4285 = vpop.f32.mrb[0].mxu0
    %4286 = vmatprep.mubr.f32.mxu0 0.0
    %4287 = vmatmul.mubr.f32.gmra.mrb[0].mxu0 %v4124
    %v4288 = vpop.f32.mrb[0].mxu0
    %v4289 = vadd.f32 0.0, %v4288
    %v4290 = vpop.f32.mrb[0].mxu0
    %4291 = vdwg.mxu0
    %4296 = vrot.lane.b32.xlu0 %v4096, 80
    %v4297 = vpop.permute.xlu0 %4296
    %4298 = vrot.lane.b32.xlu0 %v4097, 80
    %v4299 = vpop.permute.xlu0 %4298
    %4300 = vrot.lane.b32.xlu0 %v4098, 80
    %v4301 = vpop.permute.xlu0 %4300
    %4302 = vrot.lane.b32.xlu0 %v4099, 80
    %v4303 = vpop.permute.xlu0 %4302
    %4308 = vmatprep.subr.mxu0 0.0
    %4309 = vmatpush1.msra.mxu0 %v4297
    %4310 = vmatprep.subr.mxu0 0.0
    %4311 = vmatpush1.msra.mxu0 %v4299
    %4312 = vmatprep.subr.mxu0 0.0
    %4313 = vmatpush1.msra.mxu0 %v4301
    %4314 = vmatprep.subr.mxu0 0.0
    %4315 = vmatpush1.msra.mxu0 %v4303
    %4316 = vmatprep.subr.mxu0 0.0
    %4317 = vmatpush1.msra.mxu0 0.0
    %4318 = vmatprep.subr.mxu0 0.0
    %4319 = vmatpush1.msra.mxu0 0.0
    %4320 = vmatprep.subr.mxu0 0.0
    %4321 = vmatpush1.msra.mxu0 0.0
    %4322 = vmatprep.subr.mxu0 0.0
    %4323 = vmatpush1.msra.mxu0 0.0
    %4324 = vmatprep.subr.mxu0 0.0
    %4325 = vmatpush1.msra.mxu0 0.0
    %4326 = vmatprep.subr.mxu0 0.0
    %4327 = vmatpush1.msra.mxu0 0.0
    %4328 = vmatprep.subr.mxu0 0.0
    %4329 = vmatpush1.msra.mxu0 0.0
    %4330 = vmatprep.subr.mxu0 0.0
    %4331 = vmatpush1.msra.mxu0 0.0
    %4332 = vmatprep.subr.mxu0 0.0
    %4333 = vmatpush1.msra.mxu0 0.0
    %4334 = vmatprep.subr.mxu0 0.0
    %4335 = vmatpush1.msra.mxu0 0.0
    %4336 = vmatprep.subr.mxu0 0.0
    %4337 = vmatpush1.msra.mxu0 0.0
    %4338 = vmatprep.subr.mxu0 0.0
    %4339 = vmatpush1.msra.mxu0 0.0
    %4340 = vmatprep.subr.mxu0 0.0
    %4341 = vmatpush1.msra.mxu0 0.0
    %4342 = vmatprep.subr.mxu0 0.0
    %4343 = vmatpush1.msra.mxu0 0.0
    %4344 = vmatprep.subr.mxu0 0.0
    %4345 = vmatpush1.msra.mxu0 0.0
    %4346 = vmatprep.subr.mxu0 0.0
    %4347 = vmatpush1.msra.mxu0 0.0
    %4348 = vmatprep.subr.mxu0 0.0
    %4349 = vmatpush1.msra.mxu0 0.0
    %4350 = vmatprep.subr.mxu0 0.0
    %4351 = vmatpush1.msra.mxu0 0.0
    %4352 = vmatprep.subr.mxu0 0.0
    %4353 = vmatpush1.msra.mxu0 0.0
    %4354 = vmatprep.subr.mxu0 0.0
    %4355 = vmatpush1.msra.mxu0 0.0
    %4356 = vmatprep.subr.mxu0 0.0
    %4357 = vmatpush1.msra.mxu0 0.0
    %4358 = vmatprep.subr.mxu0 0.0
    %4359 = vmatpush1.msra.mxu0 0.0
    %4360 = vmatprep.subr.mxu0 0.0
    %4361 = vmatpush1.msra.mxu0 0.0
    %4362 = vmatprep.subr.mxu0 0.0
    %4363 = vmatpush1.msra.mxu0 0.0
    %4364 = vmatprep.subr.mxu0 0.0
    %4365 = vmatpush1.msra.mxu0 0.0
    %4366 = vmatprep.subr.mxu0 0.0
    %4367 = vmatpush1.msra.mxu0 0.0
    %4368 = vmatprep.subr.mxu0 0.0
    %4369 = vmatpush1.msra.mxu0 0.0
    %4370 = vmatprep.subr.mxu0 0.0
    %4371 = vmatpush1.msra.mxu0 0.0
    %4372 = vmatprep.mubr.f32.mxu0 0.0
    %4373 = vmatmul.mubr.f32.gmra.mrb[0].mxu0 %v4121
    %v4374 = vpop.f32.mrb[0].mxu0
    %v4375 = vadd.f32 0.0, %v4374
    %v4376 = vpop.f32.mrb[0].mxu0
    %4377 = vmatprep.mubr.f32.mxu0 0.0
    %4378 = vmatmul.mubr.f32.gmra.mrb[0].mxu0 %v4124
    %v4379 = vpop.f32.mrb[0].mxu0
    %v4380 = vadd.f32 0.0, %v4379
    %v4381 = vpop.f32.mrb[0].mxu0
    %4382 = vdwg.mxu0
    %4387 = vrot.lane.b32.xlu0 %v4100, 80
    %v4388 = vpop.permute.xlu0 %4387
    %4389 = vrot.lane.b32.xlu0 %v4101, 80
    %v4390 = vpop.permute.xlu0 %4389
    %4391 = vrot.lane.b32.xlu0 %v4102, 80
    %v4392 = vpop.permute.xlu0 %4391
    %4393 = vrot.lane.b32.xlu0 %v4103, 80
    %v4394 = vpop.permute.xlu0 %4393
    %4399 = vmatprep.subr.mxu0 0.0
    %4400 = vmatpush1.msra.mxu0 %v4388
    %4401 = vmatprep.subr.mxu0 0.0
    %4402 = vmatpush1.msra.mxu0 %v4390
    %4403 = vmatprep.subr.mxu0 0.0
    %4404 = vmatpush1.msra.mxu0 %v4392
    %4405 = vmatprep.subr.mxu0 0.0
    %4406 = vmatpush1.msra.mxu0 %v4394
    %4407 = vmatprep.subr.mxu0 0.0
    %4408 = vmatpush1.msra.mxu0 0.0
    %4409 = vmatprep.subr.mxu0 0.0
    %4410 = vmatpush1.msra.mxu0 0.0
    %4411 = vmatprep.subr.mxu0 0.0
    %4412 = vmatpush1.msra.mxu0 0.0
    %4413 = vmatprep.subr.mxu0 0.0
    %4414 = vmatpush1.msra.mxu0 0.0
    %4415 = vmatprep.subr.mxu0 0.0
    %4416 = vmatpush1.msra.mxu0 0.0
    %4417 = vmatprep.subr.mxu0 0.0
    %4418 = vmatpush1.msra.mxu0 0.0
    %4419 = vmatprep.subr.mxu0 0.0
    %4420 = vmatpush1.msra.mxu0 0.0
    %4421 = vmatprep.subr.mxu0 0.0
    %4422 = vmatpush1.msra.mxu0 0.0
    %4423 = vmatprep.subr.mxu0 0.0
    %4424 = vmatpush1.msra.mxu0 0.0
    %4425 = vmatprep.subr.mxu0 0.0
    %4426 = vmatpush1.msra.mxu0 0.0
    %4427 = vmatprep.subr.mxu0 0.0
    %4428 = vmatpush1.msra.mxu0 0.0
    %4429 = vmatprep.subr.mxu0 0.0
    %4430 = vmatpush1.msra.mxu0 0.0
    %4431 = vmatprep.subr.mxu0 0.0
    %4432 = vmatpush1.msra.mxu0 0.0
    %4433 = vmatprep.subr.mxu0 0.0
    %4434 = vmatpush1.msra.mxu0 0.0
    %4435 = vmatprep.subr.mxu0 0.0
    %4436 = vmatpush1.msra.mxu0 0.0
    %4437 = vmatprep.subr.mxu0 0.0
    %4438 = vmatpush1.msra.mxu0 0.0
    %4439 = vmatprep.subr.mxu0 0.0
    %4440 = vmatpush1.msra.mxu0 0.0
    %4441 = vmatprep.subr.mxu0 0.0
    %4442 = vmatpush1.msra.mxu0 0.0
    %4443 = vmatprep.subr.mxu0 0.0
    %4444 = vmatpush1.msra.mxu0 0.0
    %4445 = vmatprep.subr.mxu0 0.0
    %4446 = vmatpush1.msra.mxu0 0.0
    %4447 = vmatprep.subr.mxu0 0.0
    %4448 = vmatpush1.msra.mxu0 0.0
    %4449 = vmatprep.subr.mxu0 0.0
    %4450 = vmatpush1.msra.mxu0 0.0
    %4451 = vmatprep.subr.mxu0 0.0
    %4452 = vmatpush1.msra.mxu0 0.0
    %4453 = vmatprep.subr.mxu0 0.0
    %4454 = vmatpush1.msra.mxu0 0.0
    %4455 = vmatprep.subr.mxu0 0.0
    %4456 = vmatpush1.msra.mxu0 0.0
    %4457 = vmatprep.subr.mxu0 0.0
    %4458 = vmatpush1.msra.mxu0 0.0
    %4459 = vmatprep.subr.mxu0 0.0
    %4460 = vmatpush1.msra.mxu0 0.0
    %4461 = vmatprep.subr.mxu0 0.0
    %4462 = vmatpush1.msra.mxu0 0.0
    %4463 = vmatprep.mubr.f32.mxu0 0.0
    %4464 = vmatmul.mubr.f32.gmra.mrb[0].mxu0 %v4121
    %v4465 = vpop.f32.mrb[0].mxu0
    %v4466 = vadd.f32 0.0, %v4465
    %v4467 = vpop.f32.mrb[0].mxu0
    %4468 = vmatprep.mubr.f32.mxu0 0.0
    %4469 = vmatmul.mubr.f32.gmra.mrb[0].mxu0 %v4124
    %v4470 = vpop.f32.mrb[0].mxu0
    %v4471 = vadd.f32 0.0, %v4470
    %v4472 = vpop.f32.mrb[0].mxu0
    %4473 = vdwg.mxu0
    %v4474 = vld [vmem:[%s6] sm:$0xff]
    %v4475 = vld [vmem:[%s6 + $0x8] sm:$0xff]
    %v4476 = vld [vmem:[%s6 + $0x10] sm:$0xff]
    %v4477 = vld [vmem:[%s6 + $0x18] sm:$0xff]
    %4480 = vrot.lane.b32.xlu0 %v4193, 120
    %v4481 = vpop.permute.xlu0 %4480
    %4482 = vrot.lane.b32.xlu0 %v4198, 120
    %v4483 = vpop.permute.xlu0 %4482
    %v4484 = vsel %vm616, %v4193, 0
    %v4486 = vsel %vm616, %v4198, 0
    %v4488 = vsel %vm616, %v4481, 0
    %v4490 = vsel %vm616, %v4483, 0
    %4492 = vmatprep.subr.mxu0 0.0
    %4493 = vmatpush1.xpose.msra.mxu0 %v4488
    %4494 = vmatprep.subr.mxu0 0.0
    %4495 = vmatpush1.xpose.msra.mxu0 %v4490
    %4496 = vmatprep.subr.mxu0 0.0
    %4497 = vmatpush1.xpose.msra.mxu0 0.0
    %4498 = vmatprep.subr.mxu0 0.0
    %4499 = vmatpush1.xpose.msra.mxu0 0.0
    %4500 = vmatprep.subr.mxu0 0.0
    %4501 = vmatpush1.xpose.msra.mxu0 0.0
    %4502 = vmatprep.subr.mxu0 0.0
    %4503 = vmatpush1.xpose.msra.mxu0 0.0
    %4504 = vmatprep.subr.mxu0 0.0
    %4505 = vmatpush1.xpose.msra.mxu0 0.0
    %4506 = vmatprep.subr.mxu0 0.0
    %4507 = vmatpush1.xpose.msra.mxu0 0.0
    %4508 = vmatprep.subr.mxu0 0.0
    %4509 = vmatpush1.xpose.msra.mxu0 0.0
    %4510 = vmatprep.subr.mxu0 0.0
    %4511 = vmatpush1.xpose.msra.mxu0 0.0
    %4512 = vmatprep.subr.mxu0 0.0
    %4513 = vmatpush1.xpose.msra.mxu0 0.0
    %4514 = vmatprep.subr.mxu0 0.0
    %4515 = vmatpush1.xpose.msra.mxu0 0.0
    %4516 = vmatprep.subr.mxu0 0.0
    %4517 = vmatpush1.xpose.msra.mxu0 0.0
    %4518 = vmatprep.subr.mxu0 0.0
    %4519 = vmatpush1.xpose.msra.mxu0 0.0
    %4520 = vmatprep.subr.mxu0 0.0
    %4521 = vmatpush1.xpose.msra.mxu0 0.0
    %4522 = vmatprep.subr.mxu0 0.0
    %4523 = vmatpush1.xpose.msra.mxu0 0.0
    %4524 = vmatprep.subr.mxu0 0.0
    %4525 = vmatpush1.xpose.msra.mxu0 0.0
    %4526 = vmatprep.subr.mxu0 0.0
    %4527 = vmatpush1.xpose.msra.mxu0 0.0
    %4528 = vmatprep.subr.mxu0 0.0
    %4529 = vmatpush1.xpose.msra.mxu0 0.0
    %4530 = vmatprep.subr.mxu0 0.0
    %4531 = vmatpush1.xpose.msra.mxu0 0.0
    %4532 = vmatprep.subr.mxu0 0.0
    %4533 = vmatpush1.xpose.msra.mxu0 0.0
    %4534 = vmatprep.subr.mxu0 0.0
    %4535 = vmatpush1.xpose.msra.mxu0 0.0
    %4536 = vmatprep.subr.mxu0 0.0
    %4537 = vmatpush1.xpose.msra.mxu0 0.0
    %4538 = vmatprep.subr.mxu0 0.0
    %4539 = vmatpush1.xpose.msra.mxu0 0.0
    %4540 = vmatprep.subr.mxu0 0.0
    %4541 = vmatpush1.xpose.msra.mxu0 0.0
    %4542 = vmatprep.subr.mxu0 0.0
    %4543 = vmatpush1.xpose.msra.mxu0 0.0
    %4544 = vmatprep.subr.mxu0 0.0
    %4545 = vmatpush1.xpose.msra.mxu0 0.0
    %4546 = vmatprep.subr.mxu0 0.0
    %4547 = vmatpush1.xpose.msra.mxu0 0.0
    %4548 = vmatprep.subr.mxu0 0.0
    %4549 = vmatpush1.xpose.msra.mxu0 0.0
    %4550 = vmatprep.subr.mxu0 0.0
    %4551 = vmatpush1.xpose.msra.mxu0 0.0
    %4552 = vmatprep.subr.mxu0 0.0
    %4553 = vmatpush1.xpose.msra.mxu0 0.0
    %4554 = vmatprep.subr.mxu0 0.0
    %4555 = vmatpush1.xpose.msra.mxu0 0.0
    %4556 = vmatprep.mubr.f32.mxu0 0.0
    %4557 = vmatmul.mubr.f32.gmra.mrb[0].mxu0 %v4484
    %v4558 = vpop.f32.mrb[0].mxu0
    %v4559 = vadd.f32 %v126, %v4558
    %v4560 = vpop.f32.mrb[0].mxu0
    %4561 = vmatprep.mubr.f32.mxu0 0.0
    %4562 = vmatmul.mubr.f32.gmra.mrb[0].mxu0 %v4486
    %v4563 = vpop.f32.mrb[0].mxu0
    %v4564 = vadd.f32 %v127, %v4563
    %v4565 = vpop.f32.mrb[0].mxu0
    %4566 = vdwg.mxu0
    %4569 = vrot.lane.b32.xlu0 %v4284, 120
    %v4570 = vpop.permute.xlu0 %4569
    %4571 = vrot.lane.b32.xlu0 %v4289, 120
    %v4572 = vpop.permute.xlu0 %4571
    %v4573 = vsel %vm616, %v4284, 0
    %v4575 = vsel %vm616, %v4289, 0
    %v4577 = vsel %vm616, %v4570, 0
    %v4579 = vsel %vm616, %v4572, 0
    %4581 = vmatprep.subr.mxu0 0.0
    %4582 = vmatpush1.xpose.msra.mxu0 %v4577
    %4583 = vmatprep.subr.mxu0 0.0
    %4584 = vmatpush1.xpose.msra.mxu0 %v4579
    %4585 = vmatprep.subr.mxu0 0.0
    %4586 = vmatpush1.xpose.msra.mxu0 0.0
    %4587 = vmatprep.subr.mxu0 0.0
    %4588 = vmatpush1.xpose.msra.mxu0 0.0
    %4589 = vmatprep.subr.mxu0 0.0
    %4590 = vmatpush1.xpose.msra.mxu0 0.0
    %4591 = vmatprep.subr.mxu0 0.0
    %4592 = vmatpush1.xpose.msra.mxu0 0.0
    %4593 = vmatprep.subr.mxu0 0.0
    %4594 = vmatpush1.xpose.msra.mxu0 0.0
    %4595 = vmatprep.subr.mxu0 0.0
    %4596 = vmatpush1.xpose.msra.mxu0 0.0
    %4597 = vmatprep.subr.mxu0 0.0
    %4598 = vmatpush1.xpose.msra.mxu0 0.0
    %4599 = vmatprep.subr.mxu0 0.0
    %4600 = vmatpush1.xpose.msra.mxu0 0.0
    %4601 = vmatprep.subr.mxu0 0.0
    %4602 = vmatpush1.xpose.msra.mxu0 0.0
    %4603 = vmatprep.subr.mxu0 0.0
    %4604 = vmatpush1.xpose.msra.mxu0 0.0
    %4605 = vmatprep.subr.mxu0 0.0
    %4606 = vmatpush1.xpose.msra.mxu0 0.0
    %4607 = vmatprep.subr.mxu0 0.0
    %4608 = vmatpush1.xpose.msra.mxu0 0.0
    %4609 = vmatprep.subr.mxu0 0.0
    %4610 = vmatpush1.xpose.msra.mxu0 0.0
    %4611 = vmatprep.subr.mxu0 0.0
    %4612 = vmatpush1.xpose.msra.mxu0 0.0
    %4613 = vmatprep.subr.mxu0 0.0
    %4614 = vmatpush1.xpose.msra.mxu0 0.0
    %4615 = vmatprep.subr.mxu0 0.0
    %4616 = vmatpush1.xpose.msra.mxu0 0.0
    %4617 = vmatprep.subr.mxu0 0.0
    %4618 = vmatpush1.xpose.msra.mxu0 0.0
    %4619 = vmatprep.subr.mxu0 0.0
    %4620 = vmatpush1.xpose.msra.mxu0 0.0
    %4621 = vmatprep.subr.mxu0 0.0
    %4622 = vmatpush1.xpose.msra.mxu0 0.0
    %4623 = vmatprep.subr.mxu0 0.0
    %4624 = vmatpush1.xpose.msra.mxu0 0.0
    %4625 = vmatprep.subr.mxu0 0.0
    %4626 = vmatpush1.xpose.msra.mxu0 0.0
    %4627 = vmatprep.subr.mxu0 0.0
    %4628 = vmatpush1.xpose.msra.mxu0 0.0
    %4629 = vmatprep.subr.mxu0 0.0
    %4630 = vmatpush1.xpose.msra.mxu0 0.0
    %4631 = vmatprep.subr.mxu0 0.0
    %4632 = vmatpush1.xpose.msra.mxu0 0.0
    %4633 = vmatprep.subr.mxu0 0.0
    %4634 = vmatpush1.xpose.msra.mxu0 0.0
    %4635 = vmatprep.subr.mxu0 0.0
    %4636 = vmatpush1.xpose.msra.mxu0 0.0
    %4637 = vmatprep.subr.mxu0 0.0
    %4638 = vmatpush1.xpose.msra.mxu0 0.0
    %4639 = vmatprep.subr.mxu0 0.0
    %4640 = vmatpush1.xpose.msra.mxu0 0.0
    %4641 = vmatprep.subr.mxu0 0.0
    %4642 = vmatpush1.xpose.msra.mxu0 0.0
    %4643 = vmatprep.subr.mxu0 0.0
    %4644 = vmatpush1.xpose.msra.mxu0 0.0
    %4645 = vmatprep.mubr.f32.mxu0 0.0
    %4646 = vmatmul.mubr.f32.gmra.mrb[0].mxu0 %v4573
    %v4647 = vpop.f32.mrb[0].mxu0
    %v4648 = vadd.f32 %v126, %v4647
    %v4649 = vpop.f32.mrb[0].mxu0
    %4650 = vmatprep.mubr.f32.mxu0 0.0
    %4651 = vmatmul.mubr.f32.gmra.mrb[0].mxu0 %v4575
    %v4652 = vpop.f32.mrb[0].mxu0
    %v4653 = vadd.f32 %v127, %v4652
    %v4654 = vpop.f32.mrb[0].mxu0
    %4655 = vdwg.mxu0
    %4658 = vrot.lane.b32.xlu0 %v4375, 120
    %v4659 = vpop.permute.xlu0 %4658
    %4660 = vrot.lane.b32.xlu0 %v4380, 120
    %v4661 = vpop.permute.xlu0 %4660
    %v4662 = vsel %vm616, %v4375, 0
    %v4664 = vsel %vm616, %v4380, 0
    %v4666 = vsel %vm616, %v4659, 0
    %v4668 = vsel %vm616, %v4661, 0
    %4670 = vmatprep.subr.mxu0 0.0
    %4671 = vmatpush1.xpose.msra.mxu0 %v4666
    %4672 = vmatprep.subr.mxu0 0.0
    %4673 = vmatpush1.xpose.msra.mxu0 %v4668
    %4674 = vmatprep.subr.mxu0 0.0
    %4675 = vmatpush1.xpose.msra.mxu0 0.0
    %4676 = vmatprep.subr.mxu0 0.0
    %4677 = vmatpush1.xpose.msra.mxu0 0.0
    %4678 = vmatprep.subr.mxu0 0.0
    %4679 = vmatpush1.xpose.msra.mxu0 0.0
    %4680 = vmatprep.subr.mxu0 0.0
    %4681 = vmatpush1.xpose.msra.mxu0 0.0
    %4682 = vmatprep.subr.mxu0 0.0
    %4683 = vmatpush1.xpose.msra.mxu0 0.0
    %4684 = vmatprep.subr.mxu0 0.0
    %4685 = vmatpush1.xpose.msra.mxu0 0.0
    %4686 = vmatprep.subr.mxu0 0.0
    %4687 = vmatpush1.xpose.msra.mxu0 0.0
    %4688 = vmatprep.subr.mxu0 0.0
    %4689 = vmatpush1.xpose.msra.mxu0 0.0
    %4690 = vmatprep.subr.mxu0 0.0
    %4691 = vmatpush1.xpose.msra.mxu0 0.0
    %4692 = vmatprep.subr.mxu0 0.0
    %4693 = vmatpush1.xpose.msra.mxu0 0.0
    %4694 = vmatprep.subr.mxu0 0.0
    %4695 = vmatpush1.xpose.msra.mxu0 0.0
    %4696 = vmatprep.subr.mxu0 0.0
    %4697 = vmatpush1.xpose.msra.mxu0 0.0
    %4698 = vmatprep.subr.mxu0 0.0
    %4699 = vmatpush1.xpose.msra.mxu0 0.0
    %4700 = vmatprep.subr.mxu0 0.0
    %4701 = vmatpush1.xpose.msra.mxu0 0.0
    %4702 = vmatprep.subr.mxu0 0.0
    %4703 = vmatpush1.xpose.msra.mxu0 0.0
    %4704 = vmatprep.subr.mxu0 0.0
    %4705 = vmatpush1.xpose.msra.mxu0 0.0
    %4706 = vmatprep.subr.mxu0 0.0
    %4707 = vmatpush1.xpose.msra.mxu0 0.0
    %4708 = vmatprep.subr.mxu0 0.0
    %4709 = vmatpush1.xpose.msra.mxu0 0.0
    %4710 = vmatprep.subr.mxu0 0.0
    %4711 = vmatpush1.xpose.msra.mxu0 0.0
    %4712 = vmatprep.subr.mxu0 0.0
    %4713 = vmatpush1.xpose.msra.mxu0 0.0
    %4714 = vmatprep.subr.mxu0 0.0
    %4715 = vmatpush1.xpose.msra.mxu0 0.0
    %4716 = vmatprep.subr.mxu0 0.0
    %4717 = vmatpush1.xpose.msra.mxu0 0.0
    %4718 = vmatprep.subr.mxu0 0.0
    %4719 = vmatpush1.xpose.msra.mxu0 0.0
    %4720 = vmatprep.subr.mxu0 0.0
    %4721 = vmatpush1.xpose.msra.mxu0 0.0
    %4722 = vmatprep.subr.mxu0 0.0
    %4723 = vmatpush1.xpose.msra.mxu0 0.0
    %4724 = vmatprep.subr.mxu0 0.0
    %4725 = vmatpush1.xpose.msra.mxu0 0.0
    %4726 = vmatprep.subr.mxu0 0.0
    %4727 = vmatpush1.xpose.msra.mxu0 0.0
    %4728 = vmatprep.subr.mxu0 0.0
    %4729 = vmatpush1.xpose.msra.mxu0 0.0
    %4730 = vmatprep.subr.mxu0 0.0
    %4731 = vmatpush1.xpose.msra.mxu0 0.0
    %4732 = vmatprep.subr.mxu0 0.0
    %4733 = vmatpush1.xpose.msra.mxu0 0.0
    %4734 = vmatprep.mubr.f32.mxu0 0.0
    %4735 = vmatmul.mubr.f32.gmra.mrb[0].mxu0 %v4662
    %v4736 = vpop.f32.mrb[0].mxu0
    %v4737 = vadd.f32 %v126, %v4736
    %v4738 = vpop.f32.mrb[0].mxu0
    %4739 = vmatprep.mubr.f32.mxu0 0.0
    %4740 = vmatmul.mubr.f32.gmra.mrb[0].mxu0 %v4664
    %v4741 = vpop.f32.mrb[0].mxu0
    %v4742 = vadd.f32 %v127, %v4741
    %v4743 = vpop.f32.mrb[0].mxu0
    %4744 = vdwg.mxu0
    %4747 = vrot.lane.b32.xlu0 %v4466, 120
    %v4748 = vpop.permute.xlu0 %4747
    %4749 = vrot.lane.b32.xlu0 %v4471, 120
    %v4750 = vpop.permute.xlu0 %4749
    %v4751 = vsel %vm616, %v4466, 0
    %v4753 = vsel %vm616, %v4471, 0
    %v4755 = vsel %vm616, %v4748, 0
    %v4757 = vsel %vm616, %v4750, 0
    %4759 = vmatprep.subr.mxu0 0.0
    %4760 = vmatpush1.xpose.msra.mxu0 %v4755
    %4761 = vmatprep.subr.mxu0 0.0
    %4762 = vmatpush1.xpose.msra.mxu0 %v4757
    %4763 = vmatprep.subr.mxu0 0.0
    %4764 = vmatpush1.xpose.msra.mxu0 0.0
    %4765 = vmatprep.subr.mxu0 0.0
    %4766 = vmatpush1.xpose.msra.mxu0 0.0
    %4767 = vmatprep.subr.mxu0 0.0
    %4768 = vmatpush1.xpose.msra.mxu0 0.0
    %4769 = vmatprep.subr.mxu0 0.0
    %4770 = vmatpush1.xpose.msra.mxu0 0.0
    %4771 = vmatprep.subr.mxu0 0.0
    %4772 = vmatpush1.xpose.msra.mxu0 0.0
    %4773 = vmatprep.subr.mxu0 0.0
    %4774 = vmatpush1.xpose.msra.mxu0 0.0
    %4775 = vmatprep.subr.mxu0 0.0
    %4776 = vmatpush1.xpose.msra.mxu0 0.0
    %4777 = vmatprep.subr.mxu0 0.0
    %4778 = vmatpush1.xpose.msra.mxu0 0.0
    %4779 = vmatprep.subr.mxu0 0.0
    %4780 = vmatpush1.xpose.msra.mxu0 0.0
    %4781 = vmatprep.subr.mxu0 0.0
    %4782 = vmatpush1.xpose.msra.mxu0 0.0
    %4783 = vmatprep.subr.mxu0 0.0
    %4784 = vmatpush1.xpose.msra.mxu0 0.0
    %4785 = vmatprep.subr.mxu0 0.0
    %4786 = vmatpush1.xpose.msra.mxu0 0.0
    %4787 = vmatprep.subr.mxu0 0.0
    %4788 = vmatpush1.xpose.msra.mxu0 0.0
    %4789 = vmatprep.subr.mxu0 0.0
    %4790 = vmatpush1.xpose.msra.mxu0 0.0
    %4791 = vmatprep.subr.mxu0 0.0
    %4792 = vmatpush1.xpose.msra.mxu0 0.0
    %4793 = vmatprep.subr.mxu0 0.0
    %4794 = vmatpush1.xpose.msra.mxu0 0.0
    %4795 = vmatprep.subr.mxu0 0.0
    %4796 = vmatpush1.xpose.msra.mxu0 0.0
    %4797 = vmatprep.subr.mxu0 0.0
    %4798 = vmatpush1.xpose.msra.mxu0 0.0
    %4799 = vmatprep.subr.mxu0 0.0
    %4800 = vmatpush1.xpose.msra.mxu0 0.0
    %4801 = vmatprep.subr.mxu0 0.0
    %4802 = vmatpush1.xpose.msra.mxu0 0.0
    %4803 = vmatprep.subr.mxu0 0.0
    %4804 = vmatpush1.xpose.msra.mxu0 0.0
    %4805 = vmatprep.subr.mxu0 0.0
    %4806 = vmatpush1.xpose.msra.mxu0 0.0
    %4807 = vmatprep.subr.mxu0 0.0
    %4808 = vmatpush1.xpose.msra.mxu0 0.0
    %4809 = vmatprep.subr.mxu0 0.0
    %4810 = vmatpush1.xpose.msra.mxu0 0.0
    %4811 = vmatprep.subr.mxu0 0.0
    %4812 = vmatpush1.xpose.msra.mxu0 0.0
    %4813 = vmatprep.subr.mxu0 0.0
    %4814 = vmatpush1.xpose.msra.mxu0 0.0
    %4815 = vmatprep.subr.mxu0 0.0
    %4816 = vmatpush1.xpose.msra.mxu0 0.0
    %4817 = vmatprep.subr.mxu0 0.0
    %4818 = vmatpush1.xpose.msra.mxu0 0.0
    %4819 = vmatprep.subr.mxu0 0.0
    %4820 = vmatpush1.xpose.msra.mxu0 0.0
    %4821 = vmatprep.subr.mxu0 0.0
    %4822 = vmatpush1.xpose.msra.mxu0 0.0
    %4823 = vmatprep.mubr.f32.mxu0 0.0
    %4824 = vmatmul.mubr.f32.gmra.mrb[0].mxu0 %v4751
    %v4825 = vpop.f32.mrb[0].mxu0
    %v4826 = vadd.f32 %v126, %v4825
    %v4827 = vpop.f32.mrb[0].mxu0
    %4828 = vmatprep.mubr.f32.mxu0 0.0
    %4829 = vmatmul.mubr.f32.gmra.mrb[0].mxu0 %v4753
    %v4830 = vpop.f32.mrb[0].mxu0
    %v4831 = vadd.f32 %v127, %v4830
    %v4832 = vpop.f32.mrb[0].mxu0
    %4833 = vdwg.mxu0
    %v4834 = vsel %vm967, %v4559, -inf
    %4835 = vmax.xlane.f32.xlu0 %v4834
    %v4836 = vpop.xlane.xlu0 %4835
    %v4837 = vsel %vm967, %v4564, -inf
    %4838 = vmax.xlane.f32.xlu0 %v4837
    %v4839 = vpop.xlane.xlu0 %4838
    %v4840 = vsel %vm967, %v4648, -inf
    %4841 = vmax.xlane.f32.xlu0 %v4840
    %v4842 = vpop.xlane.xlu0 %4841
    %v4843 = vsel %vm967, %v4653, -inf
    %4844 = vmax.xlane.f32.xlu0 %v4843
    %v4845 = vpop.xlane.xlu0 %4844
    %v4846 = vsel %vm967, %v4737, -inf
    %4847 = vmax.xlane.f32.xlu0 %v4846
    %v4848 = vpop.xlane.xlu0 %4847
    %v4849 = vsel %vm967, %v4742, -inf
    %4850 = vmax.xlane.f32.xlu0 %v4849
    %v4851 = vpop.xlane.xlu0 %4850
    %v4852 = vsel %vm967, %v4826, -inf
    %4853 = vmax.xlane.f32.xlu0 %v4852
    %v4854 = vpop.xlane.xlu0 %4853
    %v4855 = vsel %vm967, %v4831, -inf
    %4856 = vmax.xlane.f32.xlu0 %v4855
    %v4857 = vpop.xlane.xlu0 %4856
    %v4858 = vsub.f32 %v4559, %v4836
    %v4859 = vsub.f32 %v4564, %v4839
    %v4860 = vsub.f32 %v4648, %v4842
    %v4861 = vsub.f32 %v4653, %v4845
    %v4862 = vsub.f32 %v4737, %v4848
    %v4863 = vsub.f32 %v4742, %v4851
    %v4864 = vsub.f32 %v4826, %v4854
    %v4865 = vsub.f32 %v4831, %v4857
    %v4866 = vmul.f32 %v4858, 1.442695
    %v4867 = vpow.pop %v4866
    %v4868 = vmul.f32 %v4859, 1.442695
    %v4869 = vpow.pop %v4868
    %v4870 = vmul.f32 %v4860, 1.442695
    %v4871 = vpow.pop %v4870
    %v4872 = vmul.f32 %v4861, 1.442695
    %v4873 = vpow.pop %v4872
    %v4874 = vmul.f32 %v4862, 1.442695
    %v4875 = vpow.pop %v4874
    %v4876 = vmul.f32 %v4863, 1.442695
    %v4877 = vpow.pop %v4876
    %v4878 = vmul.f32 %v4864, 1.442695
    %v4879 = vpow.pop %v4878
    %v4880 = vmul.f32 %v4865, 1.442695
    %v4881 = vpow.pop %v4880
    %v4882 = vsel %vm967, %v4867, 0.0
    %4883 = vadd.xlane.f32.xlu0 %v4882
    %v4884 = vpop.xlane.xlu0 %4883
    %v4885 = vsel %vm967, %v4869, 0.0
    %4886 = vadd.xlane.f32.xlu0 %v4885
    %v4887 = vpop.xlane.xlu0 %4886
    %v4888 = vsel %vm967, %v4871, 0.0
    %4889 = vadd.xlane.f32.xlu0 %v4888
    %v4890 = vpop.xlane.xlu0 %4889
    %v4891 = vsel %vm967, %v4873, 0.0
    %4892 = vadd.xlane.f32.xlu0 %v4891
    %v4893 = vpop.xlane.xlu0 %4892
    %v4894 = vsel %vm967, %v4875, 0.0
    %4895 = vadd.xlane.f32.xlu0 %v4894
    %v4896 = vpop.xlane.xlu0 %4895
    %v4897 = vsel %vm967, %v4877, 0.0
    %4898 = vadd.xlane.f32.xlu0 %v4897
    %v4899 = vpop.xlane.xlu0 %4898
    %v4900 = vsel %vm967, %v4879, 0.0
    %4901 = vadd.xlane.f32.xlu0 %v4900
    %v4902 = vpop.xlane.xlu0 %4901
    %v4903 = vsel %vm967, %v4881, 0.0
    %4904 = vadd.xlane.f32.xlu0 %v4903
    %v4905 = vpop.xlane.xlu0 %4904
    %v4906 = vrcp.pop %v4884
    %v4907 = vrcp.pop %v4887
    %v4908 = vrcp.pop %v4890
    %v4909 = vrcp.pop %v4893
    %v4910 = vrcp.pop %v4896
    %v4911 = vrcp.pop %v4899
    %v4912 = vrcp.pop %v4902
    %v4913 = vrcp.pop %v4905
    %v4914 = vmul.f32 %v4867, %v4906
    %v4915 = vmul.f32 %v4869, %v4907
    %v4916 = vmul.f32 %v4871, %v4908
    %v4917 = vmul.f32 %v4873, %v4909
    %v4918 = vmul.f32 %v4875, %v4910
    %v4919 = vmul.f32 %v4877, %v4911
    %v4920 = vmul.f32 %v4879, %v4912
    %v4921 = vmul.f32 %v4881, %v4913
    %4922 = vrot.lane.b32.xlu0 %v4193, 112
    %v4923 = vpop.permute.xlu0 %4922
    %4924 = vrot.lane.b32.xlu0 %v4198, 112
    %v4925 = vpop.permute.xlu0 %4924
    %v4929 = vsel %vm967, %v4914, 0
    %v4932 = vsel %vm967, %v4915, 0
    %4934 = vmatprep.subr.mxu0 0.0
    %4935 = vmatpush1.msra.mxu0 %v4923
    %4936 = vmatprep.subr.mxu0 0.0
    %4937 = vmatpush1.msra.mxu0 %v4925
    %4938 = vmatprep.subr.mxu0 0.0
    %4939 = vmatpush1.msra.mxu0 0.0
    %4940 = vmatprep.subr.mxu0 0.0
    %4941 = vmatpush1.msra.mxu0 0.0
    %4942 = vmatprep.subr.mxu0 0.0
    %4943 = vmatpush1.msra.mxu0 0.0
    %4944 = vmatprep.subr.mxu0 0.0
    %4945 = vmatpush1.msra.mxu0 0.0
    %4946 = vmatprep.subr.mxu0 0.0
    %4947 = vmatpush1.msra.mxu0 0.0
    %4948 = vmatprep.subr.mxu0 0.0
    %4949 = vmatpush1.msra.mxu0 0.0
    %4950 = vmatprep.subr.mxu0 0.0
    %4951 = vmatpush1.msra.mxu0 0.0
    %4952 = vmatprep.subr.mxu0 0.0
    %4953 = vmatpush1.msra.mxu0 0.0
    %4954 = vmatprep.subr.mxu0 0.0
    %4955 = vmatpush1.msra.mxu0 0.0
    %4956 = vmatprep.subr.mxu0 0.0
    %4957 = vmatpush1.msra.mxu0 0.0
    %4958 = vmatprep.subr.mxu0 0.0
    %4959 = vmatpush1.msra.mxu0 0.0
    %4960 = vmatprep.subr.mxu0 0.0
    %4961 = vmatpush1.msra.mxu0 0.0
    %4962 = vmatprep.subr.mxu0 0.0
    %4963 = vmatpush1.msra.mxu0 0.0
    %4964 = vmatprep.subr.mxu0 0.0
    %4965 = vmatpush1.msra.mxu0 0.0
    %4966 = vmatprep.subr.mxu0 0.0
    %4967 = vmatpush1.msra.mxu0 0.0
    %4968 = vmatprep.subr.mxu0 0.0
    %4969 = vmatpush1.msra.mxu0 0.0
    %4970 = vmatprep.subr.mxu0 0.0
    %4971 = vmatpush1.msra.mxu0 0.0
    %4972 = vmatprep.subr.mxu0 0.0
    %4973 = vmatpush1.msra.mxu0 0.0
    %4974 = vmatprep.subr.mxu0 0.0
    %4975 = vmatpush1.msra.mxu0 0.0
    %4976 = vmatprep.subr.mxu0 0.0
    %4977 = vmatpush1.msra.mxu0 0.0
    %4978 = vmatprep.subr.mxu0 0.0
    %4979 = vmatpush1.msra.mxu0 0.0
    %4980 = vmatprep.subr.mxu0 0.0
    %4981 = vmatpush1.msra.mxu0 0.0
    %4982 = vmatprep.subr.mxu0 0.0
    %4983 = vmatpush1.msra.mxu0 0.0
    %4984 = vmatprep.subr.mxu0 0.0
    %4985 = vmatpush1.msra.mxu0 0.0
    %4986 = vmatprep.subr.mxu0 0.0
    %4987 = vmatpush1.msra.mxu0 0.0
    %4988 = vmatprep.subr.mxu0 0.0
    %4989 = vmatpush1.msra.mxu0 0.0
    %4990 = vmatprep.subr.mxu0 0.0
    %4991 = vmatpush1.msra.mxu0 0.0
    %4992 = vmatprep.subr.mxu0 0.0
    %4993 = vmatpush1.msra.mxu0 0.0
    %4994 = vmatprep.subr.mxu0 0.0
    %4995 = vmatpush1.msra.mxu0 0.0
    %4996 = vmatprep.subr.mxu0 0.0
    %4997 = vmatpush1.msra.mxu0 0.0
    %4998 = vmatprep.mubr.f32.mxu0 0.0
    %4999 = vmatmul.mubr.f32.gmra.mrb[0].mxu0 %v4929
    %v5000 = vpop.f32.mrb[0].mxu0
    %v5001 = vadd.f32 0.0, %v5000
    %v5002 = vpop.f32.mrb[0].mxu0
    %5003 = vmatprep.mubr.f32.mxu0 0.0
    %5004 = vmatmul.mubr.f32.gmra.mrb[0].mxu0 %v4932
    %v5005 = vpop.f32.mrb[0].mxu0
    %v5006 = vadd.f32 0.0, %v5005
    %v5007 = vpop.f32.mrb[0].mxu0
    %5008 = vdwg.mxu0
    %5009 = vrot.lane.b32.xlu0 %v4284, 112
    %v5010 = vpop.permute.xlu0 %5009
    %5011 = vrot.lane.b32.xlu0 %v4289, 112
    %v5012 = vpop.permute.xlu0 %5011
    %v5016 = vsel %vm967, %v4916, 0
    %v5019 = vsel %vm967, %v4917, 0
    %5021 = vmatprep.subr.mxu0 0.0
    %5022 = vmatpush1.msra.mxu0 %v5010
    %5023 = vmatprep.subr.mxu0 0.0
    %5024 = vmatpush1.msra.mxu0 %v5012
    %5025 = vmatprep.subr.mxu0 0.0
    %5026 = vmatpush1.msra.mxu0 0.0
    %5027 = vmatprep.subr.mxu0 0.0
    %5028 = vmatpush1.msra.mxu0 0.0
    %5029 = vmatprep.subr.mxu0 0.0
    %5030 = vmatpush1.msra.mxu0 0.0
    %5031 = vmatprep.subr.mxu0 0.0
    %5032 = vmatpush1.msra.mxu0 0.0
    %5033 = vmatprep.subr.mxu0 0.0
    %5034 = vmatpush1.msra.mxu0 0.0
    %5035 = vmatprep.subr.mxu0 0.0
    %5036 = vmatpush1.msra.mxu0 0.0
    %5037 = vmatprep.subr.mxu0 0.0
    %5038 = vmatpush1.msra.mxu0 0.0
    %5039 = vmatprep.subr.mxu0 0.0
    %5040 = vmatpush1.msra.mxu0 0.0
    %5041 = vmatprep.subr.mxu0 0.0
    %5042 = vmatpush1.msra.mxu0 0.0
    %5043 = vmatprep.subr.mxu0 0.0
    %5044 = vmatpush1.msra.mxu0 0.0
    %5045 = vmatprep.subr.mxu0 0.0
    %5046 = vmatpush1.msra.mxu0 0.0
    %5047 = vmatprep.subr.mxu0 0.0
    %5048 = vmatpush1.msra.mxu0 0.0
    %5049 = vmatprep.subr.mxu0 0.0
    %5050 = vmatpush1.msra.mxu0 0.0
    %5051 = vmatprep.subr.mxu0 0.0
    %5052 = vmatpush1.msra.mxu0 0.0
    %5053 = vmatprep.subr.mxu0 0.0
    %5054 = vmatpush1.msra.mxu0 0.0
    %5055 = vmatprep.subr.mxu0 0.0
    %5056 = vmatpush1.msra.mxu0 0.0
    %5057 = vmatprep.subr.mxu0 0.0
    %5058 = vmatpush1.msra.mxu0 0.0
    %5059 = vmatprep.subr.mxu0 0.0
    %5060 = vmatpush1.msra.mxu0 0.0
    %5061 = vmatprep.subr.mxu0 0.0
    %5062 = vmatpush1.msra.mxu0 0.0
    %5063 = vmatprep.subr.mxu0 0.0
    %5064 = vmatpush1.msra.mxu0 0.0
    %5065 = vmatprep.subr.mxu0 0.0
    %5066 = vmatpush1.msra.mxu0 0.0
    %5067 = vmatprep.subr.mxu0 0.0
    %5068 = vmatpush1.msra.mxu0 0.0
    %5069 = vmatprep.subr.mxu0 0.0
    %5070 = vmatpush1.msra.mxu0 0.0
    %5071 = vmatprep.subr.mxu0 0.0
    %5072 = vmatpush1.msra.mxu0 0.0
    %5073 = vmatprep.subr.mxu0 0.0
    %5074 = vmatpush1.msra.mxu0 0.0
    %5075 = vmatprep.subr.mxu0 0.0
    %5076 = vmatpush1.msra.mxu0 0.0
    %5077 = vmatprep.subr.mxu0 0.0
    %5078 = vmatpush1.msra.mxu0 0.0
    %5079 = vmatprep.subr.mxu0 0.0
    %5080 = vmatpush1.msra.mxu0 0.0
    %5081 = vmatprep.subr.mxu0 0.0
    %5082 = vmatpush1.msra.mxu0 0.0
    %5083 = vmatprep.subr.mxu0 0.0
    %5084 = vmatpush1.msra.mxu0 0.0
    %5085 = vmatprep.mubr.f32.mxu0 0.0
    %5086 = vmatmul.mubr.f32.gmra.mrb[0].mxu0 %v5016
    %v5087 = vpop.f32.mrb[0].mxu0
    %v5088 = vadd.f32 0.0, %v5087
    %v5089 = vpop.f32.mrb[0].mxu0
    %5090 = vmatprep.mubr.f32.mxu0 0.0
    %5091 = vmatmul.mubr.f32.gmra.mrb[0].mxu0 %v5019
    %v5092 = vpop.f32.mrb[0].mxu0
    %v5093 = vadd.f32 0.0, %v5092
    %v5094 = vpop.f32.mrb[0].mxu0
    %5095 = vdwg.mxu0
    %5096 = vrot.lane.b32.xlu0 %v4375, 112
    %v5097 = vpop.permute.xlu0 %5096
    %5098 = vrot.lane.b32.xlu0 %v4380, 112
    %v5099 = vpop.permute.xlu0 %5098
    %v5103 = vsel %vm967, %v4918, 0
    %v5106 = vsel %vm967, %v4919, 0
    %5108 = vmatprep.subr.mxu0 0.0
    %5109 = vmatpush1.msra.mxu0 %v5097
    %5110 = vmatprep.subr.mxu0 0.0
    %5111 = vmatpush1.msra.mxu0 %v5099
    %5112 = vmatprep.subr.mxu0 0.0
    %5113 = vmatpush1.msra.mxu0 0.0
    %5114 = vmatprep.subr.mxu0 0.0
    %5115 = vmatpush1.msra.mxu0 0.0
    %5116 = vmatprep.subr.mxu0 0.0
    %5117 = vmatpush1.msra.mxu0 0.0
    %5118 = vmatprep.subr.mxu0 0.0
    %5119 = vmatpush1.msra.mxu0 0.0
    %5120 = vmatprep.subr.mxu0 0.0
    %5121 = vmatpush1.msra.mxu0 0.0
    %5122 = vmatprep.subr.mxu0 0.0
    %5123 = vmatpush1.msra.mxu0 0.0
    %5124 = vmatprep.subr.mxu0 0.0
    %5125 = vmatpush1.msra.mxu0 0.0
    %5126 = vmatprep.subr.mxu0 0.0
    %5127 = vmatpush1.msra.mxu0 0.0
    %5128 = vmatprep.subr.mxu0 0.0
    %5129 = vmatpush1.msra.mxu0 0.0
    %5130 = vmatprep.subr.mxu0 0.0
    %5131 = vmatpush1.msra.mxu0 0.0
    %5132 = vmatprep.subr.mxu0 0.0
    %5133 = vmatpush1.msra.mxu0 0.0
    %5134 = vmatprep.subr.mxu0 0.0
    %5135 = vmatpush1.msra.mxu0 0.0
    %5136 = vmatprep.subr.mxu0 0.0
    %5137 = vmatpush1.msra.mxu0 0.0
    %5138 = vmatprep.subr.mxu0 0.0
    %5139 = vmatpush1.msra.mxu0 0.0
    %5140 = vmatprep.subr.mxu0 0.0
    %5141 = vmatpush1.msra.mxu0 0.0
    %5142 = vmatprep.subr.mxu0 0.0
    %5143 = vmatpush1.msra.mxu0 0.0
    %5144 = vmatprep.subr.mxu0 0.0
    %5145 = vmatpush1.msra.mxu0 0.0
    %5146 = vmatprep.subr.mxu0 0.0
    %5147 = vmatpush1.msra.mxu0 0.0
    %5148 = vmatprep.subr.mxu0 0.0
    %5149 = vmatpush1.msra.mxu0 0.0
    %5150 = vmatprep.subr.mxu0 0.0
    %5151 = vmatpush1.msra.mxu0 0.0
    %5152 = vmatprep.subr.mxu0 0.0
    %5153 = vmatpush1.msra.mxu0 0.0
    %5154 = vmatprep.subr.mxu0 0.0
    %5155 = vmatpush1.msra.mxu0 0.0
    %5156 = vmatprep.subr.mxu0 0.0
    %5157 = vmatpush1.msra.mxu0 0.0
    %5158 = vmatprep.subr.mxu0 0.0
    %5159 = vmatpush1.msra.mxu0 0.0
    %5160 = vmatprep.subr.mxu0 0.0
    %5161 = vmatpush1.msra.mxu0 0.0
    %5162 = vmatprep.subr.mxu0 0.0
    %5163 = vmatpush1.msra.mxu0 0.0
    %5164 = vmatprep.subr.mxu0 0.0
    %5165 = vmatpush1.msra.mxu0 0.0
    %5166 = vmatprep.subr.mxu0 0.0
    %5167 = vmatpush1.msra.mxu0 0.0
    %5168 = vmatprep.subr.mxu0 0.0
    %5169 = vmatpush1.msra.mxu0 0.0
    %5170 = vmatprep.subr.mxu0 0.0
    %5171 = vmatpush1.msra.mxu0 0.0
    %5172 = vmatprep.mubr.f32.mxu0 0.0
    %5173 = vmatmul.mubr.f32.gmra.mrb[0].mxu0 %v5103
    %v5174 = vpop.f32.mrb[0].mxu0
    %v5175 = vadd.f32 0.0, %v5174
    %v5176 = vpop.f32.mrb[0].mxu0
    %5177 = vmatprep.mubr.f32.mxu0 0.0
    %5178 = vmatmul.mubr.f32.gmra.mrb[0].mxu0 %v5106
    %v5179 = vpop.f32.mrb[0].mxu0
    %v5180 = vadd.f32 0.0, %v5179
    %v5181 = vpop.f32.mrb[0].mxu0
    %5182 = vdwg.mxu0
    %5183 = vrot.lane.b32.xlu0 %v4466, 112
    %v5184 = vpop.permute.xlu0 %5183
    %5185 = vrot.lane.b32.xlu0 %v4471, 112
    %v5186 = vpop.permute.xlu0 %5185
    %v5190 = vsel %vm967, %v4920, 0
    %v5193 = vsel %vm967, %v4921, 0
    %5195 = vmatprep.subr.mxu0 0.0
    %5196 = vmatpush1.msra.mxu0 %v5184
    %5197 = vmatprep.subr.mxu0 0.0
    %5198 = vmatpush1.msra.mxu0 %v5186
    %5199 = vmatprep.subr.mxu0 0.0
    %5200 = vmatpush1.msra.mxu0 0.0
    %5201 = vmatprep.subr.mxu0 0.0
    %5202 = vmatpush1.msra.mxu0 0.0
    %5203 = vmatprep.subr.mxu0 0.0
    %5204 = vmatpush1.msra.mxu0 0.0
    %5205 = vmatprep.subr.mxu0 0.0
    %5206 = vmatpush1.msra.mxu0 0.0
    %5207 = vmatprep.subr.mxu0 0.0
    %5208 = vmatpush1.msra.mxu0 0.0
    %5209 = vmatprep.subr.mxu0 0.0
    %5210 = vmatpush1.msra.mxu0 0.0
    %5211 = vmatprep.subr.mxu0 0.0
    %5212 = vmatpush1.msra.mxu0 0.0
    %5213 = vmatprep.subr.mxu0 0.0
    %5214 = vmatpush1.msra.mxu0 0.0
    %5215 = vmatprep.subr.mxu0 0.0
    %5216 = vmatpush1.msra.mxu0 0.0
    %5217 = vmatprep.subr.mxu0 0.0
    %5218 = vmatpush1.msra.mxu0 0.0
    %5219 = vmatprep.subr.mxu0 0.0
    %5220 = vmatpush1.msra.mxu0 0.0
    %5221 = vmatprep.subr.mxu0 0.0
    %5222 = vmatpush1.msra.mxu0 0.0
    %5223 = vmatprep.subr.mxu0 0.0
    %5224 = vmatpush1.msra.mxu0 0.0
    %5225 = vmatprep.subr.mxu0 0.0
    %5226 = vmatpush1.msra.mxu0 0.0
    %5227 = vmatprep.subr.mxu0 0.0
    %5228 = vmatpush1.msra.mxu0 0.0
    %5229 = vmatprep.subr.mxu0 0.0
    %5230 = vmatpush1.msra.mxu0 0.0
    %5231 = vmatprep.subr.mxu0 0.0
    %5232 = vmatpush1.msra.mxu0 0.0
    %5233 = vmatprep.subr.mxu0 0.0
    %5234 = vmatpush1.msra.mxu0 0.0
    %5235 = vmatprep.subr.mxu0 0.0
    %5236 = vmatpush1.msra.mxu0 0.0
    %5237 = vmatprep.subr.mxu0 0.0
    %5238 = vmatpush1.msra.mxu0 0.0
    %5239 = vmatprep.subr.mxu0 0.0
    %5240 = vmatpush1.msra.mxu0 0.0
    %5241 = vmatprep.subr.mxu0 0.0
    %5242 = vmatpush1.msra.mxu0 0.0
    %5243 = vmatprep.subr.mxu0 0.0
    %5244 = vmatpush1.msra.mxu0 0.0
    %5245 = vmatprep.subr.mxu0 0.0
    %5246 = vmatpush1.msra.mxu0 0.0
    %5247 = vmatprep.subr.mxu0 0.0
    %5248 = vmatpush1.msra.mxu0 0.0
    %5249 = vmatprep.subr.mxu0 0.0
    %5250 = vmatpush1.msra.mxu0 0.0
    %5251 = vmatprep.subr.mxu0 0.0
    %5252 = vmatpush1.msra.mxu0 0.0
    %5253 = vmatprep.subr.mxu0 0.0
    %5254 = vmatpush1.msra.mxu0 0.0
    %5255 = vmatprep.subr.mxu0 0.0
    %5256 = vmatpush1.msra.mxu0 0.0
    %5257 = vmatprep.subr.mxu0 0.0
    %5258 = vmatpush1.msra.mxu0 0.0
    %5259 = vmatprep.mubr.f32.mxu0 0.0
    %5260 = vmatmul.mubr.f32.gmra.mrb[0].mxu0 %v5190
    %v5261 = vpop.f32.mrb[0].mxu0
    %v5262 = vadd.f32 0.0, %v5261
    %v5263 = vpop.f32.mrb[0].mxu0
    %5264 = vmatprep.mubr.f32.mxu0 0.0
    %5265 = vmatmul.mubr.f32.gmra.mrb[0].mxu0 %v5193
    %v5266 = vpop.f32.mrb[0].mxu0
    %v5267 = vadd.f32 0.0, %v5266
    %v5268 = vpop.f32.mrb[0].mxu0
    %5269 = vdwg.mxu0
    %5271 = vrot.lane.b32.xlu0 %v4474, 64
    %v5272 = vpop.permute.xlu0 %5271
    %v5275 = vsel %vm616, %v5001, 0
    %v5278 = vsel %vm616, %v5006, 0
    %5280 = vmatprep.subr.mxu0 0.0
    %5281 = vmatpush1.msra.mxu0 %v5272
    %5282 = vmatprep.subr.mxu0 0.0
    %5283 = vmatpush1.msra.mxu0 0.0
    %5284 = vmatprep.subr.mxu0 0.0
    %5285 = vmatpush1.msra.mxu0 0.0
    %5286 = vmatprep.subr.mxu0 0.0
    %5287 = vmatpush1.msra.mxu0 0.0
    %5288 = vmatprep.subr.mxu0 0.0
    %5289 = vmatpush1.msra.mxu0 0.0
    %5290 = vmatprep.subr.mxu0 0.0
    %5291 = vmatpush1.msra.mxu0 0.0
    %5292 = vmatprep.subr.mxu0 0.0
    %5293 = vmatpush1.msra.mxu0 0.0
    %5294 = vmatprep.subr.mxu0 0.0
    %5295 = vmatpush1.msra.mxu0 0.0
    %5296 = vmatprep.subr.mxu0 0.0
    %5297 = vmatpush1.msra.mxu0 0.0
    %5298 = vmatprep.subr.mxu0 0.0
    %5299 = vmatpush1.msra.mxu0 0.0
    %5300 = vmatprep.subr.mxu0 0.0
    %5301 = vmatpush1.msra.mxu0 0.0
    %5302 = vmatprep.subr.mxu0 0.0
    %5303 = vmatpush1.msra.mxu0 0.0
    %5304 = vmatprep.subr.mxu0 0.0
    %5305 = vmatpush1.msra.mxu0 0.0
    %5306 = vmatprep.subr.mxu0 0.0
    %5307 = vmatpush1.msra.mxu0 0.0
    %5308 = vmatprep.subr.mxu0 0.0
    %5309 = vmatpush1.msra.mxu0 0.0
    %5310 = vmatprep.subr.mxu0 0.0
    %5311 = vmatpush1.msra.mxu0 0.0
    %5312 = vmatprep.subr.mxu0 0.0
    %5313 = vmatpush1.msra.mxu0 0.0
    %5314 = vmatprep.subr.mxu0 0.0
    %5315 = vmatpush1.msra.mxu0 0.0
    %5316 = vmatprep.subr.mxu0 0.0
    %5317 = vmatpush1.msra.mxu0 0.0
    %5318 = vmatprep.subr.mxu0 0.0
    %5319 = vmatpush1.msra.mxu0 0.0
    %5320 = vmatprep.subr.mxu0 0.0
    %5321 = vmatpush1.msra.mxu0 0.0
    %5322 = vmatprep.subr.mxu0 0.0
    %5323 = vmatpush1.msra.mxu0 0.0
    %5324 = vmatprep.subr.mxu0 0.0
    %5325 = vmatpush1.msra.mxu0 0.0
    %5326 = vmatprep.subr.mxu0 0.0
    %5327 = vmatpush1.msra.mxu0 0.0
    %5328 = vmatprep.subr.mxu0 0.0
    %5329 = vmatpush1.msra.mxu0 0.0
    %5330 = vmatprep.subr.mxu0 0.0
    %5331 = vmatpush1.msra.mxu0 0.0
    %5332 = vmatprep.subr.mxu0 0.0
    %5333 = vmatpush1.msra.mxu0 0.0
    %5334 = vmatprep.subr.mxu0 0.0
    %5335 = vmatpush1.msra.mxu0 0.0
    %5336 = vmatprep.subr.mxu0 0.0
    %5337 = vmatpush1.msra.mxu0 0.0
    %5338 = vmatprep.subr.mxu0 0.0
    %5339 = vmatpush1.msra.mxu0 0.0
    %5340 = vmatprep.subr.mxu0 0.0
    %5341 = vmatpush1.msra.mxu0 0.0
    %5342 = vmatprep.subr.mxu0 0.0
    %5343 = vmatpush1.msra.mxu0 0.0
    %5344 = vmatprep.mubr.f32.mxu0 0.0
    %5345 = vmatmul.mubr.f32.gmra.mrb[0].mxu0 %v5275
    %v5346 = vpop.f32.mrb[0].mxu0
    %v5347 = vadd.f32 0.0, %v5346
    %v5348 = vpop.f32.mrb[0].mxu0
    %5349 = vmatprep.mubr.f32.mxu0 0.0
    %5350 = vmatmul.mubr.f32.gmra.mrb[0].mxu0 %v5278
    %v5351 = vpop.f32.mrb[0].mxu0
    %v5352 = vadd.f32 0.0, %v5351
    %v5353 = vpop.f32.mrb[0].mxu0
    %5354 = vdwg.mxu0
    %5356 = vrot.lane.b32.xlu0 %v4475, 64
    %v5357 = vpop.permute.xlu0 %5356
    %v5360 = vsel %vm616, %v5088, 0
    %v5363 = vsel %vm616, %v5093, 0
    %5365 = vmatprep.subr.mxu0 0.0
    %5366 = vmatpush1.msra.mxu0 %v5357
    %5367 = vmatprep.subr.mxu0 0.0
    %5368 = vmatpush1.msra.mxu0 0.0
    %5369 = vmatprep.subr.mxu0 0.0
    %5370 = vmatpush1.msra.mxu0 0.0
    %5371 = vmatprep.subr.mxu0 0.0
    %5372 = vmatpush1.msra.mxu0 0.0
    %5373 = vmatprep.subr.mxu0 0.0
    %5374 = vmatpush1.msra.mxu0 0.0
    %5375 = vmatprep.subr.mxu0 0.0
    %5376 = vmatpush1.msra.mxu0 0.0
    %5377 = vmatprep.subr.mxu0 0.0
    %5378 = vmatpush1.msra.mxu0 0.0
    %5379 = vmatprep.subr.mxu0 0.0
    %5380 = vmatpush1.msra.mxu0 0.0
    %5381 = vmatprep.subr.mxu0 0.0
    %5382 = vmatpush1.msra.mxu0 0.0
    %5383 = vmatprep.subr.mxu0 0.0
    %5384 = vmatpush1.msra.mxu0 0.0
    %5385 = vmatprep.subr.mxu0 0.0
    %5386 = vmatpush1.msra.mxu0 0.0
    %5387 = vmatprep.subr.mxu0 0.0
    %5388 = vmatpush1.msra.mxu0 0.0
    %5389 = vmatprep.subr.mxu0 0.0
    %5390 = vmatpush1.msra.mxu0 0.0
    %5391 = vmatprep.subr.mxu0 0.0
    %5392 = vmatpush1.msra.mxu0 0.0
    %5393 = vmatprep.subr.mxu0 0.0
    %5394 = vmatpush1.msra.mxu0 0.0
    %5395 = vmatprep.subr.mxu0 0.0
    %5396 = vmatpush1.msra.mxu0 0.0
    %5397 = vmatprep.subr.mxu0 0.0
    %5398 = vmatpush1.msra.mxu0 0.0
    %5399 = vmatprep.subr.mxu0 0.0
    %5400 = vmatpush1.msra.mxu0 0.0
    %5401 = vmatprep.subr.mxu0 0.0
    %5402 = vmatpush1.msra.mxu0 0.0
    %5403 = vmatprep.subr.mxu0 0.0
    %5404 = vmatpush1.msra.mxu0 0.0
    %5405 = vmatprep.subr.mxu0 0.0
    %5406 = vmatpush1.msra.mxu0 0.0
    %5407 = vmatprep.subr.mxu0 0.0
    %5408 = vmatpush1.msra.mxu0 0.0
    %5409 = vmatprep.subr.mxu0 0.0
    %5410 = vmatpush1.msra.mxu0 0.0
    %5411 = vmatprep.subr.mxu0 0.0
    %5412 = vmatpush1.msra.mxu0 0.0
    %5413 = vmatprep.subr.mxu0 0.0
    %5414 = vmatpush1.msra.mxu0 0.0
    %5415 = vmatprep.subr.mxu0 0.0
    %5416 = vmatpush1.msra.mxu0 0.0
    %5417 = vmatprep.subr.mxu0 0.0
    %5418 = vmatpush1.msra.mxu0 0.0
    %5419 = vmatprep.subr.mxu0 0.0
    %5420 = vmatpush1.msra.mxu0 0.0
    %5421 = vmatprep.subr.mxu0 0.0
    %5422 = vmatpush1.msra.mxu0 0.0
    %5423 = vmatprep.subr.mxu0 0.0
    %5424 = vmatpush1.msra.mxu0 0.0
    %5425 = vmatprep.subr.mxu0 0.0
    %5426 = vmatpush1.msra.mxu0 0.0
    %5427 = vmatprep.subr.mxu0 0.0
    %5428 = vmatpush1.msra.mxu0 0.0
    %5429 = vmatprep.mubr.f32.mxu0 0.0
    %5430 = vmatmul.mubr.f32.gmra.mrb[0].mxu0 %v5360
    %v5431 = vpop.f32.mrb[0].mxu0
    %v5432 = vadd.f32 0.0, %v5431
    %v5433 = vpop.f32.mrb[0].mxu0
    %5434 = vmatprep.mubr.f32.mxu0 0.0
    %5435 = vmatmul.mubr.f32.gmra.mrb[0].mxu0 %v5363
    %v5436 = vpop.f32.mrb[0].mxu0
    %v5437 = vadd.f32 0.0, %v5436
    %v5438 = vpop.f32.mrb[0].mxu0
    %5439 = vdwg.mxu0
    %5441 = vrot.lane.b32.xlu0 %v4476, 64
    %v5442 = vpop.permute.xlu0 %5441
    %v5445 = vsel %vm616, %v5175, 0
    %v5448 = vsel %vm616, %v5180, 0
    %5450 = vmatprep.subr.mxu0 0.0
    %5451 = vmatpush1.msra.mxu0 %v5442
    %5452 = vmatprep.subr.mxu0 0.0
    %5453 = vmatpush1.msra.mxu0 0.0
    %5454 = vmatprep.subr.mxu0 0.0
    %5455 = vmatpush1.msra.mxu0 0.0
    %5456 = vmatprep.subr.mxu0 0.0
    %5457 = vmatpush1.msra.mxu0 0.0
    %5458 = vmatprep.subr.mxu0 0.0
    %5459 = vmatpush1.msra.mxu0 0.0
    %5460 = vmatprep.subr.mxu0 0.0
    %5461 = vmatpush1.msra.mxu0 0.0
    %5462 = vmatprep.subr.mxu0 0.0
    %5463 = vmatpush1.msra.mxu0 0.0
    %5464 = vmatprep.subr.mxu0 0.0
    %5465 = vmatpush1.msra.mxu0 0.0
    %5466 = vmatprep.subr.mxu0 0.0
    %5467 = vmatpush1.msra.mxu0 0.0
    %5468 = vmatprep.subr.mxu0 0.0
    %5469 = vmatpush1.msra.mxu0 0.0
    %5470 = vmatprep.subr.mxu0 0.0
    %5471 = vmatpush1.msra.mxu0 0.0
    %5472 = vmatprep.subr.mxu0 0.0
    %5473 = vmatpush1.msra.mxu0 0.0
    %5474 = vmatprep.subr.mxu0 0.0
    %5475 = vmatpush1.msra.mxu0 0.0
    %5476 = vmatprep.subr.mxu0 0.0
    %5477 = vmatpush1.msra.mxu0 0.0
    %5478 = vmatprep.subr.mxu0 0.0
    %5479 = vmatpush1.msra.mxu0 0.0
    %5480 = vmatprep.subr.mxu0 0.0
    %5481 = vmatpush1.msra.mxu0 0.0
    %5482 = vmatprep.subr.mxu0 0.0
    %5483 = vmatpush1.msra.mxu0 0.0
    %5484 = vmatprep.subr.mxu0 0.0
    %5485 = vmatpush1.msra.mxu0 0.0
    %5486 = vmatprep.subr.mxu0 0.0
    %5487 = vmatpush1.msra.mxu0 0.0
    %5488 = vmatprep.subr.mxu0 0.0
    %5489 = vmatpush1.msra.mxu0 0.0
    %5490 = vmatprep.subr.mxu0 0.0
    %5491 = vmatpush1.msra.mxu0 0.0
    %5492 = vmatprep.subr.mxu0 0.0
    %5493 = vmatpush1.msra.mxu0 0.0
    %5494 = vmatprep.subr.mxu0 0.0
    %5495 = vmatpush1.msra.mxu0 0.0
    %5496 = vmatprep.subr.mxu0 0.0
    %5497 = vmatpush1.msra.mxu0 0.0
    %5498 = vmatprep.subr.mxu0 0.0
    %5499 = vmatpush1.msra.mxu0 0.0
    %5500 = vmatprep.subr.mxu0 0.0
    %5501 = vmatpush1.msra.mxu0 0.0
    %5502 = vmatprep.subr.mxu0 0.0
    %5503 = vmatpush1.msra.mxu0 0.0
    %5504 = vmatprep.subr.mxu0 0.0
    %5505 = vmatpush1.msra.mxu0 0.0
    %5506 = vmatprep.subr.mxu0 0.0
    %5507 = vmatpush1.msra.mxu0 0.0
    %5508 = vmatprep.subr.mxu0 0.0
    %5509 = vmatpush1.msra.mxu0 0.0
    %5510 = vmatprep.subr.mxu0 0.0
    %5511 = vmatpush1.msra.mxu0 0.0
    %5512 = vmatprep.subr.mxu0 0.0
    %5513 = vmatpush1.msra.mxu0 0.0
    %5514 = vmatprep.mubr.f32.mxu0 0.0
    %5515 = vmatmul.mubr.f32.gmra.mrb[0].mxu0 %v5445
    %v5516 = vpop.f32.mrb[0].mxu0
    %v5517 = vadd.f32 0.0, %v5516
    %v5518 = vpop.f32.mrb[0].mxu0
    %5519 = vmatprep.mubr.f32.mxu0 0.0
    %5520 = vmatmul.mubr.f32.gmra.mrb[0].mxu0 %v5448
    %v5521 = vpop.f32.mrb[0].mxu0
    %v5522 = vadd.f32 0.0, %v5521
    %v5523 = vpop.f32.mrb[0].mxu0
    %5524 = vdwg.mxu0
    %5526 = vrot.lane.b32.xlu0 %v4477, 64
    %v5527 = vpop.permute.xlu0 %5526
    %v5530 = vsel %vm616, %v5262, 0
    %v5533 = vsel %vm616, %v5267, 0
    %5535 = vmatprep.subr.mxu0 0.0
    %5536 = vmatpush1.msra.mxu0 %v5527
    %5537 = vmatprep.subr.mxu0 0.0
    %5538 = vmatpush1.msra.mxu0 0.0
    %5539 = vmatprep.subr.mxu0 0.0
    %5540 = vmatpush1.msra.mxu0 0.0
    %5541 = vmatprep.subr.mxu0 0.0
    %5542 = vmatpush1.msra.mxu0 0.0
    %5543 = vmatprep.subr.mxu0 0.0
    %5544 = vmatpush1.msra.mxu0 0.0
    %5545 = vmatprep.subr.mxu0 0.0
    %5546 = vmatpush1.msra.mxu0 0.0
    %5547 = vmatprep.subr.mxu0 0.0
    %5548 = vmatpush1.msra.mxu0 0.0
    %5549 = vmatprep.subr.mxu0 0.0
    %5550 = vmatpush1.msra.mxu0 0.0
    %5551 = vmatprep.subr.mxu0 0.0
    %5552 = vmatpush1.msra.mxu0 0.0
    %5553 = vmatprep.subr.mxu0 0.0
    %5554 = vmatpush1.msra.mxu0 0.0
    %5555 = vmatprep.subr.mxu0 0.0
    %5556 = vmatpush1.msra.mxu0 0.0
    %5557 = vmatprep.subr.mxu0 0.0
    %5558 = vmatpush1.msra.mxu0 0.0
    %5559 = vmatprep.subr.mxu0 0.0
    %5560 = vmatpush1.msra.mxu0 0.0
    %5561 = vmatprep.subr.mxu0 0.0
    %5562 = vmatpush1.msra.mxu0 0.0
    %5563 = vmatprep.subr.mxu0 0.0
    %5564 = vmatpush1.msra.mxu0 0.0
    %5565 = vmatprep.subr.mxu0 0.0
    %5566 = vmatpush1.msra.mxu0 0.0
    %5567 = vmatprep.subr.mxu0 0.0
    %5568 = vmatpush1.msra.mxu0 0.0
    %5569 = vmatprep.subr.mxu0 0.0
    %5570 = vmatpush1.msra.mxu0 0.0
    %5571 = vmatprep.subr.mxu0 0.0
    %5572 = vmatpush1.msra.mxu0 0.0
    %5573 = vmatprep.subr.mxu0 0.0
    %5574 = vmatpush1.msra.mxu0 0.0
    %5575 = vmatprep.subr.mxu0 0.0
    %5576 = vmatpush1.msra.mxu0 0.0
    %5577 = vmatprep.subr.mxu0 0.0
    %5578 = vmatpush1.msra.mxu0 0.0
    %5579 = vmatprep.subr.mxu0 0.0
    %5580 = vmatpush1.msra.mxu0 0.0
    %5581 = vmatprep.subr.mxu0 0.0
    %5582 = vmatpush1.msra.mxu0 0.0
    %5583 = vmatprep.subr.mxu0 0.0
    %5584 = vmatpush1.msra.mxu0 0.0
    %5585 = vmatprep.subr.mxu0 0.0
    %5586 = vmatpush1.msra.mxu0 0.0
    %5587 = vmatprep.subr.mxu0 0.0
    %5588 = vmatpush1.msra.mxu0 0.0
    %5589 = vmatprep.subr.mxu0 0.0
    %5590 = vmatpush1.msra.mxu0 0.0
    %5591 = vmatprep.subr.mxu0 0.0
    %5592 = vmatpush1.msra.mxu0 0.0
    %5593 = vmatprep.subr.mxu0 0.0
    %5594 = vmatpush1.msra.mxu0 0.0
    %5595 = vmatprep.subr.mxu0 0.0
    %5596 = vmatpush1.msra.mxu0 0.0
    %5597 = vmatprep.subr.mxu0 0.0
    %5598 = vmatpush1.msra.mxu0 0.0
    %5599 = vmatprep.mubr.f32.mxu0 0.0
    %5600 = vmatmul.mubr.f32.gmra.mrb[0].mxu0 %v5530
    %v5601 = vpop.f32.mrb[0].mxu0
    %v5602 = vadd.f32 0.0, %v5601
    %v5603 = vpop.f32.mrb[0].mxu0
    %5604 = vmatprep.mubr.f32.mxu0 0.0
    %5605 = vmatmul.mubr.f32.gmra.mrb[0].mxu0 %v5533
    %v5606 = vpop.f32.mrb[0].mxu0
    %v5607 = vadd.f32 0.0, %v5606
    %v5608 = vpop.f32.mrb[0].mxu0
    %5609 = vdwg.mxu0
    %v5610 = vadd.f32 %v5347, %v5432
    %v5611 = vadd.f32 %v5352, %v5437
    %v5612 = vadd.f32 %v5610, %v5517
    %v5613 = vadd.f32 %v5611, %v5522
    %v5614 = vadd.f32 %v5612, %v5602
    %v5615 = vadd.f32 %v5613, %v5607
    %v5616 = vadd.f32 %v4030, %v5614
    %v5617 = vadd.f32 %v4031, %v5615
    %v5618 = vld [vmem:[%s8 + $0xa] sm:$0x1]
    %v5619 = vld [vmem:[%s8 + $0xb] sm:$0x1]
    %v5620 = vsel %vm144, %v5616, 0.0
    %5621 = vadd.xlane.f32.xlu0 %v5620
    %v5622 = vpop.xlane.xlu0 %5621
    %v5623 = vsel %vm144, %v5617, 0.0
    %5624 = vadd.xlane.f32.xlu0 %v5623
    %v5625 = vpop.xlane.xlu0 %5624
    %v5626 = vmul.f32 %v5622, %v236
    %v5627 = vmul.f32 %v5625, %v236
    %v5628 = vsub.f32 %v5616, %v5626
    %v5629 = vsub.f32 %v5617, %v5627
    %v5630 = vmul.f32 %v5628, %v5628
    %v5631 = vmul.f32 %v5629, %v5629
    %v5632 = vsel %vm144, %v5630, 0.0
    %5633 = vadd.xlane.f32.xlu0 %v5632
    %v5634 = vpop.xlane.xlu0 %5633
    %v5635 = vsel %vm144, %v5631, 0.0
    %5636 = vadd.xlane.f32.xlu0 %v5635
    %v5637 = vpop.xlane.xlu0 %5636
    %v5638 = vmul.f32 %v5634, %v249
    %v5639 = vmul.f32 %v5637, %v249
    %v5640 = vrsqrt.pop %v5638
    %v5641 = vmul.f32 %v5638, %v5640
    %vm5642 = vcmp.eq.f32.partialorder %v5638, inf
    %v5643 = vsel %vm5642, %v5638, %v5641
    %vm5644 = vcmp.eq.f32.partialorder %v5638, 0.0
    %v5645 = vand.u32 %v5638, 2147483648
    %v5646 = vsel %vm5644, %v5645, %v5643
    %v5647 = vrsqrt.pop %v5639
    %v5648 = vmul.f32 %v5639, %v5647
    %vm5649 = vcmp.eq.f32.partialorder %v5639, inf
    %v5650 = vsel %vm5649, %v5639, %v5648
    %vm5651 = vcmp.eq.f32.partialorder %v5639, 0.0
    %v5652 = vand.u32 %v5639, 2147483648
    %v5653 = vsel %vm5651, %v5652, %v5650
    %v5654 = vadd.f32 %v5646, 1e-06
    %v5655 = vadd.f32 %v5653, 1e-06
    %v5656 = vrcp.pop %v5654
    %v5657 = vrcp.pop %v5655
    %v5658 = vlaneseq
    %v5659 = vshrl.u32 %v5658, 7
    %v5660 = vsub.s32 0, %v5659
    %v5661 = vrot.slane %v5618, %v5660
    %v5662 = vmul.f32 %v5661, %v5628
    %v5663 = vmul.f32 %v5661, %v5629
    %v5664 = vmul.f32 %v5662, %v5656
    %v5665 = vmul.f32 %v5663, %v5657
    %v5666 = vlaneseq
    %v5667 = vshrl.u32 %v5666, 7
    %v5668 = vsub.s32 0, %v5667
    %v5669 = vrot.slane %v5619, %v5668
    %v5670 = vadd.f32 %v5664, %v5669
    %v5671 = vadd.f32 %v5665, %v5669
    %v5672 = vld [vmem:[%s5] sm:$0xff]
    %v5673 = vld [vmem:[%s5 + $0x8] sm:$0xff]
    %v5674 = vld [vmem:[%s5 + $0x10] sm:$0xff]
    %v5675 = vld [vmem:[%s5 + $0x18] sm:$0xff]
    %v5676 = vld [vmem:[%s5 + $0x20] sm:$0xff]
    %v5677 = vld [vmem:[%s5 + $0x28] sm:$0xff]
    %v5678 = vld [vmem:[%s5 + $0x30] sm:$0xff]
    %v5679 = vld [vmem:[%s5 + $0x38] sm:$0xff]
    %v5680 = vld [vmem:[%s5 + $0x40] sm:$0xff]
    %v5681 = vld [vmem:[%s5 + $0x48] sm:$0xff]
    %v5682 = vld [vmem:[%s5 + $0x50] sm:$0xff]
    %v5683 = vld [vmem:[%s5 + $0x58] sm:$0xff]
    %v5684 = vld [vmem:[%s5 + $0x60] sm:$0xff]
    %v5685 = vld [vmem:[%s5 + $0x68] sm:$0xff]
    %v5686 = vld [vmem:[%s5 + $0x70] sm:$0xff]
    %v5687 = vld [vmem:[%s5 + $0x78] sm:$0xff]
    %5692 = vrot.lane.b32.xlu0 %v5672, 56
    %v5693 = vpop.permute.xlu0 %5692
    %5694 = vrot.lane.b32.xlu0 %v5673, 56
    %v5695 = vpop.permute.xlu0 %5694
    %5696 = vrot.lane.b32.xlu0 %v5674, 56
    %v5697 = vpop.permute.xlu0 %5696
    %5698 = vrot.lane.b32.xlu0 %v5675, 56
    %v5699 = vpop.permute.xlu0 %5698
    %v5705 = vsel %vm144, %v5670, 0
    %v5708 = vsel %vm144, %v5671, 0
    %5710 = vmatprep.subr.mxu0 0.0
    %5711 = vmatpush1.msra.mxu0 %v5693
    %5712 = vmatprep.subr.mxu0 0.0
    %5713 = vmatpush1.msra.mxu0 %v5695
    %5714 = vmatprep.subr.mxu0 0.0
    %5715 = vmatpush1.msra.mxu0 %v5697
    %5716 = vmatprep.subr.mxu0 0.0
    %5717 = vmatpush1.msra.mxu0 %v5699
    %5718 = vmatprep.subr.mxu0 0.0
    %5719 = vmatpush1.msra.mxu0 0.0
    %5720 = vmatprep.subr.mxu0 0.0
    %5721 = vmatpush1.msra.mxu0 0.0
    %5722 = vmatprep.subr.mxu0 0.0
    %5723 = vmatpush1.msra.mxu0 0.0
    %5724 = vmatprep.subr.mxu0 0.0
    %5725 = vmatpush1.msra.mxu0 0.0
    %5726 = vmatprep.subr.mxu0 0.0
    %5727 = vmatpush1.msra.mxu0 0.0
    %5728 = vmatprep.subr.mxu0 0.0
    %5729 = vmatpush1.msra.mxu0 0.0
    %5730 = vmatprep.subr.mxu0 0.0
    %5731 = vmatpush1.msra.mxu0 0.0
    %5732 = vmatprep.subr.mxu0 0.0
    %5733 = vmatpush1.msra.mxu0 0.0
    %5734 = vmatprep.subr.mxu0 0.0
    %5735 = vmatpush1.msra.mxu0 0.0
    %5736 = vmatprep.subr.mxu0 0.0
    %5737 = vmatpush1.msra.mxu0 0.0
    %5738 = vmatprep.subr.mxu0 0.0
    %5739 = vmatpush1.msra.mxu0 0.0
    %5740 = vmatprep.subr.mxu0 0.0
    %5741 = vmatpush1.msra.mxu0 0.0
    %5742 = vmatprep.subr.mxu0 0.0
    %5743 = vmatpush1.msra.mxu0 0.0
    %5744 = vmatprep.subr.mxu0 0.0
    %5745 = vmatpush1.msra.mxu0 0.0
    %5746 = vmatprep.subr.mxu0 0.0
    %5747 = vmatpush1.msra.mxu0 0.0
    %5748 = vmatprep.subr.mxu0 0.0
    %5749 = vmatpush1.msra.mxu0 0.0
    %5750 = vmatprep.subr.mxu0 0.0
    %5751 = vmatpush1.msra.mxu0 0.0
    %5752 = vmatprep.subr.mxu0 0.0
    %5753 = vmatpush1.msra.mxu0 0.0
    %5754 = vmatprep.subr.mxu0 0.0
    %5755 = vmatpush1.msra.mxu0 0.0
    %5756 = vmatprep.subr.mxu0 0.0
    %5757 = vmatpush1.msra.mxu0 0.0
    %5758 = vmatprep.subr.mxu0 0.0
    %5759 = vmatpush1.msra.mxu0 0.0
    %5760 = vmatprep.subr.mxu0 0.0
    %5761 = vmatpush1.msra.mxu0 0.0
    %5762 = vmatprep.subr.mxu0 0.0
    %5763 = vmatpush1.msra.mxu0 0.0
    %5764 = vmatprep.subr.mxu0 0.0
    %5765 = vmatpush1.msra.mxu0 0.0
    %5766 = vmatprep.subr.mxu0 0.0
    %5767 = vmatpush1.msra.mxu0 0.0
    %5768 = vmatprep.subr.mxu0 0.0
    %5769 = vmatpush1.msra.mxu0 0.0
    %5770 = vmatprep.subr.mxu0 0.0
    %5771 = vmatpush1.msra.mxu0 0.0
    %5772 = vmatprep.subr.mxu0 0.0
    %5773 = vmatpush1.msra.mxu0 0.0
    %5774 = vmatprep.mubr.f32.mxu0 0.0
    %5775 = vmatmul.mubr.f32.gmra.mrb[0].mxu0 %v5705
    %v5776 = vpop.f32.mrb[0].mxu0
    %v5777 = vadd.f32 0.0, %v5776
    %v5778 = vpop.f32.mrb[0].mxu0
    %5779 = vmatprep.mubr.f32.mxu0 0.0
    %5780 = vmatmul.mubr.f32.gmra.mrb[0].mxu0 %v5708
    %v5781 = vpop.f32.mrb[0].mxu0
    %v5782 = vadd.f32 0.0, %v5781
    %v5783 = vpop.f32.mrb[0].mxu0
    %5784 = vdwg.mxu0
    %5789 = vrot.lane.b32.xlu0 %v5676, 56
    %v5790 = vpop.permute.xlu0 %5789
    %5791 = vrot.lane.b32.xlu0 %v5677, 56
    %v5792 = vpop.permute.xlu0 %5791
    %5793 = vrot.lane.b32.xlu0 %v5678, 56
    %v5794 = vpop.permute.xlu0 %5793
    %5795 = vrot.lane.b32.xlu0 %v5679, 56
    %v5796 = vpop.permute.xlu0 %5795
    %5801 = vmatprep.subr.mxu0 0.0
    %5802 = vmatpush1.msra.mxu0 %v5790
    %5803 = vmatprep.subr.mxu0 0.0
    %5804 = vmatpush1.msra.mxu0 %v5792
    %5805 = vmatprep.subr.mxu0 0.0
    %5806 = vmatpush1.msra.mxu0 %v5794
    %5807 = vmatprep.subr.mxu0 0.0
    %5808 = vmatpush1.msra.mxu0 %v5796
    %5809 = vmatprep.subr.mxu0 0.0
    %5810 = vmatpush1.msra.mxu0 0.0
    %5811 = vmatprep.subr.mxu0 0.0
    %5812 = vmatpush1.msra.mxu0 0.0
    %5813 = vmatprep.subr.mxu0 0.0
    %5814 = vmatpush1.msra.mxu0 0.0
    %5815 = vmatprep.subr.mxu0 0.0
    %5816 = vmatpush1.msra.mxu0 0.0
    %5817 = vmatprep.subr.mxu0 0.0
    %5818 = vmatpush1.msra.mxu0 0.0
    %5819 = vmatprep.subr.mxu0 0.0
    %5820 = vmatpush1.msra.mxu0 0.0
    %5821 = vmatprep.subr.mxu0 0.0
    %5822 = vmatpush1.msra.mxu0 0.0
    %5823 = vmatprep.subr.mxu0 0.0
    %5824 = vmatpush1.msra.mxu0 0.0
    %5825 = vmatprep.subr.mxu0 0.0
    %5826 = vmatpush1.msra.mxu0 0.0
    %5827 = vmatprep.subr.mxu0 0.0
    %5828 = vmatpush1.msra.mxu0 0.0
    %5829 = vmatprep.subr.mxu0 0.0
    %5830 = vmatpush1.msra.mxu0 0.0
    %5831 = vmatprep.subr.mxu0 0.0
    %5832 = vmatpush1.msra.mxu0 0.0
    %5833 = vmatprep.subr.mxu0 0.0
    %5834 = vmatpush1.msra.mxu0 0.0
    %5835 = vmatprep.subr.mxu0 0.0
    %5836 = vmatpush1.msra.mxu0 0.0
    %5837 = vmatprep.subr.mxu0 0.0
    %5838 = vmatpush1.msra.mxu0 0.0
    %5839 = vmatprep.subr.mxu0 0.0
    %5840 = vmatpush1.msra.mxu0 0.0
    %5841 = vmatprep.subr.mxu0 0.0
    %5842 = vmatpush1.msra.mxu0 0.0
    %5843 = vmatprep.subr.mxu0 0.0
    %5844 = vmatpush1.msra.mxu0 0.0
    %5845 = vmatprep.subr.mxu0 0.0
    %5846 = vmatpush1.msra.mxu0 0.0
    %5847 = vmatprep.subr.mxu0 0.0
    %5848 = vmatpush1.msra.mxu0 0.0
    %5849 = vmatprep.subr.mxu0 0.0
    %5850 = vmatpush1.msra.mxu0 0.0
    %5851 = vmatprep.subr.mxu0 0.0
    %5852 = vmatpush1.msra.mxu0 0.0
    %5853 = vmatprep.subr.mxu0 0.0
    %5854 = vmatpush1.msra.mxu0 0.0
    %5855 = vmatprep.subr.mxu0 0.0
    %5856 = vmatpush1.msra.mxu0 0.0
    %5857 = vmatprep.subr.mxu0 0.0
    %5858 = vmatpush1.msra.mxu0 0.0
    %5859 = vmatprep.subr.mxu0 0.0
    %5860 = vmatpush1.msra.mxu0 0.0
    %5861 = vmatprep.subr.mxu0 0.0
    %5862 = vmatpush1.msra.mxu0 0.0
    %5863 = vmatprep.subr.mxu0 0.0
    %5864 = vmatpush1.msra.mxu0 0.0
    %5865 = vmatprep.mubr.f32.mxu0 0.0
    %5866 = vmatmul.mubr.f32.gmra.mrb[0].mxu0 %v5705
    %v5867 = vpop.f32.mrb[0].mxu0
    %v5868 = vadd.f32 0.0, %v5867
    %v5869 = vpop.f32.mrb[0].mxu0
    %5870 = vmatprep.mubr.f32.mxu0 0.0
    %5871 = vmatmul.mubr.f32.gmra.mrb[0].mxu0 %v5708
    %v5872 = vpop.f32.mrb[0].mxu0
    %v5873 = vadd.f32 0.0, %v5872
    %v5874 = vpop.f32.mrb[0].mxu0
    %5875 = vdwg.mxu0
    %5880 = vrot.lane.b32.xlu0 %v5680, 56
    %v5881 = vpop.permute.xlu0 %5880
    %5882 = vrot.lane.b32.xlu0 %v5681, 56
    %v5883 = vpop.permute.xlu0 %5882
    %5884 = vrot.lane.b32.xlu0 %v5682, 56
    %v5885 = vpop.permute.xlu0 %5884
    %5886 = vrot.lane.b32.xlu0 %v5683, 56
    %v5887 = vpop.permute.xlu0 %5886
    %5892 = vmatprep.subr.mxu0 0.0
    %5893 = vmatpush1.msra.mxu0 %v5881
    %5894 = vmatprep.subr.mxu0 0.0
    %5895 = vmatpush1.msra.mxu0 %v5883
    %5896 = vmatprep.subr.mxu0 0.0
    %5897 = vmatpush1.msra.mxu0 %v5885
    %5898 = vmatprep.subr.mxu0 0.0
    %5899 = vmatpush1.msra.mxu0 %v5887
    %5900 = vmatprep.subr.mxu0 0.0
    %5901 = vmatpush1.msra.mxu0 0.0
    %5902 = vmatprep.subr.mxu0 0.0
    %5903 = vmatpush1.msra.mxu0 0.0
    %5904 = vmatprep.subr.mxu0 0.0
    %5905 = vmatpush1.msra.mxu0 0.0
    %5906 = vmatprep.subr.mxu0 0.0
    %5907 = vmatpush1.msra.mxu0 0.0
    %5908 = vmatprep.subr.mxu0 0.0
    %5909 = vmatpush1.msra.mxu0 0.0
    %5910 = vmatprep.subr.mxu0 0.0
    %5911 = vmatpush1.msra.mxu0 0.0
    %5912 = vmatprep.subr.mxu0 0.0
    %5913 = vmatpush1.msra.mxu0 0.0
    %5914 = vmatprep.subr.mxu0 0.0
    %5915 = vmatpush1.msra.mxu0 0.0
    %5916 = vmatprep.subr.mxu0 0.0
    %5917 = vmatpush1.msra.mxu0 0.0
    %5918 = vmatprep.subr.mxu0 0.0
    %5919 = vmatpush1.msra.mxu0 0.0
    %5920 = vmatprep.subr.mxu0 0.0
    %5921 = vmatpush1.msra.mxu0 0.0
    %5922 = vmatprep.subr.mxu0 0.0
    %5923 = vmatpush1.msra.mxu0 0.0
    %5924 = vmatprep.subr.mxu0 0.0
    %5925 = vmatpush1.msra.mxu0 0.0
    %5926 = vmatprep.subr.mxu0 0.0
    %5927 = vmatpush1.msra.mxu0 0.0
    %5928 = vmatprep.subr.mxu0 0.0
    %5929 = vmatpush1.msra.mxu0 0.0
    %5930 = vmatprep.subr.mxu0 0.0
    %5931 = vmatpush1.msra.mxu0 0.0
    %5932 = vmatprep.subr.mxu0 0.0
    %5933 = vmatpush1.msra.mxu0 0.0
    %5934 = vmatprep.subr.mxu0 0.0
    %5935 = vmatpush1.msra.mxu0 0.0
    %5936 = vmatprep.subr.mxu0 0.0
    %5937 = vmatpush1.msra.mxu0 0.0
    %5938 = vmatprep.subr.mxu0 0.0
    %5939 = vmatpush1.msra.mxu0 0.0
    %5940 = vmatprep.subr.mxu0 0.0
    %5941 = vmatpush1.msra.mxu0 0.0
    %5942 = vmatprep.subr.mxu0 0.0
    %5943 = vmatpush1.msra.mxu0 0.0
    %5944 = vmatprep.subr.mxu0 0.0
    %5945 = vmatpush1.msra.mxu0 0.0
    %5946 = vmatprep.subr.mxu0 0.0
    %5947 = vmatpush1.msra.mxu0 0.0
    %5948 = vmatprep.subr.mxu0 0.0
    %5949 = vmatpush1.msra.mxu0 0.0
    %5950 = vmatprep.subr.mxu0 0.0
    %5951 = vmatpush1.msra.mxu0 0.0
    %5952 = vmatprep.subr.mxu0 0.0
    %5953 = vmatpush1.msra.mxu0 0.0
    %5954 = vmatprep.subr.mxu0 0.0
    %5955 = vmatpush1.msra.mxu0 0.0
    %5956 = vmatprep.mubr.f32.mxu0 0.0
    %5957 = vmatmul.mubr.f32.gmra.mrb[0].mxu0 %v5705
    %v5958 = vpop.f32.mrb[0].mxu0
    %v5959 = vadd.f32 0.0, %v5958
    %v5960 = vpop.f32.mrb[0].mxu0
    %5961 = vmatprep.mubr.f32.mxu0 0.0
    %5962 = vmatmul.mubr.f32.gmra.mrb[0].mxu0 %v5708
    %v5963 = vpop.f32.mrb[0].mxu0
    %v5964 = vadd.f32 0.0, %v5963
    %v5965 = vpop.f32.mrb[0].mxu0
    %5966 = vdwg.mxu0
    %5971 = vrot.lane.b32.xlu0 %v5684, 56
    %v5972 = vpop.permute.xlu0 %5971
    %5973 = vrot.lane.b32.xlu0 %v5685, 56
    %v5974 = vpop.permute.xlu0 %5973
    %5975 = vrot.lane.b32.xlu0 %v5686, 56
    %v5976 = vpop.permute.xlu0 %5975
    %5977 = vrot.lane.b32.xlu0 %v5687, 56
    %v5978 = vpop.permute.xlu0 %5977
    %5983 = vmatprep.subr.mxu0 0.0
    %5984 = vmatpush1.msra.mxu0 %v5972
    %5985 = vmatprep.subr.mxu0 0.0
    %5986 = vmatpush1.msra.mxu0 %v5974
    %5987 = vmatprep.subr.mxu0 0.0
    %5988 = vmatpush1.msra.mxu0 %v5976
    %5989 = vmatprep.subr.mxu0 0.0
    %5990 = vmatpush1.msra.mxu0 %v5978
    %5991 = vmatprep.subr.mxu0 0.0
    %5992 = vmatpush1.msra.mxu0 0.0
    %5993 = vmatprep.subr.mxu0 0.0
    %5994 = vmatpush1.msra.mxu0 0.0
    %5995 = vmatprep.subr.mxu0 0.0
    %5996 = vmatpush1.msra.mxu0 0.0
    %5997 = vmatprep.subr.mxu0 0.0
    %5998 = vmatpush1.msra.mxu0 0.0
    %5999 = vmatprep.subr.mxu0 0.0
    %6000 = vmatpush1.msra.mxu0 0.0
    %6001 = vmatprep.subr.mxu0 0.0
    %6002 = vmatpush1.msra.mxu0 0.0
    %6003 = vmatprep.subr.mxu0 0.0
    %6004 = vmatpush1.msra.mxu0 0.0
    %6005 = vmatprep.subr.mxu0 0.0
    %6006 = vmatpush1.msra.mxu0 0.0
    %6007 = vmatprep.subr.mxu0 0.0
    %6008 = vmatpush1.msra.mxu0 0.0
    %6009 = vmatprep.subr.mxu0 0.0
    %6010 = vmatpush1.msra.mxu0 0.0
    %6011 = vmatprep.subr.mxu0 0.0
    %6012 = vmatpush1.msra.mxu0 0.0
    %6013 = vmatprep.subr.mxu0 0.0
    %6014 = vmatpush1.msra.mxu0 0.0
    %6015 = vmatprep.subr.mxu0 0.0
    %6016 = vmatpush1.msra.mxu0 0.0
    %6017 = vmatprep.subr.mxu0 0.0
    %6018 = vmatpush1.msra.mxu0 0.0
    %6019 = vmatprep.subr.mxu0 0.0
    %6020 = vmatpush1.msra.mxu0 0.0
    %6021 = vmatprep.subr.mxu0 0.0
    %6022 = vmatpush1.msra.mxu0 0.0
    %6023 = vmatprep.subr.mxu0 0.0
    %6024 = vmatpush1.msra.mxu0 0.0
    %6025 = vmatprep.subr.mxu0 0.0
    %6026 = vmatpush1.msra.mxu0 0.0
    %6027 = vmatprep.subr.mxu0 0.0
    %6028 = vmatpush1.msra.mxu0 0.0
    %6029 = vmatprep.subr.mxu0 0.0
    %6030 = vmatpush1.msra.mxu0 0.0
    %6031 = vmatprep.subr.mxu0 0.0
    %6032 = vmatpush1.msra.mxu0 0.0
    %6033 = vmatprep.subr.mxu0 0.0
    %6034 = vmatpush1.msra.mxu0 0.0
    %6035 = vmatprep.subr.mxu0 0.0
    %6036 = vmatpush1.msra.mxu0 0.0
    %6037 = vmatprep.subr.mxu0 0.0
    %6038 = vmatpush1.msra.mxu0 0.0
    %6039 = vmatprep.subr.mxu0 0.0
    %6040 = vmatpush1.msra.mxu0 0.0
    %6041 = vmatprep.subr.mxu0 0.0
    %6042 = vmatpush1.msra.mxu0 0.0
    %6043 = vmatprep.subr.mxu0 0.0
    %6044 = vmatpush1.msra.mxu0 0.0
    %6045 = vmatprep.subr.mxu0 0.0
    %6046 = vmatpush1.msra.mxu0 0.0
    %6047 = vmatprep.mubr.f32.mxu0 0.0
    %6048 = vmatmul.mubr.f32.gmra.mrb[0].mxu0 %v5705
    %v6049 = vpop.f32.mrb[0].mxu0
    %v6050 = vadd.f32 0.0, %v6049
    %v6051 = vpop.f32.mrb[0].mxu0
    %6052 = vmatprep.mubr.f32.mxu0 0.0
    %6053 = vmatmul.mubr.f32.gmra.mrb[0].mxu0 %v5708
    %v6054 = vpop.f32.mrb[0].mxu0
    %v6055 = vadd.f32 0.0, %v6054
    %v6056 = vpop.f32.mrb[0].mxu0
    %6057 = vdwg.mxu0
    %v6058 = vld [vmem:[%s5] sm:$0xff]
    %v6059 = vld [vmem:[%s5 + $0x8] sm:$0xff]
    %v6060 = vld [vmem:[%s5 + $0x10] sm:$0xff]
    %v6061 = vld [vmem:[%s5 + $0x18] sm:$0xff]
    %v6062 = vld [vmem:[%s5 + $0x20] sm:$0xff]
    %v6063 = vld [vmem:[%s5 + $0x28] sm:$0xff]
    %v6064 = vld [vmem:[%s5 + $0x30] sm:$0xff]
    %v6065 = vld [vmem:[%s5 + $0x38] sm:$0xff]
    %v6066 = vld [vmem:[%s5 + $0x40] sm:$0xff]
    %v6067 = vld [vmem:[%s5 + $0x48] sm:$0xff]
    %v6068 = vld [vmem:[%s5 + $0x50] sm:$0xff]
    %v6069 = vld [vmem:[%s5 + $0x58] sm:$0xff]
    %v6070 = vld [vmem:[%s5 + $0x60] sm:$0xff]
    %v6071 = vld [vmem:[%s5 + $0x68] sm:$0xff]
    %v6072 = vld [vmem:[%s5 + $0x70] sm:$0xff]
    %v6073 = vld [vmem:[%s5 + $0x78] sm:$0xff]
    %6078 = vrot.lane.b32.xlu0 %v6058, 48
    %v6079 = vpop.permute.xlu0 %6078
    %6080 = vrot.lane.b32.xlu0 %v6059, 48
    %v6081 = vpop.permute.xlu0 %6080
    %6082 = vrot.lane.b32.xlu0 %v6060, 48
    %v6083 = vpop.permute.xlu0 %6082
    %6084 = vrot.lane.b32.xlu0 %v6061, 48
    %v6085 = vpop.permute.xlu0 %6084
    %v6091 = vsel %vm144, %v4032, 0
    %v6094 = vsel %vm144, %v4033, 0
    %6096 = vmatprep.subr.mxu0 0.0
    %6097 = vmatpush1.msra.mxu0 %v6079
    %6098 = vmatprep.subr.mxu0 0.0
    %6099 = vmatpush1.msra.mxu0 %v6081
    %6100 = vmatprep.subr.mxu0 0.0
    %6101 = vmatpush1.msra.mxu0 %v6083
    %6102 = vmatprep.subr.mxu0 0.0
    %6103 = vmatpush1.msra.mxu0 %v6085
    %6104 = vmatprep.subr.mxu0 0.0
    %6105 = vmatpush1.msra.mxu0 0.0
    %6106 = vmatprep.subr.mxu0 0.0
    %6107 = vmatpush1.msra.mxu0 0.0
    %6108 = vmatprep.subr.mxu0 0.0
    %6109 = vmatpush1.msra.mxu0 0.0
    %6110 = vmatprep.subr.mxu0 0.0
    %6111 = vmatpush1.msra.mxu0 0.0
    %6112 = vmatprep.subr.mxu0 0.0
    %6113 = vmatpush1.msra.mxu0 0.0
    %6114 = vmatprep.subr.mxu0 0.0
    %6115 = vmatpush1.msra.mxu0 0.0
    %6116 = vmatprep.subr.mxu0 0.0
    %6117 = vmatpush1.msra.mxu0 0.0
    %6118 = vmatprep.subr.mxu0 0.0
    %6119 = vmatpush1.msra.mxu0 0.0
    %6120 = vmatprep.subr.mxu0 0.0
    %6121 = vmatpush1.msra.mxu0 0.0
    %6122 = vmatprep.subr.mxu0 0.0
    %6123 = vmatpush1.msra.mxu0 0.0
    %6124 = vmatprep.subr.mxu0 0.0
    %6125 = vmatpush1.msra.mxu0 0.0
    %6126 = vmatprep.subr.mxu0 0.0
    %6127 = vmatpush1.msra.mxu0 0.0
    %6128 = vmatprep.subr.mxu0 0.0
    %6129 = vmatpush1.msra.mxu0 0.0
    %6130 = vmatprep.subr.mxu0 0.0
    %6131 = vmatpush1.msra.mxu0 0.0
    %6132 = vmatprep.subr.mxu0 0.0
    %6133 = vmatpush1.msra.mxu0 0.0
    %6134 = vmatprep.subr.mxu0 0.0
    %6135 = vmatpush1.msra.mxu0 0.0
    %6136 = vmatprep.subr.mxu0 0.0
    %6137 = vmatpush1.msra.mxu0 0.0
    %6138 = vmatprep.subr.mxu0 0.0
    %6139 = vmatpush1.msra.mxu0 0.0
    %6140 = vmatprep.subr.mxu0 0.0
    %6141 = vmatpush1.msra.mxu0 0.0
    %6142 = vmatprep.subr.mxu0 0.0
    %6143 = vmatpush1.msra.mxu0 0.0
    %6144 = vmatprep.subr.mxu0 0.0
    %6145 = vmatpush1.msra.mxu0 0.0
    %6146 = vmatprep.subr.mxu0 0.0
    %6147 = vmatpush1.msra.mxu0 0.0
    %6148 = vmatprep.subr.mxu0 0.0
    %6149 = vmatpush1.msra.mxu0 0.0
    %6150 = vmatprep.subr.mxu0 0.0
    %6151 = vmatpush1.msra.mxu0 0.0
    %6152 = vmatprep.subr.mxu0 0.0
    %6153 = vmatpush1.msra.mxu0 0.0
    %6154 = vmatprep.subr.mxu0 0.0
    %6155 = vmatpush1.msra.mxu0 0.0
    %6156 = vmatprep.subr.mxu0 0.0
    %6157 = vmatpush1.msra.mxu0 0.0
    %6158 = vmatprep.subr.mxu0 0.0
    %6159 = vmatpush1.msra.mxu0 0.0
    %6160 = vmatprep.mubr.f32.mxu0 0.0
    %6161 = vmatmul.mubr.f32.gmra.mrb[0].mxu0 %v6091
    %v6162 = vpop.f32.mrb[0].mxu0
    %v6163 = vadd.f32 0.0, %v6162
    %v6164 = vpop.f32.mrb[0].mxu0
    %6165 = vmatprep.mubr.f32.mxu0 0.0
    %6166 = vmatmul.mubr.f32.gmra.mrb[0].mxu0 %v6094
    %v6167 = vpop.f32.mrb[0].mxu0
    %v6168 = vadd.f32 0.0, %v6167
    %v6169 = vpop.f32.mrb[0].mxu0
    %6170 = vdwg.mxu0
    %6175 = vrot.lane.b32.xlu0 %v6062, 48
    %v6176 = vpop.permute.xlu0 %6175
    %6177 = vrot.lane.b32.xlu0 %v6063, 48
    %v6178 = vpop.permute.xlu0 %6177
    %6179 = vrot.lane.b32.xlu0 %v6064, 48
    %v6180 = vpop.permute.xlu0 %6179
    %6181 = vrot.lane.b32.xlu0 %v6065, 48
    %v6182 = vpop.permute.xlu0 %6181
    %6187 = vmatprep.subr.mxu0 0.0
    %6188 = vmatpush1.msra.mxu0 %v6176
    %6189 = vmatprep.subr.mxu0 0.0
    %6190 = vmatpush1.msra.mxu0 %v6178
    %6191 = vmatprep.subr.mxu0 0.0
    %6192 = vmatpush1.msra.mxu0 %v6180
    %6193 = vmatprep.subr.mxu0 0.0
    %6194 = vmatpush1.msra.mxu0 %v6182
    %6195 = vmatprep.subr.mxu0 0.0
    %6196 = vmatpush1.msra.mxu0 0.0
    %6197 = vmatprep.subr.mxu0 0.0
    %6198 = vmatpush1.msra.mxu0 0.0
    %6199 = vmatprep.subr.mxu0 0.0
    %6200 = vmatpush1.msra.mxu0 0.0
    %6201 = vmatprep.subr.mxu0 0.0
    %6202 = vmatpush1.msra.mxu0 0.0
    %6203 = vmatprep.subr.mxu0 0.0
    %6204 = vmatpush1.msra.mxu0 0.0
    %6205 = vmatprep.subr.mxu0 0.0
    %6206 = vmatpush1.msra.mxu0 0.0
    %6207 = vmatprep.subr.mxu0 0.0
    %6208 = vmatpush1.msra.mxu0 0.0
    %6209 = vmatprep.subr.mxu0 0.0
    %6210 = vmatpush1.msra.mxu0 0.0
    %6211 = vmatprep.subr.mxu0 0.0
    %6212 = vmatpush1.msra.mxu0 0.0
    %6213 = vmatprep.subr.mxu0 0.0
    %6214 = vmatpush1.msra.mxu0 0.0
    %6215 = vmatprep.subr.mxu0 0.0
    %6216 = vmatpush1.msra.mxu0 0.0
    %6217 = vmatprep.subr.mxu0 0.0
    %6218 = vmatpush1.msra.mxu0 0.0
    %6219 = vmatprep.subr.mxu0 0.0
    %6220 = vmatpush1.msra.mxu0 0.0
    %6221 = vmatprep.subr.mxu0 0.0
    %6222 = vmatpush1.msra.mxu0 0.0
    %6223 = vmatprep.subr.mxu0 0.0
    %6224 = vmatpush1.msra.mxu0 0.0
    %6225 = vmatprep.subr.mxu0 0.0
    %6226 = vmatpush1.msra.mxu0 0.0
    %6227 = vmatprep.subr.mxu0 0.0
    %6228 = vmatpush1.msra.mxu0 0.0
    %6229 = vmatprep.subr.mxu0 0.0
    %6230 = vmatpush1.msra.mxu0 0.0
    %6231 = vmatprep.subr.mxu0 0.0
    %6232 = vmatpush1.msra.mxu0 0.0
    %6233 = vmatprep.subr.mxu0 0.0
    %6234 = vmatpush1.msra.mxu0 0.0
    %6235 = vmatprep.subr.mxu0 0.0
    %6236 = vmatpush1.msra.mxu0 0.0
    %6237 = vmatprep.subr.mxu0 0.0
    %6238 = vmatpush1.msra.mxu0 0.0
    %6239 = vmatprep.subr.mxu0 0.0
    %6240 = vmatpush1.msra.mxu0 0.0
    %6241 = vmatprep.subr.mxu0 0.0
    %6242 = vmatpush1.msra.mxu0 0.0
    %6243 = vmatprep.subr.mxu0 0.0
    %6244 = vmatpush1.msra.mxu0 0.0
    %6245 = vmatprep.subr.mxu0 0.0
    %6246 = vmatpush1.msra.mxu0 0.0
    %6247 = vmatprep.subr.mxu0 0.0
    %6248 = vmatpush1.msra.mxu0 0.0
    %6249 = vmatprep.subr.mxu0 0.0
    %6250 = vmatpush1.msra.mxu0 0.0
    %6251 = vmatprep.mubr.f32.mxu0 0.0
    %6252 = vmatmul.mubr.f32.gmra.mrb[0].mxu0 %v6091
    %v6253 = vpop.f32.mrb[0].mxu0
    %v6254 = vadd.f32 0.0, %v6253
    %v6255 = vpop.f32.mrb[0].mxu0
    %6256 = vmatprep.mubr.f32.mxu0 0.0
    %6257 = vmatmul.mubr.f32.gmra.mrb[0].mxu0 %v6094
    %v6258 = vpop.f32.mrb[0].mxu0
    %v6259 = vadd.f32 0.0, %v6258
    %v6260 = vpop.f32.mrb[0].mxu0
    %6261 = vdwg.mxu0
    %6266 = vrot.lane.b32.xlu0 %v6066, 48
    %v6267 = vpop.permute.xlu0 %6266
    %6268 = vrot.lane.b32.xlu0 %v6067, 48
    %v6269 = vpop.permute.xlu0 %6268
    %6270 = vrot.lane.b32.xlu0 %v6068, 48
    %v6271 = vpop.permute.xlu0 %6270
    %6272 = vrot.lane.b32.xlu0 %v6069, 48
    %v6273 = vpop.permute.xlu0 %6272
    %6278 = vmatprep.subr.mxu0 0.0
    %6279 = vmatpush1.msra.mxu0 %v6267
    %6280 = vmatprep.subr.mxu0 0.0
    %6281 = vmatpush1.msra.mxu0 %v6269
    %6282 = vmatprep.subr.mxu0 0.0
    %6283 = vmatpush1.msra.mxu0 %v6271
    %6284 = vmatprep.subr.mxu0 0.0
    %6285 = vmatpush1.msra.mxu0 %v6273
    %6286 = vmatprep.subr.mxu0 0.0
    %6287 = vmatpush1.msra.mxu0 0.0
    %6288 = vmatprep.subr.mxu0 0.0
    %6289 = vmatpush1.msra.mxu0 0.0
    %6290 = vmatprep.subr.mxu0 0.0
    %6291 = vmatpush1.msra.mxu0 0.0
    %6292 = vmatprep.subr.mxu0 0.0
    %6293 = vmatpush1.msra.mxu0 0.0
    %6294 = vmatprep.subr.mxu0 0.0
    %6295 = vmatpush1.msra.mxu0 0.0
    %6296 = vmatprep.subr.mxu0 0.0
    %6297 = vmatpush1.msra.mxu0 0.0
    %6298 = vmatprep.subr.mxu0 0.0
    %6299 = vmatpush1.msra.mxu0 0.0
    %6300 = vmatprep.subr.mxu0 0.0
    %6301 = vmatpush1.msra.mxu0 0.0
    %6302 = vmatprep.subr.mxu0 0.0
    %6303 = vmatpush1.msra.mxu0 0.0
    %6304 = vmatprep.subr.mxu0 0.0
    %6305 = vmatpush1.msra.mxu0 0.0
    %6306 = vmatprep.subr.mxu0 0.0
    %6307 = vmatpush1.msra.mxu0 0.0
    %6308 = vmatprep.subr.mxu0 0.0
    %6309 = vmatpush1.msra.mxu0 0.0
    %6310 = vmatprep.subr.mxu0 0.0
    %6311 = vmatpush1.msra.mxu0 0.0
    %6312 = vmatprep.subr.mxu0 0.0
    %6313 = vmatpush1.msra.mxu0 0.0
    %6314 = vmatprep.subr.mxu0 0.0
    %6315 = vmatpush1.msra.mxu0 0.0
    %6316 = vmatprep.subr.mxu0 0.0
    %6317 = vmatpush1.msra.mxu0 0.0
    %6318 = vmatprep.subr.mxu0 0.0
    %6319 = vmatpush1.msra.mxu0 0.0
    %6320 = vmatprep.subr.mxu0 0.0
    %6321 = vmatpush1.msra.mxu0 0.0
    %6322 = vmatprep.subr.mxu0 0.0
    %6323 = vmatpush1.msra.mxu0 0.0
    %6324 = vmatprep.subr.mxu0 0.0
    %6325 = vmatpush1.msra.mxu0 0.0
    %6326 = vmatprep.subr.mxu0 0.0
    %6327 = vmatpush1.msra.mxu0 0.0
    %6328 = vmatprep.subr.mxu0 0.0
    %6329 = vmatpush1.msra.mxu0 0.0
    %6330 = vmatprep.subr.mxu0 0.0
    %6331 = vmatpush1.msra.mxu0 0.0
    %6332 = vmatprep.subr.mxu0 0.0
    %6333 = vmatpush1.msra.mxu0 0.0
    %6334 = vmatprep.subr.mxu0 0.0
    %6335 = vmatpush1.msra.mxu0 0.0
    %6336 = vmatprep.subr.mxu0 0.0
    %6337 = vmatpush1.msra.mxu0 0.0
    %6338 = vmatprep.subr.mxu0 0.0
    %6339 = vmatpush1.msra.mxu0 0.0
    %6340 = vmatprep.subr.mxu0 0.0
    %6341 = vmatpush1.msra.mxu0 0.0
    %6342 = vmatprep.mubr.f32.mxu0 0.0
    %6343 = vmatmul.mubr.f32.gmra.mrb[0].mxu0 %v6091
    %v6344 = vpop.f32.mrb[0].mxu0
    %v6345 = vadd.f32 0.0, %v6344
    %v6346 = vpop.f32.mrb[0].mxu0
    %6347 = vmatprep.mubr.f32.mxu0 0.0
    %6348 = vmatmul.mubr.f32.gmra.mrb[0].mxu0 %v6094
    %v6349 = vpop.f32.mrb[0].mxu0
    %v6350 = vadd.f32 0.0, %v6349
    %v6351 = vpop.f32.mrb[0].mxu0
    %6352 = vdwg.mxu0
    %6357 = vrot.lane.b32.xlu0 %v6070, 48
    %v6358 = vpop.permute.xlu0 %6357
    %6359 = vrot.lane.b32.xlu0 %v6071, 48
    %v6360 = vpop.permute.xlu0 %6359
    %6361 = vrot.lane.b32.xlu0 %v6072, 48
    %v6362 = vpop.permute.xlu0 %6361
    %6363 = vrot.lane.b32.xlu0 %v6073, 48
    %v6364 = vpop.permute.xlu0 %6363
    %6369 = vmatprep.subr.mxu0 0.0
    %6370 = vmatpush1.msra.mxu0 %v6358
    %6371 = vmatprep.subr.mxu0 0.0
    %6372 = vmatpush1.msra.mxu0 %v6360
    %6373 = vmatprep.subr.mxu0 0.0
    %6374 = vmatpush1.msra.mxu0 %v6362
    %6375 = vmatprep.subr.mxu0 0.0
    %6376 = vmatpush1.msra.mxu0 %v6364
    %6377 = vmatprep.subr.mxu0 0.0
    %6378 = vmatpush1.msra.mxu0 0.0
    %6379 = vmatprep.subr.mxu0 0.0
    %6380 = vmatpush1.msra.mxu0 0.0
    %6381 = vmatprep.subr.mxu0 0.0
    %6382 = vmatpush1.msra.mxu0 0.0
    %6383 = vmatprep.subr.mxu0 0.0
    %6384 = vmatpush1.msra.mxu0 0.0
    %6385 = vmatprep.subr.mxu0 0.0
    %6386 = vmatpush1.msra.mxu0 0.0
    %6387 = vmatprep.subr.mxu0 0.0
    %6388 = vmatpush1.msra.mxu0 0.0
    %6389 = vmatprep.subr.mxu0 0.0
    %6390 = vmatpush1.msra.mxu0 0.0
    %6391 = vmatprep.subr.mxu0 0.0
    %6392 = vmatpush1.msra.mxu0 0.0
    %6393 = vmatprep.subr.mxu0 0.0
    %6394 = vmatpush1.msra.mxu0 0.0
    %6395 = vmatprep.subr.mxu0 0.0
    %6396 = vmatpush1.msra.mxu0 0.0
    %6397 = vmatprep.subr.mxu0 0.0
    %6398 = vmatpush1.msra.mxu0 0.0
    %6399 = vmatprep.subr.mxu0 0.0
    %6400 = vmatpush1.msra.mxu0 0.0
    %6401 = vmatprep.subr.mxu0 0.0
    %6402 = vmatpush1.msra.mxu0 0.0
    %6403 = vmatprep.subr.mxu0 0.0
    %6404 = vmatpush1.msra.mxu0 0.0
    %6405 = vmatprep.subr.mxu0 0.0
    %6406 = vmatpush1.msra.mxu0 0.0
    %6407 = vmatprep.subr.mxu0 0.0
    %6408 = vmatpush1.msra.mxu0 0.0
    %6409 = vmatprep.subr.mxu0 0.0
    %6410 = vmatpush1.msra.mxu0 0.0
    %6411 = vmatprep.subr.mxu0 0.0
    %6412 = vmatpush1.msra.mxu0 0.0
    %6413 = vmatprep.subr.mxu0 0.0
    %6414 = vmatpush1.msra.mxu0 0.0
    %6415 = vmatprep.subr.mxu0 0.0
    %6416 = vmatpush1.msra.mxu0 0.0
    %6417 = vmatprep.subr.mxu0 0.0
    %6418 = vmatpush1.msra.mxu0 0.0
    %6419 = vmatprep.subr.mxu0 0.0
    %6420 = vmatpush1.msra.mxu0 0.0
    %6421 = vmatprep.subr.mxu0 0.0
    %6422 = vmatpush1.msra.mxu0 0.0
    %6423 = vmatprep.subr.mxu0 0.0
    %6424 = vmatpush1.msra.mxu0 0.0
    %6425 = vmatprep.subr.mxu0 0.0
    %6426 = vmatpush1.msra.mxu0 0.0
    %6427 = vmatprep.subr.mxu0 0.0
    %6428 = vmatpush1.msra.mxu0 0.0
    %6429 = vmatprep.subr.mxu0 0.0
    %6430 = vmatpush1.msra.mxu0 0.0
    %6431 = vmatprep.subr.mxu0 0.0
    %6432 = vmatpush1.msra.mxu0 0.0
    %6433 = vmatprep.mubr.f32.mxu0 0.0
    %6434 = vmatmul.mubr.f32.gmra.mrb[0].mxu0 %v6091
    %v6435 = vpop.f32.mrb[0].mxu0
    %v6436 = vadd.f32 0.0, %v6435
    %v6437 = vpop.f32.mrb[0].mxu0
    %6438 = vmatprep.mubr.f32.mxu0 0.0
    %6439 = vmatmul.mubr.f32.gmra.mrb[0].mxu0 %v6094
    %v6440 = vpop.f32.mrb[0].mxu0
    %v6441 = vadd.f32 0.0, %v6440
    %v6442 = vpop.f32.mrb[0].mxu0
    %6443 = vdwg.mxu0
    %v6444 = vld [vmem:[%s6] sm:$0xff]
    %v6445 = vld [vmem:[%s6 + $0x8] sm:$0xff]
    %v6446 = vld [vmem:[%s6 + $0x10] sm:$0xff]
    %v6447 = vld [vmem:[%s6 + $0x18] sm:$0xff]
    %v6449 = vsel %vm616, %v5777, 0
    %v6452 = vsel %vm616, %v5782, 0
    %v6455 = vsel %vm616, %v6163, 0
    %v6458 = vsel %vm616, %v6168, 0
    %6460 = vmatprep.subr.mxu0 0.0
    %6461 = vmatpush1.xpose.msra.mxu0 %v6455
    %6462 = vmatprep.subr.mxu0 0.0
    %6463 = vmatpush1.xpose.msra.mxu0 %v6458
    %6464 = vmatprep.subr.mxu0 0.0
    %6465 = vmatpush1.xpose.msra.mxu0 0.0
    %6466 = vmatprep.subr.mxu0 0.0
    %6467 = vmatpush1.xpose.msra.mxu0 0.0
    %6468 = vmatprep.subr.mxu0 0.0
    %6469 = vmatpush1.xpose.msra.mxu0 0.0
    %6470 = vmatprep.subr.mxu0 0.0
    %6471 = vmatpush1.xpose.msra.mxu0 0.0
    %6472 = vmatprep.subr.mxu0 0.0
    %6473 = vmatpush1.xpose.msra.mxu0 0.0
    %6474 = vmatprep.subr.mxu0 0.0
    %6475 = vmatpush1.xpose.msra.mxu0 0.0
    %6476 = vmatprep.subr.mxu0 0.0
    %6477 = vmatpush1.xpose.msra.mxu0 0.0
    %6478 = vmatprep.subr.mxu0 0.0
    %6479 = vmatpush1.xpose.msra.mxu0 0.0
    %6480 = vmatprep.subr.mxu0 0.0
    %6481 = vmatpush1.xpose.msra.mxu0 0.0
    %6482 = vmatprep.subr.mxu0 0.0
    %6483 = vmatpush1.xpose.msra.mxu0 0.0
    %6484 = vmatprep.subr.mxu0 0.0
    %6485 = vmatpush1.xpose.msra.mxu0 0.0
    %6486 = vmatprep.subr.mxu0 0.0
    %6487 = vmatpush1.xpose.msra.mxu0 0.0
    %6488 = vmatprep.subr.mxu0 0.0
    %6489 = vmatpush1.xpose.msra.mxu0 0.0
    %6490 = vmatprep.subr.mxu0 0.0
    %6491 = vmatpush1.xpose.msra.mxu0 0.0
    %6492 = vmatprep.subr.mxu0 0.0
    %6493 = vmatpush1.xpose.msra.mxu0 0.0
    %6494 = vmatprep.subr.mxu0 0.0
    %6495 = vmatpush1.xpose.msra.mxu0 0.0
    %6496 = vmatprep.subr.mxu0 0.0
    %6497 = vmatpush1.xpose.msra.mxu0 0.0
    %6498 = vmatprep.subr.mxu0 0.0
    %6499 = vmatpush1.xpose.msra.mxu0 0.0
    %6500 = vmatprep.subr.mxu0 0.0
    %6501 = vmatpush1.xpose.msra.mxu0 0.0
    %6502 = vmatprep.subr.mxu0 0.0
    %6503 = vmatpush1.xpose.msra.mxu0 0.0
    %6504 = vmatprep.subr.mxu0 0.0
    %6505 = vmatpush1.xpose.msra.mxu0 0.0
    %6506 = vmatprep.subr.mxu0 0.0
    %6507 = vmatpush1.xpose.msra.mxu0 0.0
    %6508 = vmatprep.subr.mxu0 0.0
    %6509 = vmatpush1.xpose.msra.mxu0 0.0
    %6510 = vmatprep.subr.mxu0 0.0
    %6511 = vmatpush1.xpose.msra.mxu0 0.0
    %6512 = vmatprep.subr.mxu0 0.0
    %6513 = vmatpush1.xpose.msra.mxu0 0.0
    %6514 = vmatprep.subr.mxu0 0.0
    %6515 = vmatpush1.xpose.msra.mxu0 0.0
    %6516 = vmatprep.subr.mxu0 0.0
    %6517 = vmatpush1.xpose.msra.mxu0 0.0
    %6518 = vmatprep.subr.mxu0 0.0
    %6519 = vmatpush1.xpose.msra.mxu0 0.0
    %6520 = vmatprep.subr.mxu0 0.0
    %6521 = vmatpush1.xpose.msra.mxu0 0.0
    %6522 = vmatprep.subr.mxu0 0.0
    %6523 = vmatpush1.xpose.msra.mxu0 0.0
    %6524 = vmatprep.mubr.f32.mxu0 0.0
    %6525 = vmatmul.mubr.f32.gmra.mrb[0].mxu0 %v6449
    %v6526 = vpop.f32.mrb[0].mxu0
    %v6527 = vadd.f32 %v128, %v6526
    %v6528 = vpop.f32.mrb[0].mxu0
    %6529 = vmatprep.mubr.f32.mxu0 0.0
    %6530 = vmatmul.mubr.f32.gmra.mrb[0].mxu0 %v6452
    %v6531 = vpop.f32.mrb[0].mxu0
    %v6532 = vadd.f32 %v129, %v6531
    %v6533 = vpop.f32.mrb[0].mxu0
    %6534 = vdwg.mxu0
    %v6536 = vsel %vm616, %v5868, 0
    %v6539 = vsel %vm616, %v5873, 0
    %v6542 = vsel %vm616, %v6254, 0
    %v6545 = vsel %vm616, %v6259, 0
    %6547 = vmatprep.subr.mxu0 0.0
    %6548 = vmatpush1.xpose.msra.mxu0 %v6542
    %6549 = vmatprep.subr.mxu0 0.0
    %6550 = vmatpush1.xpose.msra.mxu0 %v6545
    %6551 = vmatprep.subr.mxu0 0.0
    %6552 = vmatpush1.xpose.msra.mxu0 0.0
    %6553 = vmatprep.subr.mxu0 0.0
    %6554 = vmatpush1.xpose.msra.mxu0 0.0
    %6555 = vmatprep.subr.mxu0 0.0
    %6556 = vmatpush1.xpose.msra.mxu0 0.0
    %6557 = vmatprep.subr.mxu0 0.0
    %6558 = vmatpush1.xpose.msra.mxu0 0.0
    %6559 = vmatprep.subr.mxu0 0.0
    %6560 = vmatpush1.xpose.msra.mxu0 0.0
    %6561 = vmatprep.subr.mxu0 0.0
    %6562 = vmatpush1.xpose.msra.mxu0 0.0
    %6563 = vmatprep.subr.mxu0 0.0
    %6564 = vmatpush1.xpose.msra.mxu0 0.0
    %6565 = vmatprep.subr.mxu0 0.0
    %6566 = vmatpush1.xpose.msra.mxu0 0.0
    %6567 = vmatprep.subr.mxu0 0.0
    %6568 = vmatpush1.xpose.msra.mxu0 0.0
    %6569 = vmatprep.subr.mxu0 0.0
    %6570 = vmatpush1.xpose.msra.mxu0 0.0
    %6571 = vmatprep.subr.mxu0 0.0
    %6572 = vmatpush1.xpose.msra.mxu0 0.0
    %6573 = vmatprep.subr.mxu0 0.0
    %6574 = vmatpush1.xpose.msra.mxu0 0.0
    %6575 = vmatprep.subr.mxu0 0.0
    %6576 = vmatpush1.xpose.msra.mxu0 0.0
    %6577 = vmatprep.subr.mxu0 0.0
    %6578 = vmatpush1.xpose.msra.mxu0 0.0
    %6579 = vmatprep.subr.mxu0 0.0
    %6580 = vmatpush1.xpose.msra.mxu0 0.0
    %6581 = vmatprep.subr.mxu0 0.0
    %6582 = vmatpush1.xpose.msra.mxu0 0.0
    %6583 = vmatprep.subr.mxu0 0.0
    %6584 = vmatpush1.xpose.msra.mxu0 0.0
    %6585 = vmatprep.subr.mxu0 0.0
    %6586 = vmatpush1.xpose.msra.mxu0 0.0
    %6587 = vmatprep.subr.mxu0 0.0
    %6588 = vmatpush1.xpose.msra.mxu0 0.0
    %6589 = vmatprep.subr.mxu0 0.0
    %6590 = vmatpush1.xpose.msra.mxu0 0.0
    %6591 = vmatprep.subr.mxu0 0.0
    %6592 = vmatpush1.xpose.msra.mxu0 0.0
    %6593 = vmatprep.subr.mxu0 0.0
    %6594 = vmatpush1.xpose.msra.mxu0 0.0
    %6595 = vmatprep.subr.mxu0 0.0
    %6596 = vmatpush1.xpose.msra.mxu0 0.0
    %6597 = vmatprep.subr.mxu0 0.0
    %6598 = vmatpush1.xpose.msra.mxu0 0.0
    %6599 = vmatprep.subr.mxu0 0.0
    %6600 = vmatpush1.xpose.msra.mxu0 0.0
    %6601 = vmatprep.subr.mxu0 0.0
    %6602 = vmatpush1.xpose.msra.mxu0 0.0
    %6603 = vmatprep.subr.mxu0 0.0
    %6604 = vmatpush1.xpose.msra.mxu0 0.0
    %6605 = vmatprep.subr.mxu0 0.0
    %6606 = vmatpush1.xpose.msra.mxu0 0.0
    %6607 = vmatprep.subr.mxu0 0.0
    %6608 = vmatpush1.xpose.msra.mxu0 0.0
    %6609 = vmatprep.subr.mxu0 0.0
    %6610 = vmatpush1.xpose.msra.mxu0 0.0
    %6611 = vmatprep.mubr.f32.mxu0 0.0
    %6612 = vmatmul.mubr.f32.gmra.mrb[0].mxu0 %v6536
    %v6613 = vpop.f32.mrb[0].mxu0
    %v6614 = vadd.f32 %v128, %v6613
    %v6615 = vpop.f32.mrb[0].mxu0
    %6616 = vmatprep.mubr.f32.mxu0 0.0
    %6617 = vmatmul.mubr.f32.gmra.mrb[0].mxu0 %v6539
    %v6618 = vpop.f32.mrb[0].mxu0
    %v6619 = vadd.f32 %v129, %v6618
    %v6620 = vpop.f32.mrb[0].mxu0
    %6621 = vdwg.mxu0
    %v6623 = vsel %vm616, %v5959, 0
    %v6626 = vsel %vm616, %v5964, 0
    %v6629 = vsel %vm616, %v6345, 0
    %v6632 = vsel %vm616, %v6350, 0
    %6634 = vmatprep.subr.mxu0 0.0
    %6635 = vmatpush1.xpose.msra.mxu0 %v6629
    %6636 = vmatprep.subr.mxu0 0.0
    %6637 = vmatpush1.xpose.msra.mxu0 %v6632
    %6638 = vmatprep.subr.mxu0 0.0
    %6639 = vmatpush1.xpose.msra.mxu0 0.0
    %6640 = vmatprep.subr.mxu0 0.0
    %6641 = vmatpush1.xpose.msra.mxu0 0.0
    %6642 = vmatprep.subr.mxu0 0.0
    %6643 = vmatpush1.xpose.msra.mxu0 0.0
    %6644 = vmatprep.subr.mxu0 0.0
    %6645 = vmatpush1.xpose.msra.mxu0 0.0
    %6646 = vmatprep.subr.mxu0 0.0
    %6647 = vmatpush1.xpose.msra.mxu0 0.0
    %6648 = vmatprep.subr.mxu0 0.0
    %6649 = vmatpush1.xpose.msra.mxu0 0.0
    %6650 = vmatprep.subr.mxu0 0.0
    %6651 = vmatpush1.xpose.msra.mxu0 0.0
    %6652 = vmatprep.subr.mxu0 0.0
    %6653 = vmatpush1.xpose.msra.mxu0 0.0
    %6654 = vmatprep.subr.mxu0 0.0
    %6655 = vmatpush1.xpose.msra.mxu0 0.0
    %6656 = vmatprep.subr.mxu0 0.0
    %6657 = vmatpush1.xpose.msra.mxu0 0.0
    %6658 = vmatprep.subr.mxu0 0.0
    %6659 = vmatpush1.xpose.msra.mxu0 0.0
    %6660 = vmatprep.subr.mxu0 0.0
    %6661 = vmatpush1.xpose.msra.mxu0 0.0
    %6662 = vmatprep.subr.mxu0 0.0
    %6663 = vmatpush1.xpose.msra.mxu0 0.0
    %6664 = vmatprep.subr.mxu0 0.0
    %6665 = vmatpush1.xpose.msra.mxu0 0.0
    %6666 = vmatprep.subr.mxu0 0.0
    %6667 = vmatpush1.xpose.msra.mxu0 0.0
    %6668 = vmatprep.subr.mxu0 0.0
    %6669 = vmatpush1.xpose.msra.mxu0 0.0
    %6670 = vmatprep.subr.mxu0 0.0
    %6671 = vmatpush1.xpose.msra.mxu0 0.0
    %6672 = vmatprep.subr.mxu0 0.0
    %6673 = vmatpush1.xpose.msra.mxu0 0.0
    %6674 = vmatprep.subr.mxu0 0.0
    %6675 = vmatpush1.xpose.msra.mxu0 0.0
    %6676 = vmatprep.subr.mxu0 0.0
    %6677 = vmatpush1.xpose.msra.mxu0 0.0
    %6678 = vmatprep.subr.mxu0 0.0
    %6679 = vmatpush1.xpose.msra.mxu0 0.0
    %6680 = vmatprep.subr.mxu0 0.0
    %6681 = vmatpush1.xpose.msra.mxu0 0.0
    %6682 = vmatprep.subr.mxu0 0.0
    %6683 = vmatpush1.xpose.msra.mxu0 0.0
    %6684 = vmatprep.subr.mxu0 0.0
    %6685 = vmatpush1.xpose.msra.mxu0 0.0
    %6686 = vmatprep.subr.mxu0 0.0
    %6687 = vmatpush1.xpose.msra.mxu0 0.0
    %6688 = vmatprep.subr.mxu0 0.0
    %6689 = vmatpush1.xpose.msra.mxu0 0.0
    %6690 = vmatprep.subr.mxu0 0.0
    %6691 = vmatpush1.xpose.msra.mxu0 0.0
    %6692 = vmatprep.subr.mxu0 0.0
    %6693 = vmatpush1.xpose.msra.mxu0 0.0
    %6694 = vmatprep.subr.mxu0 0.0
    %6695 = vmatpush1.xpose.msra.mxu0 0.0
    %6696 = vmatprep.subr.mxu0 0.0
    %6697 = vmatpush1.xpose.msra.mxu0 0.0
    %6698 = vmatprep.mubr.f32.mxu0 0.0
    %6699 = vmatmul.mubr.f32.gmra.mrb[0].mxu0 %v6623
    %v6700 = vpop.f32.mrb[0].mxu0
    %v6701 = vadd.f32 %v128, %v6700
    %v6702 = vpop.f32.mrb[0].mxu0
    %6703 = vmatprep.mubr.f32.mxu0 0.0
    %6704 = vmatmul.mubr.f32.gmra.mrb[0].mxu0 %v6626
    %v6705 = vpop.f32.mrb[0].mxu0
    %v6706 = vadd.f32 %v129, %v6705
    %v6707 = vpop.f32.mrb[0].mxu0
    %6708 = vdwg.mxu0
    %v6710 = vsel %vm616, %v6050, 0
    %v6713 = vsel %vm616, %v6055, 0
    %v6716 = vsel %vm616, %v6436, 0
    %v6719 = vsel %vm616, %v6441, 0
    %6721 = vmatprep.subr.mxu0 0.0
    %6722 = vmatpush1.xpose.msra.mxu0 %v6716
    %6723 = vmatprep.subr.mxu0 0.0
    %6724 = vmatpush1.xpose.msra.mxu0 %v6719
    %6725 = vmatprep.subr.mxu0 0.0
    %6726 = vmatpush1.xpose.msra.mxu0 0.0
    %6727 = vmatprep.subr.mxu0 0.0
    %6728 = vmatpush1.xpose.msra.mxu0 0.0
    %6729 = vmatprep.subr.mxu0 0.0
    %6730 = vmatpush1.xpose.msra.mxu0 0.0
    %6731 = vmatprep.subr.mxu0 0.0
    %6732 = vmatpush1.xpose.msra.mxu0 0.0
    %6733 = vmatprep.subr.mxu0 0.0
    %6734 = vmatpush1.xpose.msra.mxu0 0.0
    %6735 = vmatprep.subr.mxu0 0.0
    %6736 = vmatpush1.xpose.msra.mxu0 0.0
    %6737 = vmatprep.subr.mxu0 0.0
    %6738 = vmatpush1.xpose.msra.mxu0 0.0
    %6739 = vmatprep.subr.mxu0 0.0
    %6740 = vmatpush1.xpose.msra.mxu0 0.0
    %6741 = vmatprep.subr.mxu0 0.0
    %6742 = vmatpush1.xpose.msra.mxu0 0.0
    %6743 = vmatprep.subr.mxu0 0.0
    %6744 = vmatpush1.xpose.msra.mxu0 0.0
    %6745 = vmatprep.subr.mxu0 0.0
    %6746 = vmatpush1.xpose.msra.mxu0 0.0
    %6747 = vmatprep.subr.mxu0 0.0
    %6748 = vmatpush1.xpose.msra.mxu0 0.0
    %6749 = vmatprep.subr.mxu0 0.0
    %6750 = vmatpush1.xpose.msra.mxu0 0.0
    %6751 = vmatprep.subr.mxu0 0.0
    %6752 = vmatpush1.xpose.msra.mxu0 0.0
    %6753 = vmatprep.subr.mxu0 0.0
    %6754 = vmatpush1.xpose.msra.mxu0 0.0
    %6755 = vmatprep.subr.mxu0 0.0
    %6756 = vmatpush1.xpose.msra.mxu0 0.0
    %6757 = vmatprep.subr.mxu0 0.0
    %6758 = vmatpush1.xpose.msra.mxu0 0.0
    %6759 = vmatprep.subr.mxu0 0.0
    %6760 = vmatpush1.xpose.msra.mxu0 0.0
    %6761 = vmatprep.subr.mxu0 0.0
    %6762 = vmatpush1.xpose.msra.mxu0 0.0
    %6763 = vmatprep.subr.mxu0 0.0
    %6764 = vmatpush1.xpose.msra.mxu0 0.0
    %6765 = vmatprep.subr.mxu0 0.0
    %6766 = vmatpush1.xpose.msra.mxu0 0.0
    %6767 = vmatprep.subr.mxu0 0.0
    %6768 = vmatpush1.xpose.msra.mxu0 0.0
    %6769 = vmatprep.subr.mxu0 0.0
    %6770 = vmatpush1.xpose.msra.mxu0 0.0
    %6771 = vmatprep.subr.mxu0 0.0
    %6772 = vmatpush1.xpose.msra.mxu0 0.0
    %6773 = vmatprep.subr.mxu0 0.0
    %6774 = vmatpush1.xpose.msra.mxu0 0.0
    %6775 = vmatprep.subr.mxu0 0.0
    %6776 = vmatpush1.xpose.msra.mxu0 0.0
    %6777 = vmatprep.subr.mxu0 0.0
    %6778 = vmatpush1.xpose.msra.mxu0 0.0
    %6779 = vmatprep.subr.mxu0 0.0
    %6780 = vmatpush1.xpose.msra.mxu0 0.0
    %6781 = vmatprep.subr.mxu0 0.0
    %6782 = vmatpush1.xpose.msra.mxu0 0.0
    %6783 = vmatprep.subr.mxu0 0.0
    %6784 = vmatpush1.xpose.msra.mxu0 0.0
    %6785 = vmatprep.mubr.f32.mxu0 0.0
    %6786 = vmatmul.mubr.f32.gmra.mrb[0].mxu0 %v6710
    %v6787 = vpop.f32.mrb[0].mxu0
    %v6788 = vadd.f32 %v128, %v6787
    %v6789 = vpop.f32.mrb[0].mxu0
    %6790 = vmatprep.mubr.f32.mxu0 0.0
    %6791 = vmatmul.mubr.f32.gmra.mrb[0].mxu0 %v6713
    %v6792 = vpop.f32.mrb[0].mxu0
    %v6793 = vadd.f32 %v129, %v6792
    %v6794 = vpop.f32.mrb[0].mxu0
    %6795 = vdwg.mxu0
    %v6796 = vadd.f32 %v6527, %v6614
    %v6797 = vadd.f32 %v6532, %v6619
    %v6798 = vadd.f32 %v6796, %v6701
    %v6799 = vadd.f32 %v6797, %v6706
    %v6800 = vadd.f32 %v6798, %v6788
    %v6801 = vadd.f32 %v6799, %v6793
    %v6802 = vmul.f32 %v6800, 0.25
    %v6803 = vmul.f32 %v6801, 0.25
    %v6804 = vsel %vm967, %v6527, -inf
    %6805 = vmax.xlane.f32.xlu0 %v6804
    %v6806 = vpop.xlane.xlu0 %6805
    %v6807 = vsel %vm967, %v6532, -inf
    %6808 = vmax.xlane.f32.xlu0 %v6807
    %v6809 = vpop.xlane.xlu0 %6808
    %v6810 = vsel %vm967, %v6614, -inf
    %6811 = vmax.xlane.f32.xlu0 %v6810
    %v6812 = vpop.xlane.xlu0 %6811
    %v6813 = vsel %vm967, %v6619, -inf
    %6814 = vmax.xlane.f32.xlu0 %v6813
    %v6815 = vpop.xlane.xlu0 %6814
    %v6816 = vsel %vm967, %v6701, -inf
    %6817 = vmax.xlane.f32.xlu0 %v6816
    %v6818 = vpop.xlane.xlu0 %6817
    %v6819 = vsel %vm967, %v6706, -inf
    %6820 = vmax.xlane.f32.xlu0 %v6819
    %v6821 = vpop.xlane.xlu0 %6820
    %v6822 = vsel %vm967, %v6788, -inf
    %6823 = vmax.xlane.f32.xlu0 %v6822
    %v6824 = vpop.xlane.xlu0 %6823
    %v6825 = vsel %vm967, %v6793, -inf
    %6826 = vmax.xlane.f32.xlu0 %v6825
    %v6827 = vpop.xlane.xlu0 %6826
    %v6828 = vsub.f32 %v6527, %v6806
    %v6829 = vsub.f32 %v6532, %v6809
    %v6830 = vsub.f32 %v6614, %v6812
    %v6831 = vsub.f32 %v6619, %v6815
    %v6832 = vsub.f32 %v6701, %v6818
    %v6833 = vsub.f32 %v6706, %v6821
    %v6834 = vsub.f32 %v6788, %v6824
    %v6835 = vsub.f32 %v6793, %v6827
    %v6836 = vmul.f32 %v6828, 1.442695
    %v6837 = vpow.pop %v6836
    %v6838 = vmul.f32 %v6829, 1.442695
    %v6839 = vpow.pop %v6838
    %v6840 = vmul.f32 %v6830, 1.442695
    %v6841 = vpow.pop %v6840
    %v6842 = vmul.f32 %v6831, 1.442695
    %v6843 = vpow.pop %v6842
    %v6844 = vmul.f32 %v6832, 1.442695
    %v6845 = vpow.pop %v6844
    %v6846 = vmul.f32 %v6833, 1.442695
    %v6847 = vpow.pop %v6846
    %v6848 = vmul.f32 %v6834, 1.442695
    %v6849 = vpow.pop %v6848
    %v6850 = vmul.f32 %v6835, 1.442695
    %v6851 = vpow.pop %v6850
    %v6852 = vsel %vm967, %v6837, 0.0
    %6853 = vadd.xlane.f32.xlu0 %v6852
    %v6854 = vpop.xlane.xlu0 %6853
    %v6855 = vsel %vm967, %v6839, 0.0
    %6856 = vadd.xlane.f32.xlu0 %v6855
    %v6857 = vpop.xlane.xlu0 %6856
    %v6858 = vsel %vm967, %v6841, 0.0
    %6859 = vadd.xlane.f32.xlu0 %v6858
    %v6860 = vpop.xlane.xlu0 %6859
    %v6861 = vsel %vm967, %v6843, 0.0
    %6862 = vadd.xlane.f32.xlu0 %v6861
    %v6863 = vpop.xlane.xlu0 %6862
    %v6864 = vsel %vm967, %v6845, 0.0
    %6865 = vadd.xlane.f32.xlu0 %v6864
    %v6866 = vpop.xlane.xlu0 %6865
    %v6867 = vsel %vm967, %v6847, 0.0
    %6868 = vadd.xlane.f32.xlu0 %v6867
    %v6869 = vpop.xlane.xlu0 %6868
    %v6870 = vsel %vm967, %v6849, 0.0
    %6871 = vadd.xlane.f32.xlu0 %v6870
    %v6872 = vpop.xlane.xlu0 %6871
    %v6873 = vsel %vm967, %v6851, 0.0
    %6874 = vadd.xlane.f32.xlu0 %v6873
    %v6875 = vpop.xlane.xlu0 %6874
    %v6876 = vrcp.pop %v6854
    %v6877 = vrcp.pop %v6857
    %v6878 = vrcp.pop %v6860
    %v6879 = vrcp.pop %v6863
    %v6880 = vrcp.pop %v6866
    %v6881 = vrcp.pop %v6869
    %v6882 = vrcp.pop %v6872
    %v6883 = vrcp.pop %v6875
    %v6884 = vmul.f32 %v6837, %v6876
    %v6885 = vmul.f32 %v6839, %v6877
    %v6886 = vmul.f32 %v6841, %v6878
    %v6887 = vmul.f32 %v6843, %v6879
    %v6888 = vmul.f32 %v6845, %v6880
    %v6889 = vmul.f32 %v6847, %v6881
    %v6890 = vmul.f32 %v6849, %v6882
    %v6891 = vmul.f32 %v6851, %v6883
    %6892 = vrot.lane.b32.xlu0 %v6163, 120
    %v6893 = vpop.permute.xlu0 %6892
    %6894 = vrot.lane.b32.xlu0 %v6168, 120
    %v6895 = vpop.permute.xlu0 %6894
    %v6899 = vsel %vm967, %v6884, 0
    %v6902 = vsel %vm967, %v6885, 0
    %6904 = vmatprep.subr.mxu0 0.0
    %6905 = vmatpush1.msra.mxu0 %v6893
    %6906 = vmatprep.subr.mxu0 0.0
    %6907 = vmatpush1.msra.mxu0 %v6895
    %6908 = vmatprep.subr.mxu0 0.0
    %6909 = vmatpush1.msra.mxu0 0.0
    %6910 = vmatprep.subr.mxu0 0.0
    %6911 = vmatpush1.msra.mxu0 0.0
    %6912 = vmatprep.subr.mxu0 0.0
    %6913 = vmatpush1.msra.mxu0 0.0
    %6914 = vmatprep.subr.mxu0 0.0
    %6915 = vmatpush1.msra.mxu0 0.0
    %6916 = vmatprep.subr.mxu0 0.0
    %6917 = vmatpush1.msra.mxu0 0.0
    %6918 = vmatprep.subr.mxu0 0.0
    %6919 = vmatpush1.msra.mxu0 0.0
    %6920 = vmatprep.subr.mxu0 0.0
    %6921 = vmatpush1.msra.mxu0 0.0
    %6922 = vmatprep.subr.mxu0 0.0
    %6923 = vmatpush1.msra.mxu0 0.0
    %6924 = vmatprep.subr.mxu0 0.0
    %6925 = vmatpush1.msra.mxu0 0.0
    %6926 = vmatprep.subr.mxu0 0.0
    %6927 = vmatpush1.msra.mxu0 0.0
    %6928 = vmatprep.subr.mxu0 0.0
    %6929 = vmatpush1.msra.mxu0 0.0
    %6930 = vmatprep.subr.mxu0 0.0
    %6931 = vmatpush1.msra.mxu0 0.0
    %6932 = vmatprep.subr.mxu0 0.0
    %6933 = vmatpush1.msra.mxu0 0.0
    %6934 = vmatprep.subr.mxu0 0.0
    %6935 = vmatpush1.msra.mxu0 0.0
    %6936 = vmatprep.subr.mxu0 0.0
    %6937 = vmatpush1.msra.mxu0 0.0
    %6938 = vmatprep.subr.mxu0 0.0
    %6939 = vmatpush1.msra.mxu0 0.0
    %6940 = vmatprep.subr.mxu0 0.0
    %6941 = vmatpush1.msra.mxu0 0.0
    %6942 = vmatprep.subr.mxu0 0.0
    %6943 = vmatpush1.msra.mxu0 0.0
    %6944 = vmatprep.subr.mxu0 0.0
    %6945 = vmatpush1.msra.mxu0 0.0
    %6946 = vmatprep.subr.mxu0 0.0
    %6947 = vmatpush1.msra.mxu0 0.0
    %6948 = vmatprep.subr.mxu0 0.0
    %6949 = vmatpush1.msra.mxu0 0.0
    %6950 = vmatprep.subr.mxu0 0.0
    %6951 = vmatpush1.msra.mxu0 0.0
    %6952 = vmatprep.subr.mxu0 0.0
    %6953 = vmatpush1.msra.mxu0 0.0
    %6954 = vmatprep.subr.mxu0 0.0
    %6955 = vmatpush1.msra.mxu0 0.0
    %6956 = vmatprep.subr.mxu0 0.0
    %6957 = vmatpush1.msra.mxu0 0.0
    %6958 = vmatprep.subr.mxu0 0.0
    %6959 = vmatpush1.msra.mxu0 0.0
    %6960 = vmatprep.subr.mxu0 0.0
    %6961 = vmatpush1.msra.mxu0 0.0
    %6962 = vmatprep.subr.mxu0 0.0
    %6963 = vmatpush1.msra.mxu0 0.0
    %6964 = vmatprep.subr.mxu0 0.0
    %6965 = vmatpush1.msra.mxu0 0.0
    %6966 = vmatprep.subr.mxu0 0.0
    %6967 = vmatpush1.msra.mxu0 0.0
    %6968 = vmatprep.mubr.f32.mxu0 0.0
    %6969 = vmatmul.mubr.f32.gmra.mrb[0].mxu0 %v6899
    %v6970 = vpop.f32.mrb[0].mxu0
    %v6971 = vadd.f32 0.0, %v6970
    %v6972 = vpop.f32.mrb[0].mxu0
    %6973 = vmatprep.mubr.f32.mxu0 0.0
    %6974 = vmatmul.mubr.f32.gmra.mrb[0].mxu0 %v6902
    %v6975 = vpop.f32.mrb[0].mxu0
    %v6976 = vadd.f32 0.0, %v6975
    %v6977 = vpop.f32.mrb[0].mxu0
    %6978 = vdwg.mxu0
    %6979 = vrot.lane.b32.xlu0 %v6254, 120
    %v6980 = vpop.permute.xlu0 %6979
    %6981 = vrot.lane.b32.xlu0 %v6259, 120
    %v6982 = vpop.permute.xlu0 %6981
    %v6986 = vsel %vm967, %v6886, 0
    %v6989 = vsel %vm967, %v6887, 0
    %6991 = vmatprep.subr.mxu0 0.0
    %6992 = vmatpush1.msra.mxu0 %v6980
    %6993 = vmatprep.subr.mxu0 0.0
    %6994 = vmatpush1.msra.mxu0 %v6982
    %6995 = vmatprep.subr.mxu0 0.0
    %6996 = vmatpush1.msra.mxu0 0.0
    %6997 = vmatprep.subr.mxu0 0.0
    %6998 = vmatpush1.msra.mxu0 0.0
    %6999 = vmatprep.subr.mxu0 0.0
    %7000 = vmatpush1.msra.mxu0 0.0
    %7001 = vmatprep.subr.mxu0 0.0
    %7002 = vmatpush1.msra.mxu0 0.0
    %7003 = vmatprep.subr.mxu0 0.0
    %7004 = vmatpush1.msra.mxu0 0.0
    %7005 = vmatprep.subr.mxu0 0.0
    %7006 = vmatpush1.msra.mxu0 0.0
    %7007 = vmatprep.subr.mxu0 0.0
    %7008 = vmatpush1.msra.mxu0 0.0
    %7009 = vmatprep.subr.mxu0 0.0
    %7010 = vmatpush1.msra.mxu0 0.0
    %7011 = vmatprep.subr.mxu0 0.0
    %7012 = vmatpush1.msra.mxu0 0.0
    %7013 = vmatprep.subr.mxu0 0.0
    %7014 = vmatpush1.msra.mxu0 0.0
    %7015 = vmatprep.subr.mxu0 0.0
    %7016 = vmatpush1.msra.mxu0 0.0
    %7017 = vmatprep.subr.mxu0 0.0
    %7018 = vmatpush1.msra.mxu0 0.0
    %7019 = vmatprep.subr.mxu0 0.0
    %7020 = vmatpush1.msra.mxu0 0.0
    %7021 = vmatprep.subr.mxu0 0.0
    %7022 = vmatpush1.msra.mxu0 0.0
    %7023 = vmatprep.subr.mxu0 0.0
    %7024 = vmatpush1.msra.mxu0 0.0
    %7025 = vmatprep.subr.mxu0 0.0
    %7026 = vmatpush1.msra.mxu0 0.0
    %7027 = vmatprep.subr.mxu0 0.0
    %7028 = vmatpush1.msra.mxu0 0.0
    %7029 = vmatprep.subr.mxu0 0.0
    %7030 = vmatpush1.msra.mxu0 0.0
    %7031 = vmatprep.subr.mxu0 0.0
    %7032 = vmatpush1.msra.mxu0 0.0
    %7033 = vmatprep.subr.mxu0 0.0
    %7034 = vmatpush1.msra.mxu0 0.0
    %7035 = vmatprep.subr.mxu0 0.0
    %7036 = vmatpush1.msra.mxu0 0.0
    %7037 = vmatprep.subr.mxu0 0.0
    %7038 = vmatpush1.msra.mxu0 0.0
    %7039 = vmatprep.subr.mxu0 0.0
    %7040 = vmatpush1.msra.mxu0 0.0
    %7041 = vmatprep.subr.mxu0 0.0
    %7042 = vmatpush1.msra.mxu0 0.0
    %7043 = vmatprep.subr.mxu0 0.0
    %7044 = vmatpush1.msra.mxu0 0.0
    %7045 = vmatprep.subr.mxu0 0.0
    %7046 = vmatpush1.msra.mxu0 0.0
    %7047 = vmatprep.subr.mxu0 0.0
    %7048 = vmatpush1.msra.mxu0 0.0
    %7049 = vmatprep.subr.mxu0 0.0
    %7050 = vmatpush1.msra.mxu0 0.0
    %7051 = vmatprep.subr.mxu0 0.0
    %7052 = vmatpush1.msra.mxu0 0.0
    %7053 = vmatprep.subr.mxu0 0.0
    %7054 = vmatpush1.msra.mxu0 0.0
    %7055 = vmatprep.mubr.f32.mxu0 0.0
    %7056 = vmatmul.mubr.f32.gmra.mrb[0].mxu0 %v6986
    %v7057 = vpop.f32.mrb[0].mxu0
    %v7058 = vadd.f32 0.0, %v7057
    %v7059 = vpop.f32.mrb[0].mxu0
    %7060 = vmatprep.mubr.f32.mxu0 0.0
    %7061 = vmatmul.mubr.f32.gmra.mrb[0].mxu0 %v6989
    %v7062 = vpop.f32.mrb[0].mxu0
    %v7063 = vadd.f32 0.0, %v7062
    %v7064 = vpop.f32.mrb[0].mxu0
    %7065 = vdwg.mxu0
    %7066 = vrot.lane.b32.xlu0 %v6345, 120
    %v7067 = vpop.permute.xlu0 %7066
    %7068 = vrot.lane.b32.xlu0 %v6350, 120
    %v7069 = vpop.permute.xlu0 %7068
    %v7073 = vsel %vm967, %v6888, 0
    %v7076 = vsel %vm967, %v6889, 0
    %7078 = vmatprep.subr.mxu0 0.0
    %7079 = vmatpush1.msra.mxu0 %v7067
    %7080 = vmatprep.subr.mxu0 0.0
    %7081 = vmatpush1.msra.mxu0 %v7069
    %7082 = vmatprep.subr.mxu0 0.0
    %7083 = vmatpush1.msra.mxu0 0.0
    %7084 = vmatprep.subr.mxu0 0.0
    %7085 = vmatpush1.msra.mxu0 0.0
    %7086 = vmatprep.subr.mxu0 0.0
    %7087 = vmatpush1.msra.mxu0 0.0
    %7088 = vmatprep.subr.mxu0 0.0
    %7089 = vmatpush1.msra.mxu0 0.0
    %7090 = vmatprep.subr.mxu0 0.0
    %7091 = vmatpush1.msra.mxu0 0.0
    %7092 = vmatprep.subr.mxu0 0.0
    %7093 = vmatpush1.msra.mxu0 0.0
    %7094 = vmatprep.subr.mxu0 0.0
    %7095 = vmatpush1.msra.mxu0 0.0
    %7096 = vmatprep.subr.mxu0 0.0
    %7097 = vmatpush1.msra.mxu0 0.0
    %7098 = vmatprep.subr.mxu0 0.0
    %7099 = vmatpush1.msra.mxu0 0.0
    %7100 = vmatprep.subr.mxu0 0.0
    %7101 = vmatpush1.msra.mxu0 0.0
    %7102 = vmatprep.subr.mxu0 0.0
    %7103 = vmatpush1.msra.mxu0 0.0
    %7104 = vmatprep.subr.mxu0 0.0
    %7105 = vmatpush1.msra.mxu0 0.0
    %7106 = vmatprep.subr.mxu0 0.0
    %7107 = vmatpush1.msra.mxu0 0.0
    %7108 = vmatprep.subr.mxu0 0.0
    %7109 = vmatpush1.msra.mxu0 0.0
    %7110 = vmatprep.subr.mxu0 0.0
    %7111 = vmatpush1.msra.mxu0 0.0
    %7112 = vmatprep.subr.mxu0 0.0
    %7113 = vmatpush1.msra.mxu0 0.0
    %7114 = vmatprep.subr.mxu0 0.0
    %7115 = vmatpush1.msra.mxu0 0.0
    %7116 = vmatprep.subr.mxu0 0.0
    %7117 = vmatpush1.msra.mxu0 0.0
    %7118 = vmatprep.subr.mxu0 0.0
    %7119 = vmatpush1.msra.mxu0 0.0
    %7120 = vmatprep.subr.mxu0 0.0
    %7121 = vmatpush1.msra.mxu0 0.0
    %7122 = vmatprep.subr.mxu0 0.0
    %7123 = vmatpush1.msra.mxu0 0.0
    %7124 = vmatprep.subr.mxu0 0.0
    %7125 = vmatpush1.msra.mxu0 0.0
    %7126 = vmatprep.subr.mxu0 0.0
    %7127 = vmatpush1.msra.mxu0 0.0
    %7128 = vmatprep.subr.mxu0 0.0
    %7129 = vmatpush1.msra.mxu0 0.0
    %7130 = vmatprep.subr.mxu0 0.0
    %7131 = vmatpush1.msra.mxu0 0.0
    %7132 = vmatprep.subr.mxu0 0.0
    %7133 = vmatpush1.msra.mxu0 0.0
    %7134 = vmatprep.subr.mxu0 0.0
    %7135 = vmatpush1.msra.mxu0 0.0
    %7136 = vmatprep.subr.mxu0 0.0
    %7137 = vmatpush1.msra.mxu0 0.0
    %7138 = vmatprep.subr.mxu0 0.0
    %7139 = vmatpush1.msra.mxu0 0.0
    %7140 = vmatprep.subr.mxu0 0.0
    %7141 = vmatpush1.msra.mxu0 0.0
    %7142 = vmatprep.mubr.f32.mxu0 0.0
    %7143 = vmatmul.mubr.f32.gmra.mrb[0].mxu0 %v7073
    %v7144 = vpop.f32.mrb[0].mxu0
    %v7145 = vadd.f32 0.0, %v7144
    %v7146 = vpop.f32.mrb[0].mxu0
    %7147 = vmatprep.mubr.f32.mxu0 0.0
    %7148 = vmatmul.mubr.f32.gmra.mrb[0].mxu0 %v7076
    %v7149 = vpop.f32.mrb[0].mxu0
    %v7150 = vadd.f32 0.0, %v7149
    %v7151 = vpop.f32.mrb[0].mxu0
    %7152 = vdwg.mxu0
    %7153 = vrot.lane.b32.xlu0 %v6436, 120
    %v7154 = vpop.permute.xlu0 %7153
    %7155 = vrot.lane.b32.xlu0 %v6441, 120
    %v7156 = vpop.permute.xlu0 %7155
    %v7160 = vsel %vm967, %v6890, 0
    %v7163 = vsel %vm967, %v6891, 0
    %7165 = vmatprep.subr.mxu0 0.0
    %7166 = vmatpush1.msra.mxu0 %v7154
    %7167 = vmatprep.subr.mxu0 0.0
    %7168 = vmatpush1.msra.mxu0 %v7156
    %7169 = vmatprep.subr.mxu0 0.0
    %7170 = vmatpush1.msra.mxu0 0.0
    %7171 = vmatprep.subr.mxu0 0.0
    %7172 = vmatpush1.msra.mxu0 0.0
    %7173 = vmatprep.subr.mxu0 0.0
    %7174 = vmatpush1.msra.mxu0 0.0
    %7175 = vmatprep.subr.mxu0 0.0
    %7176 = vmatpush1.msra.mxu0 0.0
    %7177 = vmatprep.subr.mxu0 0.0
    %7178 = vmatpush1.msra.mxu0 0.0
    %7179 = vmatprep.subr.mxu0 0.0
    %7180 = vmatpush1.msra.mxu0 0.0
    %7181 = vmatprep.subr.mxu0 0.0
    %7182 = vmatpush1.msra.mxu0 0.0
    %7183 = vmatprep.subr.mxu0 0.0
    %7184 = vmatpush1.msra.mxu0 0.0
    %7185 = vmatprep.subr.mxu0 0.0
    %7186 = vmatpush1.msra.mxu0 0.0
    %7187 = vmatprep.subr.mxu0 0.0
    %7188 = vmatpush1.msra.mxu0 0.0
    %7189 = vmatprep.subr.mxu0 0.0
    %7190 = vmatpush1.msra.mxu0 0.0
    %7191 = vmatprep.subr.mxu0 0.0
    %7192 = vmatpush1.msra.mxu0 0.0
    %7193 = vmatprep.subr.mxu0 0.0
    %7194 = vmatpush1.msra.mxu0 0.0
    %7195 = vmatprep.subr.mxu0 0.0
    %7196 = vmatpush1.msra.mxu0 0.0
    %7197 = vmatprep.subr.mxu0 0.0
    %7198 = vmatpush1.msra.mxu0 0.0
    %7199 = vmatprep.subr.mxu0 0.0
    %7200 = vmatpush1.msra.mxu0 0.0
    %7201 = vmatprep.subr.mxu0 0.0
    %7202 = vmatpush1.msra.mxu0 0.0
    %7203 = vmatprep.subr.mxu0 0.0
    %7204 = vmatpush1.msra.mxu0 0.0
    %7205 = vmatprep.subr.mxu0 0.0
    %7206 = vmatpush1.msra.mxu0 0.0
    %7207 = vmatprep.subr.mxu0 0.0
    %7208 = vmatpush1.msra.mxu0 0.0
    %7209 = vmatprep.subr.mxu0 0.0
    %7210 = vmatpush1.msra.mxu0 0.0
    %7211 = vmatprep.subr.mxu0 0.0
    %7212 = vmatpush1.msra.mxu0 0.0
    %7213 = vmatprep.subr.mxu0 0.0
    %7214 = vmatpush1.msra.mxu0 0.0
    %7215 = vmatprep.subr.mxu0 0.0
    %7216 = vmatpush1.msra.mxu0 0.0
    %7217 = vmatprep.subr.mxu0 0.0
    %7218 = vmatpush1.msra.mxu0 0.0
    %7219 = vmatprep.subr.mxu0 0.0
    %7220 = vmatpush1.msra.mxu0 0.0
    %7221 = vmatprep.subr.mxu0 0.0
    %7222 = vmatpush1.msra.mxu0 0.0
    %7223 = vmatprep.subr.mxu0 0.0
    %7224 = vmatpush1.msra.mxu0 0.0
    %7225 = vmatprep.subr.mxu0 0.0
    %7226 = vmatpush1.msra.mxu0 0.0
    %7227 = vmatprep.subr.mxu0 0.0
    %7228 = vmatpush1.msra.mxu0 0.0
    %7229 = vmatprep.mubr.f32.mxu0 0.0
    %7230 = vmatmul.mubr.f32.gmra.mrb[0].mxu0 %v7160
    %v7231 = vpop.f32.mrb[0].mxu0
    %v7232 = vadd.f32 0.0, %v7231
    %v7233 = vpop.f32.mrb[0].mxu0
    %7234 = vmatprep.mubr.f32.mxu0 0.0
    %7235 = vmatmul.mubr.f32.gmra.mrb[0].mxu0 %v7163
    %v7236 = vpop.f32.mrb[0].mxu0
    %v7237 = vadd.f32 0.0, %v7236
    %v7238 = vpop.f32.mrb[0].mxu0
    %7239 = vdwg.mxu0
    %7241 = vrot.lane.b32.xlu0 %v6444, 32
    %v7242 = vpop.permute.xlu0 %7241
    %v7245 = vsel %vm616, %v6971, 0
    %v7248 = vsel %vm616, %v6976, 0
    %7250 = vmatprep.subr.mxu0 0.0
    %7251 = vmatpush1.msra.mxu0 %v7242
    %7252 = vmatprep.subr.mxu0 0.0
    %7253 = vmatpush1.msra.mxu0 0.0
    %7254 = vmatprep.subr.mxu0 0.0
    %7255 = vmatpush1.msra.mxu0 0.0
    %7256 = vmatprep.subr.mxu0 0.0
    %7257 = vmatpush1.msra.mxu0 0.0
    %7258 = vmatprep.subr.mxu0 0.0
    %7259 = vmatpush1.msra.mxu0 0.0
    %7260 = vmatprep.subr.mxu0 0.0
    %7261 = vmatpush1.msra.mxu0 0.0
    %7262 = vmatprep.subr.mxu0 0.0
    %7263 = vmatpush1.msra.mxu0 0.0
    %7264 = vmatprep.subr.mxu0 0.0
    %7265 = vmatpush1.msra.mxu0 0.0
    %7266 = vmatprep.subr.mxu0 0.0
    %7267 = vmatpush1.msra.mxu0 0.0
    %7268 = vmatprep.subr.mxu0 0.0
    %7269 = vmatpush1.msra.mxu0 0.0
    %7270 = vmatprep.subr.mxu0 0.0
    %7271 = vmatpush1.msra.mxu0 0.0
    %7272 = vmatprep.subr.mxu0 0.0
    %7273 = vmatpush1.msra.mxu0 0.0
    %7274 = vmatprep.subr.mxu0 0.0
    %7275 = vmatpush1.msra.mxu0 0.0
    %7276 = vmatprep.subr.mxu0 0.0
    %7277 = vmatpush1.msra.mxu0 0.0
    %7278 = vmatprep.subr.mxu0 0.0
    %7279 = vmatpush1.msra.mxu0 0.0
    %7280 = vmatprep.subr.mxu0 0.0
    %7281 = vmatpush1.msra.mxu0 0.0
    %7282 = vmatprep.subr.mxu0 0.0
    %7283 = vmatpush1.msra.mxu0 0.0
    %7284 = vmatprep.subr.mxu0 0.0
    %7285 = vmatpush1.msra.mxu0 0.0
    %7286 = vmatprep.subr.mxu0 0.0
    %7287 = vmatpush1.msra.mxu0 0.0
    %7288 = vmatprep.subr.mxu0 0.0
    %7289 = vmatpush1.msra.mxu0 0.0
    %7290 = vmatprep.subr.mxu0 0.0
    %7291 = vmatpush1.msra.mxu0 0.0
    %7292 = vmatprep.subr.mxu0 0.0
    %7293 = vmatpush1.msra.mxu0 0.0
    %7294 = vmatprep.subr.mxu0 0.0
    %7295 = vmatpush1.msra.mxu0 0.0
    %7296 = vmatprep.subr.mxu0 0.0
    %7297 = vmatpush1.msra.mxu0 0.0
    %7298 = vmatprep.subr.mxu0 0.0
    %7299 = vmatpush1.msra.mxu0 0.0
    %7300 = vmatprep.subr.mxu0 0.0
    %7301 = vmatpush1.msra.mxu0 0.0
    %7302 = vmatprep.subr.mxu0 0.0
    %7303 = vmatpush1.msra.mxu0 0.0
    %7304 = vmatprep.subr.mxu0 0.0
    %7305 = vmatpush1.msra.mxu0 0.0
    %7306 = vmatprep.subr.mxu0 0.0
    %7307 = vmatpush1.msra.mxu0 0.0
    %7308 = vmatprep.subr.mxu0 0.0
    %7309 = vmatpush1.msra.mxu0 0.0
    %7310 = vmatprep.subr.mxu0 0.0
    %7311 = vmatpush1.msra.mxu0 0.0
    %7312 = vmatprep.subr.mxu0 0.0
    %7313 = vmatpush1.msra.mxu0 0.0
    %7314 = vmatprep.mubr.f32.mxu0 0.0
    %7315 = vmatmul.mubr.f32.gmra.mrb[0].mxu0 %v7245
    %v7316 = vpop.f32.mrb[0].mxu0
    %v7317 = vadd.f32 0.0, %v7316
    %v7318 = vpop.f32.mrb[0].mxu0
    %7319 = vmatprep.mubr.f32.mxu0 0.0
    %7320 = vmatmul.mubr.f32.gmra.mrb[0].mxu0 %v7248
    %v7321 = vpop.f32.mrb[0].mxu0
    %v7322 = vadd.f32 0.0, %v7321
    %v7323 = vpop.f32.mrb[0].mxu0
    %7324 = vdwg.mxu0
    %7326 = vrot.lane.b32.xlu0 %v6445, 32
    %v7327 = vpop.permute.xlu0 %7326
    %v7330 = vsel %vm616, %v7058, 0
    %v7333 = vsel %vm616, %v7063, 0
    %7335 = vmatprep.subr.mxu0 0.0
    %7336 = vmatpush1.msra.mxu0 %v7327
    %7337 = vmatprep.subr.mxu0 0.0
    %7338 = vmatpush1.msra.mxu0 0.0
    %7339 = vmatprep.subr.mxu0 0.0
    %7340 = vmatpush1.msra.mxu0 0.0
    %7341 = vmatprep.subr.mxu0 0.0
    %7342 = vmatpush1.msra.mxu0 0.0
    %7343 = vmatprep.subr.mxu0 0.0
    %7344 = vmatpush1.msra.mxu0 0.0
    %7345 = vmatprep.subr.mxu0 0.0
    %7346 = vmatpush1.msra.mxu0 0.0
    %7347 = vmatprep.subr.mxu0 0.0
    %7348 = vmatpush1.msra.mxu0 0.0
    %7349 = vmatprep.subr.mxu0 0.0
    %7350 = vmatpush1.msra.mxu0 0.0
    %7351 = vmatprep.subr.mxu0 0.0
    %7352 = vmatpush1.msra.mxu0 0.0
    %7353 = vmatprep.subr.mxu0 0.0
    %7354 = vmatpush1.msra.mxu0 0.0
    %7355 = vmatprep.subr.mxu0 0.0
    %7356 = vmatpush1.msra.mxu0 0.0
    %7357 = vmatprep.subr.mxu0 0.0
    %7358 = vmatpush1.msra.mxu0 0.0
    %7359 = vmatprep.subr.mxu0 0.0
    %7360 = vmatpush1.msra.mxu0 0.0
    %7361 = vmatprep.subr.mxu0 0.0
    %7362 = vmatpush1.msra.mxu0 0.0
    %7363 = vmatprep.subr.mxu0 0.0
    %7364 = vmatpush1.msra.mxu0 0.0
    %7365 = vmatprep.subr.mxu0 0.0
    %7366 = vmatpush1.msra.mxu0 0.0
    %7367 = vmatprep.subr.mxu0 0.0
    %7368 = vmatpush1.msra.mxu0 0.0
    %7369 = vmatprep.subr.mxu0 0.0
    %7370 = vmatpush1.msra.mxu0 0.0
    %7371 = vmatprep.subr.mxu0 0.0
    %7372 = vmatpush1.msra.mxu0 0.0
    %7373 = vmatprep.subr.mxu0 0.0
    %7374 = vmatpush1.msra.mxu0 0.0
    %7375 = vmatprep.subr.mxu0 0.0
    %7376 = vmatpush1.msra.mxu0 0.0
    %7377 = vmatprep.subr.mxu0 0.0
    %7378 = vmatpush1.msra.mxu0 0.0
    %7379 = vmatprep.subr.mxu0 0.0
    %7380 = vmatpush1.msra.mxu0 0.0
    %7381 = vmatprep.subr.mxu0 0.0
    %7382 = vmatpush1.msra.mxu0 0.0
    %7383 = vmatprep.subr.mxu0 0.0
    %7384 = vmatpush1.msra.mxu0 0.0
    %7385 = vmatprep.subr.mxu0 0.0
    %7386 = vmatpush1.msra.mxu0 0.0
    %7387 = vmatprep.subr.mxu0 0.0
    %7388 = vmatpush1.msra.mxu0 0.0
    %7389 = vmatprep.subr.mxu0 0.0
    %7390 = vmatpush1.msra.mxu0 0.0
    %7391 = vmatprep.subr.mxu0 0.0
    %7392 = vmatpush1.msra.mxu0 0.0
    %7393 = vmatprep.subr.mxu0 0.0
    %7394 = vmatpush1.msra.mxu0 0.0
    %7395 = vmatprep.subr.mxu0 0.0
    %7396 = vmatpush1.msra.mxu0 0.0
    %7397 = vmatprep.subr.mxu0 0.0
    %7398 = vmatpush1.msra.mxu0 0.0
    %7399 = vmatprep.mubr.f32.mxu0 0.0
    %7400 = vmatmul.mubr.f32.gmra.mrb[0].mxu0 %v7330
    %v7401 = vpop.f32.mrb[0].mxu0
    %v7402 = vadd.f32 0.0, %v7401
    %v7403 = vpop.f32.mrb[0].mxu0
    %7404 = vmatprep.mubr.f32.mxu0 0.0
    %7405 = vmatmul.mubr.f32.gmra.mrb[0].mxu0 %v7333
    %v7406 = vpop.f32.mrb[0].mxu0
    %v7407 = vadd.f32 0.0, %v7406
    %v7408 = vpop.f32.mrb[0].mxu0
    %7409 = vdwg.mxu0
    %7411 = vrot.lane.b32.xlu0 %v6446, 32
    %v7412 = vpop.permute.xlu0 %7411
    %v7415 = vsel %vm616, %v7145, 0
    %v7418 = vsel %vm616, %v7150, 0
    %7420 = vmatprep.subr.mxu0 0.0
    %7421 = vmatpush1.msra.mxu0 %v7412
    %7422 = vmatprep.subr.mxu0 0.0
    %7423 = vmatpush1.msra.mxu0 0.0
    %7424 = vmatprep.subr.mxu0 0.0
    %7425 = vmatpush1.msra.mxu0 0.0
    %7426 = vmatprep.subr.mxu0 0.0
    %7427 = vmatpush1.msra.mxu0 0.0
    %7428 = vmatprep.subr.mxu0 0.0
    %7429 = vmatpush1.msra.mxu0 0.0
    %7430 = vmatprep.subr.mxu0 0.0
    %7431 = vmatpush1.msra.mxu0 0.0
    %7432 = vmatprep.subr.mxu0 0.0
    %7433 = vmatpush1.msra.mxu0 0.0
    %7434 = vmatprep.subr.mxu0 0.0
    %7435 = vmatpush1.msra.mxu0 0.0
    %7436 = vmatprep.subr.mxu0 0.0
    %7437 = vmatpush1.msra.mxu0 0.0
    %7438 = vmatprep.subr.mxu0 0.0
    %7439 = vmatpush1.msra.mxu0 0.0
    %7440 = vmatprep.subr.mxu0 0.0
    %7441 = vmatpush1.msra.mxu0 0.0
    %7442 = vmatprep.subr.mxu0 0.0
    %7443 = vmatpush1.msra.mxu0 0.0
    %7444 = vmatprep.subr.mxu0 0.0
    %7445 = vmatpush1.msra.mxu0 0.0
    %7446 = vmatprep.subr.mxu0 0.0
    %7447 = vmatpush1.msra.mxu0 0.0
    %7448 = vmatprep.subr.mxu0 0.0
    %7449 = vmatpush1.msra.mxu0 0.0
    %7450 = vmatprep.subr.mxu0 0.0
    %7451 = vmatpush1.msra.mxu0 0.0
    %7452 = vmatprep.subr.mxu0 0.0
    %7453 = vmatpush1.msra.mxu0 0.0
    %7454 = vmatprep.subr.mxu0 0.0
    %7455 = vmatpush1.msra.mxu0 0.0
    %7456 = vmatprep.subr.mxu0 0.0
    %7457 = vmatpush1.msra.mxu0 0.0
    %7458 = vmatprep.subr.mxu0 0.0
    %7459 = vmatpush1.msra.mxu0 0.0
    %7460 = vmatprep.subr.mxu0 0.0
    %7461 = vmatpush1.msra.mxu0 0.0
    %7462 = vmatprep.subr.mxu0 0.0
    %7463 = vmatpush1.msra.mxu0 0.0
    %7464 = vmatprep.subr.mxu0 0.0
    %7465 = vmatpush1.msra.mxu0 0.0
    %7466 = vmatprep.subr.mxu0 0.0
    %7467 = vmatpush1.msra.mxu0 0.0
    %7468 = vmatprep.subr.mxu0 0.0
    %7469 = vmatpush1.msra.mxu0 0.0
    %7470 = vmatprep.subr.mxu0 0.0
    %7471 = vmatpush1.msra.mxu0 0.0
    %7472 = vmatprep.subr.mxu0 0.0
    %7473 = vmatpush1.msra.mxu0 0.0
    %7474 = vmatprep.subr.mxu0 0.0
    %7475 = vmatpush1.msra.mxu0 0.0
    %7476 = vmatprep.subr.mxu0 0.0
    %7477 = vmatpush1.msra.mxu0 0.0
    %7478 = vmatprep.subr.mxu0 0.0
    %7479 = vmatpush1.msra.mxu0 0.0
    %7480 = vmatprep.subr.mxu0 0.0
    %7481 = vmatpush1.msra.mxu0 0.0
    %7482 = vmatprep.subr.mxu0 0.0
    %7483 = vmatpush1.msra.mxu0 0.0
    %7484 = vmatprep.mubr.f32.mxu0 0.0
    %7485 = vmatmul.mubr.f32.gmra.mrb[0].mxu0 %v7415
    %v7486 = vpop.f32.mrb[0].mxu0
    %v7487 = vadd.f32 0.0, %v7486
    %v7488 = vpop.f32.mrb[0].mxu0
    %7489 = vmatprep.mubr.f32.mxu0 0.0
    %7490 = vmatmul.mubr.f32.gmra.mrb[0].mxu0 %v7418
    %v7491 = vpop.f32.mrb[0].mxu0
    %v7492 = vadd.f32 0.0, %v7491
    %v7493 = vpop.f32.mrb[0].mxu0
    %7494 = vdwg.mxu0
    %7496 = vrot.lane.b32.xlu0 %v6447, 32
    %v7497 = vpop.permute.xlu0 %7496
    %v7500 = vsel %vm616, %v7232, 0
    %v7503 = vsel %vm616, %v7237, 0
    %7505 = vmatprep.subr.mxu0 0.0
    %7506 = vmatpush1.msra.mxu0 %v7497
    %7507 = vmatprep.subr.mxu0 0.0
    %7508 = vmatpush1.msra.mxu0 0.0
    %7509 = vmatprep.subr.mxu0 0.0
    %7510 = vmatpush1.msra.mxu0 0.0
    %7511 = vmatprep.subr.mxu0 0.0
    %7512 = vmatpush1.msra.mxu0 0.0
    %7513 = vmatprep.subr.mxu0 0.0
    %7514 = vmatpush1.msra.mxu0 0.0
    %7515 = vmatprep.subr.mxu0 0.0
    %7516 = vmatpush1.msra.mxu0 0.0
    %7517 = vmatprep.subr.mxu0 0.0
    %7518 = vmatpush1.msra.mxu0 0.0
    %7519 = vmatprep.subr.mxu0 0.0
    %7520 = vmatpush1.msra.mxu0 0.0
    %7521 = vmatprep.subr.mxu0 0.0
    %7522 = vmatpush1.msra.mxu0 0.0
    %7523 = vmatprep.subr.mxu0 0.0
    %7524 = vmatpush1.msra.mxu0 0.0
    %7525 = vmatprep.subr.mxu0 0.0
    %7526 = vmatpush1.msra.mxu0 0.0
    %7527 = vmatprep.subr.mxu0 0.0
    %7528 = vmatpush1.msra.mxu0 0.0
    %7529 = vmatprep.subr.mxu0 0.0
    %7530 = vmatpush1.msra.mxu0 0.0
    %7531 = vmatprep.subr.mxu0 0.0
    %7532 = vmatpush1.msra.mxu0 0.0
    %7533 = vmatprep.subr.mxu0 0.0
    %7534 = vmatpush1.msra.mxu0 0.0
    %7535 = vmatprep.subr.mxu0 0.0
    %7536 = vmatpush1.msra.mxu0 0.0
    %7537 = vmatprep.subr.mxu0 0.0
    %7538 = vmatpush1.msra.mxu0 0.0
    %7539 = vmatprep.subr.mxu0 0.0
    %7540 = vmatpush1.msra.mxu0 0.0
    %7541 = vmatprep.subr.mxu0 0.0
    %7542 = vmatpush1.msra.mxu0 0.0
    %7543 = vmatprep.subr.mxu0 0.0
    %7544 = vmatpush1.msra.mxu0 0.0
    %7545 = vmatprep.subr.mxu0 0.0
    %7546 = vmatpush1.msra.mxu0 0.0
    %7547 = vmatprep.subr.mxu0 0.0
    %7548 = vmatpush1.msra.mxu0 0.0
    %7549 = vmatprep.subr.mxu0 0.0
    %7550 = vmatpush1.msra.mxu0 0.0
    %7551 = vmatprep.subr.mxu0 0.0
    %7552 = vmatpush1.msra.mxu0 0.0
    %7553 = vmatprep.subr.mxu0 0.0
    %7554 = vmatpush1.msra.mxu0 0.0
    %7555 = vmatprep.subr.mxu0 0.0
    %7556 = vmatpush1.msra.mxu0 0.0
    %7557 = vmatprep.subr.mxu0 0.0
    %7558 = vmatpush1.msra.mxu0 0.0
    %7559 = vmatprep.subr.mxu0 0.0
    %7560 = vmatpush1.msra.mxu0 0.0
    %7561 = vmatprep.subr.mxu0 0.0
    %7562 = vmatpush1.msra.mxu0 0.0
    %7563 = vmatprep.subr.mxu0 0.0
    %7564 = vmatpush1.msra.mxu0 0.0
    %7565 = vmatprep.subr.mxu0 0.0
    %7566 = vmatpush1.msra.mxu0 0.0
    %7567 = vmatprep.subr.mxu0 0.0
    %7568 = vmatpush1.msra.mxu0 0.0
    %7569 = vmatprep.mubr.f32.mxu0 0.0
    %7570 = vmatmul.mubr.f32.gmra.mrb[0].mxu0 %v7500
    %v7571 = vpop.f32.mrb[0].mxu0
    %v7572 = vadd.f32 0.0, %v7571
    %v7573 = vpop.f32.mrb[0].mxu0
    %7574 = vmatprep.mubr.f32.mxu0 0.0
    %7575 = vmatmul.mubr.f32.gmra.mrb[0].mxu0 %v7503
    %v7576 = vpop.f32.mrb[0].mxu0
    %v7577 = vadd.f32 0.0, %v7576
    %v7578 = vpop.f32.mrb[0].mxu0
    %7579 = vdwg.mxu0
    %v7580 = vadd.f32 %v7317, %v7402
    %v7581 = vadd.f32 %v7322, %v7407
    %v7582 = vadd.f32 %v7580, %v7487
    %v7583 = vadd.f32 %v7581, %v7492
    %v7584 = vadd.f32 %v7582, %v7572
    %v7585 = vadd.f32 %v7583, %v7577
    %v7586 = vadd.f32 %v5616, %v7584
    %v7587 = vadd.f32 %v5617, %v7585
    %v7588 = vld [vmem:[%s8 + $0xc] sm:$0x1]
    %v7589 = vld [vmem:[%s8 + $0xd] sm:$0x1]
    %v7590 = vsel %vm144, %v7586, 0.0
    %7591 = vadd.xlane.f32.xlu0 %v7590
    %v7592 = vpop.xlane.xlu0 %7591
    %v7593 = vsel %vm144, %v7587, 0.0
    %7594 = vadd.xlane.f32.xlu0 %v7593
    %v7595 = vpop.xlane.xlu0 %7594
    %v7596 = vmul.f32 %v7592, %v236
    %v7597 = vmul.f32 %v7595, %v236
    %v7598 = vsub.f32 %v7586, %v7596
    %v7599 = vsub.f32 %v7587, %v7597
    %v7600 = vmul.f32 %v7598, %v7598
    %v7601 = vmul.f32 %v7599, %v7599
    %v7602 = vsel %vm144, %v7600, 0.0
    %7603 = vadd.xlane.f32.xlu0 %v7602
    %v7604 = vpop.xlane.xlu0 %7603
    %v7605 = vsel %vm144, %v7601, 0.0
    %7606 = vadd.xlane.f32.xlu0 %v7605
    %v7607 = vpop.xlane.xlu0 %7606
    %v7608 = vmul.f32 %v7604, %v249
    %v7609 = vmul.f32 %v7607, %v249
    %v7610 = vrsqrt.pop %v7608
    %v7611 = vmul.f32 %v7608, %v7610
    %vm7612 = vcmp.eq.f32.partialorder %v7608, inf
    %v7613 = vsel %vm7612, %v7608, %v7611
    %vm7614 = vcmp.eq.f32.partialorder %v7608, 0.0
    %v7615 = vand.u32 %v7608, 2147483648
    %v7616 = vsel %vm7614, %v7615, %v7613
    %v7617 = vrsqrt.pop %v7609
    %v7618 = vmul.f32 %v7609, %v7617
    %vm7619 = vcmp.eq.f32.partialorder %v7609, inf
    %v7620 = vsel %vm7619, %v7609, %v7618
    %vm7621 = vcmp.eq.f32.partialorder %v7609, 0.0
    %v7622 = vand.u32 %v7609, 2147483648
    %v7623 = vsel %vm7621, %v7622, %v7620
    %v7624 = vadd.f32 %v7616, 1e-06
    %v7625 = vadd.f32 %v7623, 1e-06
    %v7626 = vrcp.pop %v7624
    %v7627 = vrcp.pop %v7625
    %v7628 = vlaneseq
    %v7629 = vshrl.u32 %v7628, 7
    %v7630 = vsub.s32 0, %v7629
    %v7631 = vrot.slane %v7588, %v7630
    %v7632 = vmul.f32 %v7631, %v7598
    %v7633 = vmul.f32 %v7631, %v7599
    %v7634 = vmul.f32 %v7632, %v7626
    %v7635 = vmul.f32 %v7633, %v7627
    %v7636 = vlaneseq
    %v7637 = vshrl.u32 %v7636, 7
    %v7638 = vsub.s32 0, %v7637
    %v7639 = vrot.slane %v7589, %v7638
    %v7640 = vadd.f32 %v7634, %v7639
    %v7641 = vadd.f32 %v7635, %v7639
    %v7642 = vld [vmem:[%s7 + $0x120] sm:$0xff]
    %v7643 = vld [vmem:[%s7 + $0x128] sm:$0xff]
    %v7644 = vld [vmem:[%s7 + $0x130] sm:$0xff]
    %v7645 = vld [vmem:[%s7 + $0x138] sm:$0xff]
    %v7646 = vld [vmem:[%s7 + $0x140] sm:$0xff]
    %v7647 = vld [vmem:[%s7 + $0x148] sm:$0xff]
    %v7648 = vld [vmem:[%s7 + $0x150] sm:$0xff]
    %v7649 = vld [vmem:[%s7 + $0x158] sm:$0xff]
    %v7650 = vld [vmem:[%s7 + $0x160] sm:$0xff]
    %v7651 = vld [vmem:[%s7 + $0x168] sm:$0xff]
    %v7652 = vld [vmem:[%s7 + $0x170] sm:$0xff]
    %v7653 = vld [vmem:[%s7 + $0x178] sm:$0xff]
    %v7654 = vld [vmem:[%s8 + $0xe] sm:$0x1]
    %v7655 = vrot.slane %v7640, 7
    %v7656 = vrot.slane %v7641, 7
    %v7657 = vsel %vm3767, %v7655, %v7656
    %v7658 = vsel %vm3767, %v7656, %v7655
    %v7659 = vsel %vm3772, %v7658, 0.0
    %v7660 = vsel %vm3773, %v7657, 0.0
    %v7661 = vrot.slane %v7640, 6
    %v7662 = vrot.slane %v7641, 6
    %v7663 = vsel %vm3778, %v7661, %v7662
    %v7664 = vsel %vm3778, %v7662, %v7661
    %v7665 = vsel %vm3783, %v7664, 0.0
    %v7666 = vsel %vm3784, %v7663, 0.0
    %7669 = vrot.lane.b32.xlu0 %v7659, 32
    %v7670 = vpop.permute.xlu0 %7669
    %7671 = vrot.lane.b32.xlu0 %v7660, 32
    %v7672 = vpop.permute.xlu0 %7671
    %7677 = vrot.lane.b32.xlu0 %v7640, 64
    %v7678 = vpop.permute.xlu0 %7677
    %7679 = vrot.lane.b32.xlu0 %v7641, 64
    %v7680 = vpop.permute.xlu0 %7679
    %v7683 = vsel %vm144, %v7665, %v7670
    %v7684 = vsel %vm144, %v7666, %v7672
    %v7685 = vsel %vm3805, %v7683, %v7678
    %v7686 = vsel %vm3805, %v7684, %v7680
    %v7687 = vlaneseq
    %v7688 = vshrl.u32 %v7687, 7
    %v7689 = vsub.s32 0, %v7688
    %v7690 = vrot.slane %v7654, %v7689
    %v7692 = vsel %vm3812, %v7685, 0
    %v7695 = vsel %vm3812, %v7686, 0
    %7697 = vmatprep.subr.mxu0 0.0
    %7698 = vmatpush1.msra.mxu0 %v7642
    %7699 = vmatprep.subr.mxu0 0.0
    %7700 = vmatpush1.msra.mxu0 %v7643
    %7701 = vmatprep.subr.mxu0 0.0
    %7702 = vmatpush1.msra.mxu0 %v7644
    %7703 = vmatprep.subr.mxu0 0.0
    %7704 = vmatpush1.msra.mxu0 %v7645
    %7705 = vmatprep.subr.mxu0 0.0
    %7706 = vmatpush1.msra.mxu0 %v7646
    %7707 = vmatprep.subr.mxu0 0.0
    %7708 = vmatpush1.msra.mxu0 %v7647
    %7709 = vmatprep.subr.mxu0 0.0
    %7710 = vmatpush1.msra.mxu0 %v7648
    %7711 = vmatprep.subr.mxu0 0.0
    %7712 = vmatpush1.msra.mxu0 %v7649
    %7713 = vmatprep.subr.mxu0 0.0
    %7714 = vmatpush1.msra.mxu0 %v7650
    %7715 = vmatprep.subr.mxu0 0.0
    %7716 = vmatpush1.msra.mxu0 %v7651
    %7717 = vmatprep.subr.mxu0 0.0
    %7718 = vmatpush1.msra.mxu0 %v7652
    %7719 = vmatprep.subr.mxu0 0.0
    %7720 = vmatpush1.msra.mxu0 %v7653
    %7721 = vmatprep.subr.mxu0 0.0
    %7722 = vmatpush1.msra.mxu0 0.0
    %7723 = vmatprep.subr.mxu0 0.0
    %7724 = vmatpush1.msra.mxu0 0.0
    %7725 = vmatprep.subr.mxu0 0.0
    %7726 = vmatpush1.msra.mxu0 0.0
    %7727 = vmatprep.subr.mxu0 0.0
    %7728 = vmatpush1.msra.mxu0 0.0
    %7729 = vmatprep.subr.mxu0 0.0
    %7730 = vmatpush1.msra.mxu0 0.0
    %7731 = vmatprep.subr.mxu0 0.0
    %7732 = vmatpush1.msra.mxu0 0.0
    %7733 = vmatprep.subr.mxu0 0.0
    %7734 = vmatpush1.msra.mxu0 0.0
    %7735 = vmatprep.subr.mxu0 0.0
    %7736 = vmatpush1.msra.mxu0 0.0
    %7737 = vmatprep.subr.mxu0 0.0
    %7738 = vmatpush1.msra.mxu0 0.0
    %7739 = vmatprep.subr.mxu0 0.0
    %7740 = vmatpush1.msra.mxu0 0.0
    %7741 = vmatprep.subr.mxu0 0.0
    %7742 = vmatpush1.msra.mxu0 0.0
    %7743 = vmatprep.subr.mxu0 0.0
    %7744 = vmatpush1.msra.mxu0 0.0
    %7745 = vmatprep.subr.mxu0 0.0
    %7746 = vmatpush1.msra.mxu0 0.0
    %7747 = vmatprep.subr.mxu0 0.0
    %7748 = vmatpush1.msra.mxu0 0.0
    %7749 = vmatprep.subr.mxu0 0.0
    %7750 = vmatpush1.msra.mxu0 0.0
    %7751 = vmatprep.subr.mxu0 0.0
    %7752 = vmatpush1.msra.mxu0 0.0
    %7753 = vmatprep.subr.mxu0 0.0
    %7754 = vmatpush1.msra.mxu0 0.0
    %7755 = vmatprep.subr.mxu0 0.0
    %7756 = vmatpush1.msra.mxu0 0.0
    %7757 = vmatprep.subr.mxu0 0.0
    %7758 = vmatpush1.msra.mxu0 0.0
    %7759 = vmatprep.subr.mxu0 0.0
    %7760 = vmatpush1.msra.mxu0 0.0
    %7761 = vmatprep.mubr.f32.mxu0 0.0
    %7762 = vmatmul.mubr.f32.gmra.mrb[0].mxu0 %v7692
    %v7763 = vpop.f32.mrb[0].mxu0
    %v7764 = vadd.f32 %v7690, %v7763
    %v7765 = vpop.f32.mrb[0].mxu0
    %7766 = vmatprep.mubr.f32.mxu0 0.0
    %7767 = vmatmul.mubr.f32.gmra.mrb[0].mxu0 %v7695
    %v7768 = vpop.f32.mrb[0].mxu0
    %v7769 = vadd.f32 %v7690, %v7768
    %v7770 = vpop.f32.mrb[0].mxu0
    %7771 = vdwg.mxu0
    %v7772 = vmax.f32 %v7764, 0.0
    %v7773 = vmax.f32 %v7769, 0.0
    %v7774 = vld [vmem:[%s7 + $0x180] sm:$0xff]
    %v7775 = vld [vmem:[%s7 + $0x188] sm:$0xff]
    %v7776 = vld [vmem:[%s7 + $0x190] sm:$0xff]
    %v7777 = vld [vmem:[%s7 + $0x198] sm:$0xff]
    %v7778 = vld [vmem:[%s7 + $0x1a0] sm:$0xff]
    %v7779 = vld [vmem:[%s7 + $0x1a8] sm:$0xff]
    %v7780 = vld [vmem:[%s7 + $0x1b0] sm:$0xff]
    %v7781 = vld [vmem:[%s7 + $0x1b8] sm:$0xff]
    %v7782 = vld [vmem:[%s7 + $0x1c0] sm:$0xff]
    %v7783 = vld [vmem:[%s7 + $0x1c8] sm:$0xff]
    %v7784 = vld [vmem:[%s7 + $0x1d0] sm:$0xff]
    %v7785 = vld [vmem:[%s7 + $0x1d8] sm:$0xff]
    %v7786 = vld [vmem:[%s7 + $0x1e0] sm:$0xff]
    %v7787 = vld [vmem:[%s7 + $0x1e8] sm:$0xff]
    %v7788 = vld [vmem:[%s7 + $0x1f0] sm:$0xff]
    %v7789 = vld [vmem:[%s7 + $0x1f8] sm:$0xff]
    %v7790 = vld [vmem:[%s7 + $0x200] sm:$0xff]
    %v7791 = vld [vmem:[%s7 + $0x208] sm:$0xff]
    %v7792 = vld [vmem:[%s7 + $0x210] sm:$0xff]
    %v7793 = vld [vmem:[%s7 + $0x218] sm:$0xff]
    %v7794 = vld [vmem:[%s7 + $0x220] sm:$0xff]
    %v7795 = vld [vmem:[%s7 + $0x228] sm:$0xff]
    %v7796 = vld [vmem:[%s7 + $0x230] sm:$0xff]
    %v7797 = vld [vmem:[%s7 + $0x238] sm:$0xff]
    %v7798 = vld [vmem:[%s8 + $0xf] sm:$0x1]
    %v7799 = vrot.slane %v7772, 7
    %v7800 = vrot.slane %v7773, 7
    %v7801 = vsel %vm3767, %v7799, %v7800
    %v7802 = vsel %vm3767, %v7800, %v7799
    %v7803 = vsel %vm3772, %v7802, 0.0
    %v7804 = vsel %vm3773, %v7801, 0.0
    %v7805 = vrot.slane %v7772, 6
    %v7806 = vrot.slane %v7773, 6
    %v7807 = vsel %vm3778, %v7805, %v7806
    %v7808 = vsel %vm3778, %v7806, %v7805
    %v7809 = vsel %vm3783, %v7808, 0.0
    %v7810 = vsel %vm3784, %v7807, 0.0
    %7813 = vrot.lane.b32.xlu0 %v7803, 64
    %v7814 = vpop.permute.xlu0 %7813
    %7815 = vrot.lane.b32.xlu0 %v7804, 64
    %v7816 = vpop.permute.xlu0 %7815
    %v7819 = vsel %vm3805, %v7809, %v7814
    %v7820 = vsel %vm3805, %v7810, %v7816
    %v7821 = vlaneseq
    %v7822 = vshrl.u32 %v7821, 7
    %v7823 = vsub.s32 0, %v7822
    %v7824 = vrot.slane %v7798, %v7823
    %v7826 = vsel %vm3805, %v7772, 0
    %v7829 = vsel %vm3805, %v7773, 0
    %7831 = vmatprep.subr.mxu0 0.0
    %7832 = vmatpush1.msra.mxu0 %v7774
    %7833 = vmatprep.subr.mxu0 0.0
    %7834 = vmatpush1.msra.mxu0 %v7775
    %7835 = vmatprep.subr.mxu0 0.0
    %7836 = vmatpush1.msra.mxu0 %v7776
    %7837 = vmatprep.subr.mxu0 0.0
    %7838 = vmatpush1.msra.mxu0 %v7777
    %7839 = vmatprep.subr.mxu0 0.0
    %7840 = vmatpush1.msra.mxu0 %v7778
    %7841 = vmatprep.subr.mxu0 0.0
    %7842 = vmatpush1.msra.mxu0 %v7779
    %7843 = vmatprep.subr.mxu0 0.0
    %7844 = vmatpush1.msra.mxu0 %v7780
    %7845 = vmatprep.subr.mxu0 0.0
    %7846 = vmatpush1.msra.mxu0 %v7781
    %7847 = vmatprep.subr.mxu0 0.0
    %7848 = vmatpush1.msra.mxu0 %v7782
    %7849 = vmatprep.subr.mxu0 0.0
    %7850 = vmatpush1.msra.mxu0 %v7783
    %7851 = vmatprep.subr.mxu0 0.0
    %7852 = vmatpush1.msra.mxu0 %v7784
    %7853 = vmatprep.subr.mxu0 0.0
    %7854 = vmatpush1.msra.mxu0 %v7785
    %7855 = vmatprep.subr.mxu0 0.0
    %7856 = vmatpush1.msra.mxu0 %v7786
    %7857 = vmatprep.subr.mxu0 0.0
    %7858 = vmatpush1.msra.mxu0 %v7787
    %7859 = vmatprep.subr.mxu0 0.0
    %7860 = vmatpush1.msra.mxu0 %v7788
    %7861 = vmatprep.subr.mxu0 0.0
    %7862 = vmatpush1.msra.mxu0 %v7789
    %7863 = vmatprep.subr.mxu0 0.0
    %7864 = vmatpush1.msra.mxu0 %v7790
    %7865 = vmatprep.subr.mxu0 0.0
    %7866 = vmatpush1.msra.mxu0 %v7791
    %7867 = vmatprep.subr.mxu0 0.0
    %7868 = vmatpush1.msra.mxu0 %v7792
    %7869 = vmatprep.subr.mxu0 0.0
    %7870 = vmatpush1.msra.mxu0 %v7793
    %7871 = vmatprep.subr.mxu0 0.0
    %7872 = vmatpush1.msra.mxu0 %v7794
    %7873 = vmatprep.subr.mxu0 0.0
    %7874 = vmatpush1.msra.mxu0 %v7795
    %7875 = vmatprep.subr.mxu0 0.0
    %7876 = vmatpush1.msra.mxu0 %v7796
    %7877 = vmatprep.subr.mxu0 0.0
    %7878 = vmatpush1.msra.mxu0 %v7797
    %7879 = vmatprep.subr.mxu0 0.0
    %7880 = vmatpush1.msra.mxu0 0.0
    %7881 = vmatprep.subr.mxu0 0.0
    %7882 = vmatpush1.msra.mxu0 0.0
    %7883 = vmatprep.subr.mxu0 0.0
    %7884 = vmatpush1.msra.mxu0 0.0
    %7885 = vmatprep.subr.mxu0 0.0
    %7886 = vmatpush1.msra.mxu0 0.0
    %7887 = vmatprep.subr.mxu0 0.0
    %7888 = vmatpush1.msra.mxu0 0.0
    %7889 = vmatprep.subr.mxu0 0.0
    %7890 = vmatpush1.msra.mxu0 0.0
    %7891 = vmatprep.subr.mxu0 0.0
    %7892 = vmatpush1.msra.mxu0 0.0
    %7893 = vmatprep.subr.mxu0 0.0
    %7894 = vmatpush1.msra.mxu0 0.0
    %7895 = vmatprep.mubr.f32.mxu0 %v7826
    %7896 = vmatmul.mubr.f32.gmra.mrb[0].mxu0 %v7819
    %v7897 = vpop.f32.mrb[0].mxu0
    %v7898 = vadd.f32 %v7824, %v7897
    %v7899 = vpop.f32.mrb[0].mxu0
    %7900 = vmatprep.mubr.f32.mxu0 %v7829
    %7901 = vmatmul.mubr.f32.gmra.mrb[0].mxu0 %v7820
    %v7902 = vpop.f32.mrb[0].mxu0
    %v7903 = vadd.f32 %v7824, %v7902
    %v7904 = vpop.f32.mrb[0].mxu0
    %7905 = vdwg.mxu0
    %v7906 = vmax.f32 %v7898, 0.0
    %v7907 = vmax.f32 %v7903, 0.0
    %v7908 = vadd.f32 %v7586, %v7906
    %v7909 = vadd.f32 %v7587, %v7907
    %v7910 = vld [vmem:[%s8 + $0x10] sm:$0x1]
    %v7911 = vld [vmem:[%s8 + $0x11] sm:$0x1]
    %v7912 = vsel %vm144, %v7908, 0.0
    %7913 = vadd.xlane.f32.xlu0 %v7912
    %v7914 = vpop.xlane.xlu0 %7913
    %v7915 = vsel %vm144, %v7909, 0.0
    %7916 = vadd.xlane.f32.xlu0 %v7915
    %v7917 = vpop.xlane.xlu0 %7916
    %v7918 = vmul.f32 %v7914, %v236
    %v7919 = vmul.f32 %v7917, %v236
    %v7920 = vsub.f32 %v7908, %v7918
    %v7921 = vsub.f32 %v7909, %v7919
    %v7922 = vmul.f32 %v7920, %v7920
    %v7923 = vmul.f32 %v7921, %v7921
    %v7924 = vsel %vm144, %v7922, 0.0
    %7925 = vadd.xlane.f32.xlu0 %v7924
    %v7926 = vpop.xlane.xlu0 %7925
    %v7927 = vsel %vm144, %v7923, 0.0
    %7928 = vadd.xlane.f32.xlu0 %v7927
    %v7929 = vpop.xlane.xlu0 %7928
    %v7930 = vmul.f32 %v7926, %v249
    %v7931 = vmul.f32 %v7929, %v249
    %v7932 = vrsqrt.pop %v7930
    %v7933 = vmul.f32 %v7930, %v7932
    %vm7934 = vcmp.eq.f32.partialorder %v7930, inf
    %v7935 = vsel %vm7934, %v7930, %v7933
    %vm7936 = vcmp.eq.f32.partialorder %v7930, 0.0
    %v7937 = vand.u32 %v7930, 2147483648
    %v7938 = vsel %vm7936, %v7937, %v7935
    %v7939 = vrsqrt.pop %v7931
    %v7940 = vmul.f32 %v7931, %v7939
    %vm7941 = vcmp.eq.f32.partialorder %v7931, inf
    %v7942 = vsel %vm7941, %v7931, %v7940
    %vm7943 = vcmp.eq.f32.partialorder %v7931, 0.0
    %v7944 = vand.u32 %v7931, 2147483648
    %v7945 = vsel %vm7943, %v7944, %v7942
    %v7946 = vadd.f32 %v7938, 1e-06
    %v7947 = vadd.f32 %v7945, 1e-06
    %v7948 = vrcp.pop %v7946
    %v7949 = vrcp.pop %v7947
    %v7950 = vlaneseq
    %v7951 = vshrl.u32 %v7950, 7
    %v7952 = vsub.s32 0, %v7951
    %v7953 = vrot.slane %v7910, %v7952
    %v7954 = vmul.f32 %v7953, %v7920
    %v7955 = vmul.f32 %v7953, %v7921
    %v7956 = vmul.f32 %v7954, %v7948
    %v7957 = vmul.f32 %v7955, %v7949
    %v7958 = vlaneseq
    %v7959 = vshrl.u32 %v7958, 7
    %v7960 = vsub.s32 0, %v7959
    %v7961 = vrot.slane %v7911, %v7960
    %v7962 = vadd.f32 %v7956, %v7961
    %v7963 = vadd.f32 %v7957, %v7961
    %7964 = vst.msk [vmem:[#allocation4] sm:$0xff] %vm144, %v7962
    %7965 = vst.msk [vmem:[#allocation4 + $0x8] sm:$0xff] %vm144, %v7963
    %7966 = vst.msk [vmem:[%s10] sm:$0xff] %vm616, %v6802
    %7968 = vrot.lane.b32.xlu0 %v6803, 120
    %v7969 = vpop.permute.xlu0 %7968
    %7971 = vst.msk [vmem:[%s10 + $0x8] sm:$0xff] %vm616, %v7969
    // Predicated region
    $region34: #{tpu_custom_call.1} parent=1 // pred_check
      _
    $region35: #{tpu_custom_call.1} parent=1 // pred_check_branch
      %7973 = sbr.rel (0) target = $region37
    $region36: #{tpu_custom_call.1} parent=1 // pred_region
      %s7975 = ssub.s32 256, 256
      %7976 = vsyncadd [#allocation5], %s7975
      %s7977 = sshll.u32 [#allocation4], 4
      %s7978 = int_to_ptr.vmem [resolvable:$true] %s7977
      %7983 = dma.vmem_to_hbm [thread:$0]  %s7978, 256, %s9, [#allocation5], 128, 128, 8
    $region37: #{tpu_custom_call.1} parent=1 // pred_fallthru
      _
    // Predicated region
    $region38: #{tpu_custom_call.1} parent=1 // pred_check
      _
    $region39: #{tpu_custom_call.1} parent=1 // pred_check_branch
      %7985 = sbr.rel (0) target = $region41
    $region40: #{tpu_custom_call.1} parent=1 // pred_region
      _
    $region41: #{tpu_custom_call.1} parent=1 // pred_fallthru
      _
    // Predicated region
    $region42: #{tpu_custom_call.1} parent=1 // pred_check
      _
    $region43: #{tpu_custom_call.1} parent=1 // pred_check_branch
      %7987 = sbr.rel (0) target = $region45
    $region44: #{tpu_custom_call.1} parent=1 // pred_region
      %7988 = dma.done [#allocation5], 256
    $region45: #{tpu_custom_call.1} parent=1 // pred_fallthru
      _
    // Predicated region
    $region46: #{tpu_custom_call.1} parent=1 // pred_check
      _
    $region47: #{tpu_custom_call.1} parent=1 // pred_check_branch
      %7990 = sbr.rel (0) target = $region49
    $region48: #{tpu_custom_call.1} parent=1 // pred_region
      _
    $region49: #{tpu_custom_call.1} parent=1 // pred_fallthru
      _
    %7991 = vsyncpa [#allocation5], 1

</llo_original>
